<compile_context>
chip_gen: v7x
topology: tpu7x:2x2x1
jax: 0.10.0
libtpu: 0.0.40
codegen_flags: <defaults>
</compile_context>

<pallas_src>
import jax
import jax.numpy as jnp
from jax.experimental import pallas as pl
from jax.experimental.pallas import tpu as pltpu

N = 2                                     # batch size (static)
NUM_CLASSES = 10
# (H, W, Cin, Cout) of each conv block's *input*
LAYERS = [(16, 16, 1, 32), (8, 8, 32, 64), (4, 4, 64, 128), (2, 2, 128, 256)]


def _geom(H, W):
    """Flat zero-padded activation geometry for a conv-block input of HxW."""
    Hp, Wp = H + 2, W + 2                 # 'same' 3x3 padding
    S = Hp * Wp                           # rows per image in the flat buffer
    band = H * Wp                         # rows per image that may hold valid outputs
    Meff = (N - 1) * S + band             # conv rows actually evaluated (single slab)
    return Wp, S, band, Meff


def fused_cnn_kernel(x_ref, w1_ref, b1_ref, w2_ref, b2_ref, w3_ref, b3_ref,
                     w4_hbm, b4_ref, wfc_ref, bfc_ref, out_ref,
                     o1_ref, o2_ref, o3_ref, o4_ref,
                     pad2_ref, pad3_ref, pad4_ref, w4_vmem, w4_sem):
    f32 = jnp.float32

    # Kick off the largest weight's HBM->VMEM DMA immediately; it overlaps with
    # layers 1-3 compute and is waited on just before the layer-4 tap loop.
    w4_copy = pltpu.make_async_copy(w4_hbm, w4_vmem, w4_sem)
    w4_copy.start()

    # Zero the padded activation buffers once.  INVARIANT: every border row /
    # column and every tail / next-image top-padding row must be zero so that
    # (a) 'same' padding is exact and (b) over-reaching tap reads only feed
    # rows that are never pooled.  Do NOT reduce this to border-only zeroing
    # without re-auditing that invariant.
    pad2_ref[...] = jnp.zeros_like(pad2_ref)
    pad3_ref[...] = jnp.zeros_like(pad3_ref)
    pad4_ref[...] = jnp.zeros_like(pad4_ref)

    def conv_relu(src_ref, w_ref, bias_ref, Meff, Wp, Cin, o_ref):
        """3x3 conv + bias + ReLU over the band of pool-reachable rows.

        src_ref is a flat bf16 zero-padded buffer (row = n*S + hp*Wp + wp,
        channels on lanes); each tap is one contiguous shifted slab -> one MXU
        dot per tap, accumulated in f32."""
        acc = None
        for t in range(9):
            kh, kw = divmod(t, 3)
            off = kh * Wp + kw
            slab = src_ref[off:off + Meff, :]              # (Meff, Cin) bf16
            wpc = w_ref[t * Cin:(t + 1) * Cin, :]          # (Cin, Cout) bf16
            term = jnp.dot(slab, wpc, preferred_element_type=f32)
            acc = term if acc is None else acc + term
        o_ref[...] = jnp.maximum(acc + bias_ref[...], 0.0)

    def pool_into(o_ref, dst_ref, S_src, Wp_src, W_src, Hh, Wh, S_dst, Wp_dst):
        """Fused 2x2/2 max-pool + repack (bf16) into the next padded buffer.

        Vertical max uses two contiguous reads; the result is staged over the
        (already consumed) even conv row so the horizontal max needs only one
        stride-2 pass instead of four strided reads per output row."""
        for n in range(N):
            for oh in range(Hh):
                base = n * S_src + 2 * oh * Wp_src
                vmax = jnp.maximum(
                    o_ref[base:base + W_src, :],
                    o_ref[base + Wp_src:base + Wp_src + W_src, :])
                o_ref[base:base + W_src, :] = vmax         # staging: rows are dead
                pooled = jnp.maximum(o_ref[pl.ds(base, Wh, stride=2), :],
                                     o_ref[pl.ds(base + 1, Wh, stride=2), :])
                dst = n * S_dst + (oh + 1) * Wp_dst + 1
                dst_ref[dst:dst + Wh, :] = pooled.astype(dst_ref.dtype)

    H1, W1, _, _ = LAYERS[0]
    H2, W2, Cin2, _ = LAYERS[1]
    H3, W3, Cin3, _ = LAYERS[2]
    H4, W4, Cin4, _ = LAYERS[3]
    Wp1, S1, _, Meff1 = _geom(H1, W1)
    Wp2, S2, _, Meff2 = _geom(H2, W2)
    Wp3, S3, _, Meff3 = _geom(H3, W3)
    Wp4, S4, _, Meff4 = _geom(H4, W4)

    # ---- Layer 1: one K=16 im2col MXU dot, chunked over M (keeps f32 live
    #      values at <= 4 vregs per chunk; no accumulator spills).
    CH = 128
    for c0 in range(0, Meff1, CH):
        c1 = min(c0 + CH, Meff1)
        r = jnp.dot(x_ref[c0:c1, :], w1_ref[...], preferred_element_type=f32)
        o1_ref[c0:c1, :] = jnp.maximum(r + b1_ref[...], 0.0)

    # ---- Layers 2-4: pool previous output into a bf16 padded buffer, conv.
    pool_into(o1_ref, pad2_ref, S1, Wp1, W1, H1 // 2, W1 // 2, S2, Wp2)
    conv_relu(pad2_ref, w2_ref, b2_ref, Meff2, Wp2, Cin2, o2_ref)

    pool_into(o2_ref, pad3_ref, S2, Wp2, W2, H2 // 2, W2 // 2, S3, Wp3)
    conv_relu(pad3_ref, w3_ref, b3_ref, Meff3, Wp3, Cin3, o3_ref)

    pool_into(o3_ref, pad4_ref, S3, Wp3, W3, H3 // 2, W3 // 2, S4, Wp4)
    w4_copy.wait()                    # layer-4 weights must be resident now
    conv_relu(pad4_ref, w4_vmem, b4_ref, Meff4, Wp4, Cin4, o4_ref)

    # Layer-4's 2x2 pool leaves a single pixel per image -> (N, 256) features.
    feats = []
    for n in range(N):
        base = n * S4
        f = jnp.maximum(
            jnp.maximum(o4_ref[base:base + 1, :], o4_ref[base + 1:base + 2, :]),
            jnp.maximum(o4_ref[base + Wp4:base + Wp4 + 1, :],
                        o4_ref[base + Wp4 + 1:base + Wp4 + 2, :]))
        feats.append(f)
    feat = jnp.concatenate(feats, axis=0)                   # (N, 256) f32

    # Linear(256 -> 10) + numerically stable log_softmax (f32 except MXU ops).
    logits = jnp.dot(feat.astype(jnp.bfloat16), wfc_ref[...],
                     preferred_element_type=f32) + bfc_ref[...]
    m = jnp.max(logits, axis=-1, keepdims=True)
    z = logits - m
    lse = jnp.log(jnp.sum(jnp.exp(z), axis=-1, keepdims=True))
    out_ref[...] = (z - lse).astype(out_ref.dtype)


def _scratch_shapes():
    shapes = []
    # f32 conv-output bands o1..o4 (only pool-reachable rows are materialized).
    for (H, W, _, cout) in LAYERS:
        _, _, _, meff = _geom(H, W)
        shapes.append(pltpu.VMEM((meff, cout), jnp.float32))
    # bf16 zero-padded flat activation buffers feeding layers 2..4, plus tail
    # rows that shifted tap reads may touch at never-pooled rows (values are
    # irrelevant but the reads must stay in-bounds; they are zeroed anyway).
    for (H, W, _, cout) in LAYERS[:-1]:
        Wp_n, S_n, _, _ = _geom(H // 2, W // 2)
        shapes.append(pltpu.VMEM((N * S_n + 2 * Wp_n + 2, cout), jnp.bfloat16))
    # Landing buffer + DMA semaphore for the manually-overlapped w4 copy.
    cin4, cout4 = LAYERS[3][2], LAYERS[3][3]
    shapes.append(pltpu.VMEM((9 * cin4, cout4), jnp.bfloat16))
    shapes.append(pltpu.SemaphoreType.DMA(()))
    return shapes


def neural_net_forward(params, x_nchw):
    """x_nchw: (N, 1, 16, 16) float32 (PyTorch layout) -> (N, 10) log-probs."""
    H1, W1, _, C1out = LAYERS[0]
    Wp1, S1, _, Meff1 = _geom(H1, W1)

    # ---- Layer-1 im2col (host/XLA glue, ~19 KB bf16): row r = n*S1 + hp*Wp1 + wp
    # holds the 9 taps of the 3x3 window whose top-left is padded position
    # (hp, wp); K is zero-padded 9 -> 16.  Only rows [0, Meff1) are consumed.
    x = x_nchw[:, 0, :, :]                                    # Cin == 1
    xp = jnp.pad(x, ((0, 0), (1, 3), (1, 3)))                 # (N, 20, 20)
    taps = [xp[:, kh:kh + Wp1, kw:kw + Wp1]
            for kh in range(3) for kw in range(3)]            # 9 x (N, 18, 18)
    patches = jnp.stack(taps, axis=-1).reshape(N * S1, 9)[:Meff1]
    patches = jnp.pad(patches, ((0, 0), (0, 7))).astype(jnp.bfloat16)   # (612, 16)
    w1p = jnp.pad(params["w1"].reshape(9, C1out),
                  ((0, 7), (0, 0))).astype(jnp.bfloat16)      # (16, 32)

    args = [patches, w1p, params["b1"].reshape(1, -1)]
    for li in range(2, 5):
        cin, cout = LAYERS[li - 1][2], LAYERS[li - 1][3]
        args.append(params[f"w{li}"].reshape(9 * cin, cout).astype(jnp.bfloat16))
        args.append(params[f"b{li}"].reshape(1, cout))
    args.append(params["wfc"].astype(jnp.bfloat16))
    args.append(params["bfc"].reshape(1, NUM_CLASSES))

    vmem_spec = pl.BlockSpec(memory_space=pltpu.MemorySpace.VMEM)
    in_specs = [vmem_spec] * len(args)
    in_specs[7] = pl.BlockSpec(memory_space=pl.ANY)           # w4 stays in HBM

    # Advisory cost estimate so XLA can overlap neighbours with this micro-kernel.
    flops = 2 * Meff1 * 16 * C1out
    for (H, W, cin, cout) in LAYERS[1:]:
        _, _, _, meff = _geom(H, W)
        flops += 2 * meff * 9 * cin * cout
    flops += 2 * N * 256 * NUM_CLASSES
    bytes_accessed = sum(a.size * a.dtype.itemsize for a in args) + N * NUM_CLASSES * 4

    return pl.pallas_call(
        fused_cnn_kernel,
        out_shape=jax.ShapeDtypeStruct((N, NUM_CLASSES), jnp.float32),
        in_specs=in_specs,
        out_specs=pl.BlockSpec(memory_space=pltpu.MemorySpace.VMEM),
        scratch_shapes=_scratch_shapes(),
        cost_estimate=pl.CostEstimate(flops=int(flops),
                                      transcendentals=2 * N * NUM_CLASSES,
                                      bytes_accessed=int(bytes_accessed)),
    )(*args)


def init_params(key):
    """Deterministic, torch-Conv2d/Linear-shaped params (uniform(+-1/sqrt(fan_in)))."""
    params = {}
    chans = [(cin, cout) for (_, _, cin, cout) in LAYERS]
    keys = jax.random.split(key, 10)
    ki = 0
    for li, (cin, cout) in enumerate(chans, start=1):
        bound = 1.0 / float(jnp.sqrt(9 * cin))
        params[f"w{li}"] = jax.random.uniform(
            keys[ki], (3, 3, cin, cout), jnp.float32, -bound, bound); ki += 1
        params[f"b{li}"] = jax.random.uniform(
            keys[ki], (cout,), jnp.float32, -bound, bound); ki += 1
    bound = 1.0 / float(jnp.sqrt(256))
    params["wfc"] = jax.random.uniform(
        keys[ki], (256, NUM_CLASSES), jnp.float32, -bound, bound); ki += 1
    params["bfc"] = jax.random.uniform(
        keys[ki], (NUM_CLASSES,), jnp.float32, -bound, bound)
    return params


def _reference_forward(params, x_nchw):
    """Pure-JAX reference (f32) for correctness checking."""
    x = jnp.transpose(x_nchw, (0, 2, 3, 1))                   # NHWC
    for li in range(1, 5):
        x = jax.lax.conv_general_dilated(
            x, params[f"w{li}"], (1, 1), "SAME",
            dimension_numbers=("NHWC", "HWIO", "NHWC"))
        x = jnp.maximum(x + params[f"b{li}"], 0.0)
        x = jax.lax.reduce_window(x, -jnp.inf, jax.lax.max,
                                  (1, 2, 2, 1), (1, 2, 2, 1), "VALID")
    x = x.reshape(x.shape[0], -1)
    logits = x @ params["wfc"] + params["bfc"]
    return jax.nn.log_softmax(logits, axis=-1)


if __name__ == "__main__":
    key = jax.random.PRNGKey(0)
    kx, kp = jax.random.split(key)
    x = jax.random.normal(kx, (N, 1, 16, 16), jnp.float32)
    params = init_params(kp)

    out = jax.jit(neural_net_forward)(params, x)
    out = jax.block_until_ready(out)

    assert out.shape == (N, NUM_CLASSES)
    # log_softmax rows must exponentiate-sum to ~1
    assert bool(jnp.allclose(jnp.sum(jnp.exp(out), axis=-1), 1.0, atol=1e-4))
    # compare against the pure-JAX f32 reference (kernel uses bf16 MXU operands
    # and bf16 inter-layer activation storage)
    ref = _reference_forward(params, x)
    max_err = float(jnp.max(jnp.abs(out - ref)))
    assert max_err < 0.1, f"mismatch vs reference: max abs err {max_err}"
    print("KERNEL_OK")
</pallas_src>

<mosaic_0001>
module attributes {stable_mosaic.version = 11 : i64} {
  func.func @fused_cnn_kernel(%arg0: memref<612x16xbf16, #tpu.memory_space<vmem>>, %arg1: memref<16x32xbf16, #tpu.memory_space<vmem>>, %arg2: memref<1x32xf32, #tpu.memory_space<vmem>>, %arg3: memref<288x64xbf16, #tpu.memory_space<vmem>>, %arg4: memref<1x64xf32, #tpu.memory_space<vmem>>, %arg5: memref<576x128xbf16, #tpu.memory_space<vmem>>, %arg6: memref<1x128xf32, #tpu.memory_space<vmem>>, %arg7: memref<1152x256xbf16, #tpu.memory_space<any>>, %arg8: memref<1x256xf32, #tpu.memory_space<vmem>>, %arg9: memref<256x10xbf16, #tpu.memory_space<vmem>>, %arg10: memref<1x10xf32, #tpu.memory_space<vmem>>, %arg11: memref<2x10xf32, #tpu.memory_space<vmem>>, %arg12: memref<612x32xf32, #tpu.memory_space<vmem>>, %arg13: memref<180x64xf32, #tpu.memory_space<vmem>>, %arg14: memref<60x128xf32, #tpu.memory_space<vmem>>, %arg15: memref<24x256xf32, #tpu.memory_space<vmem>>, %arg16: memref<222x32xbf16, #tpu.memory_space<vmem>>, %arg17: memref<86x64xbf16, #tpu.memory_space<vmem>>, %arg18: memref<42x128xbf16, #tpu.memory_space<vmem>>, %arg19: memref<1152x256xbf16, #tpu.memory_space<vmem>>, %arg20: memref<!tpu.dma_semaphore, #tpu.memory_space<semaphore_mem>>) attributes {dimension_semantics = [], scalar_prefetch = 0 : i64, scratch_operands = 9 : i64, tpu.core_type = #tpu.core_type<tc>} {
    tpu.enqueue_dma source(%arg7 : memref<1152x256xbf16, #tpu.memory_space<any>>) target(%arg19 : memref<1152x256xbf16, #tpu.memory_space<vmem>>) target_semaphore(%arg20 : memref<!tpu.dma_semaphore, #tpu.memory_space<semaphore_mem>>)
    %cst = arith.constant 0.000000e+00 : bf16
    %0 = vector.broadcast %cst : bf16 to vector<222x32xbf16>
    %c0 = arith.constant 0 : index
    %c0_0 = arith.constant 0 : index
    %1 = vector.load %arg16[%c0, %c0_0] : memref<222x32xbf16, #tpu.memory_space<vmem>>, vector<222x32xbf16>
    tpu.vector_store %arg16[%c0, %c0_0], %0 {strides = array<i32>} : memref<222x32xbf16, #tpu.memory_space<vmem>>, vector<222x32xbf16>,
    %cst_1 = arith.constant 0.000000e+00 : bf16
    %2 = vector.broadcast %cst_1 : bf16 to vector<86x64xbf16>
    %c0_2 = arith.constant 0 : index
    %c0_3 = arith.constant 0 : index
    %3 = vector.load %arg17[%c0_2, %c0_3] : memref<86x64xbf16, #tpu.memory_space<vmem>>, vector<86x64xbf16>
    tpu.vector_store %arg17[%c0_2, %c0_3], %2 {strides = array<i32>} : memref<86x64xbf16, #tpu.memory_space<vmem>>, vector<86x64xbf16>,
    %cst_4 = arith.constant 0.000000e+00 : bf16
    %4 = vector.broadcast %cst_4 : bf16 to vector<42x128xbf16>
    %c0_5 = arith.constant 0 : index
    %c0_6 = arith.constant 0 : index
    %5 = vector.load %arg18[%c0_5, %c0_6] : memref<42x128xbf16, #tpu.memory_space<vmem>>, vector<42x128xbf16>
    tpu.vector_store %arg18[%c0_5, %c0_6], %4 {strides = array<i32>} : memref<42x128xbf16, #tpu.memory_space<vmem>>, vector<42x128xbf16>,
    %c0_7 = arith.constant 0 : index
    %c0_8 = arith.constant 0 : index
    %6 = vector.load %arg0[%c0_7, %c0_8] : memref<612x16xbf16, #tpu.memory_space<vmem>>, vector<128x16xbf16>
    %c0_9 = arith.constant 0 : index
    %c0_10 = arith.constant 0 : index
    %7 = vector.load %arg1[%c0_9, %c0_10] : memref<16x32xbf16, #tpu.memory_space<vmem>>, vector<16x32xbf16>
    %cst_11 = arith.constant dense<0.000000e+00> : vector<128x32xf32>
    %8 = tpu.matmul %6, %7, %cst_11 {dimension_numbers = #tpu.dot_dimension_numbers<[1], [0], [0], [1], [0, 0, 1, 1], [], []>} : vector<128x16xbf16>, vector<16x32xbf16>, vector<128x32xf32> -> vector<128x32xf32>
    %c0_12 = arith.constant 0 : index
    %c0_13 = arith.constant 0 : index
    %9 = vector.load %arg2[%c0_12, %c0_13] : memref<1x32xf32, #tpu.memory_space<vmem>>, vector<1x32xf32>
    %10 = vector.broadcast %9 : vector<1x32xf32> to vector<128x32xf32>
    %11 = arith.addf %8, %10 : vector<128x32xf32>
    %cst_14 = arith.constant 0.000000e+00 : f32
    %12 = vector.broadcast %cst_14 : f32 to vector<128x32xf32>
    %13 = arith.maximumf %11, %12 : vector<128x32xf32>
    %c0_15 = arith.constant 0 : index
    %c0_16 = arith.constant 0 : index
    %14 = vector.load %arg12[%c0_15, %c0_16] : memref<612x32xf32, #tpu.memory_space<vmem>>, vector<128x32xf32>
    tpu.vector_store %arg12[%c0_15, %c0_16], %13 {strides = array<i32>} : memref<612x32xf32, #tpu.memory_space<vmem>>, vector<128x32xf32>,
    %c128 = arith.constant 128 : index
    %c0_17 = arith.constant 0 : index
    %15 = vector.load %arg0[%c128, %c0_17] : memref<612x16xbf16, #tpu.memory_space<vmem>>, vector<128x16xbf16>
    %c0_18 = arith.constant 0 : index
    %c0_19 = arith.constant 0 : index
    %16 = vector.load %arg1[%c0_18, %c0_19] : memref<16x32xbf16, #tpu.memory_space<vmem>>, vector<16x32xbf16>
    %cst_20 = arith.constant dense<0.000000e+00> : vector<128x32xf32>
    %17 = tpu.matmul %15, %16, %cst_20 {dimension_numbers = #tpu.dot_dimension_numbers<[1], [0], [0], [1], [0, 0, 1, 1], [], []>} : vector<128x16xbf16>, vector<16x32xbf16>, vector<128x32xf32> -> vector<128x32xf32>
    %c0_21 = arith.constant 0 : index
    %c0_22 = arith.constant 0 : index
    %18 = vector.load %arg2[%c0_21, %c0_22] : memref<1x32xf32, #tpu.memory_space<vmem>>, vector<1x32xf32>
    %19 = vector.broadcast %18 : vector<1x32xf32> to vector<128x32xf32>
    %20 = arith.addf %17, %19 : vector<128x32xf32>
    %cst_23 = arith.constant 0.000000e+00 : f32
    %21 = vector.broadcast %cst_23 : f32 to vector<128x32xf32>
    %22 = arith.maximumf %20, %21 : vector<128x32xf32>
    %c128_24 = arith.constant 128 : index
    %c0_25 = arith.constant 0 : index
    %23 = vector.load %arg12[%c128_24, %c0_25] : memref<612x32xf32, #tpu.memory_space<vmem>>, vector<128x32xf32>
    tpu.vector_store %arg12[%c128_24, %c0_25], %22 {strides = array<i32>} : memref<612x32xf32, #tpu.memory_space<vmem>>, vector<128x32xf32>,
    %c256 = arith.constant 256 : index
    %c0_26 = arith.constant 0 : index
    %24 = vector.load %arg0[%c256, %c0_26] : memref<612x16xbf16, #tpu.memory_space<vmem>>, vector<128x16xbf16>
    %c0_27 = arith.constant 0 : index
    %c0_28 = arith.constant 0 : index
    %25 = vector.load %arg1[%c0_27, %c0_28] : memref<16x32xbf16, #tpu.memory_space<vmem>>, vector<16x32xbf16>
    %cst_29 = arith.constant dense<0.000000e+00> : vector<128x32xf32>
    %26 = tpu.matmul %24, %25, %cst_29 {dimension_numbers = #tpu.dot_dimension_numbers<[1], [0], [0], [1], [0, 0, 1, 1], [], []>} : vector<128x16xbf16>, vector<16x32xbf16>, vector<128x32xf32> -> vector<128x32xf32>
    %c0_30 = arith.constant 0 : index
    %c0_31 = arith.constant 0 : index
    %27 = vector.load %arg2[%c0_30, %c0_31] : memref<1x32xf32, #tpu.memory_space<vmem>>, vector<1x32xf32>
    %28 = vector.broadcast %27 : vector<1x32xf32> to vector<128x32xf32>
    %29 = arith.addf %26, %28 : vector<128x32xf32>
    %cst_32 = arith.constant 0.000000e+00 : f32
    %30 = vector.broadcast %cst_32 : f32 to vector<128x32xf32>
    %31 = arith.maximumf %29, %30 : vector<128x32xf32>
    %c256_33 = arith.constant 256 : index
    %c0_34 = arith.constant 0 : index
    %32 = vector.load %arg12[%c256_33, %c0_34] : memref<612x32xf32, #tpu.memory_space<vmem>>, vector<128x32xf32>
    tpu.vector_store %arg12[%c256_33, %c0_34], %31 {strides = array<i32>} : memref<612x32xf32, #tpu.memory_space<vmem>>, vector<128x32xf32>,
    %c384 = arith.constant 384 : index
    %c0_35 = arith.constant 0 : index
    %33 = vector.load %arg0[%c384, %c0_35] : memref<612x16xbf16, #tpu.memory_space<vmem>>, vector<128x16xbf16>
    %c0_36 = arith.constant 0 : index
    %c0_37 = arith.constant 0 : index
    %34 = vector.load %arg1[%c0_36, %c0_37] : memref<16x32xbf16, #tpu.memory_space<vmem>>, vector<16x32xbf16>
    %cst_38 = arith.constant dense<0.000000e+00> : vector<128x32xf32>
    %35 = tpu.matmul %33, %34, %cst_38 {dimension_numbers = #tpu.dot_dimension_numbers<[1], [0], [0], [1], [0, 0, 1, 1], [], []>} : vector<128x16xbf16>, vector<16x32xbf16>, vector<128x32xf32> -> vector<128x32xf32>
    %c0_39 = arith.constant 0 : index
    %c0_40 = arith.constant 0 : index
    %36 = vector.load %arg2[%c0_39, %c0_40] : memref<1x32xf32, #tpu.memory_space<vmem>>, vector<1x32xf32>
    %37 = vector.broadcast %36 : vector<1x32xf32> to vector<128x32xf32>
    %38 = arith.addf %35, %37 : vector<128x32xf32>
    %cst_41 = arith.constant 0.000000e+00 : f32
    %39 = vector.broadcast %cst_41 : f32 to vector<128x32xf32>
    %40 = arith.maximumf %38, %39 : vector<128x32xf32>
    %c384_42 = arith.constant 384 : index
    %c0_43 = arith.constant 0 : index
    %41 = vector.load %arg12[%c384_42, %c0_43] : memref<612x32xf32, #tpu.memory_space<vmem>>, vector<128x32xf32>
    tpu.vector_store %arg12[%c384_42, %c0_43], %40 {strides = array<i32>} : memref<612x32xf32, #tpu.memory_space<vmem>>, vector<128x32xf32>,
    %c512 = arith.constant 512 : index
    %c0_44 = arith.constant 0 : index
    %42 = vector.load %arg0[%c512, %c0_44] : memref<612x16xbf16, #tpu.memory_space<vmem>>, vector<100x16xbf16>
    %c0_45 = arith.constant 0 : index
    %c0_46 = arith.constant 0 : index
    %43 = vector.load %arg1[%c0_45, %c0_46] : memref<16x32xbf16, #tpu.memory_space<vmem>>, vector<16x32xbf16>
    %cst_47 = arith.constant dense<0.000000e+00> : vector<100x32xf32>
    %44 = tpu.matmul %42, %43, %cst_47 {dimension_numbers = #tpu.dot_dimension_numbers<[1], [0], [0], [1], [0, 0, 1, 1], [], []>} : vector<100x16xbf16>, vector<16x32xbf16>, vector<100x32xf32> -> vector<100x32xf32>
    %c0_48 = arith.constant 0 : index
    %c0_49 = arith.constant 0 : index
    %45 = vector.load %arg2[%c0_48, %c0_49] : memref<1x32xf32, #tpu.memory_space<vmem>>, vector<1x32xf32>
    %46 = vector.broadcast %45 : vector<1x32xf32> to vector<100x32xf32>
    %47 = arith.addf %44, %46 : vector<100x32xf32>
    %cst_50 = arith.constant 0.000000e+00 : f32
    %48 = vector.broadcast %cst_50 : f32 to vector<100x32xf32>
    %49 = arith.maximumf %47, %48 : vector<100x32xf32>
    %c512_51 = arith.constant 512 : index
    %c0_52 = arith.constant 0 : index
    %50 = vector.load %arg12[%c512_51, %c0_52] : memref<612x32xf32, #tpu.memory_space<vmem>>, vector<100x32xf32>
    tpu.vector_store %arg12[%c512_51, %c0_52], %49 {strides = array<i32>} : memref<612x32xf32, #tpu.memory_space<vmem>>, vector<100x32xf32>,
    %c0_53 = arith.constant 0 : index
    %c0_54 = arith.constant 0 : index
    %51 = vector.load %arg12[%c0_53, %c0_54] : memref<612x32xf32, #tpu.memory_space<vmem>>, vector<16x32xf32>
    %c18 = arith.constant 18 : index
    %c0_55 = arith.constant 0 : index
    %52 = vector.load %arg12[%c18, %c0_55] : memref<612x32xf32, #tpu.memory_space<vmem>>, vector<16x32xf32>
    %53 = arith.maximumf %51, %52 : vector<16x32xf32>
    %c0_56 = arith.constant 0 : index
    %c0_57 = arith.constant 0 : index
    %54 = vector.load %arg12[%c0_56, %c0_57] : memref<612x32xf32, #tpu.memory_space<vmem>>, vector<16x32xf32>
    tpu.vector_store %arg12[%c0_56, %c0_57], %53 {strides = array<i32>} : memref<612x32xf32, #tpu.memory_space<vmem>>, vector<16x32xf32>,
    %c0_58 = arith.constant 0 : index
    %c0_59 = arith.constant 0 : index
    %55 = tpu.strided_load %arg12[%c0_58, %c0_59] {strides = array<i32: 2, 1>} : memref<612x32xf32, #tpu.memory_space<vmem>>, vector<8x32xf32>
    %c1 = arith.constant 1 : index
    %c0_60 = arith.constant 0 : index
    %56 = tpu.strided_load %arg12[%c1, %c0_60] {strides = array<i32: 2, 1>} : memref<612x32xf32, #tpu.memory_space<vmem>>, vector<8x32xf32>
    %57 = arith.maximumf %55, %56 : vector<8x32xf32>
    %58 = arith.truncf %57 : vector<8x32xf32> to vector<8x32xbf16>
    %c11 = arith.constant 11 : index
    %c0_61 = arith.constant 0 : index
    %59 = vector.load %arg16[%c11, %c0_61] : memref<222x32xbf16, #tpu.memory_space<vmem>>, vector<8x32xbf16>
    tpu.vector_store %arg16[%c11, %c0_61], %58 {strides = array<i32>} : memref<222x32xbf16, #tpu.memory_space<vmem>>, vector<8x32xbf16>,
    %c36 = arith.constant 36 : index
    %c0_62 = arith.constant 0 : index
    %60 = vector.load %arg12[%c36, %c0_62] : memref<612x32xf32, #tpu.memory_space<vmem>>, vector<16x32xf32>
    %c54 = arith.constant 54 : index
    %c0_63 = arith.constant 0 : index
    %61 = vector.load %arg12[%c54, %c0_63] : memref<612x32xf32, #tpu.memory_space<vmem>>, vector<16x32xf32>
    %62 = arith.maximumf %60, %61 : vector<16x32xf32>
    %c36_64 = arith.constant 36 : index
    %c0_65 = arith.constant 0 : index
    %63 = vector.load %arg12[%c36_64, %c0_65] : memref<612x32xf32, #tpu.memory_space<vmem>>, vector<16x32xf32>
    tpu.vector_store %arg12[%c36_64, %c0_65], %62 {strides = array<i32>} : memref<612x32xf32, #tpu.memory_space<vmem>>, vector<16x32xf32>,
    %c36_66 = arith.constant 36 : index
    %c0_67 = arith.constant 0 : index
    %64 = tpu.strided_load %arg12[%c36_66, %c0_67] {strides = array<i32: 2, 1>} : memref<612x32xf32, #tpu.memory_space<vmem>>, vector<8x32xf32>
    %c37 = arith.constant 37 : index
    %c0_68 = arith.constant 0 : index
    %65 = tpu.strided_load %arg12[%c37, %c0_68] {strides = array<i32: 2, 1>} : memref<612x32xf32, #tpu.memory_space<vmem>>, vector<8x32xf32>
    %66 = arith.maximumf %64, %65 : vector<8x32xf32>
    %67 = arith.truncf %66 : vector<8x32xf32> to vector<8x32xbf16>
    %c21 = arith.constant 21 : index
    %c0_69 = arith.constant 0 : index
    %68 = vector.load %arg16[%c21, %c0_69] : memref<222x32xbf16, #tpu.memory_space<vmem>>, vector<8x32xbf16>
    tpu.vector_store %arg16[%c21, %c0_69], %67 {strides = array<i32>} : memref<222x32xbf16, #tpu.memory_space<vmem>>, vector<8x32xbf16>,
    %c72 = arith.constant 72 : index
    %c0_70 = arith.constant 0 : index
    %69 = vector.load %arg12[%c72, %c0_70] : memref<612x32xf32, #tpu.memory_space<vmem>>, vector<16x32xf32>
    %c90 = arith.constant 90 : index
    %c0_71 = arith.constant 0 : index
    %70 = vector.load %arg12[%c90, %c0_71] : memref<612x32xf32, #tpu.memory_space<vmem>>, vector<16x32xf32>
    %71 = arith.maximumf %69, %70 : vector<16x32xf32>
    %c72_72 = arith.constant 72 : index
    %c0_73 = arith.constant 0 : index
    %72 = vector.load %arg12[%c72_72, %c0_73] : memref<612x32xf32, #tpu.memory_space<vmem>>, vector<16x32xf32>
    tpu.vector_store %arg12[%c72_72, %c0_73], %71 {strides = array<i32>} : memref<612x32xf32, #tpu.memory_space<vmem>>, vector<16x32xf32>,
    %c72_74 = arith.constant 72 : index
    %c0_75 = arith.constant 0 : index
    %73 = tpu.strided_load %arg12[%c72_74, %c0_75] {strides = array<i32: 2, 1>} : memref<612x32xf32, #tpu.memory_space<vmem>>, vector<8x32xf32>
    %c73 = arith.constant 73 : index
    %c0_76 = arith.constant 0 : index
    %74 = tpu.strided_load %arg12[%c73, %c0_76] {strides = array<i32: 2, 1>} : memref<612x32xf32, #tpu.memory_space<vmem>>, vector<8x32xf32>
    %75 = arith.maximumf %73, %74 : vector<8x32xf32>
    %76 = arith.truncf %75 : vector<8x32xf32> to vector<8x32xbf16>
    %c31 = arith.constant 31 : index
    %c0_77 = arith.constant 0 : index
    %77 = vector.load %arg16[%c31, %c0_77] : memref<222x32xbf16, #tpu.memory_space<vmem>>, vector<8x32xbf16>
    tpu.vector_store %arg16[%c31, %c0_77], %76 {strides = array<i32>} : memref<222x32xbf16, #tpu.memory_space<vmem>>, vector<8x32xbf16>,
    %c108 = arith.constant 108 : index
    %c0_78 = arith.constant 0 : index
    %78 = vector.load %arg12[%c108, %c0_78] : memref<612x32xf32, #tpu.memory_space<vmem>>, vector<16x32xf32>
    %c126 = arith.constant 126 : index
    %c0_79 = arith.constant 0 : index
    %79 = vector.load %arg12[%c126, %c0_79] : memref<612x32xf32, #tpu.memory_space<vmem>>, vector<16x32xf32>
    %80 = arith.maximumf %78, %79 : vector<16x32xf32>
    %c108_80 = arith.constant 108 : index
    %c0_81 = arith.constant 0 : index
    %81 = vector.load %arg12[%c108_80, %c0_81] : memref<612x32xf32, #tpu.memory_space<vmem>>, vector<16x32xf32>
    tpu.vector_store %arg12[%c108_80, %c0_81], %80 {strides = array<i32>} : memref<612x32xf32, #tpu.memory_space<vmem>>, vector<16x32xf32>,
    %c108_82 = arith.constant 108 : index
    %c0_83 = arith.constant 0 : index
    %82 = tpu.strided_load %arg12[%c108_82, %c0_83] {strides = array<i32: 2, 1>} : memref<612x32xf32, #tpu.memory_space<vmem>>, vector<8x32xf32>
    %c109 = arith.constant 109 : index
    %c0_84 = arith.constant 0 : index
    %83 = tpu.strided_load %arg12[%c109, %c0_84] {strides = array<i32: 2, 1>} : memref<612x32xf32, #tpu.memory_space<vmem>>, vector<8x32xf32>
    %84 = arith.maximumf %82, %83 : vector<8x32xf32>
    %85 = arith.truncf %84 : vector<8x32xf32> to vector<8x32xbf16>
    %c41 = arith.constant 41 : index
    %c0_85 = arith.constant 0 : index
    %86 = vector.load %arg16[%c41, %c0_85] : memref<222x32xbf16, #tpu.memory_space<vmem>>, vector<8x32xbf16>
    tpu.vector_store %arg16[%c41, %c0_85], %85 {strides = array<i32>} : memref<222x32xbf16, #tpu.memory_space<vmem>>, vector<8x32xbf16>,
    %c144 = arith.constant 144 : index
    %c0_86 = arith.constant 0 : index
    %87 = vector.load %arg12[%c144, %c0_86] : memref<612x32xf32, #tpu.memory_space<vmem>>, vector<16x32xf32>
    %c162 = arith.constant 162 : index
    %c0_87 = arith.constant 0 : index
    %88 = vector.load %arg12[%c162, %c0_87] : memref<612x32xf32, #tpu.memory_space<vmem>>, vector<16x32xf32>
    %89 = arith.maximumf %87, %88 : vector<16x32xf32>
    %c144_88 = arith.constant 144 : index
    %c0_89 = arith.constant 0 : index
    %90 = vector.load %arg12[%c144_88, %c0_89] : memref<612x32xf32, #tpu.memory_space<vmem>>, vector<16x32xf32>
    tpu.vector_store %arg12[%c144_88, %c0_89], %89 {strides = array<i32>} : memref<612x32xf32, #tpu.memory_space<vmem>>, vector<16x32xf32>,
    %c144_90 = arith.constant 144 : index
    %c0_91 = arith.constant 0 : index
    %91 = tpu.strided_load %arg12[%c144_90, %c0_91] {strides = array<i32: 2, 1>} : memref<612x32xf32, #tpu.memory_space<vmem>>, vector<8x32xf32>
    %c145 = arith.constant 145 : index
    %c0_92 = arith.constant 0 : index
    %92 = tpu.strided_load %arg12[%c145, %c0_92] {strides = array<i32: 2, 1>} : memref<612x32xf32, #tpu.memory_space<vmem>>, vector<8x32xf32>
    %93 = arith.maximumf %91, %92 : vector<8x32xf32>
    %94 = arith.truncf %93 : vector<8x32xf32> to vector<8x32xbf16>
    %c51 = arith.constant 51 : index
    %c0_93 = arith.constant 0 : index
    %95 = vector.load %arg16[%c51, %c0_93] : memref<222x32xbf16, #tpu.memory_space<vmem>>, vector<8x32xbf16>
    tpu.vector_store %arg16[%c51, %c0_93], %94 {strides = array<i32>} : memref<222x32xbf16, #tpu.memory_space<vmem>>, vector<8x32xbf16>,
    %c180 = arith.constant 180 : index
    %c0_94 = arith.constant 0 : index
    %96 = vector.load %arg12[%c180, %c0_94] : memref<612x32xf32, #tpu.memory_space<vmem>>, vector<16x32xf32>
    %c198 = arith.constant 198 : index
    %c0_95 = arith.constant 0 : index
    %97 = vector.load %arg12[%c198, %c0_95] : memref<612x32xf32, #tpu.memory_space<vmem>>, vector<16x32xf32>
    %98 = arith.maximumf %96, %97 : vector<16x32xf32>
    %c180_96 = arith.constant 180 : index
    %c0_97 = arith.constant 0 : index
    %99 = vector.load %arg12[%c180_96, %c0_97] : memref<612x32xf32, #tpu.memory_space<vmem>>, vector<16x32xf32>
    tpu.vector_store %arg12[%c180_96, %c0_97], %98 {strides = array<i32>} : memref<612x32xf32, #tpu.memory_space<vmem>>, vector<16x32xf32>,
    %c180_98 = arith.constant 180 : index
    %c0_99 = arith.constant 0 : index
    %100 = tpu.strided_load %arg12[%c180_98, %c0_99] {strides = array<i32: 2, 1>} : memref<612x32xf32, #tpu.memory_space<vmem>>, vector<8x32xf32>
    %c181 = arith.constant 181 : index
    %c0_100 = arith.constant 0 : index
    %101 = tpu.strided_load %arg12[%c181, %c0_100] {strides = array<i32: 2, 1>} : memref<612x32xf32, #tpu.memory_space<vmem>>, vector<8x32xf32>
    %102 = arith.maximumf %100, %101 : vector<8x32xf32>
    %103 = arith.truncf %102 : vector<8x32xf32> to vector<8x32xbf16>
    %c61 = arith.constant 61 : index
    %c0_101 = arith.constant 0 : index
    %104 = vector.load %arg16[%c61, %c0_101] : memref<222x32xbf16, #tpu.memory_space<vmem>>, vector<8x32xbf16>
    tpu.vector_store %arg16[%c61, %c0_101], %103 {strides = array<i32>} : memref<222x32xbf16, #tpu.memory_space<vmem>>, vector<8x32xbf16>,
    %c216 = arith.constant 216 : index
    %c0_102 = arith.constant 0 : index
    %105 = vector.load %arg12[%c216, %c0_102] : memref<612x32xf32, #tpu.memory_space<vmem>>, vector<16x32xf32>
    %c234 = arith.constant 234 : index
    %c0_103 = arith.constant 0 : index
    %106 = vector.load %arg12[%c234, %c0_103] : memref<612x32xf32, #tpu.memory_space<vmem>>, vector<16x32xf32>
    %107 = arith.maximumf %105, %106 : vector<16x32xf32>
    %c216_104 = arith.constant 216 : index
    %c0_105 = arith.constant 0 : index
    %108 = vector.load %arg12[%c216_104, %c0_105] : memref<612x32xf32, #tpu.memory_space<vmem>>, vector<16x32xf32>
    tpu.vector_store %arg12[%c216_104, %c0_105], %107 {strides = array<i32>} : memref<612x32xf32, #tpu.memory_space<vmem>>, vector<16x32xf32>,
    %c216_106 = arith.constant 216 : index
    %c0_107 = arith.constant 0 : index
    %109 = tpu.strided_load %arg12[%c216_106, %c0_107] {strides = array<i32: 2, 1>} : memref<612x32xf32, #tpu.memory_space<vmem>>, vector<8x32xf32>
    %c217 = arith.constant 217 : index
    %c0_108 = arith.constant 0 : index
    %110 = tpu.strided_load %arg12[%c217, %c0_108] {strides = array<i32: 2, 1>} : memref<612x32xf32, #tpu.memory_space<vmem>>, vector<8x32xf32>
    %111 = arith.maximumf %109, %110 : vector<8x32xf32>
    %112 = arith.truncf %111 : vector<8x32xf32> to vector<8x32xbf16>
    %c71 = arith.constant 71 : index
    %c0_109 = arith.constant 0 : index
    %113 = vector.load %arg16[%c71, %c0_109] : memref<222x32xbf16, #tpu.memory_space<vmem>>, vector<8x32xbf16>
    tpu.vector_store %arg16[%c71, %c0_109], %112 {strides = array<i32>} : memref<222x32xbf16, #tpu.memory_space<vmem>>, vector<8x32xbf16>,
    %c252 = arith.constant 252 : index
    %c0_110 = arith.constant 0 : index
    %114 = vector.load %arg12[%c252, %c0_110] : memref<612x32xf32, #tpu.memory_space<vmem>>, vector<16x32xf32>
    %c270 = arith.constant 270 : index
    %c0_111 = arith.constant 0 : index
    %115 = vector.load %arg12[%c270, %c0_111] : memref<612x32xf32, #tpu.memory_space<vmem>>, vector<16x32xf32>
    %116 = arith.maximumf %114, %115 : vector<16x32xf32>
    %c252_112 = arith.constant 252 : index
    %c0_113 = arith.constant 0 : index
    %117 = vector.load %arg12[%c252_112, %c0_113] : memref<612x32xf32, #tpu.memory_space<vmem>>, vector<16x32xf32>
    tpu.vector_store %arg12[%c252_112, %c0_113], %116 {strides = array<i32>} : memref<612x32xf32, #tpu.memory_space<vmem>>, vector<16x32xf32>,
    %c252_114 = arith.constant 252 : index
    %c0_115 = arith.constant 0 : index
    %118 = tpu.strided_load %arg12[%c252_114, %c0_115] {strides = array<i32: 2, 1>} : memref<612x32xf32, #tpu.memory_space<vmem>>, vector<8x32xf32>
    %c253 = arith.constant 253 : index
    %c0_116 = arith.constant 0 : index
    %119 = tpu.strided_load %arg12[%c253, %c0_116] {strides = array<i32: 2, 1>} : memref<612x32xf32, #tpu.memory_space<vmem>>, vector<8x32xf32>
    %120 = arith.maximumf %118, %119 : vector<8x32xf32>
    %121 = arith.truncf %120 : vector<8x32xf32> to vector<8x32xbf16>
    %c81 = arith.constant 81 : index
    %c0_117 = arith.constant 0 : index
    %122 = vector.load %arg16[%c81, %c0_117] : memref<222x32xbf16, #tpu.memory_space<vmem>>, vector<8x32xbf16>
    tpu.vector_store %arg16[%c81, %c0_117], %121 {strides = array<i32>} : memref<222x32xbf16, #tpu.memory_space<vmem>>, vector<8x32xbf16>,
    %c324 = arith.constant 324 : index
    %c0_118 = arith.constant 0 : index
    %123 = vector.load %arg12[%c324, %c0_118] : memref<612x32xf32, #tpu.memory_space<vmem>>, vector<16x32xf32>
    %c342 = arith.constant 342 : index
    %c0_119 = arith.constant 0 : index
    %124 = vector.load %arg12[%c342, %c0_119] : memref<612x32xf32, #tpu.memory_space<vmem>>, vector<16x32xf32>
    %125 = arith.maximumf %123, %124 : vector<16x32xf32>
    %c324_120 = arith.constant 324 : index
    %c0_121 = arith.constant 0 : index
    %126 = vector.load %arg12[%c324_120, %c0_121] : memref<612x32xf32, #tpu.memory_space<vmem>>, vector<16x32xf32>
    tpu.vector_store %arg12[%c324_120, %c0_121], %125 {strides = array<i32>} : memref<612x32xf32, #tpu.memory_space<vmem>>, vector<16x32xf32>,
    %c324_122 = arith.constant 324 : index
    %c0_123 = arith.constant 0 : index
    %127 = tpu.strided_load %arg12[%c324_122, %c0_123] {strides = array<i32: 2, 1>} : memref<612x32xf32, #tpu.memory_space<vmem>>, vector<8x32xf32>
    %c325 = arith.constant 325 : index
    %c0_124 = arith.constant 0 : index
    %128 = tpu.strided_load %arg12[%c325, %c0_124] {strides = array<i32: 2, 1>} : memref<612x32xf32, #tpu.memory_space<vmem>>, vector<8x32xf32>
    %129 = arith.maximumf %127, %128 : vector<8x32xf32>
    %130 = arith.truncf %129 : vector<8x32xf32> to vector<8x32xbf16>
    %c111 = arith.constant 111 : index
    %c0_125 = arith.constant 0 : index
    %131 = vector.load %arg16[%c111, %c0_125] : memref<222x32xbf16, #tpu.memory_space<vmem>>, vector<8x32xbf16>
    tpu.vector_store %arg16[%c111, %c0_125], %130 {strides = array<i32>} : memref<222x32xbf16, #tpu.memory_space<vmem>>, vector<8x32xbf16>,
    %c360 = arith.constant 360 : index
    %c0_126 = arith.constant 0 : index
    %132 = vector.load %arg12[%c360, %c0_126] : memref<612x32xf32, #tpu.memory_space<vmem>>, vector<16x32xf32>
    %c378 = arith.constant 378 : index
    %c0_127 = arith.constant 0 : index
    %133 = vector.load %arg12[%c378, %c0_127] : memref<612x32xf32, #tpu.memory_space<vmem>>, vector<16x32xf32>
    %134 = arith.maximumf %132, %133 : vector<16x32xf32>
    %c360_128 = arith.constant 360 : index
    %c0_129 = arith.constant 0 : index
    %135 = vector.load %arg12[%c360_128, %c0_129] : memref<612x32xf32, #tpu.memory_space<vmem>>, vector<16x32xf32>
    tpu.vector_store %arg12[%c360_128, %c0_129], %134 {strides = array<i32>} : memref<612x32xf32, #tpu.memory_space<vmem>>, vector<16x32xf32>,
    %c360_130 = arith.constant 360 : index
    %c0_131 = arith.constant 0 : index
    %136 = tpu.strided_load %arg12[%c360_130, %c0_131] {strides = array<i32: 2, 1>} : memref<612x32xf32, #tpu.memory_space<vmem>>, vector<8x32xf32>
    %c361 = arith.constant 361 : index
    %c0_132 = arith.constant 0 : index
    %137 = tpu.strided_load %arg12[%c361, %c0_132] {strides = array<i32: 2, 1>} : memref<612x32xf32, #tpu.memory_space<vmem>>, vector<8x32xf32>
    %138 = arith.maximumf %136, %137 : vector<8x32xf32>
    %139 = arith.truncf %138 : vector<8x32xf32> to vector<8x32xbf16>
    %c121 = arith.constant 121 : index
    %c0_133 = arith.constant 0 : index
    %140 = vector.load %arg16[%c121, %c0_133] : memref<222x32xbf16, #tpu.memory_space<vmem>>, vector<8x32xbf16>
    tpu.vector_store %arg16[%c121, %c0_133], %139 {strides = array<i32>} : memref<222x32xbf16, #tpu.memory_space<vmem>>, vector<8x32xbf16>,
    %c396 = arith.constant 396 : index
    %c0_134 = arith.constant 0 : index
    %141 = vector.load %arg12[%c396, %c0_134] : memref<612x32xf32, #tpu.memory_space<vmem>>, vector<16x32xf32>
    %c414 = arith.constant 414 : index
    %c0_135 = arith.constant 0 : index
    %142 = vector.load %arg12[%c414, %c0_135] : memref<612x32xf32, #tpu.memory_space<vmem>>, vector<16x32xf32>
    %143 = arith.maximumf %141, %142 : vector<16x32xf32>
    %c396_136 = arith.constant 396 : index
    %c0_137 = arith.constant 0 : index
    %144 = vector.load %arg12[%c396_136, %c0_137] : memref<612x32xf32, #tpu.memory_space<vmem>>, vector<16x32xf32>
    tpu.vector_store %arg12[%c396_136, %c0_137], %143 {strides = array<i32>} : memref<612x32xf32, #tpu.memory_space<vmem>>, vector<16x32xf32>,
    %c396_138 = arith.constant 396 : index
    %c0_139 = arith.constant 0 : index
    %145 = tpu.strided_load %arg12[%c396_138, %c0_139] {strides = array<i32: 2, 1>} : memref<612x32xf32, #tpu.memory_space<vmem>>, vector<8x32xf32>
    %c397 = arith.constant 397 : index
    %c0_140 = arith.constant 0 : index
    %146 = tpu.strided_load %arg12[%c397, %c0_140] {strides = array<i32: 2, 1>} : memref<612x32xf32, #tpu.memory_space<vmem>>, vector<8x32xf32>
    %147 = arith.maximumf %145, %146 : vector<8x32xf32>
    %148 = arith.truncf %147 : vector<8x32xf32> to vector<8x32xbf16>
    %c131 = arith.constant 131 : index
    %c0_141 = arith.constant 0 : index
    %149 = vector.load %arg16[%c131, %c0_141] : memref<222x32xbf16, #tpu.memory_space<vmem>>, vector<8x32xbf16>
    tpu.vector_store %arg16[%c131, %c0_141], %148 {strides = array<i32>} : memref<222x32xbf16, #tpu.memory_space<vmem>>, vector<8x32xbf16>,
    %c432 = arith.constant 432 : index
    %c0_142 = arith.constant 0 : index
    %150 = vector.load %arg12[%c432, %c0_142] : memref<612x32xf32, #tpu.memory_space<vmem>>, vector<16x32xf32>
    %c450 = arith.constant 450 : index
    %c0_143 = arith.constant 0 : index
    %151 = vector.load %arg12[%c450, %c0_143] : memref<612x32xf32, #tpu.memory_space<vmem>>, vector<16x32xf32>
    %152 = arith.maximumf %150, %151 : vector<16x32xf32>
    %c432_144 = arith.constant 432 : index
    %c0_145 = arith.constant 0 : index
    %153 = vector.load %arg12[%c432_144, %c0_145] : memref<612x32xf32, #tpu.memory_space<vmem>>, vector<16x32xf32>
    tpu.vector_store %arg12[%c432_144, %c0_145], %152 {strides = array<i32>} : memref<612x32xf32, #tpu.memory_space<vmem>>, vector<16x32xf32>,
    %c432_146 = arith.constant 432 : index
    %c0_147 = arith.constant 0 : index
    %154 = tpu.strided_load %arg12[%c432_146, %c0_147] {strides = array<i32: 2, 1>} : memref<612x32xf32, #tpu.memory_space<vmem>>, vector<8x32xf32>
    %c433 = arith.constant 433 : index
    %c0_148 = arith.constant 0 : index
    %155 = tpu.strided_load %arg12[%c433, %c0_148] {strides = array<i32: 2, 1>} : memref<612x32xf32, #tpu.memory_space<vmem>>, vector<8x32xf32>
    %156 = arith.maximumf %154, %155 : vector<8x32xf32>
    %157 = arith.truncf %156 : vector<8x32xf32> to vector<8x32xbf16>
    %c141 = arith.constant 141 : index
    %c0_149 = arith.constant 0 : index
    %158 = vector.load %arg16[%c141, %c0_149] : memref<222x32xbf16, #tpu.memory_space<vmem>>, vector<8x32xbf16>
    tpu.vector_store %arg16[%c141, %c0_149], %157 {strides = array<i32>} : memref<222x32xbf16, #tpu.memory_space<vmem>>, vector<8x32xbf16>,
    %c468 = arith.constant 468 : index
    %c0_150 = arith.constant 0 : index
    %159 = vector.load %arg12[%c468, %c0_150] : memref<612x32xf32, #tpu.memory_space<vmem>>, vector<16x32xf32>
    %c486 = arith.constant 486 : index
    %c0_151 = arith.constant 0 : index
    %160 = vector.load %arg12[%c486, %c0_151] : memref<612x32xf32, #tpu.memory_space<vmem>>, vector<16x32xf32>
    %161 = arith.maximumf %159, %160 : vector<16x32xf32>
    %c468_152 = arith.constant 468 : index
    %c0_153 = arith.constant 0 : index
    %162 = vector.load %arg12[%c468_152, %c0_153] : memref<612x32xf32, #tpu.memory_space<vmem>>, vector<16x32xf32>
    tpu.vector_store %arg12[%c468_152, %c0_153], %161 {strides = array<i32>} : memref<612x32xf32, #tpu.memory_space<vmem>>, vector<16x32xf32>,
    %c468_154 = arith.constant 468 : index
    %c0_155 = arith.constant 0 : index
    %163 = tpu.strided_load %arg12[%c468_154, %c0_155] {strides = array<i32: 2, 1>} : memref<612x32xf32, #tpu.memory_space<vmem>>, vector<8x32xf32>
    %c469 = arith.constant 469 : index
    %c0_156 = arith.constant 0 : index
    %164 = tpu.strided_load %arg12[%c469, %c0_156] {strides = array<i32: 2, 1>} : memref<612x32xf32, #tpu.memory_space<vmem>>, vector<8x32xf32>
    %165 = arith.maximumf %163, %164 : vector<8x32xf32>
    %166 = arith.truncf %165 : vector<8x32xf32> to vector<8x32xbf16>
    %c151 = arith.constant 151 : index
    %c0_157 = arith.constant 0 : index
    %167 = vector.load %arg16[%c151, %c0_157] : memref<222x32xbf16, #tpu.memory_space<vmem>>, vector<8x32xbf16>
    tpu.vector_store %arg16[%c151, %c0_157], %166 {strides = array<i32>} : memref<222x32xbf16, #tpu.memory_space<vmem>>, vector<8x32xbf16>,
    %c504 = arith.constant 504 : index
    %c0_158 = arith.constant 0 : index
    %168 = vector.load %arg12[%c504, %c0_158] : memref<612x32xf32, #tpu.memory_space<vmem>>, vector<16x32xf32>
    %c522 = arith.constant 522 : index
    %c0_159 = arith.constant 0 : index
    %169 = vector.load %arg12[%c522, %c0_159] : memref<612x32xf32, #tpu.memory_space<vmem>>, vector<16x32xf32>
    %170 = arith.maximumf %168, %169 : vector<16x32xf32>
    %c504_160 = arith.constant 504 : index
    %c0_161 = arith.constant 0 : index
    %171 = vector.load %arg12[%c504_160, %c0_161] : memref<612x32xf32, #tpu.memory_space<vmem>>, vector<16x32xf32>
    tpu.vector_store %arg12[%c504_160, %c0_161], %170 {strides = array<i32>} : memref<612x32xf32, #tpu.memory_space<vmem>>, vector<16x32xf32>,
    %c504_162 = arith.constant 504 : index
    %c0_163 = arith.constant 0 : index
    %172 = tpu.strided_load %arg12[%c504_162, %c0_163] {strides = array<i32: 2, 1>} : memref<612x32xf32, #tpu.memory_space<vmem>>, vector<8x32xf32>
    %c505 = arith.constant 505 : index
    %c0_164 = arith.constant 0 : index
    %173 = tpu.strided_load %arg12[%c505, %c0_164] {strides = array<i32: 2, 1>} : memref<612x32xf32, #tpu.memory_space<vmem>>, vector<8x32xf32>
    %174 = arith.maximumf %172, %173 : vector<8x32xf32>
    %175 = arith.truncf %174 : vector<8x32xf32> to vector<8x32xbf16>
    %c161 = arith.constant 161 : index
    %c0_165 = arith.constant 0 : index
    %176 = vector.load %arg16[%c161, %c0_165] : memref<222x32xbf16, #tpu.memory_space<vmem>>, vector<8x32xbf16>
    tpu.vector_store %arg16[%c161, %c0_165], %175 {strides = array<i32>} : memref<222x32xbf16, #tpu.memory_space<vmem>>, vector<8x32xbf16>,
    %c540 = arith.constant 540 : index
    %c0_166 = arith.constant 0 : index
    %177 = vector.load %arg12[%c540, %c0_166] : memref<612x32xf32, #tpu.memory_space<vmem>>, vector<16x32xf32>
    %c558 = arith.constant 558 : index
    %c0_167 = arith.constant 0 : index
    %178 = vector.load %arg12[%c558, %c0_167] : memref<612x32xf32, #tpu.memory_space<vmem>>, vector<16x32xf32>
    %179 = arith.maximumf %177, %178 : vector<16x32xf32>
    %c540_168 = arith.constant 540 : index
    %c0_169 = arith.constant 0 : index
    %180 = vector.load %arg12[%c540_168, %c0_169] : memref<612x32xf32, #tpu.memory_space<vmem>>, vector<16x32xf32>
    tpu.vector_store %arg12[%c540_168, %c0_169], %179 {strides = array<i32>} : memref<612x32xf32, #tpu.memory_space<vmem>>, vector<16x32xf32>,
    %c540_170 = arith.constant 540 : index
    %c0_171 = arith.constant 0 : index
    %181 = tpu.strided_load %arg12[%c540_170, %c0_171] {strides = array<i32: 2, 1>} : memref<612x32xf32, #tpu.memory_space<vmem>>, vector<8x32xf32>
    %c541 = arith.constant 541 : index
    %c0_172 = arith.constant 0 : index
    %182 = tpu.strided_load %arg12[%c541, %c0_172] {strides = array<i32: 2, 1>} : memref<612x32xf32, #tpu.memory_space<vmem>>, vector<8x32xf32>
    %183 = arith.maximumf %181, %182 : vector<8x32xf32>
    %184 = arith.truncf %183 : vector<8x32xf32> to vector<8x32xbf16>
    %c171 = arith.constant 171 : index
    %c0_173 = arith.constant 0 : index
    %185 = vector.load %arg16[%c171, %c0_173] : memref<222x32xbf16, #tpu.memory_space<vmem>>, vector<8x32xbf16>
    tpu.vector_store %arg16[%c171, %c0_173], %184 {strides = array<i32>} : memref<222x32xbf16, #tpu.memory_space<vmem>>, vector<8x32xbf16>,
    %c576 = arith.constant 576 : index
    %c0_174 = arith.constant 0 : index
    %186 = vector.load %arg12[%c576, %c0_174] : memref<612x32xf32, #tpu.memory_space<vmem>>, vector<16x32xf32>
    %c594 = arith.constant 594 : index
    %c0_175 = arith.constant 0 : index
    %187 = vector.load %arg12[%c594, %c0_175] : memref<612x32xf32, #tpu.memory_space<vmem>>, vector<16x32xf32>
    %188 = arith.maximumf %186, %187 : vector<16x32xf32>
    %c576_176 = arith.constant 576 : index
    %c0_177 = arith.constant 0 : index
    %189 = vector.load %arg12[%c576_176, %c0_177] : memref<612x32xf32, #tpu.memory_space<vmem>>, vector<16x32xf32>
    tpu.vector_store %arg12[%c576_176, %c0_177], %188 {strides = array<i32>} : memref<612x32xf32, #tpu.memory_space<vmem>>, vector<16x32xf32>,
    %c576_178 = arith.constant 576 : index
    %c0_179 = arith.constant 0 : index
    %190 = tpu.strided_load %arg12[%c576_178, %c0_179] {strides = array<i32: 2, 1>} : memref<612x32xf32, #tpu.memory_space<vmem>>, vector<8x32xf32>
    %c577 = arith.constant 577 : index
    %c0_180 = arith.constant 0 : index
    %191 = tpu.strided_load %arg12[%c577, %c0_180] {strides = array<i32: 2, 1>} : memref<612x32xf32, #tpu.memory_space<vmem>>, vector<8x32xf32>
    %192 = arith.maximumf %190, %191 : vector<8x32xf32>
    %193 = arith.truncf %192 : vector<8x32xf32> to vector<8x32xbf16>
    %c181_181 = arith.constant 181 : index
    %c0_182 = arith.constant 0 : index
    %194 = vector.load %arg16[%c181_181, %c0_182] : memref<222x32xbf16, #tpu.memory_space<vmem>>, vector<8x32xbf16>
    tpu.vector_store %arg16[%c181_181, %c0_182], %193 {strides = array<i32>} : memref<222x32xbf16, #tpu.memory_space<vmem>>, vector<8x32xbf16>,
    %c0_183 = arith.constant 0 : index
    %c0_184 = arith.constant 0 : index
    %195 = vector.load %arg16[%c0_183, %c0_184] : memref<222x32xbf16, #tpu.memory_space<vmem>>, vector<180x32xbf16>
    %c0_185 = arith.constant 0 : index
    %c0_186 = arith.constant 0 : index
    %196 = vector.load %arg3[%c0_185, %c0_186] : memref<288x64xbf16, #tpu.memory_space<vmem>>, vector<32x64xbf16>
    %cst_187 = arith.constant dense<0.000000e+00> : vector<180x64xf32>
    %197 = tpu.matmul %195, %196, %cst_187 {dimension_numbers = #tpu.dot_dimension_numbers<[1], [0], [0], [1], [0, 0, 1, 1], [], []>} : vector<180x32xbf16>, vector<32x64xbf16>, vector<180x64xf32> -> vector<180x64xf32>
    %c1_188 = arith.constant 1 : index
    %c0_189 = arith.constant 0 : index
    %198 = vector.load %arg16[%c1_188, %c0_189] : memref<222x32xbf16, #tpu.memory_space<vmem>>, vector<180x32xbf16>
    %c32 = arith.constant 32 : index
    %c0_190 = arith.constant 0 : index
    %199 = vector.load %arg3[%c32, %c0_190] : memref<288x64xbf16, #tpu.memory_space<vmem>>, vector<32x64xbf16>
    %cst_191 = arith.constant dense<0.000000e+00> : vector<180x64xf32>
    %200 = tpu.matmul %198, %199, %cst_191 {dimension_numbers = #tpu.dot_dimension_numbers<[1], [0], [0], [1], [0, 0, 1, 1], [], []>} : vector<180x32xbf16>, vector<32x64xbf16>, vector<180x64xf32> -> vector<180x64xf32>
    %201 = arith.addf %197, %200 : vector<180x64xf32>
    %c2 = arith.constant 2 : index
    %c0_192 = arith.constant 0 : index
    %202 = vector.load %arg16[%c2, %c0_192] : memref<222x32xbf16, #tpu.memory_space<vmem>>, vector<180x32xbf16>
    %c64 = arith.constant 64 : index
    %c0_193 = arith.constant 0 : index
    %203 = vector.load %arg3[%c64, %c0_193] : memref<288x64xbf16, #tpu.memory_space<vmem>>, vector<32x64xbf16>
    %cst_194 = arith.constant dense<0.000000e+00> : vector<180x64xf32>
    %204 = tpu.matmul %202, %203, %cst_194 {dimension_numbers = #tpu.dot_dimension_numbers<[1], [0], [0], [1], [0, 0, 1, 1], [], []>} : vector<180x32xbf16>, vector<32x64xbf16>, vector<180x64xf32> -> vector<180x64xf32>
    %205 = arith.addf %201, %204 : vector<180x64xf32>
    %c10 = arith.constant 10 : index
    %c0_195 = arith.constant 0 : index
    %206 = vector.load %arg16[%c10, %c0_195] : memref<222x32xbf16, #tpu.memory_space<vmem>>, vector<180x32xbf16>
    %c96 = arith.constant 96 : index
    %c0_196 = arith.constant 0 : index
    %207 = vector.load %arg3[%c96, %c0_196] : memref<288x64xbf16, #tpu.memory_space<vmem>>, vector<32x64xbf16>
    %cst_197 = arith.constant dense<0.000000e+00> : vector<180x64xf32>
    %208 = tpu.matmul %206, %207, %cst_197 {dimension_numbers = #tpu.dot_dimension_numbers<[1], [0], [0], [1], [0, 0, 1, 1], [], []>} : vector<180x32xbf16>, vector<32x64xbf16>, vector<180x64xf32> -> vector<180x64xf32>
    %209 = arith.addf %205, %208 : vector<180x64xf32>
    %c11_198 = arith.constant 11 : index
    %c0_199 = arith.constant 0 : index
    %210 = vector.load %arg16[%c11_198, %c0_199] : memref<222x32xbf16, #tpu.memory_space<vmem>>, vector<180x32xbf16>
    %c128_200 = arith.constant 128 : index
    %c0_201 = arith.constant 0 : index
    %211 = vector.load %arg3[%c128_200, %c0_201] : memref<288x64xbf16, #tpu.memory_space<vmem>>, vector<32x64xbf16>
    %cst_202 = arith.constant dense<0.000000e+00> : vector<180x64xf32>
    %212 = tpu.matmul %210, %211, %cst_202 {dimension_numbers = #tpu.dot_dimension_numbers<[1], [0], [0], [1], [0, 0, 1, 1], [], []>} : vector<180x32xbf16>, vector<32x64xbf16>, vector<180x64xf32> -> vector<180x64xf32>
    %213 = arith.addf %209, %212 : vector<180x64xf32>
    %c12 = arith.constant 12 : index
    %c0_203 = arith.constant 0 : index
    %214 = vector.load %arg16[%c12, %c0_203] : memref<222x32xbf16, #tpu.memory_space<vmem>>, vector<180x32xbf16>
    %c160 = arith.constant 160 : index
    %c0_204 = arith.constant 0 : index
    %215 = vector.load %arg3[%c160, %c0_204] : memref<288x64xbf16, #tpu.memory_space<vmem>>, vector<32x64xbf16>
    %cst_205 = arith.constant dense<0.000000e+00> : vector<180x64xf32>
    %216 = tpu.matmul %214, %215, %cst_205 {dimension_numbers = #tpu.dot_dimension_numbers<[1], [0], [0], [1], [0, 0, 1, 1], [], []>} : vector<180x32xbf16>, vector<32x64xbf16>, vector<180x64xf32> -> vector<180x64xf32>
    %217 = arith.addf %213, %216 : vector<180x64xf32>
    %c20 = arith.constant 20 : index
    %c0_206 = arith.constant 0 : index
    %218 = vector.load %arg16[%c20, %c0_206] : memref<222x32xbf16, #tpu.memory_space<vmem>>, vector<180x32xbf16>
    %c192 = arith.constant 192 : index
    %c0_207 = arith.constant 0 : index
    %219 = vector.load %arg3[%c192, %c0_207] : memref<288x64xbf16, #tpu.memory_space<vmem>>, vector<32x64xbf16>
    %cst_208 = arith.constant dense<0.000000e+00> : vector<180x64xf32>
    %220 = tpu.matmul %218, %219, %cst_208 {dimension_numbers = #tpu.dot_dimension_numbers<[1], [0], [0], [1], [0, 0, 1, 1], [], []>} : vector<180x32xbf16>, vector<32x64xbf16>, vector<180x64xf32> -> vector<180x64xf32>
    %221 = arith.addf %217, %220 : vector<180x64xf32>
    %c21_209 = arith.constant 21 : index
    %c0_210 = arith.constant 0 : index
    %222 = vector.load %arg16[%c21_209, %c0_210] : memref<222x32xbf16, #tpu.memory_space<vmem>>, vector<180x32xbf16>
    %c224 = arith.constant 224 : index
    %c0_211 = arith.constant 0 : index
    %223 = vector.load %arg3[%c224, %c0_211] : memref<288x64xbf16, #tpu.memory_space<vmem>>, vector<32x64xbf16>
    %cst_212 = arith.constant dense<0.000000e+00> : vector<180x64xf32>
    %224 = tpu.matmul %222, %223, %cst_212 {dimension_numbers = #tpu.dot_dimension_numbers<[1], [0], [0], [1], [0, 0, 1, 1], [], []>} : vector<180x32xbf16>, vector<32x64xbf16>, vector<180x64xf32> -> vector<180x64xf32>
    %225 = arith.addf %221, %224 : vector<180x64xf32>
    %c22 = arith.constant 22 : index
    %c0_213 = arith.constant 0 : index
    %226 = vector.load %arg16[%c22, %c0_213] : memref<222x32xbf16, #tpu.memory_space<vmem>>, vector<180x32xbf16>
    %c256_214 = arith.constant 256 : index
    %c0_215 = arith.constant 0 : index
    %227 = vector.load %arg3[%c256_214, %c0_215] : memref<288x64xbf16, #tpu.memory_space<vmem>>, vector<32x64xbf16>
    %cst_216 = arith.constant dense<0.000000e+00> : vector<180x64xf32>
    %228 = tpu.matmul %226, %227, %cst_216 {dimension_numbers = #tpu.dot_dimension_numbers<[1], [0], [0], [1], [0, 0, 1, 1], [], []>} : vector<180x32xbf16>, vector<32x64xbf16>, vector<180x64xf32> -> vector<180x64xf32>
    %229 = arith.addf %225, %228 : vector<180x64xf32>
    %c0_217 = arith.constant 0 : index
    %c0_218 = arith.constant 0 : index
    %230 = vector.load %arg4[%c0_217, %c0_218] : memref<1x64xf32, #tpu.memory_space<vmem>>, vector<1x64xf32>
    %231 = vector.broadcast %230 : vector<1x64xf32> to vector<180x64xf32>
    %232 = arith.addf %229, %231 : vector<180x64xf32>
    %cst_219 = arith.constant 0.000000e+00 : f32
    %233 = vector.broadcast %cst_219 : f32 to vector<180x64xf32>
    %234 = arith.maximumf %232, %233 : vector<180x64xf32>
    %c0_220 = arith.constant 0 : index
    %c0_221 = arith.constant 0 : index
    %235 = vector.load %arg13[%c0_220, %c0_221] : memref<180x64xf32, #tpu.memory_space<vmem>>, vector<180x64xf32>
    tpu.vector_store %arg13[%c0_220, %c0_221], %234 {strides = array<i32>} : memref<180x64xf32, #tpu.memory_space<vmem>>, vector<180x64xf32>,
    %c0_222 = arith.constant 0 : index
    %c0_223 = arith.constant 0 : index
    %236 = vector.load %arg13[%c0_222, %c0_223] : memref<180x64xf32, #tpu.memory_space<vmem>>, vector<8x64xf32>
    %c10_224 = arith.constant 10 : index
    %c0_225 = arith.constant 0 : index
    %237 = vector.load %arg13[%c10_224, %c0_225] : memref<180x64xf32, #tpu.memory_space<vmem>>, vector<8x64xf32>
    %238 = arith.maximumf %236, %237 : vector<8x64xf32>
    %c0_226 = arith.constant 0 : index
    %c0_227 = arith.constant 0 : index
    %239 = vector.load %arg13[%c0_226, %c0_227] : memref<180x64xf32, #tpu.memory_space<vmem>>, vector<8x64xf32>
    tpu.vector_store %arg13[%c0_226, %c0_227], %238 {strides = array<i32>} : memref<180x64xf32, #tpu.memory_space<vmem>>, vector<8x64xf32>,
    %c0_228 = arith.constant 0 : index
    %c0_229 = arith.constant 0 : index
    %240 = tpu.strided_load %arg13[%c0_228, %c0_229] {strides = array<i32: 2, 1>} : memref<180x64xf32, #tpu.memory_space<vmem>>, vector<4x64xf32>
    %c1_230 = arith.constant 1 : index
    %c0_231 = arith.constant 0 : index
    %241 = tpu.strided_load %arg13[%c1_230, %c0_231] {strides = array<i32: 2, 1>} : memref<180x64xf32, #tpu.memory_space<vmem>>, vector<4x64xf32>
    %242 = arith.maximumf %240, %241 : vector<4x64xf32>
    %243 = arith.truncf %242 : vector<4x64xf32> to vector<4x64xbf16>
    %c7 = arith.constant 7 : index
    %c0_232 = arith.constant 0 : index
    %244 = vector.load %arg17[%c7, %c0_232] : memref<86x64xbf16, #tpu.memory_space<vmem>>, vector<4x64xbf16>
    tpu.vector_store %arg17[%c7, %c0_232], %243 {strides = array<i32>} : memref<86x64xbf16, #tpu.memory_space<vmem>>, vector<4x64xbf16>,
    %c20_233 = arith.constant 20 : index
    %c0_234 = arith.constant 0 : index
    %245 = vector.load %arg13[%c20_233, %c0_234] : memref<180x64xf32, #tpu.memory_space<vmem>>, vector<8x64xf32>
    %c30 = arith.constant 30 : index
    %c0_235 = arith.constant 0 : index
    %246 = vector.load %arg13[%c30, %c0_235] : memref<180x64xf32, #tpu.memory_space<vmem>>, vector<8x64xf32>
    %247 = arith.maximumf %245, %246 : vector<8x64xf32>
    %c20_236 = arith.constant 20 : index
    %c0_237 = arith.constant 0 : index
    %248 = vector.load %arg13[%c20_236, %c0_237] : memref<180x64xf32, #tpu.memory_space<vmem>>, vector<8x64xf32>
    tpu.vector_store %arg13[%c20_236, %c0_237], %247 {strides = array<i32>} : memref<180x64xf32, #tpu.memory_space<vmem>>, vector<8x64xf32>,
    %c20_238 = arith.constant 20 : index
    %c0_239 = arith.constant 0 : index
    %249 = tpu.strided_load %arg13[%c20_238, %c0_239] {strides = array<i32: 2, 1>} : memref<180x64xf32, #tpu.memory_space<vmem>>, vector<4x64xf32>
    %c21_240 = arith.constant 21 : index
    %c0_241 = arith.constant 0 : index
    %250 = tpu.strided_load %arg13[%c21_240, %c0_241] {strides = array<i32: 2, 1>} : memref<180x64xf32, #tpu.memory_space<vmem>>, vector<4x64xf32>
    %251 = arith.maximumf %249, %250 : vector<4x64xf32>
    %252 = arith.truncf %251 : vector<4x64xf32> to vector<4x64xbf16>
    %c13 = arith.constant 13 : index
    %c0_242 = arith.constant 0 : index
    %253 = vector.load %arg17[%c13, %c0_242] : memref<86x64xbf16, #tpu.memory_space<vmem>>, vector<4x64xbf16>
    tpu.vector_store %arg17[%c13, %c0_242], %252 {strides = array<i32>} : memref<86x64xbf16, #tpu.memory_space<vmem>>, vector<4x64xbf16>,
    %c40 = arith.constant 40 : index
    %c0_243 = arith.constant 0 : index
    %254 = vector.load %arg13[%c40, %c0_243] : memref<180x64xf32, #tpu.memory_space<vmem>>, vector<8x64xf32>
    %c50 = arith.constant 50 : index
    %c0_244 = arith.constant 0 : index
    %255 = vector.load %arg13[%c50, %c0_244] : memref<180x64xf32, #tpu.memory_space<vmem>>, vector<8x64xf32>
    %256 = arith.maximumf %254, %255 : vector<8x64xf32>
    %c40_245 = arith.constant 40 : index
    %c0_246 = arith.constant 0 : index
    %257 = vector.load %arg13[%c40_245, %c0_246] : memref<180x64xf32, #tpu.memory_space<vmem>>, vector<8x64xf32>
    tpu.vector_store %arg13[%c40_245, %c0_246], %256 {strides = array<i32>} : memref<180x64xf32, #tpu.memory_space<vmem>>, vector<8x64xf32>,
    %c40_247 = arith.constant 40 : index
    %c0_248 = arith.constant 0 : index
    %258 = tpu.strided_load %arg13[%c40_247, %c0_248] {strides = array<i32: 2, 1>} : memref<180x64xf32, #tpu.memory_space<vmem>>, vector<4x64xf32>
    %c41_249 = arith.constant 41 : index
    %c0_250 = arith.constant 0 : index
    %259 = tpu.strided_load %arg13[%c41_249, %c0_250] {strides = array<i32: 2, 1>} : memref<180x64xf32, #tpu.memory_space<vmem>>, vector<4x64xf32>
    %260 = arith.maximumf %258, %259 : vector<4x64xf32>
    %261 = arith.truncf %260 : vector<4x64xf32> to vector<4x64xbf16>
    %c19 = arith.constant 19 : index
    %c0_251 = arith.constant 0 : index
    %262 = vector.load %arg17[%c19, %c0_251] : memref<86x64xbf16, #tpu.memory_space<vmem>>, vector<4x64xbf16>
    tpu.vector_store %arg17[%c19, %c0_251], %261 {strides = array<i32>} : memref<86x64xbf16, #tpu.memory_space<vmem>>, vector<4x64xbf16>,
    %c60 = arith.constant 60 : index
    %c0_252 = arith.constant 0 : index
    %263 = vector.load %arg13[%c60, %c0_252] : memref<180x64xf32, #tpu.memory_space<vmem>>, vector<8x64xf32>
    %c70 = arith.constant 70 : index
    %c0_253 = arith.constant 0 : index
    %264 = vector.load %arg13[%c70, %c0_253] : memref<180x64xf32, #tpu.memory_space<vmem>>, vector<8x64xf32>
    %265 = arith.maximumf %263, %264 : vector<8x64xf32>
    %c60_254 = arith.constant 60 : index
    %c0_255 = arith.constant 0 : index
    %266 = vector.load %arg13[%c60_254, %c0_255] : memref<180x64xf32, #tpu.memory_space<vmem>>, vector<8x64xf32>
    tpu.vector_store %arg13[%c60_254, %c0_255], %265 {strides = array<i32>} : memref<180x64xf32, #tpu.memory_space<vmem>>, vector<8x64xf32>,
    %c60_256 = arith.constant 60 : index
    %c0_257 = arith.constant 0 : index
    %267 = tpu.strided_load %arg13[%c60_256, %c0_257] {strides = array<i32: 2, 1>} : memref<180x64xf32, #tpu.memory_space<vmem>>, vector<4x64xf32>
    %c61_258 = arith.constant 61 : index
    %c0_259 = arith.constant 0 : index
    %268 = tpu.strided_load %arg13[%c61_258, %c0_259] {strides = array<i32: 2, 1>} : memref<180x64xf32, #tpu.memory_space<vmem>>, vector<4x64xf32>
    %269 = arith.maximumf %267, %268 : vector<4x64xf32>
    %270 = arith.truncf %269 : vector<4x64xf32> to vector<4x64xbf16>
    %c25 = arith.constant 25 : index
    %c0_260 = arith.constant 0 : index
    %271 = vector.load %arg17[%c25, %c0_260] : memref<86x64xbf16, #tpu.memory_space<vmem>>, vector<4x64xbf16>
    tpu.vector_store %arg17[%c25, %c0_260], %270 {strides = array<i32>} : memref<86x64xbf16, #tpu.memory_space<vmem>>, vector<4x64xbf16>,
    %c100 = arith.constant 100 : index
    %c0_261 = arith.constant 0 : index
    %272 = vector.load %arg13[%c100, %c0_261] : memref<180x64xf32, #tpu.memory_space<vmem>>, vector<8x64xf32>
    %c110 = arith.constant 110 : index
    %c0_262 = arith.constant 0 : index
    %273 = vector.load %arg13[%c110, %c0_262] : memref<180x64xf32, #tpu.memory_space<vmem>>, vector<8x64xf32>
    %274 = arith.maximumf %272, %273 : vector<8x64xf32>
    %c100_263 = arith.constant 100 : index
    %c0_264 = arith.constant 0 : index
    %275 = vector.load %arg13[%c100_263, %c0_264] : memref<180x64xf32, #tpu.memory_space<vmem>>, vector<8x64xf32>
    tpu.vector_store %arg13[%c100_263, %c0_264], %274 {strides = array<i32>} : memref<180x64xf32, #tpu.memory_space<vmem>>, vector<8x64xf32>,
    %c100_265 = arith.constant 100 : index
    %c0_266 = arith.constant 0 : index
    %276 = tpu.strided_load %arg13[%c100_265, %c0_266] {strides = array<i32: 2, 1>} : memref<180x64xf32, #tpu.memory_space<vmem>>, vector<4x64xf32>
    %c101 = arith.constant 101 : index
    %c0_267 = arith.constant 0 : index
    %277 = tpu.strided_load %arg13[%c101, %c0_267] {strides = array<i32: 2, 1>} : memref<180x64xf32, #tpu.memory_space<vmem>>, vector<4x64xf32>
    %278 = arith.maximumf %276, %277 : vector<4x64xf32>
    %279 = arith.truncf %278 : vector<4x64xf32> to vector<4x64xbf16>
    %c43 = arith.constant 43 : index
    %c0_268 = arith.constant 0 : index
    %280 = vector.load %arg17[%c43, %c0_268] : memref<86x64xbf16, #tpu.memory_space<vmem>>, vector<4x64xbf16>
    tpu.vector_store %arg17[%c43, %c0_268], %279 {strides = array<i32>} : memref<86x64xbf16, #tpu.memory_space<vmem>>, vector<4x64xbf16>,
    %c120 = arith.constant 120 : index
    %c0_269 = arith.constant 0 : index
    %281 = vector.load %arg13[%c120, %c0_269] : memref<180x64xf32, #tpu.memory_space<vmem>>, vector<8x64xf32>
    %c130 = arith.constant 130 : index
    %c0_270 = arith.constant 0 : index
    %282 = vector.load %arg13[%c130, %c0_270] : memref<180x64xf32, #tpu.memory_space<vmem>>, vector<8x64xf32>
    %283 = arith.maximumf %281, %282 : vector<8x64xf32>
    %c120_271 = arith.constant 120 : index
    %c0_272 = arith.constant 0 : index
    %284 = vector.load %arg13[%c120_271, %c0_272] : memref<180x64xf32, #tpu.memory_space<vmem>>, vector<8x64xf32>
    tpu.vector_store %arg13[%c120_271, %c0_272], %283 {strides = array<i32>} : memref<180x64xf32, #tpu.memory_space<vmem>>, vector<8x64xf32>,
    %c120_273 = arith.constant 120 : index
    %c0_274 = arith.constant 0 : index
    %285 = tpu.strided_load %arg13[%c120_273, %c0_274] {strides = array<i32: 2, 1>} : memref<180x64xf32, #tpu.memory_space<vmem>>, vector<4x64xf32>
    %c121_275 = arith.constant 121 : index
    %c0_276 = arith.constant 0 : index
    %286 = tpu.strided_load %arg13[%c121_275, %c0_276] {strides = array<i32: 2, 1>} : memref<180x64xf32, #tpu.memory_space<vmem>>, vector<4x64xf32>
    %287 = arith.maximumf %285, %286 : vector<4x64xf32>
    %288 = arith.truncf %287 : vector<4x64xf32> to vector<4x64xbf16>
    %c49 = arith.constant 49 : index
    %c0_277 = arith.constant 0 : index
    %289 = vector.load %arg17[%c49, %c0_277] : memref<86x64xbf16, #tpu.memory_space<vmem>>, vector<4x64xbf16>
    tpu.vector_store %arg17[%c49, %c0_277], %288 {strides = array<i32>} : memref<86x64xbf16, #tpu.memory_space<vmem>>, vector<4x64xbf16>,
    %c140 = arith.constant 140 : index
    %c0_278 = arith.constant 0 : index
    %290 = vector.load %arg13[%c140, %c0_278] : memref<180x64xf32, #tpu.memory_space<vmem>>, vector<8x64xf32>
    %c150 = arith.constant 150 : index
    %c0_279 = arith.constant 0 : index
    %291 = vector.load %arg13[%c150, %c0_279] : memref<180x64xf32, #tpu.memory_space<vmem>>, vector<8x64xf32>
    %292 = arith.maximumf %290, %291 : vector<8x64xf32>
    %c140_280 = arith.constant 140 : index
    %c0_281 = arith.constant 0 : index
    %293 = vector.load %arg13[%c140_280, %c0_281] : memref<180x64xf32, #tpu.memory_space<vmem>>, vector<8x64xf32>
    tpu.vector_store %arg13[%c140_280, %c0_281], %292 {strides = array<i32>} : memref<180x64xf32, #tpu.memory_space<vmem>>, vector<8x64xf32>,
    %c140_282 = arith.constant 140 : index
    %c0_283 = arith.constant 0 : index
    %294 = tpu.strided_load %arg13[%c140_282, %c0_283] {strides = array<i32: 2, 1>} : memref<180x64xf32, #tpu.memory_space<vmem>>, vector<4x64xf32>
    %c141_284 = arith.constant 141 : index
    %c0_285 = arith.constant 0 : index
    %295 = tpu.strided_load %arg13[%c141_284, %c0_285] {strides = array<i32: 2, 1>} : memref<180x64xf32, #tpu.memory_space<vmem>>, vector<4x64xf32>
    %296 = arith.maximumf %294, %295 : vector<4x64xf32>
    %297 = arith.truncf %296 : vector<4x64xf32> to vector<4x64xbf16>
    %c55 = arith.constant 55 : index
    %c0_286 = arith.constant 0 : index
    %298 = vector.load %arg17[%c55, %c0_286] : memref<86x64xbf16, #tpu.memory_space<vmem>>, vector<4x64xbf16>
    tpu.vector_store %arg17[%c55, %c0_286], %297 {strides = array<i32>} : memref<86x64xbf16, #tpu.memory_space<vmem>>, vector<4x64xbf16>,
    %c160_287 = arith.constant 160 : index
    %c0_288 = arith.constant 0 : index
    %299 = vector.load %arg13[%c160_287, %c0_288] : memref<180x64xf32, #tpu.memory_space<vmem>>, vector<8x64xf32>
    %c170 = arith.constant 170 : index
    %c0_289 = arith.constant 0 : index
    %300 = vector.load %arg13[%c170, %c0_289] : memref<180x64xf32, #tpu.memory_space<vmem>>, vector<8x64xf32>
    %301 = arith.maximumf %299, %300 : vector<8x64xf32>
    %c160_290 = arith.constant 160 : index
    %c0_291 = arith.constant 0 : index
    %302 = vector.load %arg13[%c160_290, %c0_291] : memref<180x64xf32, #tpu.memory_space<vmem>>, vector<8x64xf32>
    tpu.vector_store %arg13[%c160_290, %c0_291], %301 {strides = array<i32>} : memref<180x64xf32, #tpu.memory_space<vmem>>, vector<8x64xf32>,
    %c160_292 = arith.constant 160 : index
    %c0_293 = arith.constant 0 : index
    %303 = tpu.strided_load %arg13[%c160_292, %c0_293] {strides = array<i32: 2, 1>} : memref<180x64xf32, #tpu.memory_space<vmem>>, vector<4x64xf32>
    %c161_294 = arith.constant 161 : index
    %c0_295 = arith.constant 0 : index
    %304 = tpu.strided_load %arg13[%c161_294, %c0_295] {strides = array<i32: 2, 1>} : memref<180x64xf32, #tpu.memory_space<vmem>>, vector<4x64xf32>
    %305 = arith.maximumf %303, %304 : vector<4x64xf32>
    %306 = arith.truncf %305 : vector<4x64xf32> to vector<4x64xbf16>
    %c61_296 = arith.constant 61 : index
    %c0_297 = arith.constant 0 : index
    %307 = vector.load %arg17[%c61_296, %c0_297] : memref<86x64xbf16, #tpu.memory_space<vmem>>, vector<4x64xbf16>
    tpu.vector_store %arg17[%c61_296, %c0_297], %306 {strides = array<i32>} : memref<86x64xbf16, #tpu.memory_space<vmem>>, vector<4x64xbf16>,
    %c0_298 = arith.constant 0 : index
    %c0_299 = arith.constant 0 : index
    %308 = vector.load %arg17[%c0_298, %c0_299] : memref<86x64xbf16, #tpu.memory_space<vmem>>, vector<60x64xbf16>
    %c0_300 = arith.constant 0 : index
    %c0_301 = arith.constant 0 : index
    %309 = vector.load %arg5[%c0_300, %c0_301] : memref<576x128xbf16, #tpu.memory_space<vmem>>, vector<64x128xbf16>
    %cst_302 = arith.constant dense<0.000000e+00> : vector<60x128xf32>
    %310 = tpu.matmul %308, %309, %cst_302 {dimension_numbers = #tpu.dot_dimension_numbers<[1], [0], [0], [1], [0, 0, 1, 1], [], []>} : vector<60x64xbf16>, vector<64x128xbf16>, vector<60x128xf32> -> vector<60x128xf32>
    %c1_303 = arith.constant 1 : index
    %c0_304 = arith.constant 0 : index
    %311 = vector.load %arg17[%c1_303, %c0_304] : memref<86x64xbf16, #tpu.memory_space<vmem>>, vector<60x64xbf16>
    %c64_305 = arith.constant 64 : index
    %c0_306 = arith.constant 0 : index
    %312 = vector.load %arg5[%c64_305, %c0_306] : memref<576x128xbf16, #tpu.memory_space<vmem>>, vector<64x128xbf16>
    %cst_307 = arith.constant dense<0.000000e+00> : vector<60x128xf32>
    %313 = tpu.matmul %311, %312, %cst_307 {dimension_numbers = #tpu.dot_dimension_numbers<[1], [0], [0], [1], [0, 0, 1, 1], [], []>} : vector<60x64xbf16>, vector<64x128xbf16>, vector<60x128xf32> -> vector<60x128xf32>
    %314 = arith.addf %310, %313 : vector<60x128xf32>
    %c2_308 = arith.constant 2 : index
    %c0_309 = arith.constant 0 : index
    %315 = vector.load %arg17[%c2_308, %c0_309] : memref<86x64xbf16, #tpu.memory_space<vmem>>, vector<60x64xbf16>
    %c128_310 = arith.constant 128 : index
    %c0_311 = arith.constant 0 : index
    %316 = vector.load %arg5[%c128_310, %c0_311] : memref<576x128xbf16, #tpu.memory_space<vmem>>, vector<64x128xbf16>
    %cst_312 = arith.constant dense<0.000000e+00> : vector<60x128xf32>
    %317 = tpu.matmul %315, %316, %cst_312 {dimension_numbers = #tpu.dot_dimension_numbers<[1], [0], [0], [1], [0, 0, 1, 1], [], []>} : vector<60x64xbf16>, vector<64x128xbf16>, vector<60x128xf32> -> vector<60x128xf32>
    %318 = arith.addf %314, %317 : vector<60x128xf32>
    %c6 = arith.constant 6 : index
    %c0_313 = arith.constant 0 : index
    %319 = vector.load %arg17[%c6, %c0_313] : memref<86x64xbf16, #tpu.memory_space<vmem>>, vector<60x64xbf16>
    %c192_314 = arith.constant 192 : index
    %c0_315 = arith.constant 0 : index
    %320 = vector.load %arg5[%c192_314, %c0_315] : memref<576x128xbf16, #tpu.memory_space<vmem>>, vector<64x128xbf16>
    %cst_316 = arith.constant dense<0.000000e+00> : vector<60x128xf32>
    %321 = tpu.matmul %319, %320, %cst_316 {dimension_numbers = #tpu.dot_dimension_numbers<[1], [0], [0], [1], [0, 0, 1, 1], [], []>} : vector<60x64xbf16>, vector<64x128xbf16>, vector<60x128xf32> -> vector<60x128xf32>
    %322 = arith.addf %318, %321 : vector<60x128xf32>
    %c7_317 = arith.constant 7 : index
    %c0_318 = arith.constant 0 : index
    %323 = vector.load %arg17[%c7_317, %c0_318] : memref<86x64xbf16, #tpu.memory_space<vmem>>, vector<60x64xbf16>
    %c256_319 = arith.constant 256 : index
    %c0_320 = arith.constant 0 : index
    %324 = vector.load %arg5[%c256_319, %c0_320] : memref<576x128xbf16, #tpu.memory_space<vmem>>, vector<64x128xbf16>
    %cst_321 = arith.constant dense<0.000000e+00> : vector<60x128xf32>
    %325 = tpu.matmul %323, %324, %cst_321 {dimension_numbers = #tpu.dot_dimension_numbers<[1], [0], [0], [1], [0, 0, 1, 1], [], []>} : vector<60x64xbf16>, vector<64x128xbf16>, vector<60x128xf32> -> vector<60x128xf32>
    %326 = arith.addf %322, %325 : vector<60x128xf32>
    %c8 = arith.constant 8 : index
    %c0_322 = arith.constant 0 : index
    %327 = vector.load %arg17[%c8, %c0_322] : memref<86x64xbf16, #tpu.memory_space<vmem>>, vector<60x64xbf16>
    %c320 = arith.constant 320 : index
    %c0_323 = arith.constant 0 : index
    %328 = vector.load %arg5[%c320, %c0_323] : memref<576x128xbf16, #tpu.memory_space<vmem>>, vector<64x128xbf16>
    %cst_324 = arith.constant dense<0.000000e+00> : vector<60x128xf32>
    %329 = tpu.matmul %327, %328, %cst_324 {dimension_numbers = #tpu.dot_dimension_numbers<[1], [0], [0], [1], [0, 0, 1, 1], [], []>} : vector<60x64xbf16>, vector<64x128xbf16>, vector<60x128xf32> -> vector<60x128xf32>
    %330 = arith.addf %326, %329 : vector<60x128xf32>
    %c12_325 = arith.constant 12 : index
    %c0_326 = arith.constant 0 : index
    %331 = vector.load %arg17[%c12_325, %c0_326] : memref<86x64xbf16, #tpu.memory_space<vmem>>, vector<60x64xbf16>
    %c384_327 = arith.constant 384 : index
    %c0_328 = arith.constant 0 : index
    %332 = vector.load %arg5[%c384_327, %c0_328] : memref<576x128xbf16, #tpu.memory_space<vmem>>, vector<64x128xbf16>
    %cst_329 = arith.constant dense<0.000000e+00> : vector<60x128xf32>
    %333 = tpu.matmul %331, %332, %cst_329 {dimension_numbers = #tpu.dot_dimension_numbers<[1], [0], [0], [1], [0, 0, 1, 1], [], []>} : vector<60x64xbf16>, vector<64x128xbf16>, vector<60x128xf32> -> vector<60x128xf32>
    %334 = arith.addf %330, %333 : vector<60x128xf32>
    %c13_330 = arith.constant 13 : index
    %c0_331 = arith.constant 0 : index
    %335 = vector.load %arg17[%c13_330, %c0_331] : memref<86x64xbf16, #tpu.memory_space<vmem>>, vector<60x64xbf16>
    %c448 = arith.constant 448 : index
    %c0_332 = arith.constant 0 : index
    %336 = vector.load %arg5[%c448, %c0_332] : memref<576x128xbf16, #tpu.memory_space<vmem>>, vector<64x128xbf16>
    %cst_333 = arith.constant dense<0.000000e+00> : vector<60x128xf32>
    %337 = tpu.matmul %335, %336, %cst_333 {dimension_numbers = #tpu.dot_dimension_numbers<[1], [0], [0], [1], [0, 0, 1, 1], [], []>} : vector<60x64xbf16>, vector<64x128xbf16>, vector<60x128xf32> -> vector<60x128xf32>
    %338 = arith.addf %334, %337 : vector<60x128xf32>
    %c14 = arith.constant 14 : index
    %c0_334 = arith.constant 0 : index
    %339 = vector.load %arg17[%c14, %c0_334] : memref<86x64xbf16, #tpu.memory_space<vmem>>, vector<60x64xbf16>
    %c512_335 = arith.constant 512 : index
    %c0_336 = arith.constant 0 : index
    %340 = vector.load %arg5[%c512_335, %c0_336] : memref<576x128xbf16, #tpu.memory_space<vmem>>, vector<64x128xbf16>
    %cst_337 = arith.constant dense<0.000000e+00> : vector<60x128xf32>
    %341 = tpu.matmul %339, %340, %cst_337 {dimension_numbers = #tpu.dot_dimension_numbers<[1], [0], [0], [1], [0, 0, 1, 1], [], []>} : vector<60x64xbf16>, vector<64x128xbf16>, vector<60x128xf32> -> vector<60x128xf32>
    %342 = arith.addf %338, %341 : vector<60x128xf32>
    %c0_338 = arith.constant 0 : index
    %c0_339 = arith.constant 0 : index
    %343 = vector.load %arg6[%c0_338, %c0_339] : memref<1x128xf32, #tpu.memory_space<vmem>>, vector<1x128xf32>
    %344 = vector.broadcast %343 : vector<1x128xf32> to vector<60x128xf32>
    %345 = arith.addf %342, %344 : vector<60x128xf32>
    %cst_340 = arith.constant 0.000000e+00 : f32
    %346 = vector.broadcast %cst_340 : f32 to vector<60x128xf32>
    %347 = arith.maximumf %345, %346 : vector<60x128xf32>
    %c0_341 = arith.constant 0 : index
    %c0_342 = arith.constant 0 : index
    %348 = vector.load %arg14[%c0_341, %c0_342] : memref<60x128xf32, #tpu.memory_space<vmem>>, vector<60x128xf32>
    tpu.vector_store %arg14[%c0_341, %c0_342], %347 {strides = array<i32>} : memref<60x128xf32, #tpu.memory_space<vmem>>, vector<60x128xf32>,
    %c0_343 = arith.constant 0 : index
    %c0_344 = arith.constant 0 : index
    %349 = vector.load %arg14[%c0_343, %c0_344] : memref<60x128xf32, #tpu.memory_space<vmem>>, vector<4x128xf32>
    %c6_345 = arith.constant 6 : index
    %c0_346 = arith.constant 0 : index
    %350 = vector.load %arg14[%c6_345, %c0_346] : memref<60x128xf32, #tpu.memory_space<vmem>>, vector<4x128xf32>
    %351 = arith.maximumf %349, %350 : vector<4x128xf32>
    %c0_347 = arith.constant 0 : index
    %c0_348 = arith.constant 0 : index
    %352 = vector.load %arg14[%c0_347, %c0_348] : memref<60x128xf32, #tpu.memory_space<vmem>>, vector<4x128xf32>
    tpu.vector_store %arg14[%c0_347, %c0_348], %351 {strides = array<i32>} : memref<60x128xf32, #tpu.memory_space<vmem>>, vector<4x128xf32>,
    %c0_349 = arith.constant 0 : index
    %c0_350 = arith.constant 0 : index
    %353 = tpu.strided_load %arg14[%c0_349, %c0_350] {strides = array<i32: 2, 1>} : memref<60x128xf32, #tpu.memory_space<vmem>>, vector<2x128xf32>
    %c1_351 = arith.constant 1 : index
    %c0_352 = arith.constant 0 : index
    %354 = tpu.strided_load %arg14[%c1_351, %c0_352] {strides = array<i32: 2, 1>} : memref<60x128xf32, #tpu.memory_space<vmem>>, vector<2x128xf32>
    %355 = arith.maximumf %353, %354 : vector<2x128xf32>
    %356 = arith.truncf %355 : vector<2x128xf32> to vector<2x128xbf16>
    %c5 = arith.constant 5 : index
    %c0_353 = arith.constant 0 : index
    %357 = vector.load %arg18[%c5, %c0_353] : memref<42x128xbf16, #tpu.memory_space<vmem>>, vector<2x128xbf16>
    tpu.vector_store %arg18[%c5, %c0_353], %356 {strides = array<i32>} : memref<42x128xbf16, #tpu.memory_space<vmem>>, vector<2x128xbf16>,
    %c12_354 = arith.constant 12 : index
    %c0_355 = arith.constant 0 : index
    %358 = vector.load %arg14[%c12_354, %c0_355] : memref<60x128xf32, #tpu.memory_space<vmem>>, vector<4x128xf32>
    %c18_356 = arith.constant 18 : index
    %c0_357 = arith.constant 0 : index
    %359 = vector.load %arg14[%c18_356, %c0_357] : memref<60x128xf32, #tpu.memory_space<vmem>>, vector<4x128xf32>
    %360 = arith.maximumf %358, %359 : vector<4x128xf32>
    %c12_358 = arith.constant 12 : index
    %c0_359 = arith.constant 0 : index
    %361 = vector.load %arg14[%c12_358, %c0_359] : memref<60x128xf32, #tpu.memory_space<vmem>>, vector<4x128xf32>
    tpu.vector_store %arg14[%c12_358, %c0_359], %360 {strides = array<i32>} : memref<60x128xf32, #tpu.memory_space<vmem>>, vector<4x128xf32>,
    %c12_360 = arith.constant 12 : index
    %c0_361 = arith.constant 0 : index
    %362 = tpu.strided_load %arg14[%c12_360, %c0_361] {strides = array<i32: 2, 1>} : memref<60x128xf32, #tpu.memory_space<vmem>>, vector<2x128xf32>
    %c13_362 = arith.constant 13 : index
    %c0_363 = arith.constant 0 : index
    %363 = tpu.strided_load %arg14[%c13_362, %c0_363] {strides = array<i32: 2, 1>} : memref<60x128xf32, #tpu.memory_space<vmem>>, vector<2x128xf32>
    %364 = arith.maximumf %362, %363 : vector<2x128xf32>
    %365 = arith.truncf %364 : vector<2x128xf32> to vector<2x128xbf16>
    %c9 = arith.constant 9 : index
    %c0_364 = arith.constant 0 : index
    %366 = vector.load %arg18[%c9, %c0_364] : memref<42x128xbf16, #tpu.memory_space<vmem>>, vector<2x128xbf16>
    tpu.vector_store %arg18[%c9, %c0_364], %365 {strides = array<i32>} : memref<42x128xbf16, #tpu.memory_space<vmem>>, vector<2x128xbf16>,
    %c36_365 = arith.constant 36 : index
    %c0_366 = arith.constant 0 : index
    %367 = vector.load %arg14[%c36_365, %c0_366] : memref<60x128xf32, #tpu.memory_space<vmem>>, vector<4x128xf32>
    %c42 = arith.constant 42 : index
    %c0_367 = arith.constant 0 : index
    %368 = vector.load %arg14[%c42, %c0_367] : memref<60x128xf32, #tpu.memory_space<vmem>>, vector<4x128xf32>
    %369 = arith.maximumf %367, %368 : vector<4x128xf32>
    %c36_368 = arith.constant 36 : index
    %c0_369 = arith.constant 0 : index
    %370 = vector.load %arg14[%c36_368, %c0_369] : memref<60x128xf32, #tpu.memory_space<vmem>>, vector<4x128xf32>
    tpu.vector_store %arg14[%c36_368, %c0_369], %369 {strides = array<i32>} : memref<60x128xf32, #tpu.memory_space<vmem>>, vector<4x128xf32>,
    %c36_370 = arith.constant 36 : index
    %c0_371 = arith.constant 0 : index
    %371 = tpu.strided_load %arg14[%c36_370, %c0_371] {strides = array<i32: 2, 1>} : memref<60x128xf32, #tpu.memory_space<vmem>>, vector<2x128xf32>
    %c37_372 = arith.constant 37 : index
    %c0_373 = arith.constant 0 : index
    %372 = tpu.strided_load %arg14[%c37_372, %c0_373] {strides = array<i32: 2, 1>} : memref<60x128xf32, #tpu.memory_space<vmem>>, vector<2x128xf32>
    %373 = arith.maximumf %371, %372 : vector<2x128xf32>
    %374 = arith.truncf %373 : vector<2x128xf32> to vector<2x128xbf16>
    %c21_374 = arith.constant 21 : index
    %c0_375 = arith.constant 0 : index
    %375 = vector.load %arg18[%c21_374, %c0_375] : memref<42x128xbf16, #tpu.memory_space<vmem>>, vector<2x128xbf16>
    tpu.vector_store %arg18[%c21_374, %c0_375], %374 {strides = array<i32>} : memref<42x128xbf16, #tpu.memory_space<vmem>>, vector<2x128xbf16>,
    %c48 = arith.constant 48 : index
    %c0_376 = arith.constant 0 : index
    %376 = vector.load %arg14[%c48, %c0_376] : memref<60x128xf32, #tpu.memory_space<vmem>>, vector<4x128xf32>
    %c54_377 = arith.constant 54 : index
    %c0_378 = arith.constant 0 : index
    %377 = vector.load %arg14[%c54_377, %c0_378] : memref<60x128xf32, #tpu.memory_space<vmem>>, vector<4x128xf32>
    %378 = arith.maximumf %376, %377 : vector<4x128xf32>
    %c48_379 = arith.constant 48 : index
    %c0_380 = arith.constant 0 : index
    %379 = vector.load %arg14[%c48_379, %c0_380] : memref<60x128xf32, #tpu.memory_space<vmem>>, vector<4x128xf32>
    tpu.vector_store %arg14[%c48_379, %c0_380], %378 {strides = array<i32>} : memref<60x128xf32, #tpu.memory_space<vmem>>, vector<4x128xf32>,
    %c48_381 = arith.constant 48 : index
    %c0_382 = arith.constant 0 : index
    %380 = tpu.strided_load %arg14[%c48_381, %c0_382] {strides = array<i32: 2, 1>} : memref<60x128xf32, #tpu.memory_space<vmem>>, vector<2x128xf32>
    %c49_383 = arith.constant 49 : index
    %c0_384 = arith.constant 0 : index
    %381 = tpu.strided_load %arg14[%c49_383, %c0_384] {strides = array<i32: 2, 1>} : memref<60x128xf32, #tpu.memory_space<vmem>>, vector<2x128xf32>
    %382 = arith.maximumf %380, %381 : vector<2x128xf32>
    %383 = arith.truncf %382 : vector<2x128xf32> to vector<2x128xbf16>
    %c25_385 = arith.constant 25 : index
    %c0_386 = arith.constant 0 : index
    %384 = vector.load %arg18[%c25_385, %c0_386] : memref<42x128xbf16, #tpu.memory_space<vmem>>, vector<2x128xbf16>
    tpu.vector_store %arg18[%c25_385, %c0_386], %383 {strides = array<i32>} : memref<42x128xbf16, #tpu.memory_space<vmem>>, vector<2x128xbf16>,
    tpu.wait_dma2 semaphore(%arg20 : memref<!tpu.dma_semaphore, #tpu.memory_space<semaphore_mem>>) src(%arg7 : memref<1152x256xbf16, #tpu.memory_space<any>>) dst(%arg19 : memref<1152x256xbf16, #tpu.memory_space<vmem>>)
    %c0_387 = arith.constant 0 : index
    %c0_388 = arith.constant 0 : index
    %385 = vector.load %arg18[%c0_387, %c0_388] : memref<42x128xbf16, #tpu.memory_space<vmem>>, vector<24x128xbf16>
    %c0_389 = arith.constant 0 : index
    %c0_390 = arith.constant 0 : index
    %386 = vector.load %arg19[%c0_389, %c0_390] : memref<1152x256xbf16, #tpu.memory_space<vmem>>, vector<128x256xbf16>
    %cst_391 = arith.constant dense<0.000000e+00> : vector<24x256xf32>
    %387 = tpu.matmul %385, %386, %cst_391 {dimension_numbers = #tpu.dot_dimension_numbers<[1], [0], [0], [1], [0, 0, 1, 1], [], []>} : vector<24x128xbf16>, vector<128x256xbf16>, vector<24x256xf32> -> vector<24x256xf32>
    %c1_392 = arith.constant 1 : index
    %c0_393 = arith.constant 0 : index
    %388 = vector.load %arg18[%c1_392, %c0_393] : memref<42x128xbf16, #tpu.memory_space<vmem>>, vector<24x128xbf16>
    %c128_394 = arith.constant 128 : index
    %c0_395 = arith.constant 0 : index
    %389 = vector.load %arg19[%c128_394, %c0_395] : memref<1152x256xbf16, #tpu.memory_space<vmem>>, vector<128x256xbf16>
    %cst_396 = arith.constant dense<0.000000e+00> : vector<24x256xf32>
    %390 = tpu.matmul %388, %389, %cst_396 {dimension_numbers = #tpu.dot_dimension_numbers<[1], [0], [0], [1], [0, 0, 1, 1], [], []>} : vector<24x128xbf16>, vector<128x256xbf16>, vector<24x256xf32> -> vector<24x256xf32>
    %391 = arith.addf %387, %390 : vector<24x256xf32>
    %c2_397 = arith.constant 2 : index
    %c0_398 = arith.constant 0 : index
    %392 = vector.load %arg18[%c2_397, %c0_398] : memref<42x128xbf16, #tpu.memory_space<vmem>>, vector<24x128xbf16>
    %c256_399 = arith.constant 256 : index
    %c0_400 = arith.constant 0 : index
    %393 = vector.load %arg19[%c256_399, %c0_400] : memref<1152x256xbf16, #tpu.memory_space<vmem>>, vector<128x256xbf16>
    %cst_401 = arith.constant dense<0.000000e+00> : vector<24x256xf32>
    %394 = tpu.matmul %392, %393, %cst_401 {dimension_numbers = #tpu.dot_dimension_numbers<[1], [0], [0], [1], [0, 0, 1, 1], [], []>} : vector<24x128xbf16>, vector<128x256xbf16>, vector<24x256xf32> -> vector<24x256xf32>
    %395 = arith.addf %391, %394 : vector<24x256xf32>
    %c4 = arith.constant 4 : index
    %c0_402 = arith.constant 0 : index
    %396 = vector.load %arg18[%c4, %c0_402] : memref<42x128xbf16, #tpu.memory_space<vmem>>, vector<24x128xbf16>
    %c384_403 = arith.constant 384 : index
    %c0_404 = arith.constant 0 : index
    %397 = vector.load %arg19[%c384_403, %c0_404] : memref<1152x256xbf16, #tpu.memory_space<vmem>>, vector<128x256xbf16>
    %cst_405 = arith.constant dense<0.000000e+00> : vector<24x256xf32>
    %398 = tpu.matmul %396, %397, %cst_405 {dimension_numbers = #tpu.dot_dimension_numbers<[1], [0], [0], [1], [0, 0, 1, 1], [], []>} : vector<24x128xbf16>, vector<128x256xbf16>, vector<24x256xf32> -> vector<24x256xf32>
    %399 = arith.addf %395, %398 : vector<24x256xf32>
    %c5_406 = arith.constant 5 : index
    %c0_407 = arith.constant 0 : index
    %400 = vector.load %arg18[%c5_406, %c0_407] : memref<42x128xbf16, #tpu.memory_space<vmem>>, vector<24x128xbf16>
    %c512_408 = arith.constant 512 : index
    %c0_409 = arith.constant 0 : index
    %401 = vector.load %arg19[%c512_408, %c0_409] : memref<1152x256xbf16, #tpu.memory_space<vmem>>, vector<128x256xbf16>
    %cst_410 = arith.constant dense<0.000000e+00> : vector<24x256xf32>
    %402 = tpu.matmul %400, %401, %cst_410 {dimension_numbers = #tpu.dot_dimension_numbers<[1], [0], [0], [1], [0, 0, 1, 1], [], []>} : vector<24x128xbf16>, vector<128x256xbf16>, vector<24x256xf32> -> vector<24x256xf32>
    %403 = arith.addf %399, %402 : vector<24x256xf32>
    %c6_411 = arith.constant 6 : index
    %c0_412 = arith.constant 0 : index
    %404 = vector.load %arg18[%c6_411, %c0_412] : memref<42x128xbf16, #tpu.memory_space<vmem>>, vector<24x128xbf16>
    %c640 = arith.constant 640 : index
    %c0_413 = arith.constant 0 : index
    %405 = vector.load %arg19[%c640, %c0_413] : memref<1152x256xbf16, #tpu.memory_space<vmem>>, vector<128x256xbf16>
    %cst_414 = arith.constant dense<0.000000e+00> : vector<24x256xf32>
    %406 = tpu.matmul %404, %405, %cst_414 {dimension_numbers = #tpu.dot_dimension_numbers<[1], [0], [0], [1], [0, 0, 1, 1], [], []>} : vector<24x128xbf16>, vector<128x256xbf16>, vector<24x256xf32> -> vector<24x256xf32>
    %407 = arith.addf %403, %406 : vector<24x256xf32>
    %c8_415 = arith.constant 8 : index
    %c0_416 = arith.constant 0 : index
    %408 = vector.load %arg18[%c8_415, %c0_416] : memref<42x128xbf16, #tpu.memory_space<vmem>>, vector<24x128xbf16>
    %c768 = arith.constant 768 : index
    %c0_417 = arith.constant 0 : index
    %409 = vector.load %arg19[%c768, %c0_417] : memref<1152x256xbf16, #tpu.memory_space<vmem>>, vector<128x256xbf16>
    %cst_418 = arith.constant dense<0.000000e+00> : vector<24x256xf32>
    %410 = tpu.matmul %408, %409, %cst_418 {dimension_numbers = #tpu.dot_dimension_numbers<[1], [0], [0], [1], [0, 0, 1, 1], [], []>} : vector<24x128xbf16>, vector<128x256xbf16>, vector<24x256xf32> -> vector<24x256xf32>
    %411 = arith.addf %407, %410 : vector<24x256xf32>
    %c9_419 = arith.constant 9 : index
    %c0_420 = arith.constant 0 : index
    %412 = vector.load %arg18[%c9_419, %c0_420] : memref<42x128xbf16, #tpu.memory_space<vmem>>, vector<24x128xbf16>
    %c896 = arith.constant 896 : index
    %c0_421 = arith.constant 0 : index
    %413 = vector.load %arg19[%c896, %c0_421] : memref<1152x256xbf16, #tpu.memory_space<vmem>>, vector<128x256xbf16>
    %cst_422 = arith.constant dense<0.000000e+00> : vector<24x256xf32>
    %414 = tpu.matmul %412, %413, %cst_422 {dimension_numbers = #tpu.dot_dimension_numbers<[1], [0], [0], [1], [0, 0, 1, 1], [], []>} : vector<24x128xbf16>, vector<128x256xbf16>, vector<24x256xf32> -> vector<24x256xf32>
    %415 = arith.addf %411, %414 : vector<24x256xf32>
    %c10_423 = arith.constant 10 : index
    %c0_424 = arith.constant 0 : index
    %416 = vector.load %arg18[%c10_423, %c0_424] : memref<42x128xbf16, #tpu.memory_space<vmem>>, vector<24x128xbf16>
    %c1024 = arith.constant 1024 : index
    %c0_425 = arith.constant 0 : index
    %417 = vector.load %arg19[%c1024, %c0_425] : memref<1152x256xbf16, #tpu.memory_space<vmem>>, vector<128x256xbf16>
    %cst_426 = arith.constant dense<0.000000e+00> : vector<24x256xf32>
    %418 = tpu.matmul %416, %417, %cst_426 {dimension_numbers = #tpu.dot_dimension_numbers<[1], [0], [0], [1], [0, 0, 1, 1], [], []>} : vector<24x128xbf16>, vector<128x256xbf16>, vector<24x256xf32> -> vector<24x256xf32>
    %419 = arith.addf %415, %418 : vector<24x256xf32>
    %c0_427 = arith.constant 0 : index
    %c0_428 = arith.constant 0 : index
    %420 = vector.load %arg8[%c0_427, %c0_428] : memref<1x256xf32, #tpu.memory_space<vmem>>, vector<1x256xf32>
    %421 = vector.broadcast %420 : vector<1x256xf32> to vector<24x256xf32>
    %422 = arith.addf %419, %421 : vector<24x256xf32>
    %cst_429 = arith.constant 0.000000e+00 : f32
    %423 = vector.broadcast %cst_429 : f32 to vector<24x256xf32>
    %424 = arith.maximumf %422, %423 : vector<24x256xf32>
    %c0_430 = arith.constant 0 : index
    %c0_431 = arith.constant 0 : index
    %425 = vector.load %arg15[%c0_430, %c0_431] : memref<24x256xf32, #tpu.memory_space<vmem>>, vector<24x256xf32>
    tpu.vector_store %arg15[%c0_430, %c0_431], %424 {strides = array<i32>} : memref<24x256xf32, #tpu.memory_space<vmem>>, vector<24x256xf32>,
    %c0_432 = arith.constant 0 : index
    %c0_433 = arith.constant 0 : index
    %426 = vector.load %arg15[%c0_432, %c0_433] : memref<24x256xf32, #tpu.memory_space<vmem>>, vector<1x256xf32>
    %c1_434 = arith.constant 1 : index
    %c0_435 = arith.constant 0 : index
    %427 = vector.load %arg15[%c1_434, %c0_435] : memref<24x256xf32, #tpu.memory_space<vmem>>, vector<1x256xf32>
    %428 = arith.maximumf %426, %427 : vector<1x256xf32>
    %c4_436 = arith.constant 4 : index
    %c0_437 = arith.constant 0 : index
    %429 = vector.load %arg15[%c4_436, %c0_437] : memref<24x256xf32, #tpu.memory_space<vmem>>, vector<1x256xf32>
    %c5_438 = arith.constant 5 : index
    %c0_439 = arith.constant 0 : index
    %430 = vector.load %arg15[%c5_438, %c0_439] : memref<24x256xf32, #tpu.memory_space<vmem>>, vector<1x256xf32>
    %431 = arith.maximumf %429, %430 : vector<1x256xf32>
    %432 = arith.maximumf %428, %431 : vector<1x256xf32>
    %c16 = arith.constant 16 : index
    %c0_440 = arith.constant 0 : index
    %433 = vector.load %arg15[%c16, %c0_440] : memref<24x256xf32, #tpu.memory_space<vmem>>, vector<1x256xf32>
    %c17 = arith.constant 17 : index
    %c0_441 = arith.constant 0 : index
    %434 = vector.load %arg15[%c17, %c0_441] : memref<24x256xf32, #tpu.memory_space<vmem>>, vector<1x256xf32>
    %435 = arith.maximumf %433, %434 : vector<1x256xf32>
    %c20_442 = arith.constant 20 : index
    %c0_443 = arith.constant 0 : index
    %436 = vector.load %arg15[%c20_442, %c0_443] : memref<24x256xf32, #tpu.memory_space<vmem>>, vector<1x256xf32>
    %c21_444 = arith.constant 21 : index
    %c0_445 = arith.constant 0 : index
    %437 = vector.load %arg15[%c21_444, %c0_445] : memref<24x256xf32, #tpu.memory_space<vmem>>, vector<1x256xf32>
    %438 = arith.maximumf %436, %437 : vector<1x256xf32>
    %439 = arith.maximumf %435, %438 : vector<1x256xf32>
    %440 = tpu.concatenate %432, %439 in 0 : vector<1x256xf32>, vector<1x256xf32> -> vector<2x256xf32>
    %441 = arith.truncf %440 : vector<2x256xf32> to vector<2x256xbf16>
    %c0_446 = arith.constant 0 : index
    %c0_447 = arith.constant 0 : index
    %442 = vector.load %arg9[%c0_446, %c0_447] : memref<256x10xbf16, #tpu.memory_space<vmem>>, vector<256x10xbf16>
    %cst_448 = arith.constant dense<0.000000e+00> : vector<2x10xf32>
    %443 = tpu.matmul %441, %442, %cst_448 {dimension_numbers = #tpu.dot_dimension_numbers<[1], [0], [0], [1], [0, 0, 1, 1], [], []>} : vector<2x256xbf16>, vector<256x10xbf16>, vector<2x10xf32> -> vector<2x10xf32>
    %c0_449 = arith.constant 0 : index
    %c0_450 = arith.constant 0 : index
    %444 = vector.load %arg10[%c0_449, %c0_450] : memref<1x10xf32, #tpu.memory_space<vmem>>, vector<1x10xf32>
    %445 = vector.broadcast %444 : vector<1x10xf32> to vector<2x10xf32>
    %446 = arith.addf %443, %445 : vector<2x10xf32>
    %cst_451 = arith.constant dense<0xFF800000> : vector<2xf32>
    %447 = vector.multi_reduction <maximumf>, %446, %cst_451 [1] : vector<2x10xf32> to vector<2xf32>
    %448 = vector.shape_cast %447 : vector<2xf32> to vector<2x1xf32>
    %449 = vector.broadcast %448 : vector<2x1xf32> to vector<2x10xf32>
    %450 = arith.subf %446, %449 : vector<2x10xf32>
    %451 = math.exp %450 : vector<2x10xf32>
    %cst_452 = arith.constant dense<0.000000e+00> : vector<2xf32>
    %452 = vector.multi_reduction <add>, %451, %cst_452 [1] : vector<2x10xf32> to vector<2xf32>
    %453 = vector.shape_cast %452 : vector<2xf32> to vector<2x1xf32>
    %454 = math.log %453 : vector<2x1xf32>
    %455 = vector.broadcast %454 : vector<2x1xf32> to vector<2x10xf32>
    %456 = arith.subf %450, %455 : vector<2x10xf32>
    %c0_453 = arith.constant 0 : index
    %c0_454 = arith.constant 0 : index
    %457 = vector.load %arg11[%c0_453, %c0_454] : memref<2x10xf32, #tpu.memory_space<vmem>>, vector<2x10xf32>
    tpu.vector_store %arg11[%c0_453, %c0_454], %456 {strides = array<i32>} : memref<2x10xf32, #tpu.memory_space<vmem>>, vector<2x10xf32>,
    return
  }
}

</mosaic_0001>

<llo_original>
// kernel: neural_net_forward.1
$region0: #{neural_net_forward.1}
  #allocation0 [shape = 'u32[]', space=smem, size = 0x4, offset = 0x4, fixed_abs, tag = 'smem constant byte address 0x4 - core index']
  #allocation1 [shape = 'u32[144,128]{1,0:T(1,128)}', space=vmem, size = 0x12000, scoped, tag = 'internal scratch']
  #allocation2 [shape = 'f32[612,32]{1,0:T(8,128)}', space=vmem, size = 0x4d000, scoped, tag = 'scratch operand']
  #allocation3 [shape = 'f32[180,64]{1,0:T(8,128)}', space=vmem, size = 0x17000, scoped, tag = 'scratch operand']
  #allocation4 [shape = 'f32[60,128]{1,0:T(8,128)}', space=vmem, size = 0x8000, scoped, tag = 'scratch operand']
  #allocation5 [shape = 'f32[24,256]{1,0:T(8,128)}', space=vmem, size = 0x6000, scoped, tag = 'scratch operand']
  #allocation6 [shape = 'bf16[222,32]{1,0:T(8,128)(2,1)}', space=vmem, size = 0xe000, scoped, tag = 'scratch operand']
  #allocation7 [shape = 'bf16[86,64]{1,0:T(8,128)(2,1)}', space=vmem, size = 0x5800, scoped, tag = 'scratch operand']
  #allocation8 [shape = 'bf16[42,128]{1,0:T(8,128)(2,1)}', space=vmem, size = 0x3000, scoped, tag = 'scratch operand']
  #allocation9 [shape = 'bf16[1152,256]{1,0:T(16,128)(2,1)}', space=vmem, size = 0x90000, scoped, tag = 'scratch operand']
  #allocation10 [shape = 's32[1]{0}', space=sflag, size = 0x4, scoped, tag = 'scratch operand']
  #allocation13 [shape = 's32[]', space=sflag, size = 0x4, offset = 0, fixed_abs, tag = 'sflag constant byte address 0x0 - dummy sync flag']
  %s0 = inlined_call_operand.vmem [shape: bf16[612,16], index: 0, kind: input, shape index: {}]
  %s1 = inlined_call_operand.vmem [shape: bf16[16,32], index: 1, kind: input, shape index: {}]
  %s2 = inlined_call_operand.vmem [shape: f32[1,32], index: 2, kind: input, shape index: {}]
  %s3 = inlined_call_operand.vmem [shape: bf16[288,64], index: 3, kind: input, shape index: {}]
  %s4 = inlined_call_operand.vmem [shape: f32[1,64], index: 4, kind: input, shape index: {}]
  %s5 = inlined_call_operand.vmem [shape: bf16[576,128], index: 5, kind: input, shape index: {}]
  %s6 = inlined_call_operand.vmem [shape: f32[1,128], index: 6, kind: input, shape index: {}]
  %s7 = inlined_call_operand.vmem [shape: bf16[1152,256], index: 7, kind: input, shape index: {}]
  %s8 = inlined_call_operand.vmem [shape: f32[1,256], index: 8, kind: input, shape index: {}]
  %s9 = inlined_call_operand.vmem [shape: bf16[256,10], index: 9, kind: input, shape index: {}]
  %s10 = inlined_call_operand.vmem [shape: f32[1,10], index: 10, kind: input, shape index: {}]
  %s11 = inlined_call_operand.hbm [shape: f32[2,10], index: 11, kind: output, shape index: {}]
  %s12 = sld [smem:[#allocation0]]
  $region87: #{neural_net_forward.1} parent=0
    _
  %s14 = ssub.s32 1, %s12
  %s15 = scalar_select 0, %s14, %s12
  $region1: #{neural_net_forward.1} parent=0
    #allocation11 [shape = 'u8[1024]{0}', space=vmem, size = 0x400, scoped, tag = 'output window, operand 0, single buffered']
    #allocation12 [shape = 's32[1]{0}', space=sflag, size = 0x4, scoped, tag = 'scoped memory for neural_net_forward.1']
    %16 = vsyncpa [#allocation12], 0
    // Predicated region
    $region2: #{neural_net_forward.1} parent=1 // pred_check
      _
    $region3: #{neural_net_forward.1} parent=1 // pred_check_branch
      %18 = sbr.rel (0) target = $region5
    $region4: #{neural_net_forward.1} parent=1 // pred_region
      _
    $region5: #{neural_net_forward.1} parent=1 // pred_fallthru
      _
    // Predicated region
    $region6: #{neural_net_forward.1} parent=1 // pred_check
      _
    $region7: #{neural_net_forward.1} parent=1 // pred_check_branch
      %20 = sbr.rel (0) target = $region9
    $region8: #{neural_net_forward.1} parent=1 // pred_region
      _
    $region9: #{neural_net_forward.1} parent=1 // pred_fallthru
      _
    // Predicated region
    $region10: #{neural_net_forward.1} parent=1 // pred_check
      _
    $region11: #{neural_net_forward.1} parent=1 // pred_check_branch
      %22 = sbr.rel (0) target = $region13
    $region12: #{neural_net_forward.1} parent=1 // pred_region
      _
    $region13: #{neural_net_forward.1} parent=1 // pred_fallthru
      _
    // Predicated region
    $region14: #{neural_net_forward.1} parent=1 // pred_check
      _
    $region15: #{neural_net_forward.1} parent=1 // pred_check_branch
      %24 = sbr.rel (0) target = $region17
    $region16: #{neural_net_forward.1} parent=1 // pred_region
      _
    $region17: #{neural_net_forward.1} parent=1 // pred_fallthru
      _
    // Predicated region
    $region18: #{neural_net_forward.1} parent=1 // pred_check
      _
    $region19: #{neural_net_forward.1} parent=1 // pred_check_branch
      %26 = sbr.rel (0) target = $region21
    $region20: #{neural_net_forward.1} parent=1 // pred_region
      _
    $region21: #{neural_net_forward.1} parent=1 // pred_fallthru
      _
    // Predicated region
    $region22: #{neural_net_forward.1} parent=1 // pred_check
      _
    $region23: #{neural_net_forward.1} parent=1 // pred_check_branch
      %28 = sbr.rel (0) target = $region25
    $region24: #{neural_net_forward.1} parent=1 // pred_region
      _
    $region25: #{neural_net_forward.1} parent=1 // pred_fallthru
      _
    // Predicated region
    $region26: #{neural_net_forward.1} parent=1 // pred_check
      _
    $region27: #{neural_net_forward.1} parent=1 // pred_check_branch
      %30 = sbr.rel (0) target = $region29
    $region28: #{neural_net_forward.1} parent=1 // pred_region
      _
    $region29: #{neural_net_forward.1} parent=1 // pred_fallthru
      _
    // Predicated region
    $region30: #{neural_net_forward.1} parent=1 // pred_check
      _
    $region31: #{neural_net_forward.1} parent=1 // pred_check_branch
      %32 = sbr.rel (0) target = $region33
    $region32: #{neural_net_forward.1} parent=1 // pred_region
      _
    $region33: #{neural_net_forward.1} parent=1 // pred_fallthru
      _
    // Predicated region
    $region34: #{neural_net_forward.1} parent=1 // pred_check
      _
    $region35: #{neural_net_forward.1} parent=1 // pred_check_branch
      %34 = sbr.rel (0) target = $region37
    $region36: #{neural_net_forward.1} parent=1 // pred_region
      _
    $region37: #{neural_net_forward.1} parent=1 // pred_fallthru
      _
    // Predicated region
    $region38: #{neural_net_forward.1} parent=1 // pred_check
      _
    $region39: #{neural_net_forward.1} parent=1 // pred_check_branch
      %36 = sbr.rel (0) target = $region41
    $region40: #{neural_net_forward.1} parent=1 // pred_region
      _
    $region41: #{neural_net_forward.1} parent=1 // pred_fallthru
      _
    %p39 = scmp.lt.u32.totalorder 4, 8
    %p40 = pneg %p39
    // Predicated region
    $region42: #{neural_net_forward.1} parent=1 // pred_check
      _
    $region43: #{neural_net_forward.1} parent=1 // pred_check_branch
      %42 = sbr.rel (%p39) target = $region45
    $region44: #{neural_net_forward.1} parent=1 // pred_region
      %s631 = sand.u32 4, 7
      %p632 = scmp.eq.s32.totalorder %s631, 0
      %p633 = pneg %p632
      // Predicated region
      $region57: #{neural_net_forward.1} parent=44 // pred_check
        _
      $region58: #{neural_net_forward.1} parent=44 // pred_check_branch
        %635 = sbr.rel (%p632) target = $region60
      $region59: #{neural_net_forward.1} parent=44 // pred_region
        %s636 = sand.u32 4, 7
        %s637 = ssub.s32 4, %s636
        %s638 = scalar_lea.vmem %s7, %s637
        %s639 = ssub.s32 4, %s636
        %s640 = scalar_lea.vmem [#allocation9], %s639
        loop: start=0, step=1, limit=1
        $region61: #{neural_net_forward.1} parent=59 // loop_pre_header
          _
        $region62: #{neural_net_forward.1} parent=59 // loop_header
          %s642 = sphi 0, %s646
          %p643 = scmp.ge.s32.totalorder %s642, 1
          %s647 = sphi %s7, %s7
          %s648 = sphi [#allocation9], [#allocation9]
        $region63: #{neural_net_forward.1} parent=59 // loop_header_branch
          %645 = sbr.rel (%p643) target = $region67
        $region64: #{neural_net_forward.1} parent=59 // loop_body
          _
        $region65: #{neural_net_forward.1} parent=59 // loop_footer
          %s646 = sadd.s32 1, %s642
        $region66: #{neural_net_forward.1} parent=59 // loop_footer_branch
          %641 = sbr.rel target = $region62
        $region67: #{neural_net_forward.1} parent=59 // loop_exit
          _
        %s649 = sshllo.u32 0, %s636
        loop: start=0, step=1, limit=1
        $region68: #{neural_net_forward.1} parent=59 // loop_pre_header
          _
        $region69: #{neural_net_forward.1} parent=59 // loop_header
          %s651 = sphi 0, %s655
          %p652 = scmp.ge.s32.totalorder %s651, 1
          %s656 = sphi %s638, %s638
          %s657 = sphi %s640, %s640
        $region70: #{neural_net_forward.1} parent=59 // loop_header_branch
          %654 = sbr.rel (%p652) target = $region74
        $region71: #{neural_net_forward.1} parent=59 // loop_body
          %v658 = vld [vmem:[%s656] sm:%s649]
          %659 = vst [vmem:[%s657] sm:%s649] %v658
          %v660 = vld [vmem:[%s656 + $0x8] sm:%s649]
          %661 = vst [vmem:[%s657 + $0x4] sm:%s649] %v660
          %v662 = vld [vmem:[%s656 + $0x4] sm:%s649]
          %663 = vst [vmem:[%s657 + $0x8] sm:%s649] %v662
          %v664 = vld [vmem:[%s656 + $0xc] sm:%s649]
          %665 = vst [vmem:[%s657 + $0xc] sm:%s649] %v664
          %v666 = vld [vmem:[%s656 + $0x10] sm:%s649]
          %667 = vst [vmem:[%s657 + $0x10] sm:%s649] %v666
          %v668 = vld [vmem:[%s656 + $0x18] sm:%s649]
          %669 = vst [vmem:[%s657 + $0x14] sm:%s649] %v668
          %v670 = vld [vmem:[%s656 + $0x14] sm:%s649]
          %671 = vst [vmem:[%s657 + $0x18] sm:%s649] %v670
          %v672 = vld [vmem:[%s656 + $0x1c] sm:%s649]
          %673 = vst [vmem:[%s657 + $0x1c] sm:%s649] %v672
          %v674 = vld [vmem:[%s656 + $0x20] sm:%s649]
          %675 = vst [vmem:[%s657 + $0x20] sm:%s649] %v674
          %v676 = vld [vmem:[%s656 + $0x28] sm:%s649]
          %677 = vst [vmem:[%s657 + $0x24] sm:%s649] %v676
          %v678 = vld [vmem:[%s656 + $0x24] sm:%s649]
          %679 = vst [vmem:[%s657 + $0x28] sm:%s649] %v678
          %v680 = vld [vmem:[%s656 + $0x2c] sm:%s649]
          %681 = vst [vmem:[%s657 + $0x2c] sm:%s649] %v680
          %v682 = vld [vmem:[%s656 + $0x30] sm:%s649]
          %683 = vst [vmem:[%s657 + $0x30] sm:%s649] %v682
          %v684 = vld [vmem:[%s656 + $0x38] sm:%s649]
          %685 = vst [vmem:[%s657 + $0x34] sm:%s649] %v684
          %v686 = vld [vmem:[%s656 + $0x34] sm:%s649]
          %687 = vst [vmem:[%s657 + $0x38] sm:%s649] %v686
          %v688 = vld [vmem:[%s656 + $0x3c] sm:%s649]
          %689 = vst [vmem:[%s657 + $0x3c] sm:%s649] %v688
          %v690 = vld [vmem:[%s656 + $0x40] sm:%s649]
          %691 = vst [vmem:[%s657 + $0x40] sm:%s649] %v690
          %v692 = vld [vmem:[%s656 + $0x48] sm:%s649]
          %693 = vst [vmem:[%s657 + $0x44] sm:%s649] %v692
          %v694 = vld [vmem:[%s656 + $0x44] sm:%s649]
          %695 = vst [vmem:[%s657 + $0x48] sm:%s649] %v694
          %v696 = vld [vmem:[%s656 + $0x4c] sm:%s649]
          %697 = vst [vmem:[%s657 + $0x4c] sm:%s649] %v696
          %v698 = vld [vmem:[%s656 + $0x50] sm:%s649]
          %699 = vst [vmem:[%s657 + $0x50] sm:%s649] %v698
          %v700 = vld [vmem:[%s656 + $0x58] sm:%s649]
          %701 = vst [vmem:[%s657 + $0x54] sm:%s649] %v700
          %v702 = vld [vmem:[%s656 + $0x54] sm:%s649]
          %703 = vst [vmem:[%s657 + $0x58] sm:%s649] %v702
          %v704 = vld [vmem:[%s656 + $0x5c] sm:%s649]
          %705 = vst [vmem:[%s657 + $0x5c] sm:%s649] %v704
          %v706 = vld [vmem:[%s656 + $0x60] sm:%s649]
          %707 = vst [vmem:[%s657 + $0x60] sm:%s649] %v706
          %v708 = vld [vmem:[%s656 + $0x68] sm:%s649]
          %709 = vst [vmem:[%s657 + $0x64] sm:%s649] %v708
          %v710 = vld [vmem:[%s656 + $0x64] sm:%s649]
          %711 = vst [vmem:[%s657 + $0x68] sm:%s649] %v710
          %v712 = vld [vmem:[%s656 + $0x6c] sm:%s649]
          %713 = vst [vmem:[%s657 + $0x6c] sm:%s649] %v712
          %v714 = vld [vmem:[%s656 + $0x70] sm:%s649]
          %715 = vst [vmem:[%s657 + $0x70] sm:%s649] %v714
          %v716 = vld [vmem:[%s656 + $0x78] sm:%s649]
          %717 = vst [vmem:[%s657 + $0x74] sm:%s649] %v716
          %v718 = vld [vmem:[%s656 + $0x74] sm:%s649]
          %719 = vst [vmem:[%s657 + $0x78] sm:%s649] %v718
          %v720 = vld [vmem:[%s656 + $0x7c] sm:%s649]
          %721 = vst [vmem:[%s657 + $0x7c] sm:%s649] %v720
          %v722 = vld [vmem:[%s656 + $0x80] sm:%s649]
          %723 = vst [vmem:[%s657 + $0x80] sm:%s649] %v722
          %v724 = vld [vmem:[%s656 + $0x88] sm:%s649]
          %725 = vst [vmem:[%s657 + $0x84] sm:%s649] %v724
          %v726 = vld [vmem:[%s656 + $0x84] sm:%s649]
          %727 = vst [vmem:[%s657 + $0x88] sm:%s649] %v726
          %v728 = vld [vmem:[%s656 + $0x8c] sm:%s649]
          %729 = vst [vmem:[%s657 + $0x8c] sm:%s649] %v728
          %v730 = vld [vmem:[%s656 + $0x90] sm:%s649]
          %731 = vst [vmem:[%s657 + $0x90] sm:%s649] %v730
          %v732 = vld [vmem:[%s656 + $0x98] sm:%s649]
          %733 = vst [vmem:[%s657 + $0x94] sm:%s649] %v732
          %v734 = vld [vmem:[%s656 + $0x94] sm:%s649]
          %735 = vst [vmem:[%s657 + $0x98] sm:%s649] %v734
          %v736 = vld [vmem:[%s656 + $0x9c] sm:%s649]
          %737 = vst [vmem:[%s657 + $0x9c] sm:%s649] %v736
          %v738 = vld [vmem:[%s656 + $0xa0] sm:%s649]
          %739 = vst [vmem:[%s657 + $0xa0] sm:%s649] %v738
          %v740 = vld [vmem:[%s656 + $0xa8] sm:%s649]
          %741 = vst [vmem:[%s657 + $0xa4] sm:%s649] %v740
          %v742 = vld [vmem:[%s656 + $0xa4] sm:%s649]
          %743 = vst [vmem:[%s657 + $0xa8] sm:%s649] %v742
          %v744 = vld [vmem:[%s656 + $0xac] sm:%s649]
          %745 = vst [vmem:[%s657 + $0xac] sm:%s649] %v744
          %v746 = vld [vmem:[%s656 + $0xb0] sm:%s649]
          %747 = vst [vmem:[%s657 + $0xb0] sm:%s649] %v746
          %v748 = vld [vmem:[%s656 + $0xb8] sm:%s649]
          %749 = vst [vmem:[%s657 + $0xb4] sm:%s649] %v748
          %v750 = vld [vmem:[%s656 + $0xb4] sm:%s649]
          %751 = vst [vmem:[%s657 + $0xb8] sm:%s649] %v750
          %v752 = vld [vmem:[%s656 + $0xbc] sm:%s649]
          %753 = vst [vmem:[%s657 + $0xbc] sm:%s649] %v752
          %v754 = vld [vmem:[%s656 + $0xc0] sm:%s649]
          %755 = vst [vmem:[%s657 + $0xc0] sm:%s649] %v754
          %v756 = vld [vmem:[%s656 + $0xc8] sm:%s649]
          %757 = vst [vmem:[%s657 + $0xc4] sm:%s649] %v756
          %v758 = vld [vmem:[%s656 + $0xc4] sm:%s649]
          %759 = vst [vmem:[%s657 + $0xc8] sm:%s649] %v758
          %v760 = vld [vmem:[%s656 + $0xcc] sm:%s649]
          %761 = vst [vmem:[%s657 + $0xcc] sm:%s649] %v760
          %v762 = vld [vmem:[%s656 + $0xd0] sm:%s649]
          %763 = vst [vmem:[%s657 + $0xd0] sm:%s649] %v762
          %v764 = vld [vmem:[%s656 + $0xd8] sm:%s649]
          %765 = vst [vmem:[%s657 + $0xd4] sm:%s649] %v764
          %v766 = vld [vmem:[%s656 + $0xd4] sm:%s649]
          %767 = vst [vmem:[%s657 + $0xd8] sm:%s649] %v766
          %v768 = vld [vmem:[%s656 + $0xdc] sm:%s649]
          %769 = vst [vmem:[%s657 + $0xdc] sm:%s649] %v768
          %v770 = vld [vmem:[%s656 + $0xe0] sm:%s649]
          %771 = vst [vmem:[%s657 + $0xe0] sm:%s649] %v770
          %v772 = vld [vmem:[%s656 + $0xe8] sm:%s649]
          %773 = vst [vmem:[%s657 + $0xe4] sm:%s649] %v772
          %v774 = vld [vmem:[%s656 + $0xe4] sm:%s649]
          %775 = vst [vmem:[%s657 + $0xe8] sm:%s649] %v774
          %v776 = vld [vmem:[%s656 + $0xec] sm:%s649]
          %777 = vst [vmem:[%s657 + $0xec] sm:%s649] %v776
          %v778 = vld [vmem:[%s656 + $0xf0] sm:%s649]
          %779 = vst [vmem:[%s657 + $0xf0] sm:%s649] %v778
          %v780 = vld [vmem:[%s656 + $0xf8] sm:%s649]
          %781 = vst [vmem:[%s657 + $0xf4] sm:%s649] %v780
          %v782 = vld [vmem:[%s656 + $0xf4] sm:%s649]
          %783 = vst [vmem:[%s657 + $0xf8] sm:%s649] %v782
          %v784 = vld [vmem:[%s656 + $0xfc] sm:%s649]
          %785 = vst [vmem:[%s657 + $0xfc] sm:%s649] %v784
          %v786 = vld [vmem:[%s656 + $0x100] sm:%s649]
          %787 = vst [vmem:[%s657 + $0x100] sm:%s649] %v786
          %v788 = vld [vmem:[%s656 + $0x108] sm:%s649]
          %789 = vst [vmem:[%s657 + $0x104] sm:%s649] %v788
          %v790 = vld [vmem:[%s656 + $0x104] sm:%s649]
          %791 = vst [vmem:[%s657 + $0x108] sm:%s649] %v790
          %v792 = vld [vmem:[%s656 + $0x10c] sm:%s649]
          %793 = vst [vmem:[%s657 + $0x10c] sm:%s649] %v792
          %v794 = vld [vmem:[%s656 + $0x110] sm:%s649]
          %795 = vst [vmem:[%s657 + $0x110] sm:%s649] %v794
          %v796 = vld [vmem:[%s656 + $0x118] sm:%s649]
          %797 = vst [vmem:[%s657 + $0x114] sm:%s649] %v796
          %v798 = vld [vmem:[%s656 + $0x114] sm:%s649]
          %799 = vst [vmem:[%s657 + $0x118] sm:%s649] %v798
          %v800 = vld [vmem:[%s656 + $0x11c] sm:%s649]
          %801 = vst [vmem:[%s657 + $0x11c] sm:%s649] %v800
          %v802 = vld [vmem:[%s656 + $0x120] sm:%s649]
          %803 = vst [vmem:[%s657 + $0x120] sm:%s649] %v802
          %v804 = vld [vmem:[%s656 + $0x128] sm:%s649]
          %805 = vst [vmem:[%s657 + $0x124] sm:%s649] %v804
          %v806 = vld [vmem:[%s656 + $0x124] sm:%s649]
          %807 = vst [vmem:[%s657 + $0x128] sm:%s649] %v806
          %v808 = vld [vmem:[%s656 + $0x12c] sm:%s649]
          %809 = vst [vmem:[%s657 + $0x12c] sm:%s649] %v808
          %v810 = vld [vmem:[%s656 + $0x130] sm:%s649]
          %811 = vst [vmem:[%s657 + $0x130] sm:%s649] %v810
          %v812 = vld [vmem:[%s656 + $0x138] sm:%s649]
          %813 = vst [vmem:[%s657 + $0x134] sm:%s649] %v812
          %v814 = vld [vmem:[%s656 + $0x134] sm:%s649]
          %815 = vst [vmem:[%s657 + $0x138] sm:%s649] %v814
          %v816 = vld [vmem:[%s656 + $0x13c] sm:%s649]
          %817 = vst [vmem:[%s657 + $0x13c] sm:%s649] %v816
          %v818 = vld [vmem:[%s656 + $0x140] sm:%s649]
          %819 = vst [vmem:[%s657 + $0x140] sm:%s649] %v818
          %v820 = vld [vmem:[%s656 + $0x148] sm:%s649]
          %821 = vst [vmem:[%s657 + $0x144] sm:%s649] %v820
          %v822 = vld [vmem:[%s656 + $0x144] sm:%s649]
          %823 = vst [vmem:[%s657 + $0x148] sm:%s649] %v822
          %v824 = vld [vmem:[%s656 + $0x14c] sm:%s649]
          %825 = vst [vmem:[%s657 + $0x14c] sm:%s649] %v824
          %v826 = vld [vmem:[%s656 + $0x150] sm:%s649]
          %827 = vst [vmem:[%s657 + $0x150] sm:%s649] %v826
          %v828 = vld [vmem:[%s656 + $0x158] sm:%s649]
          %829 = vst [vmem:[%s657 + $0x154] sm:%s649] %v828
          %v830 = vld [vmem:[%s656 + $0x154] sm:%s649]
          %831 = vst [vmem:[%s657 + $0x158] sm:%s649] %v830
          %v832 = vld [vmem:[%s656 + $0x15c] sm:%s649]
          %833 = vst [vmem:[%s657 + $0x15c] sm:%s649] %v832
          %v834 = vld [vmem:[%s656 + $0x160] sm:%s649]
          %835 = vst [vmem:[%s657 + $0x160] sm:%s649] %v834
          %v836 = vld [vmem:[%s656 + $0x168] sm:%s649]
          %837 = vst [vmem:[%s657 + $0x164] sm:%s649] %v836
          %v838 = vld [vmem:[%s656 + $0x164] sm:%s649]
          %839 = vst [vmem:[%s657 + $0x168] sm:%s649] %v838
          %v840 = vld [vmem:[%s656 + $0x16c] sm:%s649]
          %841 = vst [vmem:[%s657 + $0x16c] sm:%s649] %v840
          %v842 = vld [vmem:[%s656 + $0x170] sm:%s649]
          %843 = vst [vmem:[%s657 + $0x170] sm:%s649] %v842
          %v844 = vld [vmem:[%s656 + $0x178] sm:%s649]
          %845 = vst [vmem:[%s657 + $0x174] sm:%s649] %v844
          %v846 = vld [vmem:[%s656 + $0x174] sm:%s649]
          %847 = vst [vmem:[%s657 + $0x178] sm:%s649] %v846
          %v848 = vld [vmem:[%s656 + $0x17c] sm:%s649]
          %849 = vst [vmem:[%s657 + $0x17c] sm:%s649] %v848
          %v850 = vld [vmem:[%s656 + $0x180] sm:%s649]
          %851 = vst [vmem:[%s657 + $0x180] sm:%s649] %v850
          %v852 = vld [vmem:[%s656 + $0x188] sm:%s649]
          %853 = vst [vmem:[%s657 + $0x184] sm:%s649] %v852
          %v854 = vld [vmem:[%s656 + $0x184] sm:%s649]
          %855 = vst [vmem:[%s657 + $0x188] sm:%s649] %v854
          %v856 = vld [vmem:[%s656 + $0x18c] sm:%s649]
          %857 = vst [vmem:[%s657 + $0x18c] sm:%s649] %v856
          %v858 = vld [vmem:[%s656 + $0x190] sm:%s649]
          %859 = vst [vmem:[%s657 + $0x190] sm:%s649] %v858
          %v860 = vld [vmem:[%s656 + $0x198] sm:%s649]
          %861 = vst [vmem:[%s657 + $0x194] sm:%s649] %v860
          %v862 = vld [vmem:[%s656 + $0x194] sm:%s649]
          %863 = vst [vmem:[%s657 + $0x198] sm:%s649] %v862
          %v864 = vld [vmem:[%s656 + $0x19c] sm:%s649]
          %865 = vst [vmem:[%s657 + $0x19c] sm:%s649] %v864
          %v866 = vld [vmem:[%s656 + $0x1a0] sm:%s649]
          %867 = vst [vmem:[%s657 + $0x1a0] sm:%s649] %v866
          %v868 = vld [vmem:[%s656 + $0x1a8] sm:%s649]
          %869 = vst [vmem:[%s657 + $0x1a4] sm:%s649] %v868
          %v870 = vld [vmem:[%s656 + $0x1a4] sm:%s649]
          %871 = vst [vmem:[%s657 + $0x1a8] sm:%s649] %v870
          %v872 = vld [vmem:[%s656 + $0x1ac] sm:%s649]
          %873 = vst [vmem:[%s657 + $0x1ac] sm:%s649] %v872
          %v874 = vld [vmem:[%s656 + $0x1b0] sm:%s649]
          %875 = vst [vmem:[%s657 + $0x1b0] sm:%s649] %v874
          %v876 = vld [vmem:[%s656 + $0x1b8] sm:%s649]
          %877 = vst [vmem:[%s657 + $0x1b4] sm:%s649] %v876
          %v878 = vld [vmem:[%s656 + $0x1b4] sm:%s649]
          %879 = vst [vmem:[%s657 + $0x1b8] sm:%s649] %v878
          %v880 = vld [vmem:[%s656 + $0x1bc] sm:%s649]
          %881 = vst [vmem:[%s657 + $0x1bc] sm:%s649] %v880
          %v882 = vld [vmem:[%s656 + $0x1c0] sm:%s649]
          %883 = vst [vmem:[%s657 + $0x1c0] sm:%s649] %v882
          %v884 = vld [vmem:[%s656 + $0x1c8] sm:%s649]
          %885 = vst [vmem:[%s657 + $0x1c4] sm:%s649] %v884
          %v886 = vld [vmem:[%s656 + $0x1c4] sm:%s649]
          %887 = vst [vmem:[%s657 + $0x1c8] sm:%s649] %v886
          %v888 = vld [vmem:[%s656 + $0x1cc] sm:%s649]
          %889 = vst [vmem:[%s657 + $0x1cc] sm:%s649] %v888
          %v890 = vld [vmem:[%s656 + $0x1d0] sm:%s649]
          %891 = vst [vmem:[%s657 + $0x1d0] sm:%s649] %v890
          %v892 = vld [vmem:[%s656 + $0x1d8] sm:%s649]
          %893 = vst [vmem:[%s657 + $0x1d4] sm:%s649] %v892
          %v894 = vld [vmem:[%s656 + $0x1d4] sm:%s649]
          %895 = vst [vmem:[%s657 + $0x1d8] sm:%s649] %v894
          %v896 = vld [vmem:[%s656 + $0x1dc] sm:%s649]
          %897 = vst [vmem:[%s657 + $0x1dc] sm:%s649] %v896
          %v898 = vld [vmem:[%s656 + $0x1e0] sm:%s649]
          %899 = vst [vmem:[%s657 + $0x1e0] sm:%s649] %v898
          %v900 = vld [vmem:[%s656 + $0x1e8] sm:%s649]
          %901 = vst [vmem:[%s657 + $0x1e4] sm:%s649] %v900
          %v902 = vld [vmem:[%s656 + $0x1e4] sm:%s649]
          %903 = vst [vmem:[%s657 + $0x1e8] sm:%s649] %v902
          %v904 = vld [vmem:[%s656 + $0x1ec] sm:%s649]
          %905 = vst [vmem:[%s657 + $0x1ec] sm:%s649] %v904
          %v906 = vld [vmem:[%s656 + $0x1f0] sm:%s649]
          %907 = vst [vmem:[%s657 + $0x1f0] sm:%s649] %v906
          %v908 = vld [vmem:[%s656 + $0x1f8] sm:%s649]
          %909 = vst [vmem:[%s657 + $0x1f4] sm:%s649] %v908
          %v910 = vld [vmem:[%s656 + $0x1f4] sm:%s649]
          %911 = vst [vmem:[%s657 + $0x1f8] sm:%s649] %v910
          %v912 = vld [vmem:[%s656 + $0x1fc] sm:%s649]
          %913 = vst [vmem:[%s657 + $0x1fc] sm:%s649] %v912
          %v914 = vld [vmem:[%s656 + $0x200] sm:%s649]
          %915 = vst [vmem:[%s657 + $0x200] sm:%s649] %v914
          %v916 = vld [vmem:[%s656 + $0x208] sm:%s649]
          %917 = vst [vmem:[%s657 + $0x204] sm:%s649] %v916
          %v918 = vld [vmem:[%s656 + $0x204] sm:%s649]
          %919 = vst [vmem:[%s657 + $0x208] sm:%s649] %v918
          %v920 = vld [vmem:[%s656 + $0x20c] sm:%s649]
          %921 = vst [vmem:[%s657 + $0x20c] sm:%s649] %v920
          %v922 = vld [vmem:[%s656 + $0x210] sm:%s649]
          %923 = vst [vmem:[%s657 + $0x210] sm:%s649] %v922
          %v924 = vld [vmem:[%s656 + $0x218] sm:%s649]
          %925 = vst [vmem:[%s657 + $0x214] sm:%s649] %v924
          %v926 = vld [vmem:[%s656 + $0x214] sm:%s649]
          %927 = vst [vmem:[%s657 + $0x218] sm:%s649] %v926
          %v928 = vld [vmem:[%s656 + $0x21c] sm:%s649]
          %929 = vst [vmem:[%s657 + $0x21c] sm:%s649] %v928
          %v930 = vld [vmem:[%s656 + $0x220] sm:%s649]
          %931 = vst [vmem:[%s657 + $0x220] sm:%s649] %v930
          %v932 = vld [vmem:[%s656 + $0x228] sm:%s649]
          %933 = vst [vmem:[%s657 + $0x224] sm:%s649] %v932
          %v934 = vld [vmem:[%s656 + $0x224] sm:%s649]
          %935 = vst [vmem:[%s657 + $0x228] sm:%s649] %v934
          %v936 = vld [vmem:[%s656 + $0x22c] sm:%s649]
          %937 = vst [vmem:[%s657 + $0x22c] sm:%s649] %v936
          %v938 = vld [vmem:[%s656 + $0x230] sm:%s649]
          %939 = vst [vmem:[%s657 + $0x230] sm:%s649] %v938
          %v940 = vld [vmem:[%s656 + $0x238] sm:%s649]
          %941 = vst [vmem:[%s657 + $0x234] sm:%s649] %v940
          %v942 = vld [vmem:[%s656 + $0x234] sm:%s649]
          %943 = vst [vmem:[%s657 + $0x238] sm:%s649] %v942
          %v944 = vld [vmem:[%s656 + $0x23c] sm:%s649]
          %945 = vst [vmem:[%s657 + $0x23c] sm:%s649] %v944
          %v946 = vld [vmem:[%s656 + $0x240] sm:%s649]
          %947 = vst [vmem:[%s657 + $0x240] sm:%s649] %v946
          %v948 = vld [vmem:[%s656 + $0x248] sm:%s649]
          %949 = vst [vmem:[%s657 + $0x244] sm:%s649] %v948
          %v950 = vld [vmem:[%s656 + $0x244] sm:%s649]
          %951 = vst [vmem:[%s657 + $0x248] sm:%s649] %v950
          %v952 = vld [vmem:[%s656 + $0x24c] sm:%s649]
          %953 = vst [vmem:[%s657 + $0x24c] sm:%s649] %v952
          %v954 = vld [vmem:[%s656 + $0x250] sm:%s649]
          %955 = vst [vmem:[%s657 + $0x250] sm:%s649] %v954
          %v956 = vld [vmem:[%s656 + $0x258] sm:%s649]
          %957 = vst [vmem:[%s657 + $0x254] sm:%s649] %v956
          %v958 = vld [vmem:[%s656 + $0x254] sm:%s649]
          %959 = vst [vmem:[%s657 + $0x258] sm:%s649] %v958
          %v960 = vld [vmem:[%s656 + $0x25c] sm:%s649]
          %961 = vst [vmem:[%s657 + $0x25c] sm:%s649] %v960
          %v962 = vld [vmem:[%s656 + $0x260] sm:%s649]
          %963 = vst [vmem:[%s657 + $0x260] sm:%s649] %v962
          %v964 = vld [vmem:[%s656 + $0x268] sm:%s649]
          %965 = vst [vmem:[%s657 + $0x264] sm:%s649] %v964
          %v966 = vld [vmem:[%s656 + $0x264] sm:%s649]
          %967 = vst [vmem:[%s657 + $0x268] sm:%s649] %v966
          %v968 = vld [vmem:[%s656 + $0x26c] sm:%s649]
          %969 = vst [vmem:[%s657 + $0x26c] sm:%s649] %v968
          %v970 = vld [vmem:[%s656 + $0x270] sm:%s649]
          %971 = vst [vmem:[%s657 + $0x270] sm:%s649] %v970
          %v972 = vld [vmem:[%s656 + $0x278] sm:%s649]
          %973 = vst [vmem:[%s657 + $0x274] sm:%s649] %v972
          %v974 = vld [vmem:[%s656 + $0x274] sm:%s649]
          %975 = vst [vmem:[%s657 + $0x278] sm:%s649] %v974
          %v976 = vld [vmem:[%s656 + $0x27c] sm:%s649]
          %977 = vst [vmem:[%s657 + $0x27c] sm:%s649] %v976
          %v978 = vld [vmem:[%s656 + $0x280] sm:%s649]
          %979 = vst [vmem:[%s657 + $0x280] sm:%s649] %v978
          %v980 = vld [vmem:[%s656 + $0x288] sm:%s649]
          %981 = vst [vmem:[%s657 + $0x284] sm:%s649] %v980
          %v982 = vld [vmem:[%s656 + $0x284] sm:%s649]
          %983 = vst [vmem:[%s657 + $0x288] sm:%s649] %v982
          %v984 = vld [vmem:[%s656 + $0x28c] sm:%s649]
          %985 = vst [vmem:[%s657 + $0x28c] sm:%s649] %v984
          %v986 = vld [vmem:[%s656 + $0x290] sm:%s649]
          %987 = vst [vmem:[%s657 + $0x290] sm:%s649] %v986
          %v988 = vld [vmem:[%s656 + $0x298] sm:%s649]
          %989 = vst [vmem:[%s657 + $0x294] sm:%s649] %v988
          %v990 = vld [vmem:[%s656 + $0x294] sm:%s649]
          %991 = vst [vmem:[%s657 + $0x298] sm:%s649] %v990
          %v992 = vld [vmem:[%s656 + $0x29c] sm:%s649]
          %993 = vst [vmem:[%s657 + $0x29c] sm:%s649] %v992
          %v994 = vld [vmem:[%s656 + $0x2a0] sm:%s649]
          %995 = vst [vmem:[%s657 + $0x2a0] sm:%s649] %v994
          %v996 = vld [vmem:[%s656 + $0x2a8] sm:%s649]
          %997 = vst [vmem:[%s657 + $0x2a4] sm:%s649] %v996
          %v998 = vld [vmem:[%s656 + $0x2a4] sm:%s649]
          %999 = vst [vmem:[%s657 + $0x2a8] sm:%s649] %v998
          %v1000 = vld [vmem:[%s656 + $0x2ac] sm:%s649]
          %1001 = vst [vmem:[%s657 + $0x2ac] sm:%s649] %v1000
          %v1002 = vld [vmem:[%s656 + $0x2b0] sm:%s649]
          %1003 = vst [vmem:[%s657 + $0x2b0] sm:%s649] %v1002
          %v1004 = vld [vmem:[%s656 + $0x2b8] sm:%s649]
          %1005 = vst [vmem:[%s657 + $0x2b4] sm:%s649] %v1004
          %v1006 = vld [vmem:[%s656 + $0x2b4] sm:%s649]
          %1007 = vst [vmem:[%s657 + $0x2b8] sm:%s649] %v1006
          %v1008 = vld [vmem:[%s656 + $0x2bc] sm:%s649]
          %1009 = vst [vmem:[%s657 + $0x2bc] sm:%s649] %v1008
          %v1010 = vld [vmem:[%s656 + $0x2c0] sm:%s649]
          %1011 = vst [vmem:[%s657 + $0x2c0] sm:%s649] %v1010
          %v1012 = vld [vmem:[%s656 + $0x2c8] sm:%s649]
          %1013 = vst [vmem:[%s657 + $0x2c4] sm:%s649] %v1012
          %v1014 = vld [vmem:[%s656 + $0x2c4] sm:%s649]
          %1015 = vst [vmem:[%s657 + $0x2c8] sm:%s649] %v1014
          %v1016 = vld [vmem:[%s656 + $0x2cc] sm:%s649]
          %1017 = vst [vmem:[%s657 + $0x2cc] sm:%s649] %v1016
          %v1018 = vld [vmem:[%s656 + $0x2d0] sm:%s649]
          %1019 = vst [vmem:[%s657 + $0x2d0] sm:%s649] %v1018
          %v1020 = vld [vmem:[%s656 + $0x2d8] sm:%s649]
          %1021 = vst [vmem:[%s657 + $0x2d4] sm:%s649] %v1020
          %v1022 = vld [vmem:[%s656 + $0x2d4] sm:%s649]
          %1023 = vst [vmem:[%s657 + $0x2d8] sm:%s649] %v1022
          %v1024 = vld [vmem:[%s656 + $0x2dc] sm:%s649]
          %1025 = vst [vmem:[%s657 + $0x2dc] sm:%s649] %v1024
          %v1026 = vld [vmem:[%s656 + $0x2e0] sm:%s649]
          %1027 = vst [vmem:[%s657 + $0x2e0] sm:%s649] %v1026
          %v1028 = vld [vmem:[%s656 + $0x2e8] sm:%s649]
          %1029 = vst [vmem:[%s657 + $0x2e4] sm:%s649] %v1028
          %v1030 = vld [vmem:[%s656 + $0x2e4] sm:%s649]
          %1031 = vst [vmem:[%s657 + $0x2e8] sm:%s649] %v1030
          %v1032 = vld [vmem:[%s656 + $0x2ec] sm:%s649]
          %1033 = vst [vmem:[%s657 + $0x2ec] sm:%s649] %v1032
          %v1034 = vld [vmem:[%s656 + $0x2f0] sm:%s649]
          %1035 = vst [vmem:[%s657 + $0x2f0] sm:%s649] %v1034
          %v1036 = vld [vmem:[%s656 + $0x2f8] sm:%s649]
          %1037 = vst [vmem:[%s657 + $0x2f4] sm:%s649] %v1036
          %v1038 = vld [vmem:[%s656 + $0x2f4] sm:%s649]
          %1039 = vst [vmem:[%s657 + $0x2f8] sm:%s649] %v1038
          %v1040 = vld [vmem:[%s656 + $0x2fc] sm:%s649]
          %1041 = vst [vmem:[%s657 + $0x2fc] sm:%s649] %v1040
          %v1042 = vld [vmem:[%s656 + $0x300] sm:%s649]
          %1043 = vst [vmem:[%s657 + $0x300] sm:%s649] %v1042
          %v1044 = vld [vmem:[%s656 + $0x308] sm:%s649]
          %1045 = vst [vmem:[%s657 + $0x304] sm:%s649] %v1044
          %v1046 = vld [vmem:[%s656 + $0x304] sm:%s649]
          %1047 = vst [vmem:[%s657 + $0x308] sm:%s649] %v1046
          %v1048 = vld [vmem:[%s656 + $0x30c] sm:%s649]
          %1049 = vst [vmem:[%s657 + $0x30c] sm:%s649] %v1048
          %v1050 = vld [vmem:[%s656 + $0x310] sm:%s649]
          %1051 = vst [vmem:[%s657 + $0x310] sm:%s649] %v1050
          %v1052 = vld [vmem:[%s656 + $0x318] sm:%s649]
          %1053 = vst [vmem:[%s657 + $0x314] sm:%s649] %v1052
          %v1054 = vld [vmem:[%s656 + $0x314] sm:%s649]
          %1055 = vst [vmem:[%s657 + $0x318] sm:%s649] %v1054
          %v1056 = vld [vmem:[%s656 + $0x31c] sm:%s649]
          %1057 = vst [vmem:[%s657 + $0x31c] sm:%s649] %v1056
          %v1058 = vld [vmem:[%s656 + $0x320] sm:%s649]
          %1059 = vst [vmem:[%s657 + $0x320] sm:%s649] %v1058
          %v1060 = vld [vmem:[%s656 + $0x328] sm:%s649]
          %1061 = vst [vmem:[%s657 + $0x324] sm:%s649] %v1060
          %v1062 = vld [vmem:[%s656 + $0x324] sm:%s649]
          %1063 = vst [vmem:[%s657 + $0x328] sm:%s649] %v1062
          %v1064 = vld [vmem:[%s656 + $0x32c] sm:%s649]
          %1065 = vst [vmem:[%s657 + $0x32c] sm:%s649] %v1064
          %v1066 = vld [vmem:[%s656 + $0x330] sm:%s649]
          %1067 = vst [vmem:[%s657 + $0x330] sm:%s649] %v1066
          %v1068 = vld [vmem:[%s656 + $0x338] sm:%s649]
          %1069 = vst [vmem:[%s657 + $0x334] sm:%s649] %v1068
          %v1070 = vld [vmem:[%s656 + $0x334] sm:%s649]
          %1071 = vst [vmem:[%s657 + $0x338] sm:%s649] %v1070
          %v1072 = vld [vmem:[%s656 + $0x33c] sm:%s649]
          %1073 = vst [vmem:[%s657 + $0x33c] sm:%s649] %v1072
          %v1074 = vld [vmem:[%s656 + $0x340] sm:%s649]
          %1075 = vst [vmem:[%s657 + $0x340] sm:%s649] %v1074
          %v1076 = vld [vmem:[%s656 + $0x348] sm:%s649]
          %1077 = vst [vmem:[%s657 + $0x344] sm:%s649] %v1076
          %v1078 = vld [vmem:[%s656 + $0x344] sm:%s649]
          %1079 = vst [vmem:[%s657 + $0x348] sm:%s649] %v1078
          %v1080 = vld [vmem:[%s656 + $0x34c] sm:%s649]
          %1081 = vst [vmem:[%s657 + $0x34c] sm:%s649] %v1080
          %v1082 = vld [vmem:[%s656 + $0x350] sm:%s649]
          %1083 = vst [vmem:[%s657 + $0x350] sm:%s649] %v1082
          %v1084 = vld [vmem:[%s656 + $0x358] sm:%s649]
          %1085 = vst [vmem:[%s657 + $0x354] sm:%s649] %v1084
          %v1086 = vld [vmem:[%s656 + $0x354] sm:%s649]
          %1087 = vst [vmem:[%s657 + $0x358] sm:%s649] %v1086
          %v1088 = vld [vmem:[%s656 + $0x35c] sm:%s649]
          %1089 = vst [vmem:[%s657 + $0x35c] sm:%s649] %v1088
          %v1090 = vld [vmem:[%s656 + $0x360] sm:%s649]
          %1091 = vst [vmem:[%s657 + $0x360] sm:%s649] %v1090
          %v1092 = vld [vmem:[%s656 + $0x368] sm:%s649]
          %1093 = vst [vmem:[%s657 + $0x364] sm:%s649] %v1092
          %v1094 = vld [vmem:[%s656 + $0x364] sm:%s649]
          %1095 = vst [vmem:[%s657 + $0x368] sm:%s649] %v1094
          %v1096 = vld [vmem:[%s656 + $0x36c] sm:%s649]
          %1097 = vst [vmem:[%s657 + $0x36c] sm:%s649] %v1096
          %v1098 = vld [vmem:[%s656 + $0x370] sm:%s649]
          %1099 = vst [vmem:[%s657 + $0x370] sm:%s649] %v1098
          %v1100 = vld [vmem:[%s656 + $0x378] sm:%s649]
          %1101 = vst [vmem:[%s657 + $0x374] sm:%s649] %v1100
          %v1102 = vld [vmem:[%s656 + $0x374] sm:%s649]
          %1103 = vst [vmem:[%s657 + $0x378] sm:%s649] %v1102
          %v1104 = vld [vmem:[%s656 + $0x37c] sm:%s649]
          %1105 = vst [vmem:[%s657 + $0x37c] sm:%s649] %v1104
          %v1106 = vld [vmem:[%s656 + $0x380] sm:%s649]
          %1107 = vst [vmem:[%s657 + $0x380] sm:%s649] %v1106
          %v1108 = vld [vmem:[%s656 + $0x388] sm:%s649]
          %1109 = vst [vmem:[%s657 + $0x384] sm:%s649] %v1108
          %v1110 = vld [vmem:[%s656 + $0x384] sm:%s649]
          %1111 = vst [vmem:[%s657 + $0x388] sm:%s649] %v1110
          %v1112 = vld [vmem:[%s656 + $0x38c] sm:%s649]
          %1113 = vst [vmem:[%s657 + $0x38c] sm:%s649] %v1112
          %v1114 = vld [vmem:[%s656 + $0x390] sm:%s649]
          %1115 = vst [vmem:[%s657 + $0x390] sm:%s649] %v1114
          %v1116 = vld [vmem:[%s656 + $0x398] sm:%s649]
          %1117 = vst [vmem:[%s657 + $0x394] sm:%s649] %v1116
          %v1118 = vld [vmem:[%s656 + $0x394] sm:%s649]
          %1119 = vst [vmem:[%s657 + $0x398] sm:%s649] %v1118
          %v1120 = vld [vmem:[%s656 + $0x39c] sm:%s649]
          %1121 = vst [vmem:[%s657 + $0x39c] sm:%s649] %v1120
          %v1122 = vld [vmem:[%s656 + $0x3a0] sm:%s649]
          %1123 = vst [vmem:[%s657 + $0x3a0] sm:%s649] %v1122
          %v1124 = vld [vmem:[%s656 + $0x3a8] sm:%s649]
          %1125 = vst [vmem:[%s657 + $0x3a4] sm:%s649] %v1124
          %v1126 = vld [vmem:[%s656 + $0x3a4] sm:%s649]
          %1127 = vst [vmem:[%s657 + $0x3a8] sm:%s649] %v1126
          %v1128 = vld [vmem:[%s656 + $0x3ac] sm:%s649]
          %1129 = vst [vmem:[%s657 + $0x3ac] sm:%s649] %v1128
          %v1130 = vld [vmem:[%s656 + $0x3b0] sm:%s649]
          %1131 = vst [vmem:[%s657 + $0x3b0] sm:%s649] %v1130
          %v1132 = vld [vmem:[%s656 + $0x3b8] sm:%s649]
          %1133 = vst [vmem:[%s657 + $0x3b4] sm:%s649] %v1132
          %v1134 = vld [vmem:[%s656 + $0x3b4] sm:%s649]
          %1135 = vst [vmem:[%s657 + $0x3b8] sm:%s649] %v1134
          %v1136 = vld [vmem:[%s656 + $0x3bc] sm:%s649]
          %1137 = vst [vmem:[%s657 + $0x3bc] sm:%s649] %v1136
          %v1138 = vld [vmem:[%s656 + $0x3c0] sm:%s649]
          %1139 = vst [vmem:[%s657 + $0x3c0] sm:%s649] %v1138
          %v1140 = vld [vmem:[%s656 + $0x3c8] sm:%s649]
          %1141 = vst [vmem:[%s657 + $0x3c4] sm:%s649] %v1140
          %v1142 = vld [vmem:[%s656 + $0x3c4] sm:%s649]
          %1143 = vst [vmem:[%s657 + $0x3c8] sm:%s649] %v1142
          %v1144 = vld [vmem:[%s656 + $0x3cc] sm:%s649]
          %1145 = vst [vmem:[%s657 + $0x3cc] sm:%s649] %v1144
          %v1146 = vld [vmem:[%s656 + $0x3d0] sm:%s649]
          %1147 = vst [vmem:[%s657 + $0x3d0] sm:%s649] %v1146
          %v1148 = vld [vmem:[%s656 + $0x3d8] sm:%s649]
          %1149 = vst [vmem:[%s657 + $0x3d4] sm:%s649] %v1148
          %v1150 = vld [vmem:[%s656 + $0x3d4] sm:%s649]
          %1151 = vst [vmem:[%s657 + $0x3d8] sm:%s649] %v1150
          %v1152 = vld [vmem:[%s656 + $0x3dc] sm:%s649]
          %1153 = vst [vmem:[%s657 + $0x3dc] sm:%s649] %v1152
          %v1154 = vld [vmem:[%s656 + $0x3e0] sm:%s649]
          %1155 = vst [vmem:[%s657 + $0x3e0] sm:%s649] %v1154
          %v1156 = vld [vmem:[%s656 + $0x3e8] sm:%s649]
          %1157 = vst [vmem:[%s657 + $0x3e4] sm:%s649] %v1156
          %v1158 = vld [vmem:[%s656 + $0x3e4] sm:%s649]
          %1159 = vst [vmem:[%s657 + $0x3e8] sm:%s649] %v1158
          %v1160 = vld [vmem:[%s656 + $0x3ec] sm:%s649]
          %1161 = vst [vmem:[%s657 + $0x3ec] sm:%s649] %v1160
          %v1162 = vld [vmem:[%s656 + $0x3f0] sm:%s649]
          %1163 = vst [vmem:[%s657 + $0x3f0] sm:%s649] %v1162
          %v1164 = vld [vmem:[%s656 + $0x3f8] sm:%s649]
          %1165 = vst [vmem:[%s657 + $0x3f4] sm:%s649] %v1164
          %v1166 = vld [vmem:[%s656 + $0x3f4] sm:%s649]
          %1167 = vst [vmem:[%s657 + $0x3f8] sm:%s649] %v1166
          %v1168 = vld [vmem:[%s656 + $0x3fc] sm:%s649]
          %1169 = vst [vmem:[%s657 + $0x3fc] sm:%s649] %v1168
          %v1170 = vld [vmem:[%s656 + $0x400] sm:%s649]
          %1171 = vst [vmem:[%s657 + $0x400] sm:%s649] %v1170
          %v1172 = vld [vmem:[%s656 + $0x408] sm:%s649]
          %1173 = vst [vmem:[%s657 + $0x404] sm:%s649] %v1172
          %v1174 = vld [vmem:[%s656 + $0x404] sm:%s649]
          %1175 = vst [vmem:[%s657 + $0x408] sm:%s649] %v1174
          %v1176 = vld [vmem:[%s656 + $0x40c] sm:%s649]
          %1177 = vst [vmem:[%s657 + $0x40c] sm:%s649] %v1176
          %v1178 = vld [vmem:[%s656 + $0x410] sm:%s649]
          %1179 = vst [vmem:[%s657 + $0x410] sm:%s649] %v1178
          %v1180 = vld [vmem:[%s656 + $0x418] sm:%s649]
          %1181 = vst [vmem:[%s657 + $0x414] sm:%s649] %v1180
          %v1182 = vld [vmem:[%s656 + $0x414] sm:%s649]
          %1183 = vst [vmem:[%s657 + $0x418] sm:%s649] %v1182
          %v1184 = vld [vmem:[%s656 + $0x41c] sm:%s649]
          %1185 = vst [vmem:[%s657 + $0x41c] sm:%s649] %v1184
          %v1186 = vld [vmem:[%s656 + $0x420] sm:%s649]
          %1187 = vst [vmem:[%s657 + $0x420] sm:%s649] %v1186
          %v1188 = vld [vmem:[%s656 + $0x428] sm:%s649]
          %1189 = vst [vmem:[%s657 + $0x424] sm:%s649] %v1188
          %v1190 = vld [vmem:[%s656 + $0x424] sm:%s649]
          %1191 = vst [vmem:[%s657 + $0x428] sm:%s649] %v1190
          %v1192 = vld [vmem:[%s656 + $0x42c] sm:%s649]
          %1193 = vst [vmem:[%s657 + $0x42c] sm:%s649] %v1192
          %v1194 = vld [vmem:[%s656 + $0x430] sm:%s649]
          %1195 = vst [vmem:[%s657 + $0x430] sm:%s649] %v1194
          %v1196 = vld [vmem:[%s656 + $0x438] sm:%s649]
          %1197 = vst [vmem:[%s657 + $0x434] sm:%s649] %v1196
          %v1198 = vld [vmem:[%s656 + $0x434] sm:%s649]
          %1199 = vst [vmem:[%s657 + $0x438] sm:%s649] %v1198
          %v1200 = vld [vmem:[%s656 + $0x43c] sm:%s649]
          %1201 = vst [vmem:[%s657 + $0x43c] sm:%s649] %v1200
          %v1202 = vld [vmem:[%s656 + $0x440] sm:%s649]
          %1203 = vst [vmem:[%s657 + $0x440] sm:%s649] %v1202
          %v1204 = vld [vmem:[%s656 + $0x448] sm:%s649]
          %1205 = vst [vmem:[%s657 + $0x444] sm:%s649] %v1204
          %v1206 = vld [vmem:[%s656 + $0x444] sm:%s649]
          %1207 = vst [vmem:[%s657 + $0x448] sm:%s649] %v1206
          %v1208 = vld [vmem:[%s656 + $0x44c] sm:%s649]
          %1209 = vst [vmem:[%s657 + $0x44c] sm:%s649] %v1208
          %v1210 = vld [vmem:[%s656 + $0x450] sm:%s649]
          %1211 = vst [vmem:[%s657 + $0x450] sm:%s649] %v1210
          %v1212 = vld [vmem:[%s656 + $0x458] sm:%s649]
          %1213 = vst [vmem:[%s657 + $0x454] sm:%s649] %v1212
          %v1214 = vld [vmem:[%s656 + $0x454] sm:%s649]
          %1215 = vst [vmem:[%s657 + $0x458] sm:%s649] %v1214
          %v1216 = vld [vmem:[%s656 + $0x45c] sm:%s649]
          %1217 = vst [vmem:[%s657 + $0x45c] sm:%s649] %v1216
          %v1218 = vld [vmem:[%s656 + $0x460] sm:%s649]
          %1219 = vst [vmem:[%s657 + $0x460] sm:%s649] %v1218
          %v1220 = vld [vmem:[%s656 + $0x468] sm:%s649]
          %1221 = vst [vmem:[%s657 + $0x464] sm:%s649] %v1220
          %v1222 = vld [vmem:[%s656 + $0x464] sm:%s649]
          %1223 = vst [vmem:[%s657 + $0x468] sm:%s649] %v1222
          %v1224 = vld [vmem:[%s656 + $0x46c] sm:%s649]
          %1225 = vst [vmem:[%s657 + $0x46c] sm:%s649] %v1224
          %v1226 = vld [vmem:[%s656 + $0x470] sm:%s649]
          %1227 = vst [vmem:[%s657 + $0x470] sm:%s649] %v1226
          %v1228 = vld [vmem:[%s656 + $0x478] sm:%s649]
          %1229 = vst [vmem:[%s657 + $0x474] sm:%s649] %v1228
          %v1230 = vld [vmem:[%s656 + $0x474] sm:%s649]
          %1231 = vst [vmem:[%s657 + $0x478] sm:%s649] %v1230
          %v1232 = vld [vmem:[%s656 + $0x47c] sm:%s649]
          %1233 = vst [vmem:[%s657 + $0x47c] sm:%s649] %v1232
        $region72: #{neural_net_forward.1} parent=59 // loop_footer
          %s655 = sadd.s32 1, %s651
        $region73: #{neural_net_forward.1} parent=59 // loop_footer_branch
          %650 = sbr.rel target = $region69
        $region74: #{neural_net_forward.1} parent=59 // loop_exit
          _
      $region60: #{neural_net_forward.1} parent=44 // pred_fallthru
        _
    $region45: #{neural_net_forward.1} parent=1 // pred_fallthru
      _
    // Predicated region
    $region46: #{neural_net_forward.1} parent=1 // pred_check
      %p43 = pneg %p39
    $region47: #{neural_net_forward.1} parent=1 // pred_check_branch
      %45 = sbr.rel (%p43) target = $region49
    $region48: #{neural_net_forward.1} parent=1 // pred_region
      %s46 = sshllo.u32 0, 4
      loop: start=0, step=1, limit=1
      $region50: #{neural_net_forward.1} parent=48 // loop_pre_header
        _
      $region51: #{neural_net_forward.1} parent=48 // loop_header
        %s48 = sphi 0, %s52
        %p49 = scmp.ge.s32.totalorder %s48, 1
        %s53 = sphi %s7, %s7
        %s54 = sphi [#allocation9], [#allocation9]
      $region52: #{neural_net_forward.1} parent=48 // loop_header_branch
        %51 = sbr.rel (%p49) target = $region56
      $region53: #{neural_net_forward.1} parent=48 // loop_body
        %v55 = vld [vmem:[%s53] sm:%s46]
        %56 = vst [vmem:[%s54] sm:%s46] %v55
        %v57 = vld [vmem:[%s53 + $0x8] sm:%s46]
        %58 = vst [vmem:[%s54 + $0x4] sm:%s46] %v57
        %v59 = vld [vmem:[%s53 + $0x4] sm:%s46]
        %60 = vst [vmem:[%s54 + $0x8] sm:%s46] %v59
        %v61 = vld [vmem:[%s53 + $0xc] sm:%s46]
        %62 = vst [vmem:[%s54 + $0xc] sm:%s46] %v61
        %v63 = vld [vmem:[%s53 + $0x10] sm:%s46]
        %64 = vst [vmem:[%s54 + $0x10] sm:%s46] %v63
        %v65 = vld [vmem:[%s53 + $0x18] sm:%s46]
        %66 = vst [vmem:[%s54 + $0x14] sm:%s46] %v65
        %v67 = vld [vmem:[%s53 + $0x14] sm:%s46]
        %68 = vst [vmem:[%s54 + $0x18] sm:%s46] %v67
        %v69 = vld [vmem:[%s53 + $0x1c] sm:%s46]
        %70 = vst [vmem:[%s54 + $0x1c] sm:%s46] %v69
        %v71 = vld [vmem:[%s53 + $0x20] sm:%s46]
        %72 = vst [vmem:[%s54 + $0x20] sm:%s46] %v71
        %v73 = vld [vmem:[%s53 + $0x28] sm:%s46]
        %74 = vst [vmem:[%s54 + $0x24] sm:%s46] %v73
        %v75 = vld [vmem:[%s53 + $0x24] sm:%s46]
        %76 = vst [vmem:[%s54 + $0x28] sm:%s46] %v75
        %v77 = vld [vmem:[%s53 + $0x2c] sm:%s46]
        %78 = vst [vmem:[%s54 + $0x2c] sm:%s46] %v77
        %v79 = vld [vmem:[%s53 + $0x30] sm:%s46]
        %80 = vst [vmem:[%s54 + $0x30] sm:%s46] %v79
        %v81 = vld [vmem:[%s53 + $0x38] sm:%s46]
        %82 = vst [vmem:[%s54 + $0x34] sm:%s46] %v81
        %v83 = vld [vmem:[%s53 + $0x34] sm:%s46]
        %84 = vst [vmem:[%s54 + $0x38] sm:%s46] %v83
        %v85 = vld [vmem:[%s53 + $0x3c] sm:%s46]
        %86 = vst [vmem:[%s54 + $0x3c] sm:%s46] %v85
        %v87 = vld [vmem:[%s53 + $0x40] sm:%s46]
        %88 = vst [vmem:[%s54 + $0x40] sm:%s46] %v87
        %v89 = vld [vmem:[%s53 + $0x48] sm:%s46]
        %90 = vst [vmem:[%s54 + $0x44] sm:%s46] %v89
        %v91 = vld [vmem:[%s53 + $0x44] sm:%s46]
        %92 = vst [vmem:[%s54 + $0x48] sm:%s46] %v91
        %v93 = vld [vmem:[%s53 + $0x4c] sm:%s46]
        %94 = vst [vmem:[%s54 + $0x4c] sm:%s46] %v93
        %v95 = vld [vmem:[%s53 + $0x50] sm:%s46]
        %96 = vst [vmem:[%s54 + $0x50] sm:%s46] %v95
        %v97 = vld [vmem:[%s53 + $0x58] sm:%s46]
        %98 = vst [vmem:[%s54 + $0x54] sm:%s46] %v97
        %v99 = vld [vmem:[%s53 + $0x54] sm:%s46]
        %100 = vst [vmem:[%s54 + $0x58] sm:%s46] %v99
        %v101 = vld [vmem:[%s53 + $0x5c] sm:%s46]
        %102 = vst [vmem:[%s54 + $0x5c] sm:%s46] %v101
        %v103 = vld [vmem:[%s53 + $0x60] sm:%s46]
        %104 = vst [vmem:[%s54 + $0x60] sm:%s46] %v103
        %v105 = vld [vmem:[%s53 + $0x68] sm:%s46]
        %106 = vst [vmem:[%s54 + $0x64] sm:%s46] %v105
        %v107 = vld [vmem:[%s53 + $0x64] sm:%s46]
        %108 = vst [vmem:[%s54 + $0x68] sm:%s46] %v107
        %v109 = vld [vmem:[%s53 + $0x6c] sm:%s46]
        %110 = vst [vmem:[%s54 + $0x6c] sm:%s46] %v109
        %v111 = vld [vmem:[%s53 + $0x70] sm:%s46]
        %112 = vst [vmem:[%s54 + $0x70] sm:%s46] %v111
        %v113 = vld [vmem:[%s53 + $0x78] sm:%s46]
        %114 = vst [vmem:[%s54 + $0x74] sm:%s46] %v113
        %v115 = vld [vmem:[%s53 + $0x74] sm:%s46]
        %116 = vst [vmem:[%s54 + $0x78] sm:%s46] %v115
        %v117 = vld [vmem:[%s53 + $0x7c] sm:%s46]
        %118 = vst [vmem:[%s54 + $0x7c] sm:%s46] %v117
        %v119 = vld [vmem:[%s53 + $0x80] sm:%s46]
        %120 = vst [vmem:[%s54 + $0x80] sm:%s46] %v119
        %v121 = vld [vmem:[%s53 + $0x88] sm:%s46]
        %122 = vst [vmem:[%s54 + $0x84] sm:%s46] %v121
        %v123 = vld [vmem:[%s53 + $0x84] sm:%s46]
        %124 = vst [vmem:[%s54 + $0x88] sm:%s46] %v123
        %v125 = vld [vmem:[%s53 + $0x8c] sm:%s46]
        %126 = vst [vmem:[%s54 + $0x8c] sm:%s46] %v125
        %v127 = vld [vmem:[%s53 + $0x90] sm:%s46]
        %128 = vst [vmem:[%s54 + $0x90] sm:%s46] %v127
        %v129 = vld [vmem:[%s53 + $0x98] sm:%s46]
        %130 = vst [vmem:[%s54 + $0x94] sm:%s46] %v129
        %v131 = vld [vmem:[%s53 + $0x94] sm:%s46]
        %132 = vst [vmem:[%s54 + $0x98] sm:%s46] %v131
        %v133 = vld [vmem:[%s53 + $0x9c] sm:%s46]
        %134 = vst [vmem:[%s54 + $0x9c] sm:%s46] %v133
        %v135 = vld [vmem:[%s53 + $0xa0] sm:%s46]
        %136 = vst [vmem:[%s54 + $0xa0] sm:%s46] %v135
        %v137 = vld [vmem:[%s53 + $0xa8] sm:%s46]
        %138 = vst [vmem:[%s54 + $0xa4] sm:%s46] %v137
        %v139 = vld [vmem:[%s53 + $0xa4] sm:%s46]
        %140 = vst [vmem:[%s54 + $0xa8] sm:%s46] %v139
        %v141 = vld [vmem:[%s53 + $0xac] sm:%s46]
        %142 = vst [vmem:[%s54 + $0xac] sm:%s46] %v141
        %v143 = vld [vmem:[%s53 + $0xb0] sm:%s46]
        %144 = vst [vmem:[%s54 + $0xb0] sm:%s46] %v143
        %v145 = vld [vmem:[%s53 + $0xb8] sm:%s46]
        %146 = vst [vmem:[%s54 + $0xb4] sm:%s46] %v145
        %v147 = vld [vmem:[%s53 + $0xb4] sm:%s46]
        %148 = vst [vmem:[%s54 + $0xb8] sm:%s46] %v147
        %v149 = vld [vmem:[%s53 + $0xbc] sm:%s46]
        %150 = vst [vmem:[%s54 + $0xbc] sm:%s46] %v149
        %v151 = vld [vmem:[%s53 + $0xc0] sm:%s46]
        %152 = vst [vmem:[%s54 + $0xc0] sm:%s46] %v151
        %v153 = vld [vmem:[%s53 + $0xc8] sm:%s46]
        %154 = vst [vmem:[%s54 + $0xc4] sm:%s46] %v153
        %v155 = vld [vmem:[%s53 + $0xc4] sm:%s46]
        %156 = vst [vmem:[%s54 + $0xc8] sm:%s46] %v155
        %v157 = vld [vmem:[%s53 + $0xcc] sm:%s46]
        %158 = vst [vmem:[%s54 + $0xcc] sm:%s46] %v157
        %v159 = vld [vmem:[%s53 + $0xd0] sm:%s46]
        %160 = vst [vmem:[%s54 + $0xd0] sm:%s46] %v159
        %v161 = vld [vmem:[%s53 + $0xd8] sm:%s46]
        %162 = vst [vmem:[%s54 + $0xd4] sm:%s46] %v161
        %v163 = vld [vmem:[%s53 + $0xd4] sm:%s46]
        %164 = vst [vmem:[%s54 + $0xd8] sm:%s46] %v163
        %v165 = vld [vmem:[%s53 + $0xdc] sm:%s46]
        %166 = vst [vmem:[%s54 + $0xdc] sm:%s46] %v165
        %v167 = vld [vmem:[%s53 + $0xe0] sm:%s46]
        %168 = vst [vmem:[%s54 + $0xe0] sm:%s46] %v167
        %v169 = vld [vmem:[%s53 + $0xe8] sm:%s46]
        %170 = vst [vmem:[%s54 + $0xe4] sm:%s46] %v169
        %v171 = vld [vmem:[%s53 + $0xe4] sm:%s46]
        %172 = vst [vmem:[%s54 + $0xe8] sm:%s46] %v171
        %v173 = vld [vmem:[%s53 + $0xec] sm:%s46]
        %174 = vst [vmem:[%s54 + $0xec] sm:%s46] %v173
        %v175 = vld [vmem:[%s53 + $0xf0] sm:%s46]
        %176 = vst [vmem:[%s54 + $0xf0] sm:%s46] %v175
        %v177 = vld [vmem:[%s53 + $0xf8] sm:%s46]
        %178 = vst [vmem:[%s54 + $0xf4] sm:%s46] %v177
        %v179 = vld [vmem:[%s53 + $0xf4] sm:%s46]
        %180 = vst [vmem:[%s54 + $0xf8] sm:%s46] %v179
        %v181 = vld [vmem:[%s53 + $0xfc] sm:%s46]
        %182 = vst [vmem:[%s54 + $0xfc] sm:%s46] %v181
        %v183 = vld [vmem:[%s53 + $0x100] sm:%s46]
        %184 = vst [vmem:[%s54 + $0x100] sm:%s46] %v183
        %v185 = vld [vmem:[%s53 + $0x108] sm:%s46]
        %186 = vst [vmem:[%s54 + $0x104] sm:%s46] %v185
        %v187 = vld [vmem:[%s53 + $0x104] sm:%s46]
        %188 = vst [vmem:[%s54 + $0x108] sm:%s46] %v187
        %v189 = vld [vmem:[%s53 + $0x10c] sm:%s46]
        %190 = vst [vmem:[%s54 + $0x10c] sm:%s46] %v189
        %v191 = vld [vmem:[%s53 + $0x110] sm:%s46]
        %192 = vst [vmem:[%s54 + $0x110] sm:%s46] %v191
        %v193 = vld [vmem:[%s53 + $0x118] sm:%s46]
        %194 = vst [vmem:[%s54 + $0x114] sm:%s46] %v193
        %v195 = vld [vmem:[%s53 + $0x114] sm:%s46]
        %196 = vst [vmem:[%s54 + $0x118] sm:%s46] %v195
        %v197 = vld [vmem:[%s53 + $0x11c] sm:%s46]
        %198 = vst [vmem:[%s54 + $0x11c] sm:%s46] %v197
        %v199 = vld [vmem:[%s53 + $0x120] sm:%s46]
        %200 = vst [vmem:[%s54 + $0x120] sm:%s46] %v199
        %v201 = vld [vmem:[%s53 + $0x128] sm:%s46]
        %202 = vst [vmem:[%s54 + $0x124] sm:%s46] %v201
        %v203 = vld [vmem:[%s53 + $0x124] sm:%s46]
        %204 = vst [vmem:[%s54 + $0x128] sm:%s46] %v203
        %v205 = vld [vmem:[%s53 + $0x12c] sm:%s46]
        %206 = vst [vmem:[%s54 + $0x12c] sm:%s46] %v205
        %v207 = vld [vmem:[%s53 + $0x130] sm:%s46]
        %208 = vst [vmem:[%s54 + $0x130] sm:%s46] %v207
        %v209 = vld [vmem:[%s53 + $0x138] sm:%s46]
        %210 = vst [vmem:[%s54 + $0x134] sm:%s46] %v209
        %v211 = vld [vmem:[%s53 + $0x134] sm:%s46]
        %212 = vst [vmem:[%s54 + $0x138] sm:%s46] %v211
        %v213 = vld [vmem:[%s53 + $0x13c] sm:%s46]
        %214 = vst [vmem:[%s54 + $0x13c] sm:%s46] %v213
        %v215 = vld [vmem:[%s53 + $0x140] sm:%s46]
        %216 = vst [vmem:[%s54 + $0x140] sm:%s46] %v215
        %v217 = vld [vmem:[%s53 + $0x148] sm:%s46]
        %218 = vst [vmem:[%s54 + $0x144] sm:%s46] %v217
        %v219 = vld [vmem:[%s53 + $0x144] sm:%s46]
        %220 = vst [vmem:[%s54 + $0x148] sm:%s46] %v219
        %v221 = vld [vmem:[%s53 + $0x14c] sm:%s46]
        %222 = vst [vmem:[%s54 + $0x14c] sm:%s46] %v221
        %v223 = vld [vmem:[%s53 + $0x150] sm:%s46]
        %224 = vst [vmem:[%s54 + $0x150] sm:%s46] %v223
        %v225 = vld [vmem:[%s53 + $0x158] sm:%s46]
        %226 = vst [vmem:[%s54 + $0x154] sm:%s46] %v225
        %v227 = vld [vmem:[%s53 + $0x154] sm:%s46]
        %228 = vst [vmem:[%s54 + $0x158] sm:%s46] %v227
        %v229 = vld [vmem:[%s53 + $0x15c] sm:%s46]
        %230 = vst [vmem:[%s54 + $0x15c] sm:%s46] %v229
        %v231 = vld [vmem:[%s53 + $0x160] sm:%s46]
        %232 = vst [vmem:[%s54 + $0x160] sm:%s46] %v231
        %v233 = vld [vmem:[%s53 + $0x168] sm:%s46]
        %234 = vst [vmem:[%s54 + $0x164] sm:%s46] %v233
        %v235 = vld [vmem:[%s53 + $0x164] sm:%s46]
        %236 = vst [vmem:[%s54 + $0x168] sm:%s46] %v235
        %v237 = vld [vmem:[%s53 + $0x16c] sm:%s46]
        %238 = vst [vmem:[%s54 + $0x16c] sm:%s46] %v237
        %v239 = vld [vmem:[%s53 + $0x170] sm:%s46]
        %240 = vst [vmem:[%s54 + $0x170] sm:%s46] %v239
        %v241 = vld [vmem:[%s53 + $0x178] sm:%s46]
        %242 = vst [vmem:[%s54 + $0x174] sm:%s46] %v241
        %v243 = vld [vmem:[%s53 + $0x174] sm:%s46]
        %244 = vst [vmem:[%s54 + $0x178] sm:%s46] %v243
        %v245 = vld [vmem:[%s53 + $0x17c] sm:%s46]
        %246 = vst [vmem:[%s54 + $0x17c] sm:%s46] %v245
        %v247 = vld [vmem:[%s53 + $0x180] sm:%s46]
        %248 = vst [vmem:[%s54 + $0x180] sm:%s46] %v247
        %v249 = vld [vmem:[%s53 + $0x188] sm:%s46]
        %250 = vst [vmem:[%s54 + $0x184] sm:%s46] %v249
        %v251 = vld [vmem:[%s53 + $0x184] sm:%s46]
        %252 = vst [vmem:[%s54 + $0x188] sm:%s46] %v251
        %v253 = vld [vmem:[%s53 + $0x18c] sm:%s46]
        %254 = vst [vmem:[%s54 + $0x18c] sm:%s46] %v253
        %v255 = vld [vmem:[%s53 + $0x190] sm:%s46]
        %256 = vst [vmem:[%s54 + $0x190] sm:%s46] %v255
        %v257 = vld [vmem:[%s53 + $0x198] sm:%s46]
        %258 = vst [vmem:[%s54 + $0x194] sm:%s46] %v257
        %v259 = vld [vmem:[%s53 + $0x194] sm:%s46]
        %260 = vst [vmem:[%s54 + $0x198] sm:%s46] %v259
        %v261 = vld [vmem:[%s53 + $0x19c] sm:%s46]
        %262 = vst [vmem:[%s54 + $0x19c] sm:%s46] %v261
        %v263 = vld [vmem:[%s53 + $0x1a0] sm:%s46]
        %264 = vst [vmem:[%s54 + $0x1a0] sm:%s46] %v263
        %v265 = vld [vmem:[%s53 + $0x1a8] sm:%s46]
        %266 = vst [vmem:[%s54 + $0x1a4] sm:%s46] %v265
        %v267 = vld [vmem:[%s53 + $0x1a4] sm:%s46]
        %268 = vst [vmem:[%s54 + $0x1a8] sm:%s46] %v267
        %v269 = vld [vmem:[%s53 + $0x1ac] sm:%s46]
        %270 = vst [vmem:[%s54 + $0x1ac] sm:%s46] %v269
        %v271 = vld [vmem:[%s53 + $0x1b0] sm:%s46]
        %272 = vst [vmem:[%s54 + $0x1b0] sm:%s46] %v271
        %v273 = vld [vmem:[%s53 + $0x1b8] sm:%s46]
        %274 = vst [vmem:[%s54 + $0x1b4] sm:%s46] %v273
        %v275 = vld [vmem:[%s53 + $0x1b4] sm:%s46]
        %276 = vst [vmem:[%s54 + $0x1b8] sm:%s46] %v275
        %v277 = vld [vmem:[%s53 + $0x1bc] sm:%s46]
        %278 = vst [vmem:[%s54 + $0x1bc] sm:%s46] %v277
        %v279 = vld [vmem:[%s53 + $0x1c0] sm:%s46]
        %280 = vst [vmem:[%s54 + $0x1c0] sm:%s46] %v279
        %v281 = vld [vmem:[%s53 + $0x1c8] sm:%s46]
        %282 = vst [vmem:[%s54 + $0x1c4] sm:%s46] %v281
        %v283 = vld [vmem:[%s53 + $0x1c4] sm:%s46]
        %284 = vst [vmem:[%s54 + $0x1c8] sm:%s46] %v283
        %v285 = vld [vmem:[%s53 + $0x1cc] sm:%s46]
        %286 = vst [vmem:[%s54 + $0x1cc] sm:%s46] %v285
        %v287 = vld [vmem:[%s53 + $0x1d0] sm:%s46]
        %288 = vst [vmem:[%s54 + $0x1d0] sm:%s46] %v287
        %v289 = vld [vmem:[%s53 + $0x1d8] sm:%s46]
        %290 = vst [vmem:[%s54 + $0x1d4] sm:%s46] %v289
        %v291 = vld [vmem:[%s53 + $0x1d4] sm:%s46]
        %292 = vst [vmem:[%s54 + $0x1d8] sm:%s46] %v291
        %v293 = vld [vmem:[%s53 + $0x1dc] sm:%s46]
        %294 = vst [vmem:[%s54 + $0x1dc] sm:%s46] %v293
        %v295 = vld [vmem:[%s53 + $0x1e0] sm:%s46]
        %296 = vst [vmem:[%s54 + $0x1e0] sm:%s46] %v295
        %v297 = vld [vmem:[%s53 + $0x1e8] sm:%s46]
        %298 = vst [vmem:[%s54 + $0x1e4] sm:%s46] %v297
        %v299 = vld [vmem:[%s53 + $0x1e4] sm:%s46]
        %300 = vst [vmem:[%s54 + $0x1e8] sm:%s46] %v299
        %v301 = vld [vmem:[%s53 + $0x1ec] sm:%s46]
        %302 = vst [vmem:[%s54 + $0x1ec] sm:%s46] %v301
        %v303 = vld [vmem:[%s53 + $0x1f0] sm:%s46]
        %304 = vst [vmem:[%s54 + $0x1f0] sm:%s46] %v303
        %v305 = vld [vmem:[%s53 + $0x1f8] sm:%s46]
        %306 = vst [vmem:[%s54 + $0x1f4] sm:%s46] %v305
        %v307 = vld [vmem:[%s53 + $0x1f4] sm:%s46]
        %308 = vst [vmem:[%s54 + $0x1f8] sm:%s46] %v307
        %v309 = vld [vmem:[%s53 + $0x1fc] sm:%s46]
        %310 = vst [vmem:[%s54 + $0x1fc] sm:%s46] %v309
        %v311 = vld [vmem:[%s53 + $0x200] sm:%s46]
        %312 = vst [vmem:[%s54 + $0x200] sm:%s46] %v311
        %v313 = vld [vmem:[%s53 + $0x208] sm:%s46]
        %314 = vst [vmem:[%s54 + $0x204] sm:%s46] %v313
        %v315 = vld [vmem:[%s53 + $0x204] sm:%s46]
        %316 = vst [vmem:[%s54 + $0x208] sm:%s46] %v315
        %v317 = vld [vmem:[%s53 + $0x20c] sm:%s46]
        %318 = vst [vmem:[%s54 + $0x20c] sm:%s46] %v317
        %v319 = vld [vmem:[%s53 + $0x210] sm:%s46]
        %320 = vst [vmem:[%s54 + $0x210] sm:%s46] %v319
        %v321 = vld [vmem:[%s53 + $0x218] sm:%s46]
        %322 = vst [vmem:[%s54 + $0x214] sm:%s46] %v321
        %v323 = vld [vmem:[%s53 + $0x214] sm:%s46]
        %324 = vst [vmem:[%s54 + $0x218] sm:%s46] %v323
        %v325 = vld [vmem:[%s53 + $0x21c] sm:%s46]
        %326 = vst [vmem:[%s54 + $0x21c] sm:%s46] %v325
        %v327 = vld [vmem:[%s53 + $0x220] sm:%s46]
        %328 = vst [vmem:[%s54 + $0x220] sm:%s46] %v327
        %v329 = vld [vmem:[%s53 + $0x228] sm:%s46]
        %330 = vst [vmem:[%s54 + $0x224] sm:%s46] %v329
        %v331 = vld [vmem:[%s53 + $0x224] sm:%s46]
        %332 = vst [vmem:[%s54 + $0x228] sm:%s46] %v331
        %v333 = vld [vmem:[%s53 + $0x22c] sm:%s46]
        %334 = vst [vmem:[%s54 + $0x22c] sm:%s46] %v333
        %v335 = vld [vmem:[%s53 + $0x230] sm:%s46]
        %336 = vst [vmem:[%s54 + $0x230] sm:%s46] %v335
        %v337 = vld [vmem:[%s53 + $0x238] sm:%s46]
        %338 = vst [vmem:[%s54 + $0x234] sm:%s46] %v337
        %v339 = vld [vmem:[%s53 + $0x234] sm:%s46]
        %340 = vst [vmem:[%s54 + $0x238] sm:%s46] %v339
        %v341 = vld [vmem:[%s53 + $0x23c] sm:%s46]
        %342 = vst [vmem:[%s54 + $0x23c] sm:%s46] %v341
        %v343 = vld [vmem:[%s53 + $0x240] sm:%s46]
        %344 = vst [vmem:[%s54 + $0x240] sm:%s46] %v343
        %v345 = vld [vmem:[%s53 + $0x248] sm:%s46]
        %346 = vst [vmem:[%s54 + $0x244] sm:%s46] %v345
        %v347 = vld [vmem:[%s53 + $0x244] sm:%s46]
        %348 = vst [vmem:[%s54 + $0x248] sm:%s46] %v347
        %v349 = vld [vmem:[%s53 + $0x24c] sm:%s46]
        %350 = vst [vmem:[%s54 + $0x24c] sm:%s46] %v349
        %v351 = vld [vmem:[%s53 + $0x250] sm:%s46]
        %352 = vst [vmem:[%s54 + $0x250] sm:%s46] %v351
        %v353 = vld [vmem:[%s53 + $0x258] sm:%s46]
        %354 = vst [vmem:[%s54 + $0x254] sm:%s46] %v353
        %v355 = vld [vmem:[%s53 + $0x254] sm:%s46]
        %356 = vst [vmem:[%s54 + $0x258] sm:%s46] %v355
        %v357 = vld [vmem:[%s53 + $0x25c] sm:%s46]
        %358 = vst [vmem:[%s54 + $0x25c] sm:%s46] %v357
        %v359 = vld [vmem:[%s53 + $0x260] sm:%s46]
        %360 = vst [vmem:[%s54 + $0x260] sm:%s46] %v359
        %v361 = vld [vmem:[%s53 + $0x268] sm:%s46]
        %362 = vst [vmem:[%s54 + $0x264] sm:%s46] %v361
        %v363 = vld [vmem:[%s53 + $0x264] sm:%s46]
        %364 = vst [vmem:[%s54 + $0x268] sm:%s46] %v363
        %v365 = vld [vmem:[%s53 + $0x26c] sm:%s46]
        %366 = vst [vmem:[%s54 + $0x26c] sm:%s46] %v365
        %v367 = vld [vmem:[%s53 + $0x270] sm:%s46]
        %368 = vst [vmem:[%s54 + $0x270] sm:%s46] %v367
        %v369 = vld [vmem:[%s53 + $0x278] sm:%s46]
        %370 = vst [vmem:[%s54 + $0x274] sm:%s46] %v369
        %v371 = vld [vmem:[%s53 + $0x274] sm:%s46]
        %372 = vst [vmem:[%s54 + $0x278] sm:%s46] %v371
        %v373 = vld [vmem:[%s53 + $0x27c] sm:%s46]
        %374 = vst [vmem:[%s54 + $0x27c] sm:%s46] %v373
        %v375 = vld [vmem:[%s53 + $0x280] sm:%s46]
        %376 = vst [vmem:[%s54 + $0x280] sm:%s46] %v375
        %v377 = vld [vmem:[%s53 + $0x288] sm:%s46]
        %378 = vst [vmem:[%s54 + $0x284] sm:%s46] %v377
        %v379 = vld [vmem:[%s53 + $0x284] sm:%s46]
        %380 = vst [vmem:[%s54 + $0x288] sm:%s46] %v379
        %v381 = vld [vmem:[%s53 + $0x28c] sm:%s46]
        %382 = vst [vmem:[%s54 + $0x28c] sm:%s46] %v381
        %v383 = vld [vmem:[%s53 + $0x290] sm:%s46]
        %384 = vst [vmem:[%s54 + $0x290] sm:%s46] %v383
        %v385 = vld [vmem:[%s53 + $0x298] sm:%s46]
        %386 = vst [vmem:[%s54 + $0x294] sm:%s46] %v385
        %v387 = vld [vmem:[%s53 + $0x294] sm:%s46]
        %388 = vst [vmem:[%s54 + $0x298] sm:%s46] %v387
        %v389 = vld [vmem:[%s53 + $0x29c] sm:%s46]
        %390 = vst [vmem:[%s54 + $0x29c] sm:%s46] %v389
        %v391 = vld [vmem:[%s53 + $0x2a0] sm:%s46]
        %392 = vst [vmem:[%s54 + $0x2a0] sm:%s46] %v391
        %v393 = vld [vmem:[%s53 + $0x2a8] sm:%s46]
        %394 = vst [vmem:[%s54 + $0x2a4] sm:%s46] %v393
        %v395 = vld [vmem:[%s53 + $0x2a4] sm:%s46]
        %396 = vst [vmem:[%s54 + $0x2a8] sm:%s46] %v395
        %v397 = vld [vmem:[%s53 + $0x2ac] sm:%s46]
        %398 = vst [vmem:[%s54 + $0x2ac] sm:%s46] %v397
        %v399 = vld [vmem:[%s53 + $0x2b0] sm:%s46]
        %400 = vst [vmem:[%s54 + $0x2b0] sm:%s46] %v399
        %v401 = vld [vmem:[%s53 + $0x2b8] sm:%s46]
        %402 = vst [vmem:[%s54 + $0x2b4] sm:%s46] %v401
        %v403 = vld [vmem:[%s53 + $0x2b4] sm:%s46]
        %404 = vst [vmem:[%s54 + $0x2b8] sm:%s46] %v403
        %v405 = vld [vmem:[%s53 + $0x2bc] sm:%s46]
        %406 = vst [vmem:[%s54 + $0x2bc] sm:%s46] %v405
        %v407 = vld [vmem:[%s53 + $0x2c0] sm:%s46]
        %408 = vst [vmem:[%s54 + $0x2c0] sm:%s46] %v407
        %v409 = vld [vmem:[%s53 + $0x2c8] sm:%s46]
        %410 = vst [vmem:[%s54 + $0x2c4] sm:%s46] %v409
        %v411 = vld [vmem:[%s53 + $0x2c4] sm:%s46]
        %412 = vst [vmem:[%s54 + $0x2c8] sm:%s46] %v411
        %v413 = vld [vmem:[%s53 + $0x2cc] sm:%s46]
        %414 = vst [vmem:[%s54 + $0x2cc] sm:%s46] %v413
        %v415 = vld [vmem:[%s53 + $0x2d0] sm:%s46]
        %416 = vst [vmem:[%s54 + $0x2d0] sm:%s46] %v415
        %v417 = vld [vmem:[%s53 + $0x2d8] sm:%s46]
        %418 = vst [vmem:[%s54 + $0x2d4] sm:%s46] %v417
        %v419 = vld [vmem:[%s53 + $0x2d4] sm:%s46]
        %420 = vst [vmem:[%s54 + $0x2d8] sm:%s46] %v419
        %v421 = vld [vmem:[%s53 + $0x2dc] sm:%s46]
        %422 = vst [vmem:[%s54 + $0x2dc] sm:%s46] %v421
        %v423 = vld [vmem:[%s53 + $0x2e0] sm:%s46]
        %424 = vst [vmem:[%s54 + $0x2e0] sm:%s46] %v423
        %v425 = vld [vmem:[%s53 + $0x2e8] sm:%s46]
        %426 = vst [vmem:[%s54 + $0x2e4] sm:%s46] %v425
        %v427 = vld [vmem:[%s53 + $0x2e4] sm:%s46]
        %428 = vst [vmem:[%s54 + $0x2e8] sm:%s46] %v427
        %v429 = vld [vmem:[%s53 + $0x2ec] sm:%s46]
        %430 = vst [vmem:[%s54 + $0x2ec] sm:%s46] %v429
        %v431 = vld [vmem:[%s53 + $0x2f0] sm:%s46]
        %432 = vst [vmem:[%s54 + $0x2f0] sm:%s46] %v431
        %v433 = vld [vmem:[%s53 + $0x2f8] sm:%s46]
        %434 = vst [vmem:[%s54 + $0x2f4] sm:%s46] %v433
        %v435 = vld [vmem:[%s53 + $0x2f4] sm:%s46]
        %436 = vst [vmem:[%s54 + $0x2f8] sm:%s46] %v435
        %v437 = vld [vmem:[%s53 + $0x2fc] sm:%s46]
        %438 = vst [vmem:[%s54 + $0x2fc] sm:%s46] %v437
        %v439 = vld [vmem:[%s53 + $0x300] sm:%s46]
        %440 = vst [vmem:[%s54 + $0x300] sm:%s46] %v439
        %v441 = vld [vmem:[%s53 + $0x308] sm:%s46]
        %442 = vst [vmem:[%s54 + $0x304] sm:%s46] %v441
        %v443 = vld [vmem:[%s53 + $0x304] sm:%s46]
        %444 = vst [vmem:[%s54 + $0x308] sm:%s46] %v443
        %v445 = vld [vmem:[%s53 + $0x30c] sm:%s46]
        %446 = vst [vmem:[%s54 + $0x30c] sm:%s46] %v445
        %v447 = vld [vmem:[%s53 + $0x310] sm:%s46]
        %448 = vst [vmem:[%s54 + $0x310] sm:%s46] %v447
        %v449 = vld [vmem:[%s53 + $0x318] sm:%s46]
        %450 = vst [vmem:[%s54 + $0x314] sm:%s46] %v449
        %v451 = vld [vmem:[%s53 + $0x314] sm:%s46]
        %452 = vst [vmem:[%s54 + $0x318] sm:%s46] %v451
        %v453 = vld [vmem:[%s53 + $0x31c] sm:%s46]
        %454 = vst [vmem:[%s54 + $0x31c] sm:%s46] %v453
        %v455 = vld [vmem:[%s53 + $0x320] sm:%s46]
        %456 = vst [vmem:[%s54 + $0x320] sm:%s46] %v455
        %v457 = vld [vmem:[%s53 + $0x328] sm:%s46]
        %458 = vst [vmem:[%s54 + $0x324] sm:%s46] %v457
        %v459 = vld [vmem:[%s53 + $0x324] sm:%s46]
        %460 = vst [vmem:[%s54 + $0x328] sm:%s46] %v459
        %v461 = vld [vmem:[%s53 + $0x32c] sm:%s46]
        %462 = vst [vmem:[%s54 + $0x32c] sm:%s46] %v461
        %v463 = vld [vmem:[%s53 + $0x330] sm:%s46]
        %464 = vst [vmem:[%s54 + $0x330] sm:%s46] %v463
        %v465 = vld [vmem:[%s53 + $0x338] sm:%s46]
        %466 = vst [vmem:[%s54 + $0x334] sm:%s46] %v465
        %v467 = vld [vmem:[%s53 + $0x334] sm:%s46]
        %468 = vst [vmem:[%s54 + $0x338] sm:%s46] %v467
        %v469 = vld [vmem:[%s53 + $0x33c] sm:%s46]
        %470 = vst [vmem:[%s54 + $0x33c] sm:%s46] %v469
        %v471 = vld [vmem:[%s53 + $0x340] sm:%s46]
        %472 = vst [vmem:[%s54 + $0x340] sm:%s46] %v471
        %v473 = vld [vmem:[%s53 + $0x348] sm:%s46]
        %474 = vst [vmem:[%s54 + $0x344] sm:%s46] %v473
        %v475 = vld [vmem:[%s53 + $0x344] sm:%s46]
        %476 = vst [vmem:[%s54 + $0x348] sm:%s46] %v475
        %v477 = vld [vmem:[%s53 + $0x34c] sm:%s46]
        %478 = vst [vmem:[%s54 + $0x34c] sm:%s46] %v477
        %v479 = vld [vmem:[%s53 + $0x350] sm:%s46]
        %480 = vst [vmem:[%s54 + $0x350] sm:%s46] %v479
        %v481 = vld [vmem:[%s53 + $0x358] sm:%s46]
        %482 = vst [vmem:[%s54 + $0x354] sm:%s46] %v481
        %v483 = vld [vmem:[%s53 + $0x354] sm:%s46]
        %484 = vst [vmem:[%s54 + $0x358] sm:%s46] %v483
        %v485 = vld [vmem:[%s53 + $0x35c] sm:%s46]
        %486 = vst [vmem:[%s54 + $0x35c] sm:%s46] %v485
        %v487 = vld [vmem:[%s53 + $0x360] sm:%s46]
        %488 = vst [vmem:[%s54 + $0x360] sm:%s46] %v487
        %v489 = vld [vmem:[%s53 + $0x368] sm:%s46]
        %490 = vst [vmem:[%s54 + $0x364] sm:%s46] %v489
        %v491 = vld [vmem:[%s53 + $0x364] sm:%s46]
        %492 = vst [vmem:[%s54 + $0x368] sm:%s46] %v491
        %v493 = vld [vmem:[%s53 + $0x36c] sm:%s46]
        %494 = vst [vmem:[%s54 + $0x36c] sm:%s46] %v493
        %v495 = vld [vmem:[%s53 + $0x370] sm:%s46]
        %496 = vst [vmem:[%s54 + $0x370] sm:%s46] %v495
        %v497 = vld [vmem:[%s53 + $0x378] sm:%s46]
        %498 = vst [vmem:[%s54 + $0x374] sm:%s46] %v497
        %v499 = vld [vmem:[%s53 + $0x374] sm:%s46]
        %500 = vst [vmem:[%s54 + $0x378] sm:%s46] %v499
        %v501 = vld [vmem:[%s53 + $0x37c] sm:%s46]
        %502 = vst [vmem:[%s54 + $0x37c] sm:%s46] %v501
        %v503 = vld [vmem:[%s53 + $0x380] sm:%s46]
        %504 = vst [vmem:[%s54 + $0x380] sm:%s46] %v503
        %v505 = vld [vmem:[%s53 + $0x388] sm:%s46]
        %506 = vst [vmem:[%s54 + $0x384] sm:%s46] %v505
        %v507 = vld [vmem:[%s53 + $0x384] sm:%s46]
        %508 = vst [vmem:[%s54 + $0x388] sm:%s46] %v507
        %v509 = vld [vmem:[%s53 + $0x38c] sm:%s46]
        %510 = vst [vmem:[%s54 + $0x38c] sm:%s46] %v509
        %v511 = vld [vmem:[%s53 + $0x390] sm:%s46]
        %512 = vst [vmem:[%s54 + $0x390] sm:%s46] %v511
        %v513 = vld [vmem:[%s53 + $0x398] sm:%s46]
        %514 = vst [vmem:[%s54 + $0x394] sm:%s46] %v513
        %v515 = vld [vmem:[%s53 + $0x394] sm:%s46]
        %516 = vst [vmem:[%s54 + $0x398] sm:%s46] %v515
        %v517 = vld [vmem:[%s53 + $0x39c] sm:%s46]
        %518 = vst [vmem:[%s54 + $0x39c] sm:%s46] %v517
        %v519 = vld [vmem:[%s53 + $0x3a0] sm:%s46]
        %520 = vst [vmem:[%s54 + $0x3a0] sm:%s46] %v519
        %v521 = vld [vmem:[%s53 + $0x3a8] sm:%s46]
        %522 = vst [vmem:[%s54 + $0x3a4] sm:%s46] %v521
        %v523 = vld [vmem:[%s53 + $0x3a4] sm:%s46]
        %524 = vst [vmem:[%s54 + $0x3a8] sm:%s46] %v523
        %v525 = vld [vmem:[%s53 + $0x3ac] sm:%s46]
        %526 = vst [vmem:[%s54 + $0x3ac] sm:%s46] %v525
        %v527 = vld [vmem:[%s53 + $0x3b0] sm:%s46]
        %528 = vst [vmem:[%s54 + $0x3b0] sm:%s46] %v527
        %v529 = vld [vmem:[%s53 + $0x3b8] sm:%s46]
        %530 = vst [vmem:[%s54 + $0x3b4] sm:%s46] %v529
        %v531 = vld [vmem:[%s53 + $0x3b4] sm:%s46]
        %532 = vst [vmem:[%s54 + $0x3b8] sm:%s46] %v531
        %v533 = vld [vmem:[%s53 + $0x3bc] sm:%s46]
        %534 = vst [vmem:[%s54 + $0x3bc] sm:%s46] %v533
        %v535 = vld [vmem:[%s53 + $0x3c0] sm:%s46]
        %536 = vst [vmem:[%s54 + $0x3c0] sm:%s46] %v535
        %v537 = vld [vmem:[%s53 + $0x3c8] sm:%s46]
        %538 = vst [vmem:[%s54 + $0x3c4] sm:%s46] %v537
        %v539 = vld [vmem:[%s53 + $0x3c4] sm:%s46]
        %540 = vst [vmem:[%s54 + $0x3c8] sm:%s46] %v539
        %v541 = vld [vmem:[%s53 + $0x3cc] sm:%s46]
        %542 = vst [vmem:[%s54 + $0x3cc] sm:%s46] %v541
        %v543 = vld [vmem:[%s53 + $0x3d0] sm:%s46]
        %544 = vst [vmem:[%s54 + $0x3d0] sm:%s46] %v543
        %v545 = vld [vmem:[%s53 + $0x3d8] sm:%s46]
        %546 = vst [vmem:[%s54 + $0x3d4] sm:%s46] %v545
        %v547 = vld [vmem:[%s53 + $0x3d4] sm:%s46]
        %548 = vst [vmem:[%s54 + $0x3d8] sm:%s46] %v547
        %v549 = vld [vmem:[%s53 + $0x3dc] sm:%s46]
        %550 = vst [vmem:[%s54 + $0x3dc] sm:%s46] %v549
        %v551 = vld [vmem:[%s53 + $0x3e0] sm:%s46]
        %552 = vst [vmem:[%s54 + $0x3e0] sm:%s46] %v551
        %v553 = vld [vmem:[%s53 + $0x3e8] sm:%s46]
        %554 = vst [vmem:[%s54 + $0x3e4] sm:%s46] %v553
        %v555 = vld [vmem:[%s53 + $0x3e4] sm:%s46]
        %556 = vst [vmem:[%s54 + $0x3e8] sm:%s46] %v555
        %v557 = vld [vmem:[%s53 + $0x3ec] sm:%s46]
        %558 = vst [vmem:[%s54 + $0x3ec] sm:%s46] %v557
        %v559 = vld [vmem:[%s53 + $0x3f0] sm:%s46]
        %560 = vst [vmem:[%s54 + $0x3f0] sm:%s46] %v559
        %v561 = vld [vmem:[%s53 + $0x3f8] sm:%s46]
        %562 = vst [vmem:[%s54 + $0x3f4] sm:%s46] %v561
        %v563 = vld [vmem:[%s53 + $0x3f4] sm:%s46]
        %564 = vst [vmem:[%s54 + $0x3f8] sm:%s46] %v563
        %v565 = vld [vmem:[%s53 + $0x3fc] sm:%s46]
        %566 = vst [vmem:[%s54 + $0x3fc] sm:%s46] %v565
        %v567 = vld [vmem:[%s53 + $0x400] sm:%s46]
        %568 = vst [vmem:[%s54 + $0x400] sm:%s46] %v567
        %v569 = vld [vmem:[%s53 + $0x408] sm:%s46]
        %570 = vst [vmem:[%s54 + $0x404] sm:%s46] %v569
        %v571 = vld [vmem:[%s53 + $0x404] sm:%s46]
        %572 = vst [vmem:[%s54 + $0x408] sm:%s46] %v571
        %v573 = vld [vmem:[%s53 + $0x40c] sm:%s46]
        %574 = vst [vmem:[%s54 + $0x40c] sm:%s46] %v573
        %v575 = vld [vmem:[%s53 + $0x410] sm:%s46]
        %576 = vst [vmem:[%s54 + $0x410] sm:%s46] %v575
        %v577 = vld [vmem:[%s53 + $0x418] sm:%s46]
        %578 = vst [vmem:[%s54 + $0x414] sm:%s46] %v577
        %v579 = vld [vmem:[%s53 + $0x414] sm:%s46]
        %580 = vst [vmem:[%s54 + $0x418] sm:%s46] %v579
        %v581 = vld [vmem:[%s53 + $0x41c] sm:%s46]
        %582 = vst [vmem:[%s54 + $0x41c] sm:%s46] %v581
        %v583 = vld [vmem:[%s53 + $0x420] sm:%s46]
        %584 = vst [vmem:[%s54 + $0x420] sm:%s46] %v583
        %v585 = vld [vmem:[%s53 + $0x428] sm:%s46]
        %586 = vst [vmem:[%s54 + $0x424] sm:%s46] %v585
        %v587 = vld [vmem:[%s53 + $0x424] sm:%s46]
        %588 = vst [vmem:[%s54 + $0x428] sm:%s46] %v587
        %v589 = vld [vmem:[%s53 + $0x42c] sm:%s46]
        %590 = vst [vmem:[%s54 + $0x42c] sm:%s46] %v589
        %v591 = vld [vmem:[%s53 + $0x430] sm:%s46]
        %592 = vst [vmem:[%s54 + $0x430] sm:%s46] %v591
        %v593 = vld [vmem:[%s53 + $0x438] sm:%s46]
        %594 = vst [vmem:[%s54 + $0x434] sm:%s46] %v593
        %v595 = vld [vmem:[%s53 + $0x434] sm:%s46]
        %596 = vst [vmem:[%s54 + $0x438] sm:%s46] %v595
        %v597 = vld [vmem:[%s53 + $0x43c] sm:%s46]
        %598 = vst [vmem:[%s54 + $0x43c] sm:%s46] %v597
        %v599 = vld [vmem:[%s53 + $0x440] sm:%s46]
        %600 = vst [vmem:[%s54 + $0x440] sm:%s46] %v599
        %v601 = vld [vmem:[%s53 + $0x448] sm:%s46]
        %602 = vst [vmem:[%s54 + $0x444] sm:%s46] %v601
        %v603 = vld [vmem:[%s53 + $0x444] sm:%s46]
        %604 = vst [vmem:[%s54 + $0x448] sm:%s46] %v603
        %v605 = vld [vmem:[%s53 + $0x44c] sm:%s46]
        %606 = vst [vmem:[%s54 + $0x44c] sm:%s46] %v605
        %v607 = vld [vmem:[%s53 + $0x450] sm:%s46]
        %608 = vst [vmem:[%s54 + $0x450] sm:%s46] %v607
        %v609 = vld [vmem:[%s53 + $0x458] sm:%s46]
        %610 = vst [vmem:[%s54 + $0x454] sm:%s46] %v609
        %v611 = vld [vmem:[%s53 + $0x454] sm:%s46]
        %612 = vst [vmem:[%s54 + $0x458] sm:%s46] %v611
        %v613 = vld [vmem:[%s53 + $0x45c] sm:%s46]
        %614 = vst [vmem:[%s54 + $0x45c] sm:%s46] %v613
        %v615 = vld [vmem:[%s53 + $0x460] sm:%s46]
        %616 = vst [vmem:[%s54 + $0x460] sm:%s46] %v615
        %v617 = vld [vmem:[%s53 + $0x468] sm:%s46]
        %618 = vst [vmem:[%s54 + $0x464] sm:%s46] %v617
        %v619 = vld [vmem:[%s53 + $0x464] sm:%s46]
        %620 = vst [vmem:[%s54 + $0x468] sm:%s46] %v619
        %v621 = vld [vmem:[%s53 + $0x46c] sm:%s46]
        %622 = vst [vmem:[%s54 + $0x46c] sm:%s46] %v621
        %v623 = vld [vmem:[%s53 + $0x470] sm:%s46]
        %624 = vst [vmem:[%s54 + $0x470] sm:%s46] %v623
        %v625 = vld [vmem:[%s53 + $0x478] sm:%s46]
        %626 = vst [vmem:[%s54 + $0x474] sm:%s46] %v625
        %v627 = vld [vmem:[%s53 + $0x474] sm:%s46]
        %628 = vst [vmem:[%s54 + $0x478] sm:%s46] %v627
        %v629 = vld [vmem:[%s53 + $0x47c] sm:%s46]
        %630 = vst [vmem:[%s54 + $0x47c] sm:%s46] %v629
      $region54: #{neural_net_forward.1} parent=48 // loop_footer
        %s52 = sadd.s32 1, %s48
      $region55: #{neural_net_forward.1} parent=48 // loop_footer_branch
        %47 = sbr.rel target = $region51
      $region56: #{neural_net_forward.1} parent=48 // loop_exit
        _
    $region49: #{neural_net_forward.1} parent=1 // pred_fallthru
      _
    // Predicated region
    $region75: #{neural_net_forward.1} parent=1 // pred_check
      _
    $region76: #{neural_net_forward.1} parent=1 // pred_check_branch
      %1236 = sbr.rel (0) target = $region78
    $region77: #{neural_net_forward.1} parent=1 // pred_region
      %1237 = vsyncadd [#allocation10], 18432
    $region78: #{neural_net_forward.1} parent=1 // pred_fallthru
      _
    %vm1238 = vcmask 257024
    %1239 = vst.msk [vmem:[#allocation6] sm:$0xf] %vm1238, 0
    %1240 = vst.msk [vmem:[#allocation6 + $0x4] sm:$0xf] %vm1238, 0
    %1241 = vst.msk [vmem:[#allocation6 + $0x8] sm:$0xf] %vm1238, 0
    %1242 = vst.msk [vmem:[#allocation6 + $0xc] sm:$0xf] %vm1238, 0
    %1243 = vst.msk [vmem:[#allocation6 + $0x10] sm:$0xf] %vm1238, 0
    %1244 = vst.msk [vmem:[#allocation6 + $0x14] sm:$0xf] %vm1238, 0
    %1245 = vst.msk [vmem:[#allocation6 + $0x18] sm:$0xf] %vm1238, 0
    %1246 = vst.msk [vmem:[#allocation6 + $0x1c] sm:$0xf] %vm1238, 0
    %1247 = vst.msk [vmem:[#allocation6 + $0x20] sm:$0xf] %vm1238, 0
    %1248 = vst.msk [vmem:[#allocation6 + $0x24] sm:$0xf] %vm1238, 0
    %1249 = vst.msk [vmem:[#allocation6 + $0x28] sm:$0xf] %vm1238, 0
    %1250 = vst.msk [vmem:[#allocation6 + $0x2c] sm:$0xf] %vm1238, 0
    %1251 = vst.msk [vmem:[#allocation6 + $0x30] sm:$0xf] %vm1238, 0
    %1252 = vst.msk [vmem:[#allocation6 + $0x34] sm:$0xf] %vm1238, 0
    %1253 = vst.msk [vmem:[#allocation6 + $0x38] sm:$0xf] %vm1238, 0
    %1254 = vst.msk [vmem:[#allocation6 + $0x3c] sm:$0xf] %vm1238, 0
    %1255 = vst.msk [vmem:[#allocation6 + $0x40] sm:$0xf] %vm1238, 0
    %1256 = vst.msk [vmem:[#allocation6 + $0x44] sm:$0xf] %vm1238, 0
    %1257 = vst.msk [vmem:[#allocation6 + $0x48] sm:$0xf] %vm1238, 0
    %1258 = vst.msk [vmem:[#allocation6 + $0x4c] sm:$0xf] %vm1238, 0
    %1259 = vst.msk [vmem:[#allocation6 + $0x50] sm:$0xf] %vm1238, 0
    %1260 = vst.msk [vmem:[#allocation6 + $0x54] sm:$0xf] %vm1238, 0
    %1261 = vst.msk [vmem:[#allocation6 + $0x58] sm:$0xf] %vm1238, 0
    %1262 = vst.msk [vmem:[#allocation6 + $0x5c] sm:$0xf] %vm1238, 0
    %1263 = vst.msk [vmem:[#allocation6 + $0x60] sm:$0xf] %vm1238, 0
    %1264 = vst.msk [vmem:[#allocation6 + $0x64] sm:$0xf] %vm1238, 0
    %1265 = vst.msk [vmem:[#allocation6 + $0x68] sm:$0xf] %vm1238, 0
    %vm1266 = vcmask 256000
    %1267 = vst.msk [vmem:[#allocation6 + $0x6c] sm:$0x7] %vm1266, 0
    %vm1268 = vcmask 519168
    %1269 = vst.msk [vmem:[#allocation7] sm:$0xf] %vm1268, 0
    %1270 = vst.msk [vmem:[#allocation7 + $0x4] sm:$0xf] %vm1268, 0
    %1271 = vst.msk [vmem:[#allocation7 + $0x8] sm:$0xf] %vm1268, 0
    %1272 = vst.msk [vmem:[#allocation7 + $0xc] sm:$0xf] %vm1268, 0
    %1273 = vst.msk [vmem:[#allocation7 + $0x10] sm:$0xf] %vm1268, 0
    %1274 = vst.msk [vmem:[#allocation7 + $0x14] sm:$0xf] %vm1268, 0
    %1275 = vst.msk [vmem:[#allocation7 + $0x18] sm:$0xf] %vm1268, 0
    %1276 = vst.msk [vmem:[#allocation7 + $0x1c] sm:$0xf] %vm1268, 0
    %1277 = vst.msk [vmem:[#allocation7 + $0x20] sm:$0xf] %vm1268, 0
    %1278 = vst.msk [vmem:[#allocation7 + $0x24] sm:$0xf] %vm1268, 0
    %vm1279 = vcmask 518144
    %1280 = vst.msk [vmem:[#allocation7 + $0x28] sm:$0x7] %vm1279, 0
    %1281 = vst [vmem:[#allocation8] sm:$0xf] 0
    %1282 = vst [vmem:[#allocation8 + $0x4] sm:$0xf] 0
    %1283 = vst [vmem:[#allocation8 + $0x8] sm:$0xf] 0
    %1284 = vst [vmem:[#allocation8 + $0xc] sm:$0xf] 0
    %1285 = vst [vmem:[#allocation8 + $0x10] sm:$0xf] 0
    %1286 = vst [vmem:[#allocation8 + $0x14] sm:$0x1] 0
    %v1287 = vld [vmem:[%s0] sm:$0xf]
    %v1288 = vld [vmem:[%s0 + $0x4] sm:$0xf]
    %v1289 = vld [vmem:[%s0 + $0x8] sm:$0xf]
    %v1290 = vld [vmem:[%s0 + $0xc] sm:$0xf]
    %v1291 = vld [vmem:[%s0 + $0x10] sm:$0xf]
    %v1292 = vld [vmem:[%s0 + $0x14] sm:$0xf]
    %v1293 = vld [vmem:[%s0 + $0x18] sm:$0xf]
    %v1294 = vld [vmem:[%s0 + $0x1c] sm:$0xf]
    %v1295 = vld [vmem:[%s0 + $0x20] sm:$0xf]
    %v1296 = vld [vmem:[%s0 + $0x24] sm:$0xf]
    %v1297 = vld [vmem:[%s0 + $0x28] sm:$0xf]
    %v1298 = vld [vmem:[%s0 + $0x2c] sm:$0xf]
    %v1299 = vld [vmem:[%s0 + $0x30] sm:$0xf]
    %v1300 = vld [vmem:[%s0 + $0x34] sm:$0xf]
    %v1301 = vld [vmem:[%s0 + $0x38] sm:$0xf]
    %v1302 = vld [vmem:[%s0 + $0x3c] sm:$0xf]
    %v1303 = vld [vmem:[%s1] sm:$0xf]
    %v1304 = vld [vmem:[%s1 + $0x4] sm:$0xf]
    %v1305 = vld [vmem:[%s2] sm:$0x1]
    %v1307 = vlaneseq
    %v1308 = vshrl.u32 %v1307, 7
    %v1309 = vsub.s32 0, %v1308
    %v1310 = vrot.slane %v1305, %v1309
    %v1328 = vunpack.c.l.b16 %v1287
    %v1329 = vunpack.c.l.b16 %v1288
    %v1330 = vunpack.c.l.b16 %v1289
    %v1331 = vunpack.c.l.b16 %v1290
    %v1332 = vunpack.c.l.b16 %v1291
    %v1333 = vunpack.c.l.b16 %v1292
    %v1334 = vunpack.c.l.b16 %v1293
    %v1335 = vunpack.c.l.b16 %v1294
    %v1336 = vunpack.c.l.b16 %v1295
    %v1337 = vunpack.c.l.b16 %v1296
    %v1338 = vunpack.c.l.b16 %v1297
    %v1339 = vunpack.c.l.b16 %v1298
    %v1340 = vunpack.c.l.b16 %v1299
    %v1341 = vunpack.c.l.b16 %v1300
    %v1342 = vunpack.c.l.b16 %v1301
    %v1343 = vunpack.c.l.b16 %v1302
    %v1344 = vpack.c.b16 %v1329, %v1328
    %v1345 = vpack.c.b16 %v1331, %v1330
    %v1346 = vpack.c.b16 %v1333, %v1332
    %v1347 = vpack.c.b16 %v1335, %v1334
    %v1348 = vpack.c.b16 %v1337, %v1336
    %v1349 = vpack.c.b16 %v1339, %v1338
    %v1350 = vpack.c.b16 %v1341, %v1340
    %v1351 = vpack.c.b16 %v1343, %v1342
    %v1354 = vunpack.c.l.b16 %v1303
    %v1355 = vunpack.c.l.b16 %v1304
    %v1356 = vpack.c.b16 %v1355, %v1354
    %vm1358 = vcmask 130048
    %v1360 = vsel %vm1358, %v1344, 0
    %v1363 = vsel %vm1358, %v1345, 0
    %v1366 = vsel %vm1358, %v1346, 0
    %v1369 = vsel %vm1358, %v1347, 0
    %v1372 = vsel %vm1358, %v1348, 0
    %v1375 = vsel %vm1358, %v1349, 0
    %v1378 = vsel %vm1358, %v1350, 0
    %v1381 = vsel %vm1358, %v1351, 0
    %1383 = vmatprep.subr.bf16.mxu0 0
    %1384 = vmatpush1.bf16.msra.mxu0 %v1356
    %1385 = vmatprep.subr.bf16.mxu0 0
    %1386 = vmatpush1.bf16.msra.mxu0 0
    %1387 = vmatprep.subr.bf16.mxu0 0
    %1388 = vmatpush1.bf16.msra.mxu0 0
    %1389 = vmatprep.subr.bf16.mxu0 0
    %1390 = vmatpush1.bf16.msra.mxu0 0
    %1391 = vmatprep.subr.bf16.mxu0 0
    %1392 = vmatpush1.bf16.msra.mxu0 0
    %1393 = vmatprep.subr.bf16.mxu0 0
    %1394 = vmatpush1.bf16.msra.mxu0 0
    %1395 = vmatprep.subr.bf16.mxu0 0
    %1396 = vmatpush1.bf16.msra.mxu0 0
    %1397 = vmatprep.subr.bf16.mxu0 0
    %1398 = vmatpush1.bf16.msra.mxu0 0
    %1399 = vmatprep.subr.bf16.mxu0 0
    %1400 = vmatpush1.bf16.msra.mxu0 0
    %1401 = vmatprep.subr.bf16.mxu0 0
    %1402 = vmatpush1.bf16.msra.mxu0 0
    %1403 = vmatprep.subr.bf16.mxu0 0
    %1404 = vmatpush1.bf16.msra.mxu0 0
    %1405 = vmatprep.subr.bf16.mxu0 0
    %1406 = vmatpush1.bf16.msra.mxu0 0
    %1407 = vmatprep.subr.bf16.mxu0 0
    %1408 = vmatpush1.bf16.msra.mxu0 0
    %1409 = vmatprep.subr.bf16.mxu0 0
    %1410 = vmatpush1.bf16.msra.mxu0 0
    %1411 = vmatprep.subr.bf16.mxu0 0
    %1412 = vmatpush1.bf16.msra.mxu0 0
    %1413 = vmatprep.subr.bf16.mxu0 0
    %1414 = vmatpush1.bf16.msra.mxu0 0
    %1415 = vmatprep.mubr.bf16.mxu0 0
    %1416 = vmatmul.mubr.bf16.gmra.mrb[0].mxu0 %v1360
    %v1417 = vpop.f32.mrb[0].mxu0
    %v1418 = vadd.f32 %v1310, %v1417
    %v1419 = vpop.f32.mrb[0].mxu0
    %v1420 = vpop.f32.mrb[0].mxu0
    %v1421 = vadd.f32 %v1310, %v1420
    %v1422 = vpop.f32.mrb[0].mxu0
    %1423 = vmatprep.mubr.bf16.mxu0 0
    %1424 = vmatmul.mubr.bf16.gmra.mrb[0].mxu0 %v1363
    %v1425 = vpop.f32.mrb[0].mxu0
    %v1426 = vadd.f32 %v1310, %v1425
    %v1427 = vpop.f32.mrb[0].mxu0
    %v1428 = vpop.f32.mrb[0].mxu0
    %v1429 = vadd.f32 %v1310, %v1428
    %v1430 = vpop.f32.mrb[0].mxu0
    %1431 = vmatprep.mubr.bf16.mxu0 0
    %1432 = vmatmul.mubr.bf16.gmra.mrb[0].mxu0 %v1366
    %v1433 = vpop.f32.mrb[0].mxu0
    %v1434 = vadd.f32 %v1310, %v1433
    %v1435 = vpop.f32.mrb[0].mxu0
    %v1436 = vpop.f32.mrb[0].mxu0
    %v1437 = vadd.f32 %v1310, %v1436
    %v1438 = vpop.f32.mrb[0].mxu0
    %1439 = vmatprep.mubr.bf16.mxu0 0
    %1440 = vmatmul.mubr.bf16.gmra.mrb[0].mxu0 %v1369
    %v1441 = vpop.f32.mrb[0].mxu0
    %v1442 = vadd.f32 %v1310, %v1441
    %v1443 = vpop.f32.mrb[0].mxu0
    %v1444 = vpop.f32.mrb[0].mxu0
    %v1445 = vadd.f32 %v1310, %v1444
    %v1446 = vpop.f32.mrb[0].mxu0
    %1447 = vmatprep.mubr.bf16.mxu0 0
    %1448 = vmatmul.mubr.bf16.gmra.mrb[0].mxu0 %v1372
    %v1449 = vpop.f32.mrb[0].mxu0
    %v1450 = vadd.f32 %v1310, %v1449
    %v1451 = vpop.f32.mrb[0].mxu0
    %v1452 = vpop.f32.mrb[0].mxu0
    %v1453 = vadd.f32 %v1310, %v1452
    %v1454 = vpop.f32.mrb[0].mxu0
    %1455 = vmatprep.mubr.bf16.mxu0 0
    %1456 = vmatmul.mubr.bf16.gmra.mrb[0].mxu0 %v1375
    %v1457 = vpop.f32.mrb[0].mxu0
    %v1458 = vadd.f32 %v1310, %v1457
    %v1459 = vpop.f32.mrb[0].mxu0
    %v1460 = vpop.f32.mrb[0].mxu0
    %v1461 = vadd.f32 %v1310, %v1460
    %v1462 = vpop.f32.mrb[0].mxu0
    %1463 = vmatprep.mubr.bf16.mxu0 0
    %1464 = vmatmul.mubr.bf16.gmra.mrb[0].mxu0 %v1378
    %v1465 = vpop.f32.mrb[0].mxu0
    %v1466 = vadd.f32 %v1310, %v1465
    %v1467 = vpop.f32.mrb[0].mxu0
    %v1468 = vpop.f32.mrb[0].mxu0
    %v1469 = vadd.f32 %v1310, %v1468
    %v1470 = vpop.f32.mrb[0].mxu0
    %1471 = vmatprep.mubr.bf16.mxu0 0
    %1472 = vmatmul.mubr.bf16.gmra.mrb[0].mxu0 %v1381
    %v1473 = vpop.f32.mrb[0].mxu0
    %v1474 = vadd.f32 %v1310, %v1473
    %v1475 = vpop.f32.mrb[0].mxu0
    %v1476 = vpop.f32.mrb[0].mxu0
    %v1477 = vadd.f32 %v1310, %v1476
    %v1478 = vpop.f32.mrb[0].mxu0
    %1479 = vdwg.mxu0
    %v1480 = vmax.f32 %v1418, 0.0
    %v1481 = vmax.f32 %v1421, 0.0
    %v1482 = vmax.f32 %v1426, 0.0
    %v1483 = vmax.f32 %v1429, 0.0
    %v1484 = vmax.f32 %v1434, 0.0
    %v1485 = vmax.f32 %v1437, 0.0
    %v1486 = vmax.f32 %v1442, 0.0
    %v1487 = vmax.f32 %v1445, 0.0
    %v1488 = vmax.f32 %v1450, 0.0
    %v1489 = vmax.f32 %v1453, 0.0
    %v1490 = vmax.f32 %v1458, 0.0
    %v1491 = vmax.f32 %v1461, 0.0
    %v1492 = vmax.f32 %v1466, 0.0
    %v1493 = vmax.f32 %v1469, 0.0
    %v1494 = vmax.f32 %v1474, 0.0
    %v1495 = vmax.f32 %v1477, 0.0
    %vm1496 = vcmask 261120
    %1497 = vst.msk [vmem:[#allocation2] sm:$0xff] %vm1496, %v1480
    %1498 = vst.msk [vmem:[#allocation2 + $0x8] sm:$0xff] %vm1496, %v1481
    %1499 = vst.msk [vmem:[#allocation2 + $0x10] sm:$0xff] %vm1496, %v1482
    %1500 = vst.msk [vmem:[#allocation2 + $0x18] sm:$0xff] %vm1496, %v1483
    %1501 = vst.msk [vmem:[#allocation2 + $0x20] sm:$0xff] %vm1496, %v1484
    %1502 = vst.msk [vmem:[#allocation2 + $0x28] sm:$0xff] %vm1496, %v1485
    %1503 = vst.msk [vmem:[#allocation2 + $0x30] sm:$0xff] %vm1496, %v1486
    %1504 = vst.msk [vmem:[#allocation2 + $0x38] sm:$0xff] %vm1496, %v1487
    %1505 = vst.msk [vmem:[#allocation2 + $0x40] sm:$0xff] %vm1496, %v1488
    %1506 = vst.msk [vmem:[#allocation2 + $0x48] sm:$0xff] %vm1496, %v1489
    %1507 = vst.msk [vmem:[#allocation2 + $0x50] sm:$0xff] %vm1496, %v1490
    %1508 = vst.msk [vmem:[#allocation2 + $0x58] sm:$0xff] %vm1496, %v1491
    %1509 = vst.msk [vmem:[#allocation2 + $0x60] sm:$0xff] %vm1496, %v1492
    %1510 = vst.msk [vmem:[#allocation2 + $0x68] sm:$0xff] %vm1496, %v1493
    %1511 = vst.msk [vmem:[#allocation2 + $0x70] sm:$0xff] %vm1496, %v1494
    %1512 = vst.msk [vmem:[#allocation2 + $0x78] sm:$0xff] %vm1496, %v1495
    %v1513 = vld [vmem:[%s0 + $0x40] sm:$0xf]
    %v1514 = vld [vmem:[%s0 + $0x44] sm:$0xf]
    %v1515 = vld [vmem:[%s0 + $0x48] sm:$0xf]
    %v1516 = vld [vmem:[%s0 + $0x4c] sm:$0xf]
    %v1517 = vld [vmem:[%s0 + $0x50] sm:$0xf]
    %v1518 = vld [vmem:[%s0 + $0x54] sm:$0xf]
    %v1519 = vld [vmem:[%s0 + $0x58] sm:$0xf]
    %v1520 = vld [vmem:[%s0 + $0x5c] sm:$0xf]
    %v1521 = vld [vmem:[%s0 + $0x60] sm:$0xf]
    %v1522 = vld [vmem:[%s0 + $0x64] sm:$0xf]
    %v1523 = vld [vmem:[%s0 + $0x68] sm:$0xf]
    %v1524 = vld [vmem:[%s0 + $0x6c] sm:$0xf]
    %v1525 = vld [vmem:[%s0 + $0x70] sm:$0xf]
    %v1526 = vld [vmem:[%s0 + $0x74] sm:$0xf]
    %v1527 = vld [vmem:[%s0 + $0x78] sm:$0xf]
    %v1528 = vld [vmem:[%s0 + $0x7c] sm:$0xf]
    %v1529 = vld [vmem:[%s1] sm:$0xf]
    %v1530 = vld [vmem:[%s1 + $0x4] sm:$0xf]
    %v1531 = vld [vmem:[%s2] sm:$0x1]
    %v1533 = vlaneseq
    %v1534 = vshrl.u32 %v1533, 7
    %v1535 = vsub.s32 0, %v1534
    %v1536 = vrot.slane %v1531, %v1535
    %v1554 = vunpack.c.l.b16 %v1513
    %v1555 = vunpack.c.l.b16 %v1514
    %v1556 = vunpack.c.l.b16 %v1515
    %v1557 = vunpack.c.l.b16 %v1516
    %v1558 = vunpack.c.l.b16 %v1517
    %v1559 = vunpack.c.l.b16 %v1518
    %v1560 = vunpack.c.l.b16 %v1519
    %v1561 = vunpack.c.l.b16 %v1520
    %v1562 = vunpack.c.l.b16 %v1521
    %v1563 = vunpack.c.l.b16 %v1522
    %v1564 = vunpack.c.l.b16 %v1523
    %v1565 = vunpack.c.l.b16 %v1524
    %v1566 = vunpack.c.l.b16 %v1525
    %v1567 = vunpack.c.l.b16 %v1526
    %v1568 = vunpack.c.l.b16 %v1527
    %v1569 = vunpack.c.l.b16 %v1528
    %v1570 = vpack.c.b16 %v1555, %v1554
    %v1571 = vpack.c.b16 %v1557, %v1556
    %v1572 = vpack.c.b16 %v1559, %v1558
    %v1573 = vpack.c.b16 %v1561, %v1560
    %v1574 = vpack.c.b16 %v1563, %v1562
    %v1575 = vpack.c.b16 %v1565, %v1564
    %v1576 = vpack.c.b16 %v1567, %v1566
    %v1577 = vpack.c.b16 %v1569, %v1568
    %v1580 = vunpack.c.l.b16 %v1529
    %v1581 = vunpack.c.l.b16 %v1530
    %v1582 = vpack.c.b16 %v1581, %v1580
    %v1585 = vsel %vm1358, %v1570, 0
    %v1588 = vsel %vm1358, %v1571, 0
    %v1591 = vsel %vm1358, %v1572, 0
    %v1594 = vsel %vm1358, %v1573, 0
    %v1597 = vsel %vm1358, %v1574, 0
    %v1600 = vsel %vm1358, %v1575, 0
    %v1603 = vsel %vm1358, %v1576, 0
    %v1606 = vsel %vm1358, %v1577, 0
    %1608 = vmatprep.subr.bf16.mxu0 0
    %1609 = vmatpush1.bf16.msra.mxu0 %v1582
    %1610 = vmatprep.subr.bf16.mxu0 0
    %1611 = vmatpush1.bf16.msra.mxu0 0
    %1612 = vmatprep.subr.bf16.mxu0 0
    %1613 = vmatpush1.bf16.msra.mxu0 0
    %1614 = vmatprep.subr.bf16.mxu0 0
    %1615 = vmatpush1.bf16.msra.mxu0 0
    %1616 = vmatprep.subr.bf16.mxu0 0
    %1617 = vmatpush1.bf16.msra.mxu0 0
    %1618 = vmatprep.subr.bf16.mxu0 0
    %1619 = vmatpush1.bf16.msra.mxu0 0
    %1620 = vmatprep.subr.bf16.mxu0 0
    %1621 = vmatpush1.bf16.msra.mxu0 0
    %1622 = vmatprep.subr.bf16.mxu0 0
    %1623 = vmatpush1.bf16.msra.mxu0 0
    %1624 = vmatprep.subr.bf16.mxu0 0
    %1625 = vmatpush1.bf16.msra.mxu0 0
    %1626 = vmatprep.subr.bf16.mxu0 0
    %1627 = vmatpush1.bf16.msra.mxu0 0
    %1628 = vmatprep.subr.bf16.mxu0 0
    %1629 = vmatpush1.bf16.msra.mxu0 0
    %1630 = vmatprep.subr.bf16.mxu0 0
    %1631 = vmatpush1.bf16.msra.mxu0 0
    %1632 = vmatprep.subr.bf16.mxu0 0
    %1633 = vmatpush1.bf16.msra.mxu0 0
    %1634 = vmatprep.subr.bf16.mxu0 0
    %1635 = vmatpush1.bf16.msra.mxu0 0
    %1636 = vmatprep.subr.bf16.mxu0 0
    %1637 = vmatpush1.bf16.msra.mxu0 0
    %1638 = vmatprep.subr.bf16.mxu0 0
    %1639 = vmatpush1.bf16.msra.mxu0 0
    %1640 = vmatprep.mubr.bf16.mxu0 0
    %1641 = vmatmul.mubr.bf16.gmra.mrb[0].mxu0 %v1585
    %v1642 = vpop.f32.mrb[0].mxu0
    %v1643 = vadd.f32 %v1536, %v1642
    %v1644 = vpop.f32.mrb[0].mxu0
    %v1645 = vpop.f32.mrb[0].mxu0
    %v1646 = vadd.f32 %v1536, %v1645
    %v1647 = vpop.f32.mrb[0].mxu0
    %1648 = vmatprep.mubr.bf16.mxu0 0
    %1649 = vmatmul.mubr.bf16.gmra.mrb[0].mxu0 %v1588
    %v1650 = vpop.f32.mrb[0].mxu0
    %v1651 = vadd.f32 %v1536, %v1650
    %v1652 = vpop.f32.mrb[0].mxu0
    %v1653 = vpop.f32.mrb[0].mxu0
    %v1654 = vadd.f32 %v1536, %v1653
    %v1655 = vpop.f32.mrb[0].mxu0
    %1656 = vmatprep.mubr.bf16.mxu0 0
    %1657 = vmatmul.mubr.bf16.gmra.mrb[0].mxu0 %v1591
    %v1658 = vpop.f32.mrb[0].mxu0
    %v1659 = vadd.f32 %v1536, %v1658
    %v1660 = vpop.f32.mrb[0].mxu0
    %v1661 = vpop.f32.mrb[0].mxu0
    %v1662 = vadd.f32 %v1536, %v1661
    %v1663 = vpop.f32.mrb[0].mxu0
    %1664 = vmatprep.mubr.bf16.mxu0 0
    %1665 = vmatmul.mubr.bf16.gmra.mrb[0].mxu0 %v1594
    %v1666 = vpop.f32.mrb[0].mxu0
    %v1667 = vadd.f32 %v1536, %v1666
    %v1668 = vpop.f32.mrb[0].mxu0
    %v1669 = vpop.f32.mrb[0].mxu0
    %v1670 = vadd.f32 %v1536, %v1669
    %v1671 = vpop.f32.mrb[0].mxu0
    %1672 = vmatprep.mubr.bf16.mxu0 0
    %1673 = vmatmul.mubr.bf16.gmra.mrb[0].mxu0 %v1597
    %v1674 = vpop.f32.mrb[0].mxu0
    %v1675 = vadd.f32 %v1536, %v1674
    %v1676 = vpop.f32.mrb[0].mxu0
    %v1677 = vpop.f32.mrb[0].mxu0
    %v1678 = vadd.f32 %v1536, %v1677
    %v1679 = vpop.f32.mrb[0].mxu0
    %1680 = vmatprep.mubr.bf16.mxu0 0
    %1681 = vmatmul.mubr.bf16.gmra.mrb[0].mxu0 %v1600
    %v1682 = vpop.f32.mrb[0].mxu0
    %v1683 = vadd.f32 %v1536, %v1682
    %v1684 = vpop.f32.mrb[0].mxu0
    %v1685 = vpop.f32.mrb[0].mxu0
    %v1686 = vadd.f32 %v1536, %v1685
    %v1687 = vpop.f32.mrb[0].mxu0
    %1688 = vmatprep.mubr.bf16.mxu0 0
    %1689 = vmatmul.mubr.bf16.gmra.mrb[0].mxu0 %v1603
    %v1690 = vpop.f32.mrb[0].mxu0
    %v1691 = vadd.f32 %v1536, %v1690
    %v1692 = vpop.f32.mrb[0].mxu0
    %v1693 = vpop.f32.mrb[0].mxu0
    %v1694 = vadd.f32 %v1536, %v1693
    %v1695 = vpop.f32.mrb[0].mxu0
    %1696 = vmatprep.mubr.bf16.mxu0 0
    %1697 = vmatmul.mubr.bf16.gmra.mrb[0].mxu0 %v1606
    %v1698 = vpop.f32.mrb[0].mxu0
    %v1699 = vadd.f32 %v1536, %v1698
    %v1700 = vpop.f32.mrb[0].mxu0
    %v1701 = vpop.f32.mrb[0].mxu0
    %v1702 = vadd.f32 %v1536, %v1701
    %v1703 = vpop.f32.mrb[0].mxu0
    %1704 = vdwg.mxu0
    %v1705 = vmax.f32 %v1643, 0.0
    %v1706 = vmax.f32 %v1646, 0.0
    %v1707 = vmax.f32 %v1651, 0.0
    %v1708 = vmax.f32 %v1654, 0.0
    %v1709 = vmax.f32 %v1659, 0.0
    %v1710 = vmax.f32 %v1662, 0.0
    %v1711 = vmax.f32 %v1667, 0.0
    %v1712 = vmax.f32 %v1670, 0.0
    %v1713 = vmax.f32 %v1675, 0.0
    %v1714 = vmax.f32 %v1678, 0.0
    %v1715 = vmax.f32 %v1683, 0.0
    %v1716 = vmax.f32 %v1686, 0.0
    %v1717 = vmax.f32 %v1691, 0.0
    %v1718 = vmax.f32 %v1694, 0.0
    %v1719 = vmax.f32 %v1699, 0.0
    %v1720 = vmax.f32 %v1702, 0.0
    %1721 = vst.msk [vmem:[#allocation2 + $0x80] sm:$0xff] %vm1496, %v1705
    %1722 = vst.msk [vmem:[#allocation2 + $0x88] sm:$0xff] %vm1496, %v1706
    %1723 = vst.msk [vmem:[#allocation2 + $0x90] sm:$0xff] %vm1496, %v1707
    %1724 = vst.msk [vmem:[#allocation2 + $0x98] sm:$0xff] %vm1496, %v1708
    %1725 = vst.msk [vmem:[#allocation2 + $0xa0] sm:$0xff] %vm1496, %v1709
    %1726 = vst.msk [vmem:[#allocation2 + $0xa8] sm:$0xff] %vm1496, %v1710
    %1727 = vst.msk [vmem:[#allocation2 + $0xb0] sm:$0xff] %vm1496, %v1711
    %1728 = vst.msk [vmem:[#allocation2 + $0xb8] sm:$0xff] %vm1496, %v1712
    %1729 = vst.msk [vmem:[#allocation2 + $0xc0] sm:$0xff] %vm1496, %v1713
    %1730 = vst.msk [vmem:[#allocation2 + $0xc8] sm:$0xff] %vm1496, %v1714
    %1731 = vst.msk [vmem:[#allocation2 + $0xd0] sm:$0xff] %vm1496, %v1715
    %1732 = vst.msk [vmem:[#allocation2 + $0xd8] sm:$0xff] %vm1496, %v1716
    %1733 = vst.msk [vmem:[#allocation2 + $0xe0] sm:$0xff] %vm1496, %v1717
    %1734 = vst.msk [vmem:[#allocation2 + $0xe8] sm:$0xff] %vm1496, %v1718
    %1735 = vst.msk [vmem:[#allocation2 + $0xf0] sm:$0xff] %vm1496, %v1719
    %1736 = vst.msk [vmem:[#allocation2 + $0xf8] sm:$0xff] %vm1496, %v1720
    %v1737 = vld [vmem:[%s0 + $0x80] sm:$0xf]
    %v1738 = vld [vmem:[%s0 + $0x84] sm:$0xf]
    %v1739 = vld [vmem:[%s0 + $0x88] sm:$0xf]
    %v1740 = vld [vmem:[%s0 + $0x8c] sm:$0xf]
    %v1741 = vld [vmem:[%s0 + $0x90] sm:$0xf]
    %v1742 = vld [vmem:[%s0 + $0x94] sm:$0xf]
    %v1743 = vld [vmem:[%s0 + $0x98] sm:$0xf]
    %v1744 = vld [vmem:[%s0 + $0x9c] sm:$0xf]
    %v1745 = vld [vmem:[%s0 + $0xa0] sm:$0xf]
    %v1746 = vld [vmem:[%s0 + $0xa4] sm:$0xf]
    %v1747 = vld [vmem:[%s0 + $0xa8] sm:$0xf]
    %v1748 = vld [vmem:[%s0 + $0xac] sm:$0xf]
    %v1749 = vld [vmem:[%s0 + $0xb0] sm:$0xf]
    %v1750 = vld [vmem:[%s0 + $0xb4] sm:$0xf]
    %v1751 = vld [vmem:[%s0 + $0xb8] sm:$0xf]
    %v1752 = vld [vmem:[%s0 + $0xbc] sm:$0xf]
    %v1753 = vld [vmem:[%s1] sm:$0xf]
    %v1754 = vld [vmem:[%s1 + $0x4] sm:$0xf]
    %v1755 = vld [vmem:[%s2] sm:$0x1]
    %v1757 = vlaneseq
    %v1758 = vshrl.u32 %v1757, 7
    %v1759 = vsub.s32 0, %v1758
    %v1760 = vrot.slane %v1755, %v1759
    %v1778 = vunpack.c.l.b16 %v1737
    %v1779 = vunpack.c.l.b16 %v1738
    %v1780 = vunpack.c.l.b16 %v1739
    %v1781 = vunpack.c.l.b16 %v1740
    %v1782 = vunpack.c.l.b16 %v1741
    %v1783 = vunpack.c.l.b16 %v1742
    %v1784 = vunpack.c.l.b16 %v1743
    %v1785 = vunpack.c.l.b16 %v1744
    %v1786 = vunpack.c.l.b16 %v1745
    %v1787 = vunpack.c.l.b16 %v1746
    %v1788 = vunpack.c.l.b16 %v1747
    %v1789 = vunpack.c.l.b16 %v1748
    %v1790 = vunpack.c.l.b16 %v1749
    %v1791 = vunpack.c.l.b16 %v1750
    %v1792 = vunpack.c.l.b16 %v1751
    %v1793 = vunpack.c.l.b16 %v1752
    %v1794 = vpack.c.b16 %v1779, %v1778
    %v1795 = vpack.c.b16 %v1781, %v1780
    %v1796 = vpack.c.b16 %v1783, %v1782
    %v1797 = vpack.c.b16 %v1785, %v1784
    %v1798 = vpack.c.b16 %v1787, %v1786
    %v1799 = vpack.c.b16 %v1789, %v1788
    %v1800 = vpack.c.b16 %v1791, %v1790
    %v1801 = vpack.c.b16 %v1793, %v1792
    %v1804 = vunpack.c.l.b16 %v1753
    %v1805 = vunpack.c.l.b16 %v1754
    %v1806 = vpack.c.b16 %v1805, %v1804
    %v1809 = vsel %vm1358, %v1794, 0
    %v1812 = vsel %vm1358, %v1795, 0
    %v1815 = vsel %vm1358, %v1796, 0
    %v1818 = vsel %vm1358, %v1797, 0
    %v1821 = vsel %vm1358, %v1798, 0
    %v1824 = vsel %vm1358, %v1799, 0
    %v1827 = vsel %vm1358, %v1800, 0
    %v1830 = vsel %vm1358, %v1801, 0
    %1832 = vmatprep.subr.bf16.mxu0 0
    %1833 = vmatpush1.bf16.msra.mxu0 %v1806
    %1834 = vmatprep.subr.bf16.mxu0 0
    %1835 = vmatpush1.bf16.msra.mxu0 0
    %1836 = vmatprep.subr.bf16.mxu0 0
    %1837 = vmatpush1.bf16.msra.mxu0 0
    %1838 = vmatprep.subr.bf16.mxu0 0
    %1839 = vmatpush1.bf16.msra.mxu0 0
    %1840 = vmatprep.subr.bf16.mxu0 0
    %1841 = vmatpush1.bf16.msra.mxu0 0
    %1842 = vmatprep.subr.bf16.mxu0 0
    %1843 = vmatpush1.bf16.msra.mxu0 0
    %1844 = vmatprep.subr.bf16.mxu0 0
    %1845 = vmatpush1.bf16.msra.mxu0 0
    %1846 = vmatprep.subr.bf16.mxu0 0
    %1847 = vmatpush1.bf16.msra.mxu0 0
    %1848 = vmatprep.subr.bf16.mxu0 0
    %1849 = vmatpush1.bf16.msra.mxu0 0
    %1850 = vmatprep.subr.bf16.mxu0 0
    %1851 = vmatpush1.bf16.msra.mxu0 0
    %1852 = vmatprep.subr.bf16.mxu0 0
    %1853 = vmatpush1.bf16.msra.mxu0 0
    %1854 = vmatprep.subr.bf16.mxu0 0
    %1855 = vmatpush1.bf16.msra.mxu0 0
    %1856 = vmatprep.subr.bf16.mxu0 0
    %1857 = vmatpush1.bf16.msra.mxu0 0
    %1858 = vmatprep.subr.bf16.mxu0 0
    %1859 = vmatpush1.bf16.msra.mxu0 0
    %1860 = vmatprep.subr.bf16.mxu0 0
    %1861 = vmatpush1.bf16.msra.mxu0 0
    %1862 = vmatprep.subr.bf16.mxu0 0
    %1863 = vmatpush1.bf16.msra.mxu0 0
    %1864 = vmatprep.mubr.bf16.mxu0 0
    %1865 = vmatmul.mubr.bf16.gmra.mrb[0].mxu0 %v1809
    %v1866 = vpop.f32.mrb[0].mxu0
    %v1867 = vadd.f32 %v1760, %v1866
    %v1868 = vpop.f32.mrb[0].mxu0
    %v1869 = vpop.f32.mrb[0].mxu0
    %v1870 = vadd.f32 %v1760, %v1869
    %v1871 = vpop.f32.mrb[0].mxu0
    %1872 = vmatprep.mubr.bf16.mxu0 0
    %1873 = vmatmul.mubr.bf16.gmra.mrb[0].mxu0 %v1812
    %v1874 = vpop.f32.mrb[0].mxu0
    %v1875 = vadd.f32 %v1760, %v1874
    %v1876 = vpop.f32.mrb[0].mxu0
    %v1877 = vpop.f32.mrb[0].mxu0
    %v1878 = vadd.f32 %v1760, %v1877
    %v1879 = vpop.f32.mrb[0].mxu0
    %1880 = vmatprep.mubr.bf16.mxu0 0
    %1881 = vmatmul.mubr.bf16.gmra.mrb[0].mxu0 %v1815
    %v1882 = vpop.f32.mrb[0].mxu0
    %v1883 = vadd.f32 %v1760, %v1882
    %v1884 = vpop.f32.mrb[0].mxu0
    %v1885 = vpop.f32.mrb[0].mxu0
    %v1886 = vadd.f32 %v1760, %v1885
    %v1887 = vpop.f32.mrb[0].mxu0
    %1888 = vmatprep.mubr.bf16.mxu0 0
    %1889 = vmatmul.mubr.bf16.gmra.mrb[0].mxu0 %v1818
    %v1890 = vpop.f32.mrb[0].mxu0
    %v1891 = vadd.f32 %v1760, %v1890
    %v1892 = vpop.f32.mrb[0].mxu0
    %v1893 = vpop.f32.mrb[0].mxu0
    %v1894 = vadd.f32 %v1760, %v1893
    %v1895 = vpop.f32.mrb[0].mxu0
    %1896 = vmatprep.mubr.bf16.mxu0 0
    %1897 = vmatmul.mubr.bf16.gmra.mrb[0].mxu0 %v1821
    %v1898 = vpop.f32.mrb[0].mxu0
    %v1899 = vadd.f32 %v1760, %v1898
    %v1900 = vpop.f32.mrb[0].mxu0
    %v1901 = vpop.f32.mrb[0].mxu0
    %v1902 = vadd.f32 %v1760, %v1901
    %v1903 = vpop.f32.mrb[0].mxu0
    %1904 = vmatprep.mubr.bf16.mxu0 0
    %1905 = vmatmul.mubr.bf16.gmra.mrb[0].mxu0 %v1824
    %v1906 = vpop.f32.mrb[0].mxu0
    %v1907 = vadd.f32 %v1760, %v1906
    %v1908 = vpop.f32.mrb[0].mxu0
    %v1909 = vpop.f32.mrb[0].mxu0
    %v1910 = vadd.f32 %v1760, %v1909
    %v1911 = vpop.f32.mrb[0].mxu0
    %1912 = vmatprep.mubr.bf16.mxu0 0
    %1913 = vmatmul.mubr.bf16.gmra.mrb[0].mxu0 %v1827
    %v1914 = vpop.f32.mrb[0].mxu0
    %v1915 = vadd.f32 %v1760, %v1914
    %v1916 = vpop.f32.mrb[0].mxu0
    %v1917 = vpop.f32.mrb[0].mxu0
    %v1918 = vadd.f32 %v1760, %v1917
    %v1919 = vpop.f32.mrb[0].mxu0
    %1920 = vmatprep.mubr.bf16.mxu0 0
    %1921 = vmatmul.mubr.bf16.gmra.mrb[0].mxu0 %v1830
    %v1922 = vpop.f32.mrb[0].mxu0
    %v1923 = vadd.f32 %v1760, %v1922
    %v1924 = vpop.f32.mrb[0].mxu0
    %v1925 = vpop.f32.mrb[0].mxu0
    %v1926 = vadd.f32 %v1760, %v1925
    %v1927 = vpop.f32.mrb[0].mxu0
    %1928 = vdwg.mxu0
    %v1929 = vmax.f32 %v1867, 0.0
    %v1930 = vmax.f32 %v1870, 0.0
    %v1931 = vmax.f32 %v1875, 0.0
    %v1932 = vmax.f32 %v1878, 0.0
    %v1933 = vmax.f32 %v1883, 0.0
    %v1934 = vmax.f32 %v1886, 0.0
    %v1935 = vmax.f32 %v1891, 0.0
    %v1936 = vmax.f32 %v1894, 0.0
    %v1937 = vmax.f32 %v1899, 0.0
    %v1938 = vmax.f32 %v1902, 0.0
    %v1939 = vmax.f32 %v1907, 0.0
    %v1940 = vmax.f32 %v1910, 0.0
    %v1941 = vmax.f32 %v1915, 0.0
    %v1942 = vmax.f32 %v1918, 0.0
    %v1943 = vmax.f32 %v1923, 0.0
    %v1944 = vmax.f32 %v1926, 0.0
    %1945 = vst.msk [vmem:[#allocation2 + $0x100] sm:$0xff] %vm1496, %v1929
    %1946 = vst.msk [vmem:[#allocation2 + $0x108] sm:$0xff] %vm1496, %v1930
    %1947 = vst.msk [vmem:[#allocation2 + $0x110] sm:$0xff] %vm1496, %v1931
    %1948 = vst.msk [vmem:[#allocation2 + $0x118] sm:$0xff] %vm1496, %v1932
    %1949 = vst.msk [vmem:[#allocation2 + $0x120] sm:$0xff] %vm1496, %v1933
    %1950 = vst.msk [vmem:[#allocation2 + $0x128] sm:$0xff] %vm1496, %v1934
    %1951 = vst.msk [vmem:[#allocation2 + $0x130] sm:$0xff] %vm1496, %v1935
    %1952 = vst.msk [vmem:[#allocation2 + $0x138] sm:$0xff] %vm1496, %v1936
    %1953 = vst.msk [vmem:[#allocation2 + $0x140] sm:$0xff] %vm1496, %v1937
    %1954 = vst.msk [vmem:[#allocation2 + $0x148] sm:$0xff] %vm1496, %v1938
    %1955 = vst.msk [vmem:[#allocation2 + $0x150] sm:$0xff] %vm1496, %v1939
    %1956 = vst.msk [vmem:[#allocation2 + $0x158] sm:$0xff] %vm1496, %v1940
    %1957 = vst.msk [vmem:[#allocation2 + $0x160] sm:$0xff] %vm1496, %v1941
    %1958 = vst.msk [vmem:[#allocation2 + $0x168] sm:$0xff] %vm1496, %v1942
    %1959 = vst.msk [vmem:[#allocation2 + $0x170] sm:$0xff] %vm1496, %v1943
    %1960 = vst.msk [vmem:[#allocation2 + $0x178] sm:$0xff] %vm1496, %v1944
    %v1961 = vld [vmem:[%s0 + $0xc0] sm:$0xf]
    %v1962 = vld [vmem:[%s0 + $0xc4] sm:$0xf]
    %v1963 = vld [vmem:[%s0 + $0xc8] sm:$0xf]
    %v1964 = vld [vmem:[%s0 + $0xcc] sm:$0xf]
    %v1965 = vld [vmem:[%s0 + $0xd0] sm:$0xf]
    %v1966 = vld [vmem:[%s0 + $0xd4] sm:$0xf]
    %v1967 = vld [vmem:[%s0 + $0xd8] sm:$0xf]
    %v1968 = vld [vmem:[%s0 + $0xdc] sm:$0xf]
    %v1969 = vld [vmem:[%s0 + $0xe0] sm:$0xf]
    %v1970 = vld [vmem:[%s0 + $0xe4] sm:$0xf]
    %v1971 = vld [vmem:[%s0 + $0xe8] sm:$0xf]
    %v1972 = vld [vmem:[%s0 + $0xec] sm:$0xf]
    %v1973 = vld [vmem:[%s0 + $0xf0] sm:$0xf]
    %v1974 = vld [vmem:[%s0 + $0xf4] sm:$0xf]
    %v1975 = vld [vmem:[%s0 + $0xf8] sm:$0xf]
    %v1976 = vld [vmem:[%s0 + $0xfc] sm:$0xf]
    %v1977 = vld [vmem:[%s1] sm:$0xf]
    %v1978 = vld [vmem:[%s1 + $0x4] sm:$0xf]
    %v1979 = vld [vmem:[%s2] sm:$0x1]
    %v1981 = vlaneseq
    %v1982 = vshrl.u32 %v1981, 7
    %v1983 = vsub.s32 0, %v1982
    %v1984 = vrot.slane %v1979, %v1983
    %v2002 = vunpack.c.l.b16 %v1961
    %v2003 = vunpack.c.l.b16 %v1962
    %v2004 = vunpack.c.l.b16 %v1963
    %v2005 = vunpack.c.l.b16 %v1964
    %v2006 = vunpack.c.l.b16 %v1965
    %v2007 = vunpack.c.l.b16 %v1966
    %v2008 = vunpack.c.l.b16 %v1967
    %v2009 = vunpack.c.l.b16 %v1968
    %v2010 = vunpack.c.l.b16 %v1969
    %v2011 = vunpack.c.l.b16 %v1970
    %v2012 = vunpack.c.l.b16 %v1971
    %v2013 = vunpack.c.l.b16 %v1972
    %v2014 = vunpack.c.l.b16 %v1973
    %v2015 = vunpack.c.l.b16 %v1974
    %v2016 = vunpack.c.l.b16 %v1975
    %v2017 = vunpack.c.l.b16 %v1976
    %v2018 = vpack.c.b16 %v2003, %v2002
    %v2019 = vpack.c.b16 %v2005, %v2004
    %v2020 = vpack.c.b16 %v2007, %v2006
    %v2021 = vpack.c.b16 %v2009, %v2008
    %v2022 = vpack.c.b16 %v2011, %v2010
    %v2023 = vpack.c.b16 %v2013, %v2012
    %v2024 = vpack.c.b16 %v2015, %v2014
    %v2025 = vpack.c.b16 %v2017, %v2016
    %v2028 = vunpack.c.l.b16 %v1977
    %v2029 = vunpack.c.l.b16 %v1978
    %v2030 = vpack.c.b16 %v2029, %v2028
    %v2033 = vsel %vm1358, %v2018, 0
    %v2036 = vsel %vm1358, %v2019, 0
    %v2039 = vsel %vm1358, %v2020, 0
    %v2042 = vsel %vm1358, %v2021, 0
    %v2045 = vsel %vm1358, %v2022, 0
    %v2048 = vsel %vm1358, %v2023, 0
    %v2051 = vsel %vm1358, %v2024, 0
    %v2054 = vsel %vm1358, %v2025, 0
    %2056 = vmatprep.subr.bf16.mxu0 0
    %2057 = vmatpush1.bf16.msra.mxu0 %v2030
    %2058 = vmatprep.subr.bf16.mxu0 0
    %2059 = vmatpush1.bf16.msra.mxu0 0
    %2060 = vmatprep.subr.bf16.mxu0 0
    %2061 = vmatpush1.bf16.msra.mxu0 0
    %2062 = vmatprep.subr.bf16.mxu0 0
    %2063 = vmatpush1.bf16.msra.mxu0 0
    %2064 = vmatprep.subr.bf16.mxu0 0
    %2065 = vmatpush1.bf16.msra.mxu0 0
    %2066 = vmatprep.subr.bf16.mxu0 0
    %2067 = vmatpush1.bf16.msra.mxu0 0
    %2068 = vmatprep.subr.bf16.mxu0 0
    %2069 = vmatpush1.bf16.msra.mxu0 0
    %2070 = vmatprep.subr.bf16.mxu0 0
    %2071 = vmatpush1.bf16.msra.mxu0 0
    %2072 = vmatprep.subr.bf16.mxu0 0
    %2073 = vmatpush1.bf16.msra.mxu0 0
    %2074 = vmatprep.subr.bf16.mxu0 0
    %2075 = vmatpush1.bf16.msra.mxu0 0
    %2076 = vmatprep.subr.bf16.mxu0 0
    %2077 = vmatpush1.bf16.msra.mxu0 0
    %2078 = vmatprep.subr.bf16.mxu0 0
    %2079 = vmatpush1.bf16.msra.mxu0 0
    %2080 = vmatprep.subr.bf16.mxu0 0
    %2081 = vmatpush1.bf16.msra.mxu0 0
    %2082 = vmatprep.subr.bf16.mxu0 0
    %2083 = vmatpush1.bf16.msra.mxu0 0
    %2084 = vmatprep.subr.bf16.mxu0 0
    %2085 = vmatpush1.bf16.msra.mxu0 0
    %2086 = vmatprep.subr.bf16.mxu0 0
    %2087 = vmatpush1.bf16.msra.mxu0 0
    %2088 = vmatprep.mubr.bf16.mxu0 0
    %2089 = vmatmul.mubr.bf16.gmra.mrb[0].mxu0 %v2033
    %v2090 = vpop.f32.mrb[0].mxu0
    %v2091 = vadd.f32 %v1984, %v2090
    %v2092 = vpop.f32.mrb[0].mxu0
    %v2093 = vpop.f32.mrb[0].mxu0
    %v2094 = vadd.f32 %v1984, %v2093
    %v2095 = vpop.f32.mrb[0].mxu0
    %2096 = vmatprep.mubr.bf16.mxu0 0
    %2097 = vmatmul.mubr.bf16.gmra.mrb[0].mxu0 %v2036
    %v2098 = vpop.f32.mrb[0].mxu0
    %v2099 = vadd.f32 %v1984, %v2098
    %v2100 = vpop.f32.mrb[0].mxu0
    %v2101 = vpop.f32.mrb[0].mxu0
    %v2102 = vadd.f32 %v1984, %v2101
    %v2103 = vpop.f32.mrb[0].mxu0
    %2104 = vmatprep.mubr.bf16.mxu0 0
    %2105 = vmatmul.mubr.bf16.gmra.mrb[0].mxu0 %v2039
    %v2106 = vpop.f32.mrb[0].mxu0
    %v2107 = vadd.f32 %v1984, %v2106
    %v2108 = vpop.f32.mrb[0].mxu0
    %v2109 = vpop.f32.mrb[0].mxu0
    %v2110 = vadd.f32 %v1984, %v2109
    %v2111 = vpop.f32.mrb[0].mxu0
    %2112 = vmatprep.mubr.bf16.mxu0 0
    %2113 = vmatmul.mubr.bf16.gmra.mrb[0].mxu0 %v2042
    %v2114 = vpop.f32.mrb[0].mxu0
    %v2115 = vadd.f32 %v1984, %v2114
    %v2116 = vpop.f32.mrb[0].mxu0
    %v2117 = vpop.f32.mrb[0].mxu0
    %v2118 = vadd.f32 %v1984, %v2117
    %v2119 = vpop.f32.mrb[0].mxu0
    %2120 = vmatprep.mubr.bf16.mxu0 0
    %2121 = vmatmul.mubr.bf16.gmra.mrb[0].mxu0 %v2045
    %v2122 = vpop.f32.mrb[0].mxu0
    %v2123 = vadd.f32 %v1984, %v2122
    %v2124 = vpop.f32.mrb[0].mxu0
    %v2125 = vpop.f32.mrb[0].mxu0
    %v2126 = vadd.f32 %v1984, %v2125
    %v2127 = vpop.f32.mrb[0].mxu0
    %2128 = vmatprep.mubr.bf16.mxu0 0
    %2129 = vmatmul.mubr.bf16.gmra.mrb[0].mxu0 %v2048
    %v2130 = vpop.f32.mrb[0].mxu0
    %v2131 = vadd.f32 %v1984, %v2130
    %v2132 = vpop.f32.mrb[0].mxu0
    %v2133 = vpop.f32.mrb[0].mxu0
    %v2134 = vadd.f32 %v1984, %v2133
    %v2135 = vpop.f32.mrb[0].mxu0
    %2136 = vmatprep.mubr.bf16.mxu0 0
    %2137 = vmatmul.mubr.bf16.gmra.mrb[0].mxu0 %v2051
    %v2138 = vpop.f32.mrb[0].mxu0
    %v2139 = vadd.f32 %v1984, %v2138
    %v2140 = vpop.f32.mrb[0].mxu0
    %v2141 = vpop.f32.mrb[0].mxu0
    %v2142 = vadd.f32 %v1984, %v2141
    %v2143 = vpop.f32.mrb[0].mxu0
    %2144 = vmatprep.mubr.bf16.mxu0 0
    %2145 = vmatmul.mubr.bf16.gmra.mrb[0].mxu0 %v2054
    %v2146 = vpop.f32.mrb[0].mxu0
    %v2147 = vadd.f32 %v1984, %v2146
    %v2148 = vpop.f32.mrb[0].mxu0
    %v2149 = vpop.f32.mrb[0].mxu0
    %v2150 = vadd.f32 %v1984, %v2149
    %v2151 = vpop.f32.mrb[0].mxu0
    %2152 = vdwg.mxu0
    %v2153 = vmax.f32 %v2091, 0.0
    %v2154 = vmax.f32 %v2094, 0.0
    %v2155 = vmax.f32 %v2099, 0.0
    %v2156 = vmax.f32 %v2102, 0.0
    %v2157 = vmax.f32 %v2107, 0.0
    %v2158 = vmax.f32 %v2110, 0.0
    %v2159 = vmax.f32 %v2115, 0.0
    %v2160 = vmax.f32 %v2118, 0.0
    %v2161 = vmax.f32 %v2123, 0.0
    %v2162 = vmax.f32 %v2126, 0.0
    %v2163 = vmax.f32 %v2131, 0.0
    %v2164 = vmax.f32 %v2134, 0.0
    %v2165 = vmax.f32 %v2139, 0.0
    %v2166 = vmax.f32 %v2142, 0.0
    %v2167 = vmax.f32 %v2147, 0.0
    %v2168 = vmax.f32 %v2150, 0.0
    %2169 = vst.msk [vmem:[#allocation2 + $0x180] sm:$0xff] %vm1496, %v2153
    %2170 = vst.msk [vmem:[#allocation2 + $0x188] sm:$0xff] %vm1496, %v2154
    %2171 = vst.msk [vmem:[#allocation2 + $0x190] sm:$0xff] %vm1496, %v2155
    %2172 = vst.msk [vmem:[#allocation2 + $0x198] sm:$0xff] %vm1496, %v2156
    %2173 = vst.msk [vmem:[#allocation2 + $0x1a0] sm:$0xff] %vm1496, %v2157
    %2174 = vst.msk [vmem:[#allocation2 + $0x1a8] sm:$0xff] %vm1496, %v2158
    %2175 = vst.msk [vmem:[#allocation2 + $0x1b0] sm:$0xff] %vm1496, %v2159
    %2176 = vst.msk [vmem:[#allocation2 + $0x1b8] sm:$0xff] %vm1496, %v2160
    %2177 = vst.msk [vmem:[#allocation2 + $0x1c0] sm:$0xff] %vm1496, %v2161
    %2178 = vst.msk [vmem:[#allocation2 + $0x1c8] sm:$0xff] %vm1496, %v2162
    %2179 = vst.msk [vmem:[#allocation2 + $0x1d0] sm:$0xff] %vm1496, %v2163
    %2180 = vst.msk [vmem:[#allocation2 + $0x1d8] sm:$0xff] %vm1496, %v2164
    %2181 = vst.msk [vmem:[#allocation2 + $0x1e0] sm:$0xff] %vm1496, %v2165
    %2182 = vst.msk [vmem:[#allocation2 + $0x1e8] sm:$0xff] %vm1496, %v2166
    %2183 = vst.msk [vmem:[#allocation2 + $0x1f0] sm:$0xff] %vm1496, %v2167
    %2184 = vst.msk [vmem:[#allocation2 + $0x1f8] sm:$0xff] %vm1496, %v2168
    %v2185 = vld [vmem:[%s0 + $0x100] sm:$0xf]
    %v2186 = vld [vmem:[%s0 + $0x104] sm:$0xf]
    %v2187 = vld [vmem:[%s0 + $0x108] sm:$0xf]
    %v2188 = vld [vmem:[%s0 + $0x10c] sm:$0xf]
    %v2189 = vld [vmem:[%s0 + $0x110] sm:$0xf]
    %v2190 = vld [vmem:[%s0 + $0x114] sm:$0xf]
    %v2191 = vld [vmem:[%s0 + $0x118] sm:$0xf]
    %v2192 = vld [vmem:[%s0 + $0x11c] sm:$0xf]
    %v2193 = vld [vmem:[%s0 + $0x120] sm:$0xf]
    %v2194 = vld [vmem:[%s0 + $0x124] sm:$0xf]
    %v2195 = vld [vmem:[%s0 + $0x128] sm:$0xf]
    %v2196 = vld [vmem:[%s0 + $0x12c] sm:$0xf]
    %v2197 = vld [vmem:[%s0 + $0x130] sm:$0x3]
    %v2198 = vld [vmem:[%s1] sm:$0xf]
    %v2199 = vld [vmem:[%s1 + $0x4] sm:$0xf]
    %v2200 = vld [vmem:[%s2] sm:$0x1]
    %v2202 = vlaneseq
    %v2203 = vshrl.u32 %v2202, 7
    %v2204 = vsub.s32 0, %v2203
    %v2205 = vrot.slane %v2200, %v2204
    %v2220 = vunpack.c.l.b16 %v2185
    %v2221 = vunpack.c.l.b16 %v2186
    %v2222 = vunpack.c.l.b16 %v2187
    %v2223 = vunpack.c.l.b16 %v2188
    %v2224 = vunpack.c.l.b16 %v2189
    %v2225 = vunpack.c.l.b16 %v2190
    %v2226 = vunpack.c.l.b16 %v2191
    %v2227 = vunpack.c.l.b16 %v2192
    %v2228 = vunpack.c.l.b16 %v2193
    %v2229 = vunpack.c.l.b16 %v2194
    %v2230 = vunpack.c.l.b16 %v2195
    %v2231 = vunpack.c.l.b16 %v2196
    %v2232 = vunpack.c.l.b16 %v2197
    %v2233 = vpack.c.b16 %v2221, %v2220
    %v2234 = vpack.c.b16 %v2223, %v2222
    %v2235 = vpack.c.b16 %v2225, %v2224
    %v2236 = vpack.c.b16 %v2227, %v2226
    %v2237 = vpack.c.b16 %v2229, %v2228
    %v2238 = vpack.c.b16 %v2231, %v2230
    %v2239 = vpack.c.b16 %v2232, %v2232
    %v2242 = vunpack.c.l.b16 %v2198
    %v2243 = vunpack.c.l.b16 %v2199
    %v2244 = vpack.c.b16 %v2243, %v2242
    %v2247 = vsel %vm1358, %v2233, 0
    %v2250 = vsel %vm1358, %v2234, 0
    %v2253 = vsel %vm1358, %v2235, 0
    %v2256 = vsel %vm1358, %v2236, 0
    %v2259 = vsel %vm1358, %v2237, 0
    %v2262 = vsel %vm1358, %v2238, 0
    %v2265 = vsel %vm1358, %v2239, 0
    %2267 = vmatprep.subr.bf16.mxu0 0
    %2268 = vmatpush1.bf16.msra.mxu0 %v2244
    %2269 = vmatprep.subr.bf16.mxu0 0
    %2270 = vmatpush1.bf16.msra.mxu0 0
    %2271 = vmatprep.subr.bf16.mxu0 0
    %2272 = vmatpush1.bf16.msra.mxu0 0
    %2273 = vmatprep.subr.bf16.mxu0 0
    %2274 = vmatpush1.bf16.msra.mxu0 0
    %2275 = vmatprep.subr.bf16.mxu0 0
    %2276 = vmatpush1.bf16.msra.mxu0 0
    %2277 = vmatprep.subr.bf16.mxu0 0
    %2278 = vmatpush1.bf16.msra.mxu0 0
    %2279 = vmatprep.subr.bf16.mxu0 0
    %2280 = vmatpush1.bf16.msra.mxu0 0
    %2281 = vmatprep.subr.bf16.mxu0 0
    %2282 = vmatpush1.bf16.msra.mxu0 0
    %2283 = vmatprep.subr.bf16.mxu0 0
    %2284 = vmatpush1.bf16.msra.mxu0 0
    %2285 = vmatprep.subr.bf16.mxu0 0
    %2286 = vmatpush1.bf16.msra.mxu0 0
    %2287 = vmatprep.subr.bf16.mxu0 0
    %2288 = vmatpush1.bf16.msra.mxu0 0
    %2289 = vmatprep.subr.bf16.mxu0 0
    %2290 = vmatpush1.bf16.msra.mxu0 0
    %2291 = vmatprep.subr.bf16.mxu0 0
    %2292 = vmatpush1.bf16.msra.mxu0 0
    %2293 = vmatprep.subr.bf16.mxu0 0
    %2294 = vmatpush1.bf16.msra.mxu0 0
    %2295 = vmatprep.subr.bf16.mxu0 0
    %2296 = vmatpush1.bf16.msra.mxu0 0
    %2297 = vmatprep.subr.bf16.mxu0 0
    %2298 = vmatpush1.bf16.msra.mxu0 0
    %2299 = vmatprep.mubr.bf16.mxu0 0
    %2300 = vmatmul.mubr.bf16.gmra.mrb[0].mxu0 %v2247
    %v2301 = vpop.f32.mrb[0].mxu0
    %v2302 = vadd.f32 %v2205, %v2301
    %v2303 = vpop.f32.mrb[0].mxu0
    %v2304 = vpop.f32.mrb[0].mxu0
    %v2305 = vadd.f32 %v2205, %v2304
    %v2306 = vpop.f32.mrb[0].mxu0
    %2307 = vmatprep.mubr.bf16.mxu0 0
    %2308 = vmatmul.mubr.bf16.gmra.mrb[0].mxu0 %v2250
    %v2309 = vpop.f32.mrb[0].mxu0
    %v2310 = vadd.f32 %v2205, %v2309
    %v2311 = vpop.f32.mrb[0].mxu0
    %v2312 = vpop.f32.mrb[0].mxu0
    %v2313 = vadd.f32 %v2205, %v2312
    %v2314 = vpop.f32.mrb[0].mxu0
    %2315 = vmatprep.mubr.bf16.mxu0 0
    %2316 = vmatmul.mubr.bf16.gmra.mrb[0].mxu0 %v2253
    %v2317 = vpop.f32.mrb[0].mxu0
    %v2318 = vadd.f32 %v2205, %v2317
    %v2319 = vpop.f32.mrb[0].mxu0
    %v2320 = vpop.f32.mrb[0].mxu0
    %v2321 = vadd.f32 %v2205, %v2320
    %v2322 = vpop.f32.mrb[0].mxu0
    %2323 = vmatprep.mubr.bf16.mxu0 0
    %2324 = vmatmul.mubr.bf16.gmra.mrb[0].mxu0 %v2256
    %v2325 = vpop.f32.mrb[0].mxu0
    %v2326 = vadd.f32 %v2205, %v2325
    %v2327 = vpop.f32.mrb[0].mxu0
    %v2328 = vpop.f32.mrb[0].mxu0
    %v2329 = vadd.f32 %v2205, %v2328
    %v2330 = vpop.f32.mrb[0].mxu0
    %2331 = vmatprep.mubr.bf16.mxu0 0
    %2332 = vmatmul.mubr.bf16.gmra.mrb[0].mxu0 %v2259
    %v2333 = vpop.f32.mrb[0].mxu0
    %v2334 = vadd.f32 %v2205, %v2333
    %v2335 = vpop.f32.mrb[0].mxu0
    %v2336 = vpop.f32.mrb[0].mxu0
    %v2337 = vadd.f32 %v2205, %v2336
    %v2338 = vpop.f32.mrb[0].mxu0
    %2339 = vmatprep.mubr.bf16.mxu0 0
    %2340 = vmatmul.mubr.bf16.gmra.mrb[0].mxu0 %v2262
    %v2341 = vpop.f32.mrb[0].mxu0
    %v2342 = vadd.f32 %v2205, %v2341
    %v2343 = vpop.f32.mrb[0].mxu0
    %v2344 = vpop.f32.mrb[0].mxu0
    %v2345 = vadd.f32 %v2205, %v2344
    %v2346 = vpop.f32.mrb[0].mxu0
    %2347 = vmatprep.mubr.bf16.mxu0 0
    %2348 = vmatmul.mubr.bf16.gmra.mrb[0].mxu0 %v2265
    %v2349 = vpop.f32.mrb[0].mxu0
    %v2350 = vadd.f32 %v2205, %v2349
    %v2351 = vpop.f32.mrb[0].mxu0
    %v2352 = vpop.f32.mrb[0].mxu0
    %v2353 = vpop.f32.mrb[0].mxu0
    %2354 = vdwg.mxu0
    %v2355 = vmax.f32 %v2302, 0.0
    %v2356 = vmax.f32 %v2305, 0.0
    %v2357 = vmax.f32 %v2310, 0.0
    %v2358 = vmax.f32 %v2313, 0.0
    %v2359 = vmax.f32 %v2318, 0.0
    %v2360 = vmax.f32 %v2321, 0.0
    %v2361 = vmax.f32 %v2326, 0.0
    %v2362 = vmax.f32 %v2329, 0.0
    %v2363 = vmax.f32 %v2334, 0.0
    %v2364 = vmax.f32 %v2337, 0.0
    %v2365 = vmax.f32 %v2342, 0.0
    %v2366 = vmax.f32 %v2345, 0.0
    %v2367 = vmax.f32 %v2350, 0.0
    %2368 = vst.msk [vmem:[#allocation2 + $0x200] sm:$0xff] %vm1496, %v2355
    %2369 = vst.msk [vmem:[#allocation2 + $0x208] sm:$0xff] %vm1496, %v2356
    %2370 = vst.msk [vmem:[#allocation2 + $0x210] sm:$0xff] %vm1496, %v2357
    %2371 = vst.msk [vmem:[#allocation2 + $0x218] sm:$0xff] %vm1496, %v2358
    %2372 = vst.msk [vmem:[#allocation2 + $0x220] sm:$0xff] %vm1496, %v2359
    %2373 = vst.msk [vmem:[#allocation2 + $0x228] sm:$0xff] %vm1496, %v2360
    %2374 = vst.msk [vmem:[#allocation2 + $0x230] sm:$0xff] %vm1496, %v2361
    %2375 = vst.msk [vmem:[#allocation2 + $0x238] sm:$0xff] %vm1496, %v2362
    %2376 = vst.msk [vmem:[#allocation2 + $0x240] sm:$0xff] %vm1496, %v2363
    %2377 = vst.msk [vmem:[#allocation2 + $0x248] sm:$0xff] %vm1496, %v2364
    %2378 = vst.msk [vmem:[#allocation2 + $0x250] sm:$0xff] %vm1496, %v2365
    %2379 = vst.msk [vmem:[#allocation2 + $0x258] sm:$0xff] %vm1496, %v2366
    %2380 = vst.msk [vmem:[#allocation2 + $0x260] sm:$0xf] %vm1238, %v2367
    %v2381 = vld [vmem:[#allocation2] sm:$0xff]
    %v2382 = vld [vmem:[#allocation2 + $0x8] sm:$0xff]
    %v2383 = vld [vmem:[#allocation2 + $0x12] sm:$0xff]
    %v2384 = vld [vmem:[#allocation2 + $0x1a] sm:$0xff]
    %v2385 = vmax.f32 %v2381, %v2383
    %v2386 = vmax.f32 %v2382, %v2384
    %2387 = vst.msk [vmem:[#allocation2] sm:$0xff] %vm1496, %v2385
    %2388 = vst.msk [vmem:[#allocation2 + $0x8] sm:$0xff] %vm1496, %v2386
    %v2389 = vld [vmem:[#allocation2] ss:$2 sm:$0xff]
    %s2390 = scalar_lea.vmem [#allocation2], 1
    %v2391 = vld [vmem:[%s2390] ss:$2 sm:$0xff]
    %v2392 = vmax.f32 %v2389, %v2391
    %v2393 = vpack.c.bf16 %v2392, %v2392
    %v2395 = vunpack.c.l.b16 %v2393
    %v2396 = vpack.c.b16 %v2395, %v2395
    %v2398 = vshrl.u32 %v2396, 16
    %v2400 = vrot.slane %v2398, 6
    %v2401 = vshll.u32 %v2396, 16
    %v2403 = vrot.slane %v2401, 7
    %v2404 = vor.u32 %v2400, %v2403
    %v2405 = vrot.slane %v2404, 4
    %vm2408 = vcmask 257025
    %vm2409 = vsmask.f32 7942
    %vm2410 = vmand %vm2408, %vm2409
    %v2411 = vld [vmem:[#allocation6 + $0x4] sm:$0xe]
    %v2412 = vsel %vm2410, %v2404, %v2411
    %2413 = vst [vmem:[#allocation6 + $0x4] sm:$0xe] %v2412
    %vm2414 = vcmask 254976
    %vm2415 = vsmask.f32 1280
    %vm2416 = vmand %vm2414, %vm2415
    %v2417 = vld [vmem:[#allocation6 + $0x8] sm:$0x3]
    %v2418 = vsel %vm2416, %v2405, %v2417
    %2419 = vst [vmem:[#allocation6 + $0x8] sm:$0x3] %v2418
    %v2420 = vld [vmem:[#allocation2 + $0x24] sm:$0xff]
    %v2421 = vld [vmem:[#allocation2 + $0x2c] sm:$0xff]
    %v2422 = vld [vmem:[#allocation2 + $0x36] sm:$0xff]
    %v2423 = vld [vmem:[#allocation2 + $0x3e] sm:$0xff]
    %v2424 = vmax.f32 %v2420, %v2422
    %v2425 = vmax.f32 %v2421, %v2423
    %2426 = vst.msk [vmem:[#allocation2 + $0x24] sm:$0xff] %vm1496, %v2424
    %2427 = vst.msk [vmem:[#allocation2 + $0x2c] sm:$0xff] %vm1496, %v2425
    %s2428 = scalar_lea.vmem [#allocation2], 36
    %v2429 = vld [vmem:[%s2428] ss:$2 sm:$0xff]
    %s2430 = scalar_lea.vmem [#allocation2], 37
    %v2431 = vld [vmem:[%s2430] ss:$2 sm:$0xff]
    %v2432 = vmax.f32 %v2429, %v2431
    %v2433 = vpack.c.bf16 %v2432, %v2432
    %v2435 = vunpack.c.l.b16 %v2433
    %v2436 = vpack.c.b16 %v2435, %v2435
    %v2438 = vshrl.u32 %v2436, 16
    %v2440 = vrot.slane %v2438, 5
    %v2441 = vshll.u32 %v2436, 16
    %v2443 = vrot.slane %v2441, 6
    %v2444 = vor.u32 %v2440, %v2443
    %v2445 = vrot.slane %v2444, 4
    %vm2448 = vcmask 257026
    %vm2449 = vsmask.f32 7946
    %vm2450 = vmand %vm2448, %vm2449
    %v2451 = vld [vmem:[#allocation6 + $0x8] sm:$0xc]
    %v2452 = vsel %vm2450, %v2444, %v2451
    %2453 = vst [vmem:[#allocation6 + $0x8] sm:$0xc] %v2452
    %vm2454 = vcmask 256000
    %vm2455 = vsmask.f32 2304
    %vm2456 = vmand %vm2454, %vm2455
    %v2457 = vld [vmem:[#allocation6 + $0xc] sm:$0x7]
    %v2458 = vsel %vm2456, %v2445, %v2457
    %2459 = vst [vmem:[#allocation6 + $0xc] sm:$0x7] %v2458
    %v2460 = vld [vmem:[#allocation2 + $0x48] sm:$0xff]
    %v2461 = vld [vmem:[#allocation2 + $0x50] sm:$0xff]
    %v2462 = vld [vmem:[#allocation2 + $0x5a] sm:$0xff]
    %v2463 = vld [vmem:[#allocation2 + $0x62] sm:$0xff]
    %v2464 = vmax.f32 %v2460, %v2462
    %v2465 = vmax.f32 %v2461, %v2463
    %2466 = vst.msk [vmem:[#allocation2 + $0x48] sm:$0xff] %vm1496, %v2464
    %2467 = vst.msk [vmem:[#allocation2 + $0x50] sm:$0xff] %vm1496, %v2465
    %s2468 = scalar_lea.vmem [#allocation2], 72
    %v2469 = vld [vmem:[%s2468] ss:$2 sm:$0xff]
    %s2470 = scalar_lea.vmem [#allocation2], 73
    %v2471 = vld [vmem:[%s2470] ss:$2 sm:$0xff]
    %v2472 = vmax.f32 %v2469, %v2471
    %v2473 = vpack.c.bf16 %v2472, %v2472
    %v2475 = vunpack.c.l.b16 %v2473
    %v2476 = vpack.c.b16 %v2475, %v2475
    %v2478 = vshll.u32 %v2476, 16
    %v2480 = vrot.slane %v2478, 5
    %v2481 = vshrl.u32 %v2476, 16
    %v2483 = vrot.slane %v2481, 4
    %v2484 = vor.u32 %v2483, %v2480
    %v2485 = vrot.slane %v2484, 4
    %vm2488 = vcmask 257027
    %vm2489 = vsmask.f32 7950
    %vm2490 = vmand %vm2488, %vm2489
    %v2491 = vld [vmem:[#allocation6 + $0xc] sm:$0x8]
    %v2492 = vsel %vm2490, %v2480, %v2491
    %2493 = vst [vmem:[#allocation6 + $0xc] sm:$0x8] %v2492
    %vm2494 = vcmask 257024
    %vm2495 = vsmask.f32 3328
    %vm2496 = vmand %vm2494, %vm2495
    %v2497 = vld [vmem:[#allocation6 + $0x10] sm:$0xf]
    %v2498 = vsel %vm2496, %v2485, %v2497
    %2499 = vst [vmem:[#allocation6 + $0x10] sm:$0xf] %v2498
    %v2500 = vld [vmem:[#allocation2 + $0x6c] sm:$0xff]
    %v2501 = vld [vmem:[#allocation2 + $0x74] sm:$0xff]
    %v2502 = vld [vmem:[#allocation2 + $0x7e] sm:$0xff]
    %v2503 = vld [vmem:[#allocation2 + $0x86] sm:$0xff]
    %v2504 = vmax.f32 %v2500, %v2502
    %v2505 = vmax.f32 %v2501, %v2503
    %2506 = vst.msk [vmem:[#allocation2 + $0x6c] sm:$0xff] %vm1496, %v2504
    %2507 = vst.msk [vmem:[#allocation2 + $0x74] sm:$0xff] %vm1496, %v2505
    %s2508 = scalar_lea.vmem [#allocation2], 108
    %v2509 = vld [vmem:[%s2508] ss:$2 sm:$0xff]
    %s2510 = scalar_lea.vmem [#allocation2], 109
    %v2511 = vld [vmem:[%s2510] ss:$2 sm:$0xff]
    %v2512 = vmax.f32 %v2509, %v2511
    %v2513 = vpack.c.bf16 %v2512, %v2512
    %v2515 = vunpack.c.l.b16 %v2513
    %v2516 = vpack.c.b16 %v2515, %v2515
    %v2518 = vshrl.u32 %v2516, 16
    %v2520 = vrot.slane %v2518, 7
    %v2521 = vshll.u32 %v2516, 16
    %v2523 = vor.u32 %v2520, %v2521
    %v2524 = vrot.slane %v2520, 4
    %vm2527 = vsmask.f32 7938
    %vm2528 = vmand %vm2494, %vm2527
    %v2529 = vld [vmem:[#allocation6 + $0x14] sm:$0xf]
    %v2530 = vsel %vm2528, %v2523, %v2529
    %2531 = vst [vmem:[#allocation6 + $0x14] sm:$0xf] %v2530
    %vm2532 = vcmask 253952
    %vm2533 = vsmask.f32 256
    %vm2534 = vmand %vm2532, %vm2533
    %v2535 = vld [vmem:[#allocation6 + $0x18] sm:$0x1]
    %v2536 = vsel %vm2534, %v2524, %v2535
    %2537 = vst [vmem:[#allocation6 + $0x18] sm:$0x1] %v2536
    %v2538 = vld [vmem:[#allocation2 + $0x90] sm:$0xff]
    %v2539 = vld [vmem:[#allocation2 + $0x98] sm:$0xff]
    %v2540 = vld [vmem:[#allocation2 + $0xa2] sm:$0xff]
    %v2541 = vld [vmem:[#allocation2 + $0xaa] sm:$0xff]
    %v2542 = vmax.f32 %v2538, %v2540
    %v2543 = vmax.f32 %v2539, %v2541
    %2544 = vst.msk [vmem:[#allocation2 + $0x90] sm:$0xff] %vm1496, %v2542
    %2545 = vst.msk [vmem:[#allocation2 + $0x98] sm:$0xff] %vm1496, %v2543
    %s2546 = scalar_lea.vmem [#allocation2], 144
    %v2547 = vld [vmem:[%s2546] ss:$2 sm:$0xff]
    %s2548 = scalar_lea.vmem [#allocation2], 145
    %v2549 = vld [vmem:[%s2548] ss:$2 sm:$0xff]
    %v2550 = vmax.f32 %v2547, %v2549
    %v2551 = vpack.c.bf16 %v2550, %v2550
    %v2553 = vunpack.c.l.b16 %v2551
    %v2554 = vpack.c.b16 %v2553, %v2553
    %v2556 = vshrl.u32 %v2554, 16
    %v2558 = vrot.slane %v2556, 6
    %v2559 = vshll.u32 %v2554, 16
    %v2561 = vrot.slane %v2559, 7
    %v2562 = vor.u32 %v2558, %v2561
    %v2563 = vrot.slane %v2562, 4
    %v2566 = vld [vmem:[#allocation6 + $0x18] sm:$0xe]
    %v2567 = vsel %vm2410, %v2562, %v2566
    %2568 = vst [vmem:[#allocation6 + $0x18] sm:$0xe] %v2567
    %v2569 = vld [vmem:[#allocation6 + $0x1c] sm:$0x3]
    %v2570 = vsel %vm2416, %v2563, %v2569
    %2571 = vst [vmem:[#allocation6 + $0x1c] sm:$0x3] %v2570
    %v2572 = vld [vmem:[#allocation2 + $0xb4] sm:$0xff]
    %v2573 = vld [vmem:[#allocation2 + $0xbc] sm:$0xff]
    %v2574 = vld [vmem:[#allocation2 + $0xc6] sm:$0xff]
    %v2575 = vld [vmem:[#allocation2 + $0xce] sm:$0xff]
    %v2576 = vmax.f32 %v2572, %v2574
    %v2577 = vmax.f32 %v2573, %v2575
    %2578 = vst.msk [vmem:[#allocation2 + $0xb4] sm:$0xff] %vm1496, %v2576
    %2579 = vst.msk [vmem:[#allocation2 + $0xbc] sm:$0xff] %vm1496, %v2577
    %s2580 = scalar_lea.vmem [#allocation2], 180
    %v2581 = vld [vmem:[%s2580] ss:$2 sm:$0xff]
    %s2582 = scalar_lea.vmem [#allocation2], 181
    %v2583 = vld [vmem:[%s2582] ss:$2 sm:$0xff]
    %v2584 = vmax.f32 %v2581, %v2583
    %v2585 = vpack.c.bf16 %v2584, %v2584
    %v2587 = vunpack.c.l.b16 %v2585
    %v2588 = vpack.c.b16 %v2587, %v2587
    %v2590 = vshrl.u32 %v2588, 16
    %v2592 = vrot.slane %v2590, 5
    %v2593 = vshll.u32 %v2588, 16
    %v2595 = vrot.slane %v2593, 6
    %v2596 = vor.u32 %v2592, %v2595
    %v2597 = vrot.slane %v2596, 4
    %v2600 = vld [vmem:[#allocation6 + $0x1c] sm:$0xc]
    %v2601 = vsel %vm2450, %v2596, %v2600
    %2602 = vst [vmem:[#allocation6 + $0x1c] sm:$0xc] %v2601
    %v2603 = vld [vmem:[#allocation6 + $0x20] sm:$0x7]
    %v2604 = vsel %vm2456, %v2597, %v2603
    %2605 = vst [vmem:[#allocation6 + $0x20] sm:$0x7] %v2604
    %v2606 = vld [vmem:[#allocation2 + $0xd8] sm:$0xff]
    %v2607 = vld [vmem:[#allocation2 + $0xe0] sm:$0xff]
    %v2608 = vld [vmem:[#allocation2 + $0xea] sm:$0xff]
    %v2609 = vld [vmem:[#allocation2 + $0xf2] sm:$0xff]
    %v2610 = vmax.f32 %v2606, %v2608
    %v2611 = vmax.f32 %v2607, %v2609
    %2612 = vst.msk [vmem:[#allocation2 + $0xd8] sm:$0xff] %vm1496, %v2610
    %2613 = vst.msk [vmem:[#allocation2 + $0xe0] sm:$0xff] %vm1496, %v2611
    %s2614 = scalar_lea.vmem [#allocation2], 216
    %v2615 = vld [vmem:[%s2614] ss:$2 sm:$0xff]
    %s2616 = scalar_lea.vmem [#allocation2], 217
    %v2617 = vld [vmem:[%s2616] ss:$2 sm:$0xff]
    %v2618 = vmax.f32 %v2615, %v2617
    %v2619 = vpack.c.bf16 %v2618, %v2618
    %v2621 = vunpack.c.l.b16 %v2619
    %v2622 = vpack.c.b16 %v2621, %v2621
    %v2624 = vshll.u32 %v2622, 16
    %v2626 = vrot.slane %v2624, 5
    %v2627 = vshrl.u32 %v2622, 16
    %v2629 = vrot.slane %v2627, 4
    %v2630 = vor.u32 %v2629, %v2626
    %v2631 = vrot.slane %v2630, 4
    %v2634 = vld [vmem:[#allocation6 + $0x20] sm:$0x8]
    %v2635 = vsel %vm2490, %v2626, %v2634
    %2636 = vst [vmem:[#allocation6 + $0x20] sm:$0x8] %v2635
    %v2637 = vld [vmem:[#allocation6 + $0x24] sm:$0xf]
    %v2638 = vsel %vm2496, %v2631, %v2637
    %2639 = vst [vmem:[#allocation6 + $0x24] sm:$0xf] %v2638
    %v2640 = vld [vmem:[#allocation2 + $0xfc] sm:$0xff]
    %v2641 = vld [vmem:[#allocation2 + $0x104] sm:$0xff]
    %v2642 = vld [vmem:[#allocation2 + $0x10e] sm:$0xff]
    %v2643 = vld [vmem:[#allocation2 + $0x116] sm:$0xff]
    %v2644 = vmax.f32 %v2640, %v2642
    %v2645 = vmax.f32 %v2641, %v2643
    %2646 = vst.msk [vmem:[#allocation2 + $0xfc] sm:$0xff] %vm1496, %v2644
    %2647 = vst.msk [vmem:[#allocation2 + $0x104] sm:$0xff] %vm1496, %v2645
    %s2648 = scalar_lea.vmem [#allocation2], 252
    %v2649 = vld [vmem:[%s2648] ss:$2 sm:$0xff]
    %s2650 = scalar_lea.vmem [#allocation2], 253
    %v2651 = vld [vmem:[%s2650] ss:$2 sm:$0xff]
    %v2652 = vmax.f32 %v2649, %v2651
    %v2653 = vpack.c.bf16 %v2652, %v2652
    %v2655 = vunpack.c.l.b16 %v2653
    %v2656 = vpack.c.b16 %v2655, %v2655
    %v2658 = vshrl.u32 %v2656, 16
    %v2660 = vrot.slane %v2658, 7
    %v2661 = vshll.u32 %v2656, 16
    %v2663 = vor.u32 %v2660, %v2661
    %v2664 = vrot.slane %v2660, 4
    %v2667 = vld [vmem:[#allocation6 + $0x28] sm:$0xf]
    %v2668 = vsel %vm2528, %v2663, %v2667
    %2669 = vst [vmem:[#allocation6 + $0x28] sm:$0xf] %v2668
    %v2670 = vld [vmem:[#allocation6 + $0x2c] sm:$0x1]
    %v2671 = vsel %vm2534, %v2664, %v2670
    %2672 = vst [vmem:[#allocation6 + $0x2c] sm:$0x1] %v2671
    %v2673 = vld [vmem:[#allocation2 + $0x144] sm:$0xff]
    %v2674 = vld [vmem:[#allocation2 + $0x14c] sm:$0xff]
    %v2675 = vld [vmem:[#allocation2 + $0x156] sm:$0xff]
    %v2676 = vld [vmem:[#allocation2 + $0x15e] sm:$0xff]
    %v2677 = vmax.f32 %v2673, %v2675
    %v2678 = vmax.f32 %v2674, %v2676
    %2679 = vst.msk [vmem:[#allocation2 + $0x144] sm:$0xff] %vm1496, %v2677
    %2680 = vst.msk [vmem:[#allocation2 + $0x14c] sm:$0xff] %vm1496, %v2678
    %s2681 = scalar_lea.vmem [#allocation2], 324
    %v2682 = vld [vmem:[%s2681] ss:$2 sm:$0xff]
    %s2683 = scalar_lea.vmem [#allocation2], 325
    %v2684 = vld [vmem:[%s2683] ss:$2 sm:$0xff]
    %v2685 = vmax.f32 %v2682, %v2684
    %v2686 = vpack.c.bf16 %v2685, %v2685
    %v2688 = vunpack.c.l.b16 %v2686
    %v2689 = vpack.c.b16 %v2688, %v2688
    %v2691 = vshll.u32 %v2689, 16
    %v2693 = vrot.slane %v2691, 5
    %v2694 = vshrl.u32 %v2689, 16
    %v2696 = vrot.slane %v2694, 4
    %v2697 = vor.u32 %v2696, %v2693
    %v2698 = vrot.slane %v2697, 4
    %v2701 = vld [vmem:[#allocation6 + $0x34] sm:$0x8]
    %v2702 = vsel %vm2490, %v2693, %v2701
    %2703 = vst [vmem:[#allocation6 + $0x34] sm:$0x8] %v2702
    %v2704 = vld [vmem:[#allocation6 + $0x38] sm:$0xf]
    %v2705 = vsel %vm2496, %v2698, %v2704
    %2706 = vst [vmem:[#allocation6 + $0x38] sm:$0xf] %v2705
    %v2707 = vld [vmem:[#allocation2 + $0x168] sm:$0xff]
    %v2708 = vld [vmem:[#allocation2 + $0x170] sm:$0xff]
    %v2709 = vld [vmem:[#allocation2 + $0x17a] sm:$0xff]
    %v2710 = vld [vmem:[#allocation2 + $0x182] sm:$0xff]
    %v2711 = vmax.f32 %v2707, %v2709
    %v2712 = vmax.f32 %v2708, %v2710
    %2713 = vst.msk [vmem:[#allocation2 + $0x168] sm:$0xff] %vm1496, %v2711
    %2714 = vst.msk [vmem:[#allocation2 + $0x170] sm:$0xff] %vm1496, %v2712
    %s2715 = scalar_lea.vmem [#allocation2], 360
    %v2716 = vld [vmem:[%s2715] ss:$2 sm:$0xff]
    %s2717 = scalar_lea.vmem [#allocation2], 361
    %v2718 = vld [vmem:[%s2717] ss:$2 sm:$0xff]
    %v2719 = vmax.f32 %v2716, %v2718
    %v2720 = vpack.c.bf16 %v2719, %v2719
    %v2722 = vunpack.c.l.b16 %v2720
    %v2723 = vpack.c.b16 %v2722, %v2722
    %v2725 = vshrl.u32 %v2723, 16
    %v2727 = vrot.slane %v2725, 7
    %v2728 = vshll.u32 %v2723, 16
    %v2730 = vor.u32 %v2727, %v2728
    %v2731 = vrot.slane %v2727, 4
    %v2734 = vld [vmem:[#allocation6 + $0x3c] sm:$0xf]
    %v2735 = vsel %vm2528, %v2730, %v2734
    %2736 = vst [vmem:[#allocation6 + $0x3c] sm:$0xf] %v2735
    %v2737 = vld [vmem:[#allocation6 + $0x40] sm:$0x1]
    %v2738 = vsel %vm2534, %v2731, %v2737
    %2739 = vst [vmem:[#allocation6 + $0x40] sm:$0x1] %v2738
    %v2740 = vld [vmem:[#allocation2 + $0x18c] sm:$0xff]
    %v2741 = vld [vmem:[#allocation2 + $0x194] sm:$0xff]
    %v2742 = vld [vmem:[#allocation2 + $0x19e] sm:$0xff]
    %v2743 = vld [vmem:[#allocation2 + $0x1a6] sm:$0xff]
    %v2744 = vmax.f32 %v2740, %v2742
    %v2745 = vmax.f32 %v2741, %v2743
    %2746 = vst.msk [vmem:[#allocation2 + $0x18c] sm:$0xff] %vm1496, %v2744
    %2747 = vst.msk [vmem:[#allocation2 + $0x194] sm:$0xff] %vm1496, %v2745
    %s2748 = scalar_lea.vmem [#allocation2], 396
    %v2749 = vld [vmem:[%s2748] ss:$2 sm:$0xff]
    %s2750 = scalar_lea.vmem [#allocation2], 397
    %v2751 = vld [vmem:[%s2750] ss:$2 sm:$0xff]
    %v2752 = vmax.f32 %v2749, %v2751
    %v2753 = vpack.c.bf16 %v2752, %v2752
    %v2755 = vunpack.c.l.b16 %v2753
    %v2756 = vpack.c.b16 %v2755, %v2755
    %v2758 = vshrl.u32 %v2756, 16
    %v2760 = vrot.slane %v2758, 6
    %v2761 = vshll.u32 %v2756, 16
    %v2763 = vrot.slane %v2761, 7
    %v2764 = vor.u32 %v2760, %v2763
    %v2765 = vrot.slane %v2764, 4
    %v2768 = vld [vmem:[#allocation6 + $0x40] sm:$0xe]
    %v2769 = vsel %vm2410, %v2764, %v2768
    %2770 = vst [vmem:[#allocation6 + $0x40] sm:$0xe] %v2769
    %v2771 = vld [vmem:[#allocation6 + $0x44] sm:$0x3]
    %v2772 = vsel %vm2416, %v2765, %v2771
    %2773 = vst [vmem:[#allocation6 + $0x44] sm:$0x3] %v2772
    %v2774 = vld [vmem:[#allocation2 + $0x1b0] sm:$0xff]
    %v2775 = vld [vmem:[#allocation2 + $0x1b8] sm:$0xff]
    %v2776 = vld [vmem:[#allocation2 + $0x1c2] sm:$0xff]
    %v2777 = vld [vmem:[#allocation2 + $0x1ca] sm:$0xff]
    %v2778 = vmax.f32 %v2774, %v2776
    %v2779 = vmax.f32 %v2775, %v2777
    %2780 = vst.msk [vmem:[#allocation2 + $0x1b0] sm:$0xff] %vm1496, %v2778
    %2781 = vst.msk [vmem:[#allocation2 + $0x1b8] sm:$0xff] %vm1496, %v2779
    %s2782 = scalar_lea.vmem [#allocation2], 432
    %v2783 = vld [vmem:[%s2782] ss:$2 sm:$0xff]
    %s2784 = scalar_lea.vmem [#allocation2], 433
    %v2785 = vld [vmem:[%s2784] ss:$2 sm:$0xff]
    %v2786 = vmax.f32 %v2783, %v2785
    %v2787 = vpack.c.bf16 %v2786, %v2786
    %v2789 = vunpack.c.l.b16 %v2787
    %v2790 = vpack.c.b16 %v2789, %v2789
    %v2792 = vshrl.u32 %v2790, 16
    %v2794 = vrot.slane %v2792, 5
    %v2795 = vshll.u32 %v2790, 16
    %v2797 = vrot.slane %v2795, 6
    %v2798 = vor.u32 %v2794, %v2797
    %v2799 = vrot.slane %v2798, 4
    %v2802 = vld [vmem:[#allocation6 + $0x44] sm:$0xc]
    %v2803 = vsel %vm2450, %v2798, %v2802
    %2804 = vst [vmem:[#allocation6 + $0x44] sm:$0xc] %v2803
    %v2805 = vld [vmem:[#allocation6 + $0x48] sm:$0x7]
    %v2806 = vsel %vm2456, %v2799, %v2805
    %2807 = vst [vmem:[#allocation6 + $0x48] sm:$0x7] %v2806
    %v2808 = vld [vmem:[#allocation2 + $0x1d4] sm:$0xff]
    %v2809 = vld [vmem:[#allocation2 + $0x1dc] sm:$0xff]
    %v2810 = vld [vmem:[#allocation2 + $0x1e6] sm:$0xff]
    %v2811 = vld [vmem:[#allocation2 + $0x1ee] sm:$0xff]
    %v2812 = vmax.f32 %v2808, %v2810
    %v2813 = vmax.f32 %v2809, %v2811
    %2814 = vst.msk [vmem:[#allocation2 + $0x1d4] sm:$0xff] %vm1496, %v2812
    %2815 = vst.msk [vmem:[#allocation2 + $0x1dc] sm:$0xff] %vm1496, %v2813
    %s2816 = scalar_lea.vmem [#allocation2], 468
    %v2817 = vld [vmem:[%s2816] ss:$2 sm:$0xff]
    %s2818 = scalar_lea.vmem [#allocation2], 469
    %v2819 = vld [vmem:[%s2818] ss:$2 sm:$0xff]
    %v2820 = vmax.f32 %v2817, %v2819
    %v2821 = vpack.c.bf16 %v2820, %v2820
    %v2823 = vunpack.c.l.b16 %v2821
    %v2824 = vpack.c.b16 %v2823, %v2823
    %v2826 = vshll.u32 %v2824, 16
    %v2828 = vrot.slane %v2826, 5
    %v2829 = vshrl.u32 %v2824, 16
    %v2831 = vrot.slane %v2829, 4
    %v2832 = vor.u32 %v2831, %v2828
    %v2833 = vrot.slane %v2832, 4
    %v2836 = vld [vmem:[#allocation6 + $0x48] sm:$0x8]
    %v2837 = vsel %vm2490, %v2828, %v2836
    %2838 = vst [vmem:[#allocation6 + $0x48] sm:$0x8] %v2837
    %v2839 = vld [vmem:[#allocation6 + $0x4c] sm:$0xf]
    %v2840 = vsel %vm2496, %v2833, %v2839
    %2841 = vst [vmem:[#allocation6 + $0x4c] sm:$0xf] %v2840
    %v2842 = vld [vmem:[#allocation2 + $0x1f8] sm:$0xff]
    %v2843 = vld [vmem:[#allocation2 + $0x200] sm:$0xff]
    %v2844 = vld [vmem:[#allocation2 + $0x20a] sm:$0xff]
    %v2845 = vld [vmem:[#allocation2 + $0x212] sm:$0xff]
    %v2846 = vmax.f32 %v2842, %v2844
    %v2847 = vmax.f32 %v2843, %v2845
    %2848 = vst.msk [vmem:[#allocation2 + $0x1f8] sm:$0xff] %vm1496, %v2846
    %2849 = vst.msk [vmem:[#allocation2 + $0x200] sm:$0xff] %vm1496, %v2847
    %s2850 = scalar_lea.vmem [#allocation2], 504
    %v2851 = vld [vmem:[%s2850] ss:$2 sm:$0xff]
    %s2852 = scalar_lea.vmem [#allocation2], 505
    %v2853 = vld [vmem:[%s2852] ss:$2 sm:$0xff]
    %v2854 = vmax.f32 %v2851, %v2853
    %v2855 = vpack.c.bf16 %v2854, %v2854
    %v2857 = vunpack.c.l.b16 %v2855
    %v2858 = vpack.c.b16 %v2857, %v2857
    %v2860 = vshrl.u32 %v2858, 16
    %v2862 = vrot.slane %v2860, 7
    %v2863 = vshll.u32 %v2858, 16
    %v2865 = vor.u32 %v2862, %v2863
    %v2866 = vrot.slane %v2862, 4
    %v2869 = vld [vmem:[#allocation6 + $0x50] sm:$0xf]
    %v2870 = vsel %vm2528, %v2865, %v2869
    %2871 = vst [vmem:[#allocation6 + $0x50] sm:$0xf] %v2870
    %v2872 = vld [vmem:[#allocation6 + $0x54] sm:$0x1]
    %v2873 = vsel %vm2534, %v2866, %v2872
    %2874 = vst [vmem:[#allocation6 + $0x54] sm:$0x1] %v2873
    %v2875 = vld [vmem:[#allocation2 + $0x21c] sm:$0xff]
    %v2876 = vld [vmem:[#allocation2 + $0x224] sm:$0xff]
    %v2877 = vld [vmem:[#allocation2 + $0x22e] sm:$0xff]
    %v2878 = vld [vmem:[#allocation2 + $0x236] sm:$0xff]
    %v2879 = vmax.f32 %v2875, %v2877
    %v2880 = vmax.f32 %v2876, %v2878
    %2881 = vst.msk [vmem:[#allocation2 + $0x21c] sm:$0xff] %vm1496, %v2879
    %2882 = vst.msk [vmem:[#allocation2 + $0x224] sm:$0xff] %vm1496, %v2880
    %s2883 = scalar_lea.vmem [#allocation2], 540
    %v2884 = vld [vmem:[%s2883] ss:$2 sm:$0xff]
    %s2885 = scalar_lea.vmem [#allocation2], 541
    %v2886 = vld [vmem:[%s2885] ss:$2 sm:$0xff]
    %v2887 = vmax.f32 %v2884, %v2886
    %v2888 = vpack.c.bf16 %v2887, %v2887
    %v2890 = vunpack.c.l.b16 %v2888
    %v2891 = vpack.c.b16 %v2890, %v2890
    %v2893 = vshrl.u32 %v2891, 16
    %v2895 = vrot.slane %v2893, 6
    %v2896 = vshll.u32 %v2891, 16
    %v2898 = vrot.slane %v2896, 7
    %v2899 = vor.u32 %v2895, %v2898
    %v2900 = vrot.slane %v2899, 4
    %v2903 = vld [vmem:[#allocation6 + $0x54] sm:$0xe]
    %v2904 = vsel %vm2410, %v2899, %v2903
    %2905 = vst [vmem:[#allocation6 + $0x54] sm:$0xe] %v2904
    %v2906 = vld [vmem:[#allocation6 + $0x58] sm:$0x3]
    %v2907 = vsel %vm2416, %v2900, %v2906
    %2908 = vst [vmem:[#allocation6 + $0x58] sm:$0x3] %v2907
    %v2909 = vld [vmem:[#allocation2 + $0x240] sm:$0xff]
    %v2910 = vld [vmem:[#allocation2 + $0x248] sm:$0xff]
    %v2911 = vld [vmem:[#allocation2 + $0x252] sm:$0xff]
    %v2912 = vld [vmem:[#allocation2 + $0x25a] sm:$0xff]
    %v2913 = vmax.f32 %v2909, %v2911
    %v2914 = vmax.f32 %v2910, %v2912
    %2915 = vst.msk [vmem:[#allocation2 + $0x240] sm:$0xff] %vm1496, %v2913
    %2916 = vst.msk [vmem:[#allocation2 + $0x248] sm:$0xff] %vm1496, %v2914
    %s2917 = scalar_lea.vmem [#allocation2], 576
    %v2918 = vld [vmem:[%s2917] ss:$2 sm:$0xff]
    %s2919 = scalar_lea.vmem [#allocation2], 577
    %v2920 = vld [vmem:[%s2919] ss:$2 sm:$0xff]
    %v2921 = vmax.f32 %v2918, %v2920
    %v2922 = vpack.c.bf16 %v2921, %v2921
    %v2924 = vunpack.c.l.b16 %v2922
    %v2925 = vpack.c.b16 %v2924, %v2924
    %v2927 = vshrl.u32 %v2925, 16
    %v2929 = vrot.slane %v2927, 5
    %v2930 = vshll.u32 %v2925, 16
    %v2932 = vrot.slane %v2930, 6
    %v2933 = vor.u32 %v2929, %v2932
    %v2934 = vrot.slane %v2933, 4
    %v2937 = vld [vmem:[#allocation6 + $0x58] sm:$0xc]
    %v2938 = vsel %vm2450, %v2933, %v2937
    %2939 = vst [vmem:[#allocation6 + $0x58] sm:$0xc] %v2938
    %v2940 = vld [vmem:[#allocation6 + $0x5c] sm:$0x7]
    %v2941 = vsel %vm2456, %v2934, %v2940
    %2942 = vst [vmem:[#allocation6 + $0x5c] sm:$0x7] %v2941
    %v2943 = vld [vmem:[#allocation6] sm:$0xf]
    %v2944 = vld [vmem:[#allocation6 + $0x4] sm:$0xf]
    %v2945 = vld [vmem:[#allocation6 + $0x8] sm:$0xf]
    %v2946 = vld [vmem:[#allocation6 + $0xc] sm:$0xf]
    %v2947 = vld [vmem:[#allocation6 + $0x10] sm:$0xf]
    %v2948 = vld [vmem:[#allocation6 + $0x14] sm:$0xf]
    %v2949 = vld [vmem:[#allocation6 + $0x18] sm:$0xf]
    %v2950 = vld [vmem:[#allocation6 + $0x1c] sm:$0xf]
    %v2951 = vld [vmem:[#allocation6 + $0x20] sm:$0xf]
    %v2952 = vld [vmem:[#allocation6 + $0x24] sm:$0xf]
    %v2953 = vld [vmem:[#allocation6 + $0x28] sm:$0xf]
    %v2954 = vld [vmem:[#allocation6 + $0x2c] sm:$0xf]
    %v2955 = vld [vmem:[#allocation6 + $0x30] sm:$0xf]
    %v2956 = vld [vmem:[#allocation6 + $0x34] sm:$0xf]
    %v2957 = vld [vmem:[#allocation6 + $0x38] sm:$0xf]
    %v2958 = vld [vmem:[#allocation6 + $0x3c] sm:$0xf]
    %v2959 = vld [vmem:[#allocation6 + $0x40] sm:$0xf]
    %v2960 = vld [vmem:[#allocation6 + $0x44] sm:$0xf]
    %v2961 = vld [vmem:[#allocation6 + $0x48] sm:$0xf]
    %v2962 = vld [vmem:[#allocation6 + $0x4c] sm:$0xf]
    %v2963 = vld [vmem:[#allocation6 + $0x50] sm:$0xf]
    %v2964 = vld [vmem:[#allocation6 + $0x54] sm:$0xf]
    %v2965 = vld [vmem:[#allocation6 + $0x58] sm:$0x3]
    %v2966 = vld [vmem:[%s3] sm:$0xf]
    %v2967 = vld [vmem:[%s3 + $0x4] sm:$0xf]
    %v2968 = vld [vmem:[%s3 + $0x8] sm:$0xf]
    %v2969 = vld [vmem:[%s3 + $0xc] sm:$0xf]
    %v2970 = vld [vmem:[#allocation6 + $0x58] sm:$0x7]
    %v2971 = vld [vmem:[%s3 + $0x10] sm:$0xf]
    %v2972 = vld [vmem:[%s3 + $0x14] sm:$0xf]
    %v2973 = vld [vmem:[%s3 + $0x18] sm:$0xf]
    %v2974 = vld [vmem:[%s3 + $0x1c] sm:$0xf]
    %v2998 = vunpack.c.l.b16 %v2943
    %v2999 = vunpack.c.l.b16 %v2944
    %v3000 = vunpack.c.l.b16 %v2945
    %v3001 = vunpack.c.l.b16 %v2946
    %v3002 = vunpack.c.l.b16 %v2947
    %v3003 = vunpack.c.l.b16 %v2948
    %v3004 = vunpack.c.l.b16 %v2949
    %v3005 = vunpack.c.l.b16 %v2950
    %v3006 = vunpack.c.l.b16 %v2951
    %v3007 = vunpack.c.l.b16 %v2952
    %v3008 = vunpack.c.l.b16 %v2953
    %v3009 = vunpack.c.l.b16 %v2954
    %v3010 = vunpack.c.l.b16 %v2955
    %v3011 = vunpack.c.l.b16 %v2956
    %v3012 = vunpack.c.l.b16 %v2957
    %v3013 = vunpack.c.l.b16 %v2958
    %v3014 = vunpack.c.l.b16 %v2959
    %v3015 = vunpack.c.l.b16 %v2960
    %v3016 = vunpack.c.l.b16 %v2961
    %v3017 = vunpack.c.l.b16 %v2962
    %v3018 = vunpack.c.l.b16 %v2963
    %v3019 = vunpack.c.l.b16 %v2964
    %v3020 = vunpack.c.l.b16 %v2970
    %v3021 = vpack.c.b16 %v2999, %v2998
    %v3022 = vpack.c.b16 %v3001, %v3000
    %v3023 = vpack.c.b16 %v3003, %v3002
    %v3024 = vpack.c.b16 %v3005, %v3004
    %v3025 = vpack.c.b16 %v3007, %v3006
    %v3026 = vpack.c.b16 %v3009, %v3008
    %v3027 = vpack.c.b16 %v3011, %v3010
    %v3028 = vpack.c.b16 %v3013, %v3012
    %v3029 = vpack.c.b16 %v3015, %v3014
    %v3030 = vpack.c.b16 %v3017, %v3016
    %v3031 = vpack.c.b16 %v3019, %v3018
    %v3032 = vpack.c.b16 %v3020, %v3020
    %vm3033 = vsmask.f32 7424
    %v3035 = vshrl.u32 %v3021, 16
    %v3037 = vshll.u32 %v3021, 16
    %v3039 = vrot.slane %v3037, 1
    %v3040 = vor.u32 %v3035, %v3039
    %v3042 = vshll.u32 %v3022, 16
    %v3044 = vrot.slane %v3042, 1
    %v3045 = vsel %vm3033, %v3040, %v3044
    %v3046 = vshrl.u32 %v3022, 16
    %v3048 = vor.u32 %v3046, %v3044
    %v3050 = vshll.u32 %v3023, 16
    %v3052 = vrot.slane %v3050, 1
    %v3053 = vsel %vm3033, %v3048, %v3052
    %v3054 = vshrl.u32 %v3023, 16
    %v3056 = vor.u32 %v3054, %v3052
    %v3058 = vshll.u32 %v3024, 16
    %v3060 = vrot.slane %v3058, 1
    %v3061 = vsel %vm3033, %v3056, %v3060
    %v3062 = vshrl.u32 %v3024, 16
    %v3064 = vor.u32 %v3062, %v3060
    %v3066 = vshll.u32 %v3025, 16
    %v3068 = vrot.slane %v3066, 1
    %v3069 = vsel %vm3033, %v3064, %v3068
    %v3070 = vshrl.u32 %v3025, 16
    %v3072 = vor.u32 %v3070, %v3068
    %v3074 = vshll.u32 %v3026, 16
    %v3076 = vrot.slane %v3074, 1
    %v3077 = vsel %vm3033, %v3072, %v3076
    %v3078 = vshrl.u32 %v3026, 16
    %v3080 = vor.u32 %v3078, %v3076
    %v3082 = vshll.u32 %v3027, 16
    %v3084 = vrot.slane %v3082, 1
    %v3085 = vsel %vm3033, %v3080, %v3084
    %v3086 = vshrl.u32 %v3027, 16
    %v3088 = vor.u32 %v3086, %v3084
    %v3090 = vshll.u32 %v3028, 16
    %v3092 = vrot.slane %v3090, 1
    %v3093 = vsel %vm3033, %v3088, %v3092
    %v3094 = vshrl.u32 %v3028, 16
    %v3096 = vor.u32 %v3094, %v3092
    %v3098 = vshll.u32 %v3029, 16
    %v3100 = vrot.slane %v3098, 1
    %v3101 = vsel %vm3033, %v3096, %v3100
    %v3102 = vshrl.u32 %v3029, 16
    %v3104 = vor.u32 %v3102, %v3100
    %v3106 = vshll.u32 %v3030, 16
    %v3108 = vrot.slane %v3106, 1
    %v3109 = vsel %vm3033, %v3104, %v3108
    %v3110 = vshrl.u32 %v3030, 16
    %v3112 = vor.u32 %v3110, %v3108
    %v3114 = vshll.u32 %v3031, 16
    %v3116 = vrot.slane %v3114, 1
    %v3117 = vsel %vm3033, %v3112, %v3116
    %v3118 = vshrl.u32 %v3031, 16
    %v3120 = vor.u32 %v3118, %v3116
    %v3122 = vshll.u32 %v3032, 16
    %v3124 = vrot.slane %v3122, 1
    %v3125 = vsel %vm3033, %v3120, %v3124
    %v3126 = vshrl.u32 %v3032, 16
    %v3128 = vor.u32 %v3126, %v3124
    %v3133 = vunpack.c.l.b16 %v2971
    %v3134 = vunpack.c.l.b16 %v2972
    %v3135 = vunpack.c.l.b16 %v2973
    %v3136 = vunpack.c.l.b16 %v2974
    %v3137 = vpack.c.b16 %v3134, %v3133
    %v3138 = vpack.c.b16 %v3136, %v3135
    %v3142 = vsel %vm1496, %v3045, 0
    %v3145 = vsel %vm1496, %v3053, 0
    %v3148 = vsel %vm1496, %v3061, 0
    %v3151 = vsel %vm1496, %v3069, 0
    %v3154 = vsel %vm1496, %v3077, 0
    %v3157 = vsel %vm1496, %v3085, 0
    %v3160 = vsel %vm1496, %v3093, 0
    %v3163 = vsel %vm1496, %v3101, 0
    %v3166 = vsel %vm1496, %v3109, 0
    %v3169 = vsel %vm1496, %v3117, 0
    %v3172 = vsel %vm1496, %v3125, 0
    %v3175 = vsel %vm1496, %v3128, 0
    %3177 = vmatprep.subr.bf16.mxu0 0
    %3178 = vmatpush1.bf16.msra.mxu0 %v3137
    %3179 = vmatprep.subr.bf16.mxu0 0
    %3180 = vmatpush1.bf16.msra.mxu0 %v3138
    %3181 = vmatprep.subr.bf16.mxu0 0
    %3182 = vmatpush1.bf16.msra.mxu0 0
    %3183 = vmatprep.subr.bf16.mxu0 0
    %3184 = vmatpush1.bf16.msra.mxu0 0
    %3185 = vmatprep.subr.bf16.mxu0 0
    %3186 = vmatpush1.bf16.msra.mxu0 0
    %3187 = vmatprep.subr.bf16.mxu0 0
    %3188 = vmatpush1.bf16.msra.mxu0 0
    %3189 = vmatprep.subr.bf16.mxu0 0
    %3190 = vmatpush1.bf16.msra.mxu0 0
    %3191 = vmatprep.subr.bf16.mxu0 0
    %3192 = vmatpush1.bf16.msra.mxu0 0
    %3193 = vmatprep.subr.bf16.mxu0 0
    %3194 = vmatpush1.bf16.msra.mxu0 0
    %3195 = vmatprep.subr.bf16.mxu0 0
    %3196 = vmatpush1.bf16.msra.mxu0 0
    %3197 = vmatprep.subr.bf16.mxu0 0
    %3198 = vmatpush1.bf16.msra.mxu0 0
    %3199 = vmatprep.subr.bf16.mxu0 0
    %3200 = vmatpush1.bf16.msra.mxu0 0
    %3201 = vmatprep.subr.bf16.mxu0 0
    %3202 = vmatpush1.bf16.msra.mxu0 0
    %3203 = vmatprep.subr.bf16.mxu0 0
    %3204 = vmatpush1.bf16.msra.mxu0 0
    %3205 = vmatprep.subr.bf16.mxu0 0
    %3206 = vmatpush1.bf16.msra.mxu0 0
    %3207 = vmatprep.subr.bf16.mxu0 0
    %3208 = vmatpush1.bf16.msra.mxu0 0
    %3209 = vmatprep.mubr.bf16.mxu0 0
    %3210 = vmatmul.mubr.bf16.gmra.mrb[0].mxu0 %v3142
    %v3211 = vpop.f32.mrb[0].mxu0
    %v3212 = vadd.f32 0.0, %v3211
    %v3213 = vpop.f32.mrb[0].mxu0
    %v3214 = vpop.f32.mrb[0].mxu0
    %v3215 = vadd.f32 0.0, %v3214
    %v3216 = vpop.f32.mrb[0].mxu0
    %3217 = vmatprep.mubr.bf16.mxu0 0
    %3218 = vmatmul.mubr.bf16.gmra.mrb[0].mxu0 %v3145
    %v3219 = vpop.f32.mrb[0].mxu0
    %v3220 = vadd.f32 0.0, %v3219
    %v3221 = vpop.f32.mrb[0].mxu0
    %v3222 = vpop.f32.mrb[0].mxu0
    %v3223 = vadd.f32 0.0, %v3222
    %v3224 = vpop.f32.mrb[0].mxu0
    %3225 = vmatprep.mubr.bf16.mxu0 0
    %3226 = vmatmul.mubr.bf16.gmra.mrb[0].mxu0 %v3148
    %v3227 = vpop.f32.mrb[0].mxu0
    %v3228 = vadd.f32 0.0, %v3227
    %v3229 = vpop.f32.mrb[0].mxu0
    %v3230 = vpop.f32.mrb[0].mxu0
    %v3231 = vadd.f32 0.0, %v3230
    %v3232 = vpop.f32.mrb[0].mxu0
    %3233 = vmatprep.mubr.bf16.mxu0 0
    %3234 = vmatmul.mubr.bf16.gmra.mrb[0].mxu0 %v3151
    %v3235 = vpop.f32.mrb[0].mxu0
    %v3236 = vadd.f32 0.0, %v3235
    %v3237 = vpop.f32.mrb[0].mxu0
    %v3238 = vpop.f32.mrb[0].mxu0
    %v3239 = vadd.f32 0.0, %v3238
    %v3240 = vpop.f32.mrb[0].mxu0
    %3241 = vmatprep.mubr.bf16.mxu0 0
    %3242 = vmatmul.mubr.bf16.gmra.mrb[0].mxu0 %v3154
    %v3243 = vpop.f32.mrb[0].mxu0
    %v3244 = vadd.f32 0.0, %v3243
    %v3245 = vpop.f32.mrb[0].mxu0
    %v3246 = vpop.f32.mrb[0].mxu0
    %v3247 = vadd.f32 0.0, %v3246
    %v3248 = vpop.f32.mrb[0].mxu0
    %3249 = vmatprep.mubr.bf16.mxu0 0
    %3250 = vmatmul.mubr.bf16.gmra.mrb[0].mxu0 %v3157
    %v3251 = vpop.f32.mrb[0].mxu0
    %v3252 = vadd.f32 0.0, %v3251
    %v3253 = vpop.f32.mrb[0].mxu0
    %v3254 = vpop.f32.mrb[0].mxu0
    %v3255 = vadd.f32 0.0, %v3254
    %v3256 = vpop.f32.mrb[0].mxu0
    %3257 = vmatprep.mubr.bf16.mxu0 0
    %3258 = vmatmul.mubr.bf16.gmra.mrb[0].mxu0 %v3160
    %v3259 = vpop.f32.mrb[0].mxu0
    %v3260 = vadd.f32 0.0, %v3259
    %v3261 = vpop.f32.mrb[0].mxu0
    %v3262 = vpop.f32.mrb[0].mxu0
    %v3263 = vadd.f32 0.0, %v3262
    %v3264 = vpop.f32.mrb[0].mxu0
    %3265 = vmatprep.mubr.bf16.mxu0 0
    %3266 = vmatmul.mubr.bf16.gmra.mrb[0].mxu0 %v3163
    %v3267 = vpop.f32.mrb[0].mxu0
    %v3268 = vadd.f32 0.0, %v3267
    %v3269 = vpop.f32.mrb[0].mxu0
    %v3270 = vpop.f32.mrb[0].mxu0
    %v3271 = vadd.f32 0.0, %v3270
    %v3272 = vpop.f32.mrb[0].mxu0
    %3273 = vmatprep.mubr.bf16.mxu0 0
    %3274 = vmatmul.mubr.bf16.gmra.mrb[0].mxu0 %v3166
    %v3275 = vpop.f32.mrb[0].mxu0
    %v3276 = vadd.f32 0.0, %v3275
    %v3277 = vpop.f32.mrb[0].mxu0
    %v3278 = vpop.f32.mrb[0].mxu0
    %v3279 = vadd.f32 0.0, %v3278
    %v3280 = vpop.f32.mrb[0].mxu0
    %3281 = vmatprep.mubr.bf16.mxu0 0
    %3282 = vmatmul.mubr.bf16.gmra.mrb[0].mxu0 %v3169
    %v3283 = vpop.f32.mrb[0].mxu0
    %v3284 = vadd.f32 0.0, %v3283
    %v3285 = vpop.f32.mrb[0].mxu0
    %v3286 = vpop.f32.mrb[0].mxu0
    %v3287 = vadd.f32 0.0, %v3286
    %v3288 = vpop.f32.mrb[0].mxu0
    %3289 = vmatprep.mubr.bf16.mxu0 0
    %3290 = vmatmul.mubr.bf16.gmra.mrb[0].mxu0 %v3172
    %v3291 = vpop.f32.mrb[0].mxu0
    %v3292 = vadd.f32 0.0, %v3291
    %v3293 = vpop.f32.mrb[0].mxu0
    %v3294 = vpop.f32.mrb[0].mxu0
    %v3295 = vadd.f32 0.0, %v3294
    %v3296 = vpop.f32.mrb[0].mxu0
    %3297 = vmatprep.mubr.bf16.mxu0 0
    %3298 = vmatmul.mubr.bf16.gmra.mrb[0].mxu0 %v3175
    %v3299 = vpop.f32.mrb[0].mxu0
    %v3300 = vadd.f32 0.0, %v3299
    %v3301 = vpop.f32.mrb[0].mxu0
    %v3302 = vpop.f32.mrb[0].mxu0
    %v3303 = vpop.f32.mrb[0].mxu0
    %3304 = vdwg.mxu0
    %v3306 = vunpack.c.l.b16 %v2965
    %v3307 = vpack.c.b16 %v3306, %v3306
    %v3312 = vunpack.c.l.b16 %v2966
    %v3313 = vunpack.c.l.b16 %v2967
    %v3314 = vunpack.c.l.b16 %v2968
    %v3315 = vunpack.c.l.b16 %v2969
    %v3316 = vpack.c.b16 %v3313, %v3312
    %v3317 = vpack.c.b16 %v3315, %v3314
    %v3320 = vsel %vm1496, %v3021, 0
    %v3322 = vsel %vm1496, %v3022, 0
    %v3324 = vsel %vm1496, %v3023, 0
    %v3326 = vsel %vm1496, %v3024, 0
    %v3328 = vsel %vm1496, %v3025, 0
    %v3330 = vsel %vm1496, %v3026, 0
    %v3332 = vsel %vm1496, %v3027, 0
    %v3334 = vsel %vm1496, %v3028, 0
    %v3336 = vsel %vm1496, %v3029, 0
    %v3338 = vsel %vm1496, %v3030, 0
    %v3340 = vsel %vm1496, %v3031, 0
    %v3343 = vsel %vm1496, %v3307, 0
    %3345 = vmatprep.subr.bf16.mxu0 0
    %3346 = vmatpush1.bf16.msra.mxu0 %v3316
    %3347 = vmatprep.subr.bf16.mxu0 0
    %3348 = vmatpush1.bf16.msra.mxu0 %v3317
    %3349 = vmatprep.subr.bf16.mxu0 0
    %3350 = vmatpush1.bf16.msra.mxu0 0
    %3351 = vmatprep.subr.bf16.mxu0 0
    %3352 = vmatpush1.bf16.msra.mxu0 0
    %3353 = vmatprep.subr.bf16.mxu0 0
    %3354 = vmatpush1.bf16.msra.mxu0 0
    %3355 = vmatprep.subr.bf16.mxu0 0
    %3356 = vmatpush1.bf16.msra.mxu0 0
    %3357 = vmatprep.subr.bf16.mxu0 0
    %3358 = vmatpush1.bf16.msra.mxu0 0
    %3359 = vmatprep.subr.bf16.mxu0 0
    %3360 = vmatpush1.bf16.msra.mxu0 0
    %3361 = vmatprep.subr.bf16.mxu0 0
    %3362 = vmatpush1.bf16.msra.mxu0 0
    %3363 = vmatprep.subr.bf16.mxu0 0
    %3364 = vmatpush1.bf16.msra.mxu0 0
    %3365 = vmatprep.subr.bf16.mxu0 0
    %3366 = vmatpush1.bf16.msra.mxu0 0
    %3367 = vmatprep.subr.bf16.mxu0 0
    %3368 = vmatpush1.bf16.msra.mxu0 0
    %3369 = vmatprep.subr.bf16.mxu0 0
    %3370 = vmatpush1.bf16.msra.mxu0 0
    %3371 = vmatprep.subr.bf16.mxu0 0
    %3372 = vmatpush1.bf16.msra.mxu0 0
    %3373 = vmatprep.subr.bf16.mxu0 0
    %3374 = vmatpush1.bf16.msra.mxu0 0
    %3375 = vmatprep.subr.bf16.mxu0 0
    %3376 = vmatpush1.bf16.msra.mxu0 0
    %3377 = vmatprep.mubr.bf16.mxu0 0
    %3378 = vmatmul.mubr.bf16.gmra.mrb[0].mxu0 %v3320
    %v3379 = vpop.f32.mrb[0].mxu0
    %v3380 = vadd.f32 %v3212, %v3379
    %v3381 = vpop.f32.mrb[0].mxu0
    %v3382 = vpop.f32.mrb[0].mxu0
    %v3383 = vadd.f32 %v3215, %v3382
    %v3384 = vpop.f32.mrb[0].mxu0
    %3385 = vmatprep.mubr.bf16.mxu0 0
    %3386 = vmatmul.mubr.bf16.gmra.mrb[0].mxu0 %v3322
    %v3387 = vpop.f32.mrb[0].mxu0
    %v3388 = vadd.f32 %v3220, %v3387
    %v3389 = vpop.f32.mrb[0].mxu0
    %v3390 = vpop.f32.mrb[0].mxu0
    %v3391 = vadd.f32 %v3223, %v3390
    %v3392 = vpop.f32.mrb[0].mxu0
    %3393 = vmatprep.mubr.bf16.mxu0 0
    %3394 = vmatmul.mubr.bf16.gmra.mrb[0].mxu0 %v3324
    %v3395 = vpop.f32.mrb[0].mxu0
    %v3396 = vadd.f32 %v3228, %v3395
    %v3397 = vpop.f32.mrb[0].mxu0
    %v3398 = vpop.f32.mrb[0].mxu0
    %v3399 = vadd.f32 %v3231, %v3398
    %v3400 = vpop.f32.mrb[0].mxu0
    %3401 = vmatprep.mubr.bf16.mxu0 0
    %3402 = vmatmul.mubr.bf16.gmra.mrb[0].mxu0 %v3326
    %v3403 = vpop.f32.mrb[0].mxu0
    %v3404 = vadd.f32 %v3236, %v3403
    %v3405 = vpop.f32.mrb[0].mxu0
    %v3406 = vpop.f32.mrb[0].mxu0
    %v3407 = vadd.f32 %v3239, %v3406
    %v3408 = vpop.f32.mrb[0].mxu0
    %3409 = vmatprep.mubr.bf16.mxu0 0
    %3410 = vmatmul.mubr.bf16.gmra.mrb[0].mxu0 %v3328
    %v3411 = vpop.f32.mrb[0].mxu0
    %v3412 = vadd.f32 %v3244, %v3411
    %v3413 = vpop.f32.mrb[0].mxu0
    %v3414 = vpop.f32.mrb[0].mxu0
    %v3415 = vadd.f32 %v3247, %v3414
    %v3416 = vpop.f32.mrb[0].mxu0
    %3417 = vmatprep.mubr.bf16.mxu0 0
    %3418 = vmatmul.mubr.bf16.gmra.mrb[0].mxu0 %v3330
    %v3419 = vpop.f32.mrb[0].mxu0
    %v3420 = vadd.f32 %v3252, %v3419
    %v3421 = vpop.f32.mrb[0].mxu0
    %v3422 = vpop.f32.mrb[0].mxu0
    %v3423 = vadd.f32 %v3255, %v3422
    %v3424 = vpop.f32.mrb[0].mxu0
    %3425 = vmatprep.mubr.bf16.mxu0 0
    %3426 = vmatmul.mubr.bf16.gmra.mrb[0].mxu0 %v3332
    %v3427 = vpop.f32.mrb[0].mxu0
    %v3428 = vadd.f32 %v3260, %v3427
    %v3429 = vpop.f32.mrb[0].mxu0
    %v3430 = vpop.f32.mrb[0].mxu0
    %v3431 = vadd.f32 %v3263, %v3430
    %v3432 = vpop.f32.mrb[0].mxu0
    %3433 = vmatprep.mubr.bf16.mxu0 0
    %3434 = vmatmul.mubr.bf16.gmra.mrb[0].mxu0 %v3334
    %v3435 = vpop.f32.mrb[0].mxu0
    %v3436 = vadd.f32 %v3268, %v3435
    %v3437 = vpop.f32.mrb[0].mxu0
    %v3438 = vpop.f32.mrb[0].mxu0
    %v3439 = vadd.f32 %v3271, %v3438
    %v3440 = vpop.f32.mrb[0].mxu0
    %3441 = vmatprep.mubr.bf16.mxu0 0
    %3442 = vmatmul.mubr.bf16.gmra.mrb[0].mxu0 %v3336
    %v3443 = vpop.f32.mrb[0].mxu0
    %v3444 = vadd.f32 %v3276, %v3443
    %v3445 = vpop.f32.mrb[0].mxu0
    %v3446 = vpop.f32.mrb[0].mxu0
    %v3447 = vadd.f32 %v3279, %v3446
    %v3448 = vpop.f32.mrb[0].mxu0
    %3449 = vmatprep.mubr.bf16.mxu0 0
    %3450 = vmatmul.mubr.bf16.gmra.mrb[0].mxu0 %v3338
    %v3451 = vpop.f32.mrb[0].mxu0
    %v3452 = vadd.f32 %v3284, %v3451
    %v3453 = vpop.f32.mrb[0].mxu0
    %v3454 = vpop.f32.mrb[0].mxu0
    %v3455 = vadd.f32 %v3287, %v3454
    %v3456 = vpop.f32.mrb[0].mxu0
    %3457 = vmatprep.mubr.bf16.mxu0 0
    %3458 = vmatmul.mubr.bf16.gmra.mrb[0].mxu0 %v3340
    %v3459 = vpop.f32.mrb[0].mxu0
    %v3460 = vadd.f32 %v3292, %v3459
    %v3461 = vpop.f32.mrb[0].mxu0
    %v3462 = vpop.f32.mrb[0].mxu0
    %v3463 = vadd.f32 %v3295, %v3462
    %v3464 = vpop.f32.mrb[0].mxu0
    %3465 = vmatprep.mubr.bf16.mxu0 0
    %3466 = vmatmul.mubr.bf16.gmra.mrb[0].mxu0 %v3343
    %v3467 = vpop.f32.mrb[0].mxu0
    %v3468 = vadd.f32 %v3300, %v3467
    %v3469 = vpop.f32.mrb[0].mxu0
    %v3470 = vpop.f32.mrb[0].mxu0
    %v3471 = vpop.f32.mrb[0].mxu0
    %3472 = vdwg.mxu0
    %v3473 = vld [vmem:[#allocation6] sm:$0xe]
    %v3474 = vld [vmem:[%s3 + $0x20] sm:$0xf]
    %v3475 = vld [vmem:[%s3 + $0x24] sm:$0xf]
    %v3476 = vld [vmem:[%s3 + $0x28] sm:$0xf]
    %v3477 = vld [vmem:[%s3 + $0x2c] sm:$0xf]
    %v3479 = vunpack.c.l.b16 %v3473
    %v3480 = vpack.c.b16 %v2999, %v3479
    %vm3481 = vcmask 1046528
    %v3482 = vrot.slane %v3480, 1
    %v3483 = vrot.slane %v3022, 1
    %v3484 = vsel %vm3481, %v3482, %v3483
    %v3485 = vrot.slane %v3023, 1
    %v3486 = vsel %vm3481, %v3483, %v3485
    %v3487 = vrot.slane %v3024, 1
    %v3488 = vsel %vm3481, %v3485, %v3487
    %v3489 = vrot.slane %v3025, 1
    %v3490 = vsel %vm3481, %v3487, %v3489
    %v3491 = vrot.slane %v3026, 1
    %v3492 = vsel %vm3481, %v3489, %v3491
    %v3493 = vrot.slane %v3027, 1
    %v3494 = vsel %vm3481, %v3491, %v3493
    %v3495 = vrot.slane %v3028, 1
    %v3496 = vsel %vm3481, %v3493, %v3495
    %v3497 = vrot.slane %v3029, 1
    %v3498 = vsel %vm3481, %v3495, %v3497
    %v3499 = vrot.slane %v3030, 1
    %v3500 = vsel %vm3481, %v3497, %v3499
    %v3501 = vrot.slane %v3031, 1
    %v3502 = vsel %vm3481, %v3499, %v3501
    %v3503 = vrot.slane %v3032, 1
    %v3504 = vsel %vm3481, %v3501, %v3503
    %v3509 = vunpack.c.l.b16 %v3474
    %v3510 = vunpack.c.l.b16 %v3475
    %v3511 = vunpack.c.l.b16 %v3476
    %v3512 = vunpack.c.l.b16 %v3477
    %v3513 = vpack.c.b16 %v3510, %v3509
    %v3514 = vpack.c.b16 %v3512, %v3511
    %v3518 = vsel %vm1496, %v3484, 0
    %v3521 = vsel %vm1496, %v3486, 0
    %v3524 = vsel %vm1496, %v3488, 0
    %v3527 = vsel %vm1496, %v3490, 0
    %v3530 = vsel %vm1496, %v3492, 0
    %v3533 = vsel %vm1496, %v3494, 0
    %v3536 = vsel %vm1496, %v3496, 0
    %v3539 = vsel %vm1496, %v3498, 0
    %v3542 = vsel %vm1496, %v3500, 0
    %v3545 = vsel %vm1496, %v3502, 0
    %v3548 = vsel %vm1496, %v3504, 0
    %v3551 = vsel %vm1496, %v3503, 0
    %3553 = vmatprep.subr.bf16.mxu0 0
    %3554 = vmatpush1.bf16.msra.mxu0 %v3513
    %3555 = vmatprep.subr.bf16.mxu0 0
    %3556 = vmatpush1.bf16.msra.mxu0 %v3514
    %3557 = vmatprep.subr.bf16.mxu0 0
    %3558 = vmatpush1.bf16.msra.mxu0 0
    %3559 = vmatprep.subr.bf16.mxu0 0
    %3560 = vmatpush1.bf16.msra.mxu0 0
    %3561 = vmatprep.subr.bf16.mxu0 0
    %3562 = vmatpush1.bf16.msra.mxu0 0
    %3563 = vmatprep.subr.bf16.mxu0 0
    %3564 = vmatpush1.bf16.msra.mxu0 0
    %3565 = vmatprep.subr.bf16.mxu0 0
    %3566 = vmatpush1.bf16.msra.mxu0 0
    %3567 = vmatprep.subr.bf16.mxu0 0
    %3568 = vmatpush1.bf16.msra.mxu0 0
    %3569 = vmatprep.subr.bf16.mxu0 0
    %3570 = vmatpush1.bf16.msra.mxu0 0
    %3571 = vmatprep.subr.bf16.mxu0 0
    %3572 = vmatpush1.bf16.msra.mxu0 0
    %3573 = vmatprep.subr.bf16.mxu0 0
    %3574 = vmatpush1.bf16.msra.mxu0 0
    %3575 = vmatprep.subr.bf16.mxu0 0
    %3576 = vmatpush1.bf16.msra.mxu0 0
    %3577 = vmatprep.subr.bf16.mxu0 0
    %3578 = vmatpush1.bf16.msra.mxu0 0
    %3579 = vmatprep.subr.bf16.mxu0 0
    %3580 = vmatpush1.bf16.msra.mxu0 0
    %3581 = vmatprep.subr.bf16.mxu0 0
    %3582 = vmatpush1.bf16.msra.mxu0 0
    %3583 = vmatprep.subr.bf16.mxu0 0
    %3584 = vmatpush1.bf16.msra.mxu0 0
    %3585 = vmatprep.mubr.bf16.mxu0 0
    %3586 = vmatmul.mubr.bf16.gmra.mrb[0].mxu0 %v3518
    %v3587 = vpop.f32.mrb[0].mxu0
    %v3588 = vadd.f32 0.0, %v3587
    %v3589 = vpop.f32.mrb[0].mxu0
    %v3590 = vpop.f32.mrb[0].mxu0
    %v3591 = vadd.f32 0.0, %v3590
    %v3592 = vpop.f32.mrb[0].mxu0
    %3593 = vmatprep.mubr.bf16.mxu0 0
    %3594 = vmatmul.mubr.bf16.gmra.mrb[0].mxu0 %v3521
    %v3595 = vpop.f32.mrb[0].mxu0
    %v3596 = vadd.f32 0.0, %v3595
    %v3597 = vpop.f32.mrb[0].mxu0
    %v3598 = vpop.f32.mrb[0].mxu0
    %v3599 = vadd.f32 0.0, %v3598
    %v3600 = vpop.f32.mrb[0].mxu0
    %3601 = vmatprep.mubr.bf16.mxu0 0
    %3602 = vmatmul.mubr.bf16.gmra.mrb[0].mxu0 %v3524
    %v3603 = vpop.f32.mrb[0].mxu0
    %v3604 = vadd.f32 0.0, %v3603
    %v3605 = vpop.f32.mrb[0].mxu0
    %v3606 = vpop.f32.mrb[0].mxu0
    %v3607 = vadd.f32 0.0, %v3606
    %v3608 = vpop.f32.mrb[0].mxu0
    %3609 = vmatprep.mubr.bf16.mxu0 0
    %3610 = vmatmul.mubr.bf16.gmra.mrb[0].mxu0 %v3527
    %v3611 = vpop.f32.mrb[0].mxu0
    %v3612 = vadd.f32 0.0, %v3611
    %v3613 = vpop.f32.mrb[0].mxu0
    %v3614 = vpop.f32.mrb[0].mxu0
    %v3615 = vadd.f32 0.0, %v3614
    %v3616 = vpop.f32.mrb[0].mxu0
    %3617 = vmatprep.mubr.bf16.mxu0 0
    %3618 = vmatmul.mubr.bf16.gmra.mrb[0].mxu0 %v3530
    %v3619 = vpop.f32.mrb[0].mxu0
    %v3620 = vadd.f32 0.0, %v3619
    %v3621 = vpop.f32.mrb[0].mxu0
    %v3622 = vpop.f32.mrb[0].mxu0
    %v3623 = vadd.f32 0.0, %v3622
    %v3624 = vpop.f32.mrb[0].mxu0
    %3625 = vmatprep.mubr.bf16.mxu0 0
    %3626 = vmatmul.mubr.bf16.gmra.mrb[0].mxu0 %v3533
    %v3627 = vpop.f32.mrb[0].mxu0
    %v3628 = vadd.f32 0.0, %v3627
    %v3629 = vpop.f32.mrb[0].mxu0
    %v3630 = vpop.f32.mrb[0].mxu0
    %v3631 = vadd.f32 0.0, %v3630
    %v3632 = vpop.f32.mrb[0].mxu0
    %3633 = vmatprep.mubr.bf16.mxu0 0
    %3634 = vmatmul.mubr.bf16.gmra.mrb[0].mxu0 %v3536
    %v3635 = vpop.f32.mrb[0].mxu0
    %v3636 = vadd.f32 0.0, %v3635
    %v3637 = vpop.f32.mrb[0].mxu0
    %v3638 = vpop.f32.mrb[0].mxu0
    %v3639 = vadd.f32 0.0, %v3638
    %v3640 = vpop.f32.mrb[0].mxu0
    %3641 = vmatprep.mubr.bf16.mxu0 0
    %3642 = vmatmul.mubr.bf16.gmra.mrb[0].mxu0 %v3539
    %v3643 = vpop.f32.mrb[0].mxu0
    %v3644 = vadd.f32 0.0, %v3643
    %v3645 = vpop.f32.mrb[0].mxu0
    %v3646 = vpop.f32.mrb[0].mxu0
    %v3647 = vadd.f32 0.0, %v3646
    %v3648 = vpop.f32.mrb[0].mxu0
    %3649 = vmatprep.mubr.bf16.mxu0 0
    %3650 = vmatmul.mubr.bf16.gmra.mrb[0].mxu0 %v3542
    %v3651 = vpop.f32.mrb[0].mxu0
    %v3652 = vadd.f32 0.0, %v3651
    %v3653 = vpop.f32.mrb[0].mxu0
    %v3654 = vpop.f32.mrb[0].mxu0
    %v3655 = vadd.f32 0.0, %v3654
    %v3656 = vpop.f32.mrb[0].mxu0
    %3657 = vmatprep.mubr.bf16.mxu0 0
    %3658 = vmatmul.mubr.bf16.gmra.mrb[0].mxu0 %v3545
    %v3659 = vpop.f32.mrb[0].mxu0
    %v3660 = vadd.f32 0.0, %v3659
    %v3661 = vpop.f32.mrb[0].mxu0
    %v3662 = vpop.f32.mrb[0].mxu0
    %v3663 = vadd.f32 0.0, %v3662
    %v3664 = vpop.f32.mrb[0].mxu0
    %3665 = vmatprep.mubr.bf16.mxu0 0
    %3666 = vmatmul.mubr.bf16.gmra.mrb[0].mxu0 %v3548
    %v3667 = vpop.f32.mrb[0].mxu0
    %v3668 = vadd.f32 0.0, %v3667
    %v3669 = vpop.f32.mrb[0].mxu0
    %v3670 = vpop.f32.mrb[0].mxu0
    %v3671 = vadd.f32 0.0, %v3670
    %v3672 = vpop.f32.mrb[0].mxu0
    %3673 = vmatprep.mubr.bf16.mxu0 0
    %3674 = vmatmul.mubr.bf16.gmra.mrb[0].mxu0 %v3551
    %v3675 = vpop.f32.mrb[0].mxu0
    %v3676 = vadd.f32 0.0, %v3675
    %v3677 = vpop.f32.mrb[0].mxu0
    %v3678 = vpop.f32.mrb[0].mxu0
    %v3679 = vpop.f32.mrb[0].mxu0
    %3680 = vdwg.mxu0
    %v3681 = vadd.f32 %v3380, %v3588
    %v3682 = vadd.f32 %v3383, %v3591
    %v3683 = vadd.f32 %v3388, %v3596
    %v3684 = vadd.f32 %v3391, %v3599
    %v3685 = vadd.f32 %v3396, %v3604
    %v3686 = vadd.f32 %v3399, %v3607
    %v3687 = vadd.f32 %v3404, %v3612
    %v3688 = vadd.f32 %v3407, %v3615
    %v3689 = vadd.f32 %v3412, %v3620
    %v3690 = vadd.f32 %v3415, %v3623
    %v3691 = vadd.f32 %v3420, %v3628
    %v3692 = vadd.f32 %v3423, %v3631
    %v3693 = vadd.f32 %v3428, %v3636
    %v3694 = vadd.f32 %v3431, %v3639
    %v3695 = vadd.f32 %v3436, %v3644
    %v3696 = vadd.f32 %v3439, %v3647
    %v3697 = vadd.f32 %v3444, %v3652
    %v3698 = vadd.f32 %v3447, %v3655
    %v3699 = vadd.f32 %v3452, %v3660
    %v3700 = vadd.f32 %v3455, %v3663
    %v3701 = vadd.f32 %v3460, %v3668
    %v3702 = vadd.f32 %v3463, %v3671
    %v3703 = vadd.f32 %v3468, %v3676
    %v3704 = vld [vmem:[#allocation6 + $0x4] sm:$0xe]
    %v3705 = vld [vmem:[#allocation6 + $0x8] sm:$0xf]
    %v3706 = vld [vmem:[#allocation6 + $0xc] sm:$0xf]
    %v3707 = vld [vmem:[#allocation6 + $0x10] sm:$0xf]
    %v3708 = vld [vmem:[#allocation6 + $0x14] sm:$0xf]
    %v3709 = vld [vmem:[#allocation6 + $0x18] sm:$0xf]
    %v3710 = vld [vmem:[#allocation6 + $0x1c] sm:$0xf]
    %v3711 = vld [vmem:[#allocation6 + $0x20] sm:$0xf]
    %v3712 = vld [vmem:[#allocation6 + $0x24] sm:$0xf]
    %v3713 = vld [vmem:[#allocation6 + $0x28] sm:$0xf]
    %v3714 = vld [vmem:[#allocation6 + $0x2c] sm:$0xf]
    %v3715 = vld [vmem:[#allocation6 + $0x30] sm:$0xf]
    %v3716 = vld [vmem:[#allocation6 + $0x34] sm:$0xf]
    %v3717 = vld [vmem:[#allocation6 + $0x38] sm:$0xf]
    %v3718 = vld [vmem:[#allocation6 + $0x3c] sm:$0xf]
    %v3719 = vld [vmem:[#allocation6 + $0x40] sm:$0xf]
    %v3720 = vld [vmem:[#allocation6 + $0x44] sm:$0xf]
    %v3721 = vld [vmem:[#allocation6 + $0x48] sm:$0xf]
    %v3722 = vld [vmem:[#allocation6 + $0x4c] sm:$0xf]
    %v3723 = vld [vmem:[#allocation6 + $0x50] sm:$0xf]
    %v3724 = vld [vmem:[#allocation6 + $0x54] sm:$0xf]
    %v3725 = vld [vmem:[#allocation6 + $0x58] sm:$0xf]
    %v3726 = vld [vmem:[#allocation6 + $0x5c] sm:$0x7]
    %v3727 = vld [vmem:[%s3 + $0x30] sm:$0xf]
    %v3728 = vld [vmem:[%s3 + $0x34] sm:$0xf]
    %v3729 = vld [vmem:[%s3 + $0x38] sm:$0xf]
    %v3730 = vld [vmem:[%s3 + $0x3c] sm:$0xf]
    %v3754 = vunpack.c.l.b16 %v3704
    %v3755 = vunpack.c.l.b16 %v3705
    %v3756 = vunpack.c.l.b16 %v3706
    %v3757 = vunpack.c.l.b16 %v3707
    %v3758 = vunpack.c.l.b16 %v3708
    %v3759 = vunpack.c.l.b16 %v3709
    %v3760 = vunpack.c.l.b16 %v3710
    %v3761 = vunpack.c.l.b16 %v3711
    %v3762 = vunpack.c.l.b16 %v3712
    %v3763 = vunpack.c.l.b16 %v3713
    %v3764 = vunpack.c.l.b16 %v3714
    %v3765 = vunpack.c.l.b16 %v3715
    %v3766 = vunpack.c.l.b16 %v3716
    %v3767 = vunpack.c.l.b16 %v3717
    %v3768 = vunpack.c.l.b16 %v3718
    %v3769 = vunpack.c.l.b16 %v3719
    %v3770 = vunpack.c.l.b16 %v3720
    %v3771 = vunpack.c.l.b16 %v3721
    %v3772 = vunpack.c.l.b16 %v3722
    %v3773 = vunpack.c.l.b16 %v3723
    %v3774 = vunpack.c.l.b16 %v3724
    %v3775 = vunpack.c.l.b16 %v3725
    %v3776 = vunpack.c.l.b16 %v3726
    %v3777 = vpack.c.b16 %v3755, %v3754
    %v3778 = vpack.c.b16 %v3757, %v3756
    %v3779 = vpack.c.b16 %v3759, %v3758
    %v3780 = vpack.c.b16 %v3761, %v3760
    %v3781 = vpack.c.b16 %v3763, %v3762
    %v3782 = vpack.c.b16 %v3765, %v3764
    %v3783 = vpack.c.b16 %v3767, %v3766
    %v3784 = vpack.c.b16 %v3769, %v3768
    %v3785 = vpack.c.b16 %v3771, %v3770
    %v3786 = vpack.c.b16 %v3773, %v3772
    %v3787 = vpack.c.b16 %v3775, %v3774
    %v3788 = vpack.c.b16 %v3776, %v3776
    %v3789 = vrot.slane %v3777, 1
    %v3790 = vrot.slane %v3778, 1
    %v3791 = vsel %vm3481, %v3789, %v3790
    %v3792 = vrot.slane %v3779, 1
    %v3793 = vsel %vm3481, %v3790, %v3792
    %v3794 = vrot.slane %v3780, 1
    %v3795 = vsel %vm3481, %v3792, %v3794
    %v3796 = vrot.slane %v3781, 1
    %v3797 = vsel %vm3481, %v3794, %v3796
    %v3798 = vrot.slane %v3782, 1
    %v3799 = vsel %vm3481, %v3796, %v3798
    %v3800 = vrot.slane %v3783, 1
    %v3801 = vsel %vm3481, %v3798, %v3800
    %v3802 = vrot.slane %v3784, 1
    %v3803 = vsel %vm3481, %v3800, %v3802
    %v3804 = vrot.slane %v3785, 1
    %v3805 = vsel %vm3481, %v3802, %v3804
    %v3806 = vrot.slane %v3786, 1
    %v3807 = vsel %vm3481, %v3804, %v3806
    %v3808 = vrot.slane %v3787, 1
    %v3809 = vsel %vm3481, %v3806, %v3808
    %v3810 = vrot.slane %v3788, 1
    %v3811 = vsel %vm3481, %v3808, %v3810
    %v3816 = vunpack.c.l.b16 %v3727
    %v3817 = vunpack.c.l.b16 %v3728
    %v3818 = vunpack.c.l.b16 %v3729
    %v3819 = vunpack.c.l.b16 %v3730
    %v3820 = vpack.c.b16 %v3817, %v3816
    %v3821 = vpack.c.b16 %v3819, %v3818
    %v3825 = vsel %vm1496, %v3791, 0
    %v3828 = vsel %vm1496, %v3793, 0
    %v3831 = vsel %vm1496, %v3795, 0
    %v3834 = vsel %vm1496, %v3797, 0
    %v3837 = vsel %vm1496, %v3799, 0
    %v3840 = vsel %vm1496, %v3801, 0
    %v3843 = vsel %vm1496, %v3803, 0
    %v3846 = vsel %vm1496, %v3805, 0
    %v3849 = vsel %vm1496, %v3807, 0
    %v3852 = vsel %vm1496, %v3809, 0
    %v3855 = vsel %vm1496, %v3811, 0
    %v3858 = vsel %vm1496, %v3810, 0
    %3860 = vmatprep.subr.bf16.mxu0 0
    %3861 = vmatpush1.bf16.msra.mxu0 %v3820
    %3862 = vmatprep.subr.bf16.mxu0 0
    %3863 = vmatpush1.bf16.msra.mxu0 %v3821
    %3864 = vmatprep.subr.bf16.mxu0 0
    %3865 = vmatpush1.bf16.msra.mxu0 0
    %3866 = vmatprep.subr.bf16.mxu0 0
    %3867 = vmatpush1.bf16.msra.mxu0 0
    %3868 = vmatprep.subr.bf16.mxu0 0
    %3869 = vmatpush1.bf16.msra.mxu0 0
    %3870 = vmatprep.subr.bf16.mxu0 0
    %3871 = vmatpush1.bf16.msra.mxu0 0
    %3872 = vmatprep.subr.bf16.mxu0 0
    %3873 = vmatpush1.bf16.msra.mxu0 0
    %3874 = vmatprep.subr.bf16.mxu0 0
    %3875 = vmatpush1.bf16.msra.mxu0 0
    %3876 = vmatprep.subr.bf16.mxu0 0
    %3877 = vmatpush1.bf16.msra.mxu0 0
    %3878 = vmatprep.subr.bf16.mxu0 0
    %3879 = vmatpush1.bf16.msra.mxu0 0
    %3880 = vmatprep.subr.bf16.mxu0 0
    %3881 = vmatpush1.bf16.msra.mxu0 0
    %3882 = vmatprep.subr.bf16.mxu0 0
    %3883 = vmatpush1.bf16.msra.mxu0 0
    %3884 = vmatprep.subr.bf16.mxu0 0
    %3885 = vmatpush1.bf16.msra.mxu0 0
    %3886 = vmatprep.subr.bf16.mxu0 0
    %3887 = vmatpush1.bf16.msra.mxu0 0
    %3888 = vmatprep.subr.bf16.mxu0 0
    %3889 = vmatpush1.bf16.msra.mxu0 0
    %3890 = vmatprep.subr.bf16.mxu0 0
    %3891 = vmatpush1.bf16.msra.mxu0 0
    %3892 = vmatprep.mubr.bf16.mxu0 0
    %3893 = vmatmul.mubr.bf16.gmra.mrb[0].mxu0 %v3825
    %v3894 = vpop.f32.mrb[0].mxu0
    %v3895 = vadd.f32 0.0, %v3894
    %v3896 = vpop.f32.mrb[0].mxu0
    %v3897 = vpop.f32.mrb[0].mxu0
    %v3898 = vadd.f32 0.0, %v3897
    %v3899 = vpop.f32.mrb[0].mxu0
    %3900 = vmatprep.mubr.bf16.mxu0 0
    %3901 = vmatmul.mubr.bf16.gmra.mrb[0].mxu0 %v3828
    %v3902 = vpop.f32.mrb[0].mxu0
    %v3903 = vadd.f32 0.0, %v3902
    %v3904 = vpop.f32.mrb[0].mxu0
    %v3905 = vpop.f32.mrb[0].mxu0
    %v3906 = vadd.f32 0.0, %v3905
    %v3907 = vpop.f32.mrb[0].mxu0
    %3908 = vmatprep.mubr.bf16.mxu0 0
    %3909 = vmatmul.mubr.bf16.gmra.mrb[0].mxu0 %v3831
    %v3910 = vpop.f32.mrb[0].mxu0
    %v3911 = vadd.f32 0.0, %v3910
    %v3912 = vpop.f32.mrb[0].mxu0
    %v3913 = vpop.f32.mrb[0].mxu0
    %v3914 = vadd.f32 0.0, %v3913
    %v3915 = vpop.f32.mrb[0].mxu0
    %3916 = vmatprep.mubr.bf16.mxu0 0
    %3917 = vmatmul.mubr.bf16.gmra.mrb[0].mxu0 %v3834
    %v3918 = vpop.f32.mrb[0].mxu0
    %v3919 = vadd.f32 0.0, %v3918
    %v3920 = vpop.f32.mrb[0].mxu0
    %v3921 = vpop.f32.mrb[0].mxu0
    %v3922 = vadd.f32 0.0, %v3921
    %v3923 = vpop.f32.mrb[0].mxu0
    %3924 = vmatprep.mubr.bf16.mxu0 0
    %3925 = vmatmul.mubr.bf16.gmra.mrb[0].mxu0 %v3837
    %v3926 = vpop.f32.mrb[0].mxu0
    %v3927 = vadd.f32 0.0, %v3926
    %v3928 = vpop.f32.mrb[0].mxu0
    %v3929 = vpop.f32.mrb[0].mxu0
    %v3930 = vadd.f32 0.0, %v3929
    %v3931 = vpop.f32.mrb[0].mxu0
    %3932 = vmatprep.mubr.bf16.mxu0 0
    %3933 = vmatmul.mubr.bf16.gmra.mrb[0].mxu0 %v3840
    %v3934 = vpop.f32.mrb[0].mxu0
    %v3935 = vadd.f32 0.0, %v3934
    %v3936 = vpop.f32.mrb[0].mxu0
    %v3937 = vpop.f32.mrb[0].mxu0
    %v3938 = vadd.f32 0.0, %v3937
    %v3939 = vpop.f32.mrb[0].mxu0
    %3940 = vmatprep.mubr.bf16.mxu0 0
    %3941 = vmatmul.mubr.bf16.gmra.mrb[0].mxu0 %v3843
    %v3942 = vpop.f32.mrb[0].mxu0
    %v3943 = vadd.f32 0.0, %v3942
    %v3944 = vpop.f32.mrb[0].mxu0
    %v3945 = vpop.f32.mrb[0].mxu0
    %v3946 = vadd.f32 0.0, %v3945
    %v3947 = vpop.f32.mrb[0].mxu0
    %3948 = vmatprep.mubr.bf16.mxu0 0
    %3949 = vmatmul.mubr.bf16.gmra.mrb[0].mxu0 %v3846
    %v3950 = vpop.f32.mrb[0].mxu0
    %v3951 = vadd.f32 0.0, %v3950
    %v3952 = vpop.f32.mrb[0].mxu0
    %v3953 = vpop.f32.mrb[0].mxu0
    %v3954 = vadd.f32 0.0, %v3953
    %v3955 = vpop.f32.mrb[0].mxu0
    %3956 = vmatprep.mubr.bf16.mxu0 0
    %3957 = vmatmul.mubr.bf16.gmra.mrb[0].mxu0 %v3849
    %v3958 = vpop.f32.mrb[0].mxu0
    %v3959 = vadd.f32 0.0, %v3958
    %v3960 = vpop.f32.mrb[0].mxu0
    %v3961 = vpop.f32.mrb[0].mxu0
    %v3962 = vadd.f32 0.0, %v3961
    %v3963 = vpop.f32.mrb[0].mxu0
    %3964 = vmatprep.mubr.bf16.mxu0 0
    %3965 = vmatmul.mubr.bf16.gmra.mrb[0].mxu0 %v3852
    %v3966 = vpop.f32.mrb[0].mxu0
    %v3967 = vadd.f32 0.0, %v3966
    %v3968 = vpop.f32.mrb[0].mxu0
    %v3969 = vpop.f32.mrb[0].mxu0
    %v3970 = vadd.f32 0.0, %v3969
    %v3971 = vpop.f32.mrb[0].mxu0
    %3972 = vmatprep.mubr.bf16.mxu0 0
    %3973 = vmatmul.mubr.bf16.gmra.mrb[0].mxu0 %v3855
    %v3974 = vpop.f32.mrb[0].mxu0
    %v3975 = vadd.f32 0.0, %v3974
    %v3976 = vpop.f32.mrb[0].mxu0
    %v3977 = vpop.f32.mrb[0].mxu0
    %v3978 = vadd.f32 0.0, %v3977
    %v3979 = vpop.f32.mrb[0].mxu0
    %3980 = vmatprep.mubr.bf16.mxu0 0
    %3981 = vmatmul.mubr.bf16.gmra.mrb[0].mxu0 %v3858
    %v3982 = vpop.f32.mrb[0].mxu0
    %v3983 = vadd.f32 0.0, %v3982
    %v3984 = vpop.f32.mrb[0].mxu0
    %v3985 = vpop.f32.mrb[0].mxu0
    %v3986 = vpop.f32.mrb[0].mxu0
    %3987 = vdwg.mxu0
    %v3988 = vadd.f32 %v3681, %v3895
    %v3989 = vadd.f32 %v3682, %v3898
    %v3990 = vadd.f32 %v3683, %v3903
    %v3991 = vadd.f32 %v3684, %v3906
    %v3992 = vadd.f32 %v3685, %v3911
    %v3993 = vadd.f32 %v3686, %v3914
    %v3994 = vadd.f32 %v3687, %v3919
    %v3995 = vadd.f32 %v3688, %v3922
    %v3996 = vadd.f32 %v3689, %v3927
    %v3997 = vadd.f32 %v3690, %v3930
    %v3998 = vadd.f32 %v3691, %v3935
    %v3999 = vadd.f32 %v3692, %v3938
    %v4000 = vadd.f32 %v3693, %v3943
    %v4001 = vadd.f32 %v3694, %v3946
    %v4002 = vadd.f32 %v3695, %v3951
    %v4003 = vadd.f32 %v3696, %v3954
    %v4004 = vadd.f32 %v3697, %v3959
    %v4005 = vadd.f32 %v3698, %v3962
    %v4006 = vadd.f32 %v3699, %v3967
    %v4007 = vadd.f32 %v3700, %v3970
    %v4008 = vadd.f32 %v3701, %v3975
    %v4009 = vadd.f32 %v3702, %v3978
    %v4010 = vadd.f32 %v3703, %v3983
    %v4011 = vld [vmem:[#allocation6 + $0x5c] sm:$0xf]
    %v4012 = vld [vmem:[%s3 + $0x40] sm:$0xf]
    %v4013 = vld [vmem:[%s3 + $0x44] sm:$0xf]
    %v4014 = vld [vmem:[%s3 + $0x48] sm:$0xf]
    %v4015 = vld [vmem:[%s3 + $0x4c] sm:$0xf]
    %v4017 = vunpack.c.l.b16 %v4011
    %v4018 = vpack.c.b16 %v4017, %v4017
    %vm4019 = vsmask.f32 6400
    %v4021 = vshrl.u32 %v3777, 16
    %v4023 = vrot.slane %v4021, 1
    %v4024 = vshll.u32 %v3777, 16
    %v4026 = vrot.slane %v4024, 2
    %v4027 = vor.u32 %v4023, %v4026
    %v4029 = vshrl.u32 %v3778, 16
    %v4031 = vrot.slane %v4029, 1
    %v4032 = vshll.u32 %v3778, 16
    %v4034 = vrot.slane %v4032, 2
    %v4035 = vor.u32 %v4031, %v4034
    %v4036 = vsel %vm4019, %v4027, %v4035
    %v4038 = vshrl.u32 %v3779, 16
    %v4040 = vrot.slane %v4038, 1
    %v4041 = vshll.u32 %v3779, 16
    %v4043 = vrot.slane %v4041, 2
    %v4044 = vor.u32 %v4040, %v4043
    %v4045 = vsel %vm4019, %v4035, %v4044
    %v4047 = vshrl.u32 %v3780, 16
    %v4049 = vrot.slane %v4047, 1
    %v4050 = vshll.u32 %v3780, 16
    %v4052 = vrot.slane %v4050, 2
    %v4053 = vor.u32 %v4049, %v4052
    %v4054 = vsel %vm4019, %v4044, %v4053
    %v4056 = vshrl.u32 %v3781, 16
    %v4058 = vrot.slane %v4056, 1
    %v4059 = vshll.u32 %v3781, 16
    %v4061 = vrot.slane %v4059, 2
    %v4062 = vor.u32 %v4058, %v4061
    %v4063 = vsel %vm4019, %v4053, %v4062
    %v4065 = vshrl.u32 %v3782, 16
    %v4067 = vrot.slane %v4065, 1
    %v4068 = vshll.u32 %v3782, 16
    %v4070 = vrot.slane %v4068, 2
    %v4071 = vor.u32 %v4067, %v4070
    %v4072 = vsel %vm4019, %v4062, %v4071
    %v4074 = vshrl.u32 %v3783, 16
    %v4076 = vrot.slane %v4074, 1
    %v4077 = vshll.u32 %v3783, 16
    %v4079 = vrot.slane %v4077, 2
    %v4080 = vor.u32 %v4076, %v4079
    %v4081 = vsel %vm4019, %v4071, %v4080
    %v4083 = vshrl.u32 %v3784, 16
    %v4085 = vrot.slane %v4083, 1
    %v4086 = vshll.u32 %v3784, 16
    %v4088 = vrot.slane %v4086, 2
    %v4089 = vor.u32 %v4085, %v4088
    %v4090 = vsel %vm4019, %v4080, %v4089
    %v4092 = vshrl.u32 %v3785, 16
    %v4094 = vrot.slane %v4092, 1
    %v4095 = vshll.u32 %v3785, 16
    %v4097 = vrot.slane %v4095, 2
    %v4098 = vor.u32 %v4094, %v4097
    %v4099 = vsel %vm4019, %v4089, %v4098
    %v4101 = vshrl.u32 %v3786, 16
    %v4103 = vrot.slane %v4101, 1
    %v4104 = vshll.u32 %v3786, 16
    %v4106 = vrot.slane %v4104, 2
    %v4107 = vor.u32 %v4103, %v4106
    %v4108 = vsel %vm4019, %v4098, %v4107
    %v4110 = vshrl.u32 %v3787, 16
    %v4112 = vrot.slane %v4110, 1
    %v4113 = vshll.u32 %v3787, 16
    %v4115 = vrot.slane %v4113, 2
    %v4116 = vor.u32 %v4112, %v4115
    %v4117 = vsel %vm4019, %v4107, %v4116
    %v4119 = vshrl.u32 %v4018, 16
    %v4121 = vrot.slane %v4119, 1
    %v4122 = vshll.u32 %v4018, 16
    %v4124 = vrot.slane %v4122, 2
    %v4125 = vor.u32 %v4121, %v4124
    %v4126 = vsel %vm4019, %v4116, %v4125
    %v4131 = vunpack.c.l.b16 %v4012
    %v4132 = vunpack.c.l.b16 %v4013
    %v4133 = vunpack.c.l.b16 %v4014
    %v4134 = vunpack.c.l.b16 %v4015
    %v4135 = vpack.c.b16 %v4132, %v4131
    %v4136 = vpack.c.b16 %v4134, %v4133
    %v4140 = vsel %vm1496, %v4036, 0
    %v4143 = vsel %vm1496, %v4045, 0
    %v4146 = vsel %vm1496, %v4054, 0
    %v4149 = vsel %vm1496, %v4063, 0
    %v4152 = vsel %vm1496, %v4072, 0
    %v4155 = vsel %vm1496, %v4081, 0
    %v4158 = vsel %vm1496, %v4090, 0
    %v4161 = vsel %vm1496, %v4099, 0
    %v4164 = vsel %vm1496, %v4108, 0
    %v4167 = vsel %vm1496, %v4117, 0
    %v4170 = vsel %vm1496, %v4126, 0
    %v4173 = vsel %vm1496, %v4125, 0
    %4175 = vmatprep.subr.bf16.mxu0 0
    %4176 = vmatpush1.bf16.msra.mxu0 %v4135
    %4177 = vmatprep.subr.bf16.mxu0 0
    %4178 = vmatpush1.bf16.msra.mxu0 %v4136
    %4179 = vmatprep.subr.bf16.mxu0 0
    %4180 = vmatpush1.bf16.msra.mxu0 0
    %4181 = vmatprep.subr.bf16.mxu0 0
    %4182 = vmatpush1.bf16.msra.mxu0 0
    %4183 = vmatprep.subr.bf16.mxu0 0
    %4184 = vmatpush1.bf16.msra.mxu0 0
    %4185 = vmatprep.subr.bf16.mxu0 0
    %4186 = vmatpush1.bf16.msra.mxu0 0
    %4187 = vmatprep.subr.bf16.mxu0 0
    %4188 = vmatpush1.bf16.msra.mxu0 0
    %4189 = vmatprep.subr.bf16.mxu0 0
    %4190 = vmatpush1.bf16.msra.mxu0 0
    %4191 = vmatprep.subr.bf16.mxu0 0
    %4192 = vmatpush1.bf16.msra.mxu0 0
    %4193 = vmatprep.subr.bf16.mxu0 0
    %4194 = vmatpush1.bf16.msra.mxu0 0
    %4195 = vmatprep.subr.bf16.mxu0 0
    %4196 = vmatpush1.bf16.msra.mxu0 0
    %4197 = vmatprep.subr.bf16.mxu0 0
    %4198 = vmatpush1.bf16.msra.mxu0 0
    %4199 = vmatprep.subr.bf16.mxu0 0
    %4200 = vmatpush1.bf16.msra.mxu0 0
    %4201 = vmatprep.subr.bf16.mxu0 0
    %4202 = vmatpush1.bf16.msra.mxu0 0
    %4203 = vmatprep.subr.bf16.mxu0 0
    %4204 = vmatpush1.bf16.msra.mxu0 0
    %4205 = vmatprep.subr.bf16.mxu0 0
    %4206 = vmatpush1.bf16.msra.mxu0 0
    %4207 = vmatprep.mubr.bf16.mxu0 0
    %4208 = vmatmul.mubr.bf16.gmra.mrb[0].mxu0 %v4140
    %v4209 = vpop.f32.mrb[0].mxu0
    %v4210 = vadd.f32 0.0, %v4209
    %v4211 = vpop.f32.mrb[0].mxu0
    %v4212 = vpop.f32.mrb[0].mxu0
    %v4213 = vadd.f32 0.0, %v4212
    %v4214 = vpop.f32.mrb[0].mxu0
    %4215 = vmatprep.mubr.bf16.mxu0 0
    %4216 = vmatmul.mubr.bf16.gmra.mrb[0].mxu0 %v4143
    %v4217 = vpop.f32.mrb[0].mxu0
    %v4218 = vadd.f32 0.0, %v4217
    %v4219 = vpop.f32.mrb[0].mxu0
    %v4220 = vpop.f32.mrb[0].mxu0
    %v4221 = vadd.f32 0.0, %v4220
    %v4222 = vpop.f32.mrb[0].mxu0
    %4223 = vmatprep.mubr.bf16.mxu0 0
    %4224 = vmatmul.mubr.bf16.gmra.mrb[0].mxu0 %v4146
    %v4225 = vpop.f32.mrb[0].mxu0
    %v4226 = vadd.f32 0.0, %v4225
    %v4227 = vpop.f32.mrb[0].mxu0
    %v4228 = vpop.f32.mrb[0].mxu0
    %v4229 = vadd.f32 0.0, %v4228
    %v4230 = vpop.f32.mrb[0].mxu0
    %4231 = vmatprep.mubr.bf16.mxu0 0
    %4232 = vmatmul.mubr.bf16.gmra.mrb[0].mxu0 %v4149
    %v4233 = vpop.f32.mrb[0].mxu0
    %v4234 = vadd.f32 0.0, %v4233
    %v4235 = vpop.f32.mrb[0].mxu0
    %v4236 = vpop.f32.mrb[0].mxu0
    %v4237 = vadd.f32 0.0, %v4236
    %v4238 = vpop.f32.mrb[0].mxu0
    %4239 = vmatprep.mubr.bf16.mxu0 0
    %4240 = vmatmul.mubr.bf16.gmra.mrb[0].mxu0 %v4152
    %v4241 = vpop.f32.mrb[0].mxu0
    %v4242 = vadd.f32 0.0, %v4241
    %v4243 = vpop.f32.mrb[0].mxu0
    %v4244 = vpop.f32.mrb[0].mxu0
    %v4245 = vadd.f32 0.0, %v4244
    %v4246 = vpop.f32.mrb[0].mxu0
    %4247 = vmatprep.mubr.bf16.mxu0 0
    %4248 = vmatmul.mubr.bf16.gmra.mrb[0].mxu0 %v4155
    %v4249 = vpop.f32.mrb[0].mxu0
    %v4250 = vadd.f32 0.0, %v4249
    %v4251 = vpop.f32.mrb[0].mxu0
    %v4252 = vpop.f32.mrb[0].mxu0
    %v4253 = vadd.f32 0.0, %v4252
    %v4254 = vpop.f32.mrb[0].mxu0
    %4255 = vmatprep.mubr.bf16.mxu0 0
    %4256 = vmatmul.mubr.bf16.gmra.mrb[0].mxu0 %v4158
    %v4257 = vpop.f32.mrb[0].mxu0
    %v4258 = vadd.f32 0.0, %v4257
    %v4259 = vpop.f32.mrb[0].mxu0
    %v4260 = vpop.f32.mrb[0].mxu0
    %v4261 = vadd.f32 0.0, %v4260
    %v4262 = vpop.f32.mrb[0].mxu0
    %4263 = vmatprep.mubr.bf16.mxu0 0
    %4264 = vmatmul.mubr.bf16.gmra.mrb[0].mxu0 %v4161
    %v4265 = vpop.f32.mrb[0].mxu0
    %v4266 = vadd.f32 0.0, %v4265
    %v4267 = vpop.f32.mrb[0].mxu0
    %v4268 = vpop.f32.mrb[0].mxu0
    %v4269 = vadd.f32 0.0, %v4268
    %v4270 = vpop.f32.mrb[0].mxu0
    %4271 = vmatprep.mubr.bf16.mxu0 0
    %4272 = vmatmul.mubr.bf16.gmra.mrb[0].mxu0 %v4164
    %v4273 = vpop.f32.mrb[0].mxu0
    %v4274 = vadd.f32 0.0, %v4273
    %v4275 = vpop.f32.mrb[0].mxu0
    %v4276 = vpop.f32.mrb[0].mxu0
    %v4277 = vadd.f32 0.0, %v4276
    %v4278 = vpop.f32.mrb[0].mxu0
    %4279 = vmatprep.mubr.bf16.mxu0 0
    %4280 = vmatmul.mubr.bf16.gmra.mrb[0].mxu0 %v4167
    %v4281 = vpop.f32.mrb[0].mxu0
    %v4282 = vadd.f32 0.0, %v4281
    %v4283 = vpop.f32.mrb[0].mxu0
    %v4284 = vpop.f32.mrb[0].mxu0
    %v4285 = vadd.f32 0.0, %v4284
    %v4286 = vpop.f32.mrb[0].mxu0
    %4287 = vmatprep.mubr.bf16.mxu0 0
    %4288 = vmatmul.mubr.bf16.gmra.mrb[0].mxu0 %v4170
    %v4289 = vpop.f32.mrb[0].mxu0
    %v4290 = vadd.f32 0.0, %v4289
    %v4291 = vpop.f32.mrb[0].mxu0
    %v4292 = vpop.f32.mrb[0].mxu0
    %v4293 = vadd.f32 0.0, %v4292
    %v4294 = vpop.f32.mrb[0].mxu0
    %4295 = vmatprep.mubr.bf16.mxu0 0
    %4296 = vmatmul.mubr.bf16.gmra.mrb[0].mxu0 %v4173
    %v4297 = vpop.f32.mrb[0].mxu0
    %v4298 = vadd.f32 0.0, %v4297
    %v4299 = vpop.f32.mrb[0].mxu0
    %v4300 = vpop.f32.mrb[0].mxu0
    %v4301 = vpop.f32.mrb[0].mxu0
    %4302 = vdwg.mxu0
    %v4303 = vadd.f32 %v3988, %v4210
    %v4304 = vadd.f32 %v3989, %v4213
    %v4305 = vadd.f32 %v3990, %v4218
    %v4306 = vadd.f32 %v3991, %v4221
    %v4307 = vadd.f32 %v3992, %v4226
    %v4308 = vadd.f32 %v3993, %v4229
    %v4309 = vadd.f32 %v3994, %v4234
    %v4310 = vadd.f32 %v3995, %v4237
    %v4311 = vadd.f32 %v3996, %v4242
    %v4312 = vadd.f32 %v3997, %v4245
    %v4313 = vadd.f32 %v3998, %v4250
    %v4314 = vadd.f32 %v3999, %v4253
    %v4315 = vadd.f32 %v4000, %v4258
    %v4316 = vadd.f32 %v4001, %v4261
    %v4317 = vadd.f32 %v4002, %v4266
    %v4318 = vadd.f32 %v4003, %v4269
    %v4319 = vadd.f32 %v4004, %v4274
    %v4320 = vadd.f32 %v4005, %v4277
    %v4321 = vadd.f32 %v4006, %v4282
    %v4322 = vadd.f32 %v4007, %v4285
    %v4323 = vadd.f32 %v4008, %v4290
    %v4324 = vadd.f32 %v4009, %v4293
    %v4325 = vadd.f32 %v4010, %v4298
    %v4326 = vld [vmem:[#allocation6 + $0x4] sm:$0xc]
    %v4327 = vld [vmem:[%s3 + $0x50] sm:$0xf]
    %v4328 = vld [vmem:[%s3 + $0x54] sm:$0xf]
    %v4329 = vld [vmem:[%s3 + $0x58] sm:$0xf]
    %v4330 = vld [vmem:[%s3 + $0x5c] sm:$0xf]
    %v4332 = vunpack.c.l.b16 %v4326
    %v4333 = vpack.c.b16 %v3755, %v4332
    %vm4334 = vcmask 1045504
    %v4335 = vrot.slane %v4333, 2
    %v4336 = vrot.slane %v3778, 2
    %v4337 = vsel %vm4334, %v4335, %v4336
    %v4338 = vrot.slane %v3779, 2
    %v4339 = vsel %vm4334, %v4336, %v4338
    %v4340 = vrot.slane %v3780, 2
    %v4341 = vsel %vm4334, %v4338, %v4340
    %v4342 = vrot.slane %v3781, 2
    %v4343 = vsel %vm4334, %v4340, %v4342
    %v4344 = vrot.slane %v3782, 2
    %v4345 = vsel %vm4334, %v4342, %v4344
    %v4346 = vrot.slane %v3783, 2
    %v4347 = vsel %vm4334, %v4344, %v4346
    %v4348 = vrot.slane %v3784, 2
    %v4349 = vsel %vm4334, %v4346, %v4348
    %v4350 = vrot.slane %v3785, 2
    %v4351 = vsel %vm4334, %v4348, %v4350
    %v4352 = vrot.slane %v3786, 2
    %v4353 = vsel %vm4334, %v4350, %v4352
    %v4354 = vrot.slane %v3787, 2
    %v4355 = vsel %vm4334, %v4352, %v4354
    %v4356 = vrot.slane %v4018, 2
    %v4357 = vsel %vm4334, %v4354, %v4356
    %v4362 = vunpack.c.l.b16 %v4327
    %v4363 = vunpack.c.l.b16 %v4328
    %v4364 = vunpack.c.l.b16 %v4329
    %v4365 = vunpack.c.l.b16 %v4330
    %v4366 = vpack.c.b16 %v4363, %v4362
    %v4367 = vpack.c.b16 %v4365, %v4364
    %v4371 = vsel %vm1496, %v4337, 0
    %v4374 = vsel %vm1496, %v4339, 0
    %v4377 = vsel %vm1496, %v4341, 0
    %v4380 = vsel %vm1496, %v4343, 0
    %v4383 = vsel %vm1496, %v4345, 0
    %v4386 = vsel %vm1496, %v4347, 0
    %v4389 = vsel %vm1496, %v4349, 0
    %v4392 = vsel %vm1496, %v4351, 0
    %v4395 = vsel %vm1496, %v4353, 0
    %v4398 = vsel %vm1496, %v4355, 0
    %v4401 = vsel %vm1496, %v4357, 0
    %v4404 = vsel %vm1496, %v4356, 0
    %4406 = vmatprep.subr.bf16.mxu0 0
    %4407 = vmatpush1.bf16.msra.mxu0 %v4366
    %4408 = vmatprep.subr.bf16.mxu0 0
    %4409 = vmatpush1.bf16.msra.mxu0 %v4367
    %4410 = vmatprep.subr.bf16.mxu0 0
    %4411 = vmatpush1.bf16.msra.mxu0 0
    %4412 = vmatprep.subr.bf16.mxu0 0
    %4413 = vmatpush1.bf16.msra.mxu0 0
    %4414 = vmatprep.subr.bf16.mxu0 0
    %4415 = vmatpush1.bf16.msra.mxu0 0
    %4416 = vmatprep.subr.bf16.mxu0 0
    %4417 = vmatpush1.bf16.msra.mxu0 0
    %4418 = vmatprep.subr.bf16.mxu0 0
    %4419 = vmatpush1.bf16.msra.mxu0 0
    %4420 = vmatprep.subr.bf16.mxu0 0
    %4421 = vmatpush1.bf16.msra.mxu0 0
    %4422 = vmatprep.subr.bf16.mxu0 0
    %4423 = vmatpush1.bf16.msra.mxu0 0
    %4424 = vmatprep.subr.bf16.mxu0 0
    %4425 = vmatpush1.bf16.msra.mxu0 0
    %4426 = vmatprep.subr.bf16.mxu0 0
    %4427 = vmatpush1.bf16.msra.mxu0 0
    %4428 = vmatprep.subr.bf16.mxu0 0
    %4429 = vmatpush1.bf16.msra.mxu0 0
    %4430 = vmatprep.subr.bf16.mxu0 0
    %4431 = vmatpush1.bf16.msra.mxu0 0
    %4432 = vmatprep.subr.bf16.mxu0 0
    %4433 = vmatpush1.bf16.msra.mxu0 0
    %4434 = vmatprep.subr.bf16.mxu0 0
    %4435 = vmatpush1.bf16.msra.mxu0 0
    %4436 = vmatprep.subr.bf16.mxu0 0
    %4437 = vmatpush1.bf16.msra.mxu0 0
    %4438 = vmatprep.mubr.bf16.mxu0 0
    %4439 = vmatmul.mubr.bf16.gmra.mrb[0].mxu0 %v4371
    %v4440 = vpop.f32.mrb[0].mxu0
    %v4441 = vadd.f32 0.0, %v4440
    %v4442 = vpop.f32.mrb[0].mxu0
    %v4443 = vpop.f32.mrb[0].mxu0
    %v4444 = vadd.f32 0.0, %v4443
    %v4445 = vpop.f32.mrb[0].mxu0
    %4446 = vmatprep.mubr.bf16.mxu0 0
    %4447 = vmatmul.mubr.bf16.gmra.mrb[0].mxu0 %v4374
    %v4448 = vpop.f32.mrb[0].mxu0
    %v4449 = vadd.f32 0.0, %v4448
    %v4450 = vpop.f32.mrb[0].mxu0
    %v4451 = vpop.f32.mrb[0].mxu0
    %v4452 = vadd.f32 0.0, %v4451
    %v4453 = vpop.f32.mrb[0].mxu0
    %4454 = vmatprep.mubr.bf16.mxu0 0
    %4455 = vmatmul.mubr.bf16.gmra.mrb[0].mxu0 %v4377
    %v4456 = vpop.f32.mrb[0].mxu0
    %v4457 = vadd.f32 0.0, %v4456
    %v4458 = vpop.f32.mrb[0].mxu0
    %v4459 = vpop.f32.mrb[0].mxu0
    %v4460 = vadd.f32 0.0, %v4459
    %v4461 = vpop.f32.mrb[0].mxu0
    %4462 = vmatprep.mubr.bf16.mxu0 0
    %4463 = vmatmul.mubr.bf16.gmra.mrb[0].mxu0 %v4380
    %v4464 = vpop.f32.mrb[0].mxu0
    %v4465 = vadd.f32 0.0, %v4464
    %v4466 = vpop.f32.mrb[0].mxu0
    %v4467 = vpop.f32.mrb[0].mxu0
    %v4468 = vadd.f32 0.0, %v4467
    %v4469 = vpop.f32.mrb[0].mxu0
    %4470 = vmatprep.mubr.bf16.mxu0 0
    %4471 = vmatmul.mubr.bf16.gmra.mrb[0].mxu0 %v4383
    %v4472 = vpop.f32.mrb[0].mxu0
    %v4473 = vadd.f32 0.0, %v4472
    %v4474 = vpop.f32.mrb[0].mxu0
    %v4475 = vpop.f32.mrb[0].mxu0
    %v4476 = vadd.f32 0.0, %v4475
    %v4477 = vpop.f32.mrb[0].mxu0
    %4478 = vmatprep.mubr.bf16.mxu0 0
    %4479 = vmatmul.mubr.bf16.gmra.mrb[0].mxu0 %v4386
    %v4480 = vpop.f32.mrb[0].mxu0
    %v4481 = vadd.f32 0.0, %v4480
    %v4482 = vpop.f32.mrb[0].mxu0
    %v4483 = vpop.f32.mrb[0].mxu0
    %v4484 = vadd.f32 0.0, %v4483
    %v4485 = vpop.f32.mrb[0].mxu0
    %4486 = vmatprep.mubr.bf16.mxu0 0
    %4487 = vmatmul.mubr.bf16.gmra.mrb[0].mxu0 %v4389
    %v4488 = vpop.f32.mrb[0].mxu0
    %v4489 = vadd.f32 0.0, %v4488
    %v4490 = vpop.f32.mrb[0].mxu0
    %v4491 = vpop.f32.mrb[0].mxu0
    %v4492 = vadd.f32 0.0, %v4491
    %v4493 = vpop.f32.mrb[0].mxu0
    %4494 = vmatprep.mubr.bf16.mxu0 0
    %4495 = vmatmul.mubr.bf16.gmra.mrb[0].mxu0 %v4392
    %v4496 = vpop.f32.mrb[0].mxu0
    %v4497 = vadd.f32 0.0, %v4496
    %v4498 = vpop.f32.mrb[0].mxu0
    %v4499 = vpop.f32.mrb[0].mxu0
    %v4500 = vadd.f32 0.0, %v4499
    %v4501 = vpop.f32.mrb[0].mxu0
    %4502 = vmatprep.mubr.bf16.mxu0 0
    %4503 = vmatmul.mubr.bf16.gmra.mrb[0].mxu0 %v4395
    %v4504 = vpop.f32.mrb[0].mxu0
    %v4505 = vadd.f32 0.0, %v4504
    %v4506 = vpop.f32.mrb[0].mxu0
    %v4507 = vpop.f32.mrb[0].mxu0
    %v4508 = vadd.f32 0.0, %v4507
    %v4509 = vpop.f32.mrb[0].mxu0
    %4510 = vmatprep.mubr.bf16.mxu0 0
    %4511 = vmatmul.mubr.bf16.gmra.mrb[0].mxu0 %v4398
    %v4512 = vpop.f32.mrb[0].mxu0
    %v4513 = vadd.f32 0.0, %v4512
    %v4514 = vpop.f32.mrb[0].mxu0
    %v4515 = vpop.f32.mrb[0].mxu0
    %v4516 = vadd.f32 0.0, %v4515
    %v4517 = vpop.f32.mrb[0].mxu0
    %4518 = vmatprep.mubr.bf16.mxu0 0
    %4519 = vmatmul.mubr.bf16.gmra.mrb[0].mxu0 %v4401
    %v4520 = vpop.f32.mrb[0].mxu0
    %v4521 = vadd.f32 0.0, %v4520
    %v4522 = vpop.f32.mrb[0].mxu0
    %v4523 = vpop.f32.mrb[0].mxu0
    %v4524 = vadd.f32 0.0, %v4523
    %v4525 = vpop.f32.mrb[0].mxu0
    %4526 = vmatprep.mubr.bf16.mxu0 0
    %4527 = vmatmul.mubr.bf16.gmra.mrb[0].mxu0 %v4404
    %v4528 = vpop.f32.mrb[0].mxu0
    %v4529 = vadd.f32 0.0, %v4528
    %v4530 = vpop.f32.mrb[0].mxu0
    %v4531 = vpop.f32.mrb[0].mxu0
    %v4532 = vpop.f32.mrb[0].mxu0
    %4533 = vdwg.mxu0
    %v4534 = vadd.f32 %v4303, %v4441
    %v4535 = vadd.f32 %v4304, %v4444
    %v4536 = vadd.f32 %v4305, %v4449
    %v4537 = vadd.f32 %v4306, %v4452
    %v4538 = vadd.f32 %v4307, %v4457
    %v4539 = vadd.f32 %v4308, %v4460
    %v4540 = vadd.f32 %v4309, %v4465
    %v4541 = vadd.f32 %v4310, %v4468
    %v4542 = vadd.f32 %v4311, %v4473
    %v4543 = vadd.f32 %v4312, %v4476
    %v4544 = vadd.f32 %v4313, %v4481
    %v4545 = vadd.f32 %v4314, %v4484
    %v4546 = vadd.f32 %v4315, %v4489
    %v4547 = vadd.f32 %v4316, %v4492
    %v4548 = vadd.f32 %v4317, %v4497
    %v4549 = vadd.f32 %v4318, %v4500
    %v4550 = vadd.f32 %v4319, %v4505
    %v4551 = vadd.f32 %v4320, %v4508
    %v4552 = vadd.f32 %v4321, %v4513
    %v4553 = vadd.f32 %v4322, %v4516
    %v4554 = vadd.f32 %v4323, %v4521
    %v4555 = vadd.f32 %v4324, %v4524
    %v4556 = vadd.f32 %v4325, %v4529
    %v4557 = vld [vmem:[#allocation6 + $0x8] sm:$0xc]
    %v4558 = vld [vmem:[#allocation6 + $0xc] sm:$0xf]
    %v4559 = vld [vmem:[#allocation6 + $0x10] sm:$0xf]
    %v4560 = vld [vmem:[#allocation6 + $0x14] sm:$0xf]
    %v4561 = vld [vmem:[#allocation6 + $0x18] sm:$0xf]
    %v4562 = vld [vmem:[#allocation6 + $0x1c] sm:$0xf]
    %v4563 = vld [vmem:[#allocation6 + $0x20] sm:$0xf]
    %v4564 = vld [vmem:[#allocation6 + $0x24] sm:$0xf]
    %v4565 = vld [vmem:[#allocation6 + $0x28] sm:$0xf]
    %v4566 = vld [vmem:[#allocation6 + $0x2c] sm:$0xf]
    %v4567 = vld [vmem:[#allocation6 + $0x30] sm:$0xf]
    %v4568 = vld [vmem:[#allocation6 + $0x34] sm:$0xf]
    %v4569 = vld [vmem:[#allocation6 + $0x38] sm:$0xf]
    %v4570 = vld [vmem:[#allocation6 + $0x3c] sm:$0xf]
    %v4571 = vld [vmem:[#allocation6 + $0x40] sm:$0xf]
    %v4572 = vld [vmem:[#allocation6 + $0x44] sm:$0xf]
    %v4573 = vld [vmem:[#allocation6 + $0x48] sm:$0xf]
    %v4574 = vld [vmem:[#allocation6 + $0x4c] sm:$0xf]
    %v4575 = vld [vmem:[#allocation6 + $0x50] sm:$0xf]
    %v4576 = vld [vmem:[#allocation6 + $0x54] sm:$0xf]
    %v4577 = vld [vmem:[#allocation6 + $0x58] sm:$0xf]
    %v4578 = vld [vmem:[#allocation6 + $0x5c] sm:$0xf]
    %v4579 = vld [vmem:[#allocation6 + $0x60] sm:$0xf]
    %v4580 = vld [vmem:[%s3 + $0x60] sm:$0xf]
    %v4581 = vld [vmem:[%s3 + $0x64] sm:$0xf]
    %v4582 = vld [vmem:[%s3 + $0x68] sm:$0xf]
    %v4583 = vld [vmem:[%s3 + $0x6c] sm:$0xf]
    %v4607 = vunpack.c.l.b16 %v4557
    %v4608 = vunpack.c.l.b16 %v4558
    %v4609 = vunpack.c.l.b16 %v4559
    %v4610 = vunpack.c.l.b16 %v4560
    %v4611 = vunpack.c.l.b16 %v4561
    %v4612 = vunpack.c.l.b16 %v4562
    %v4613 = vunpack.c.l.b16 %v4563
    %v4614 = vunpack.c.l.b16 %v4564
    %v4615 = vunpack.c.l.b16 %v4565
    %v4616 = vunpack.c.l.b16 %v4566
    %v4617 = vunpack.c.l.b16 %v4567
    %v4618 = vunpack.c.l.b16 %v4568
    %v4619 = vunpack.c.l.b16 %v4569
    %v4620 = vunpack.c.l.b16 %v4570
    %v4621 = vunpack.c.l.b16 %v4571
    %v4622 = vunpack.c.l.b16 %v4572
    %v4623 = vunpack.c.l.b16 %v4573
    %v4624 = vunpack.c.l.b16 %v4574
    %v4625 = vunpack.c.l.b16 %v4575
    %v4626 = vunpack.c.l.b16 %v4576
    %v4627 = vunpack.c.l.b16 %v4577
    %v4628 = vunpack.c.l.b16 %v4578
    %v4629 = vunpack.c.l.b16 %v4579
    %v4630 = vpack.c.b16 %v4608, %v4607
    %v4631 = vpack.c.b16 %v4610, %v4609
    %v4632 = vpack.c.b16 %v4612, %v4611
    %v4633 = vpack.c.b16 %v4614, %v4613
    %v4634 = vpack.c.b16 %v4616, %v4615
    %v4635 = vpack.c.b16 %v4618, %v4617
    %v4636 = vpack.c.b16 %v4620, %v4619
    %v4637 = vpack.c.b16 %v4622, %v4621
    %v4638 = vpack.c.b16 %v4624, %v4623
    %v4639 = vpack.c.b16 %v4626, %v4625
    %v4640 = vpack.c.b16 %v4628, %v4627
    %v4641 = vpack.c.b16 %v4629, %v4629
    %v4642 = vrot.slane %v4630, 2
    %v4643 = vrot.slane %v4631, 2
    %v4644 = vsel %vm4334, %v4642, %v4643
    %v4645 = vrot.slane %v4632, 2
    %v4646 = vsel %vm4334, %v4643, %v4645
    %v4647 = vrot.slane %v4633, 2
    %v4648 = vsel %vm4334, %v4645, %v4647
    %v4649 = vrot.slane %v4634, 2
    %v4650 = vsel %vm4334, %v4647, %v4649
    %v4651 = vrot.slane %v4635, 2
    %v4652 = vsel %vm4334, %v4649, %v4651
    %v4653 = vrot.slane %v4636, 2
    %v4654 = vsel %vm4334, %v4651, %v4653
    %v4655 = vrot.slane %v4637, 2
    %v4656 = vsel %vm4334, %v4653, %v4655
    %v4657 = vrot.slane %v4638, 2
    %v4658 = vsel %vm4334, %v4655, %v4657
    %v4659 = vrot.slane %v4639, 2
    %v4660 = vsel %vm4334, %v4657, %v4659
    %v4661 = vrot.slane %v4640, 2
    %v4662 = vsel %vm4334, %v4659, %v4661
    %v4663 = vrot.slane %v4641, 2
    %v4664 = vsel %vm4334, %v4661, %v4663
    %v4669 = vunpack.c.l.b16 %v4580
    %v4670 = vunpack.c.l.b16 %v4581
    %v4671 = vunpack.c.l.b16 %v4582
    %v4672 = vunpack.c.l.b16 %v4583
    %v4673 = vpack.c.b16 %v4670, %v4669
    %v4674 = vpack.c.b16 %v4672, %v4671
    %v4678 = vsel %vm1496, %v4644, 0
    %v4681 = vsel %vm1496, %v4646, 0
    %v4684 = vsel %vm1496, %v4648, 0
    %v4687 = vsel %vm1496, %v4650, 0
    %v4690 = vsel %vm1496, %v4652, 0
    %v4693 = vsel %vm1496, %v4654, 0
    %v4696 = vsel %vm1496, %v4656, 0
    %v4699 = vsel %vm1496, %v4658, 0
    %v4702 = vsel %vm1496, %v4660, 0
    %v4705 = vsel %vm1496, %v4662, 0
    %v4708 = vsel %vm1496, %v4664, 0
    %v4711 = vsel %vm1496, %v4663, 0
    %4713 = vmatprep.subr.bf16.mxu0 0
    %4714 = vmatpush1.bf16.msra.mxu0 %v4673
    %4715 = vmatprep.subr.bf16.mxu0 0
    %4716 = vmatpush1.bf16.msra.mxu0 %v4674
    %4717 = vmatprep.subr.bf16.mxu0 0
    %4718 = vmatpush1.bf16.msra.mxu0 0
    %4719 = vmatprep.subr.bf16.mxu0 0
    %4720 = vmatpush1.bf16.msra.mxu0 0
    %4721 = vmatprep.subr.bf16.mxu0 0
    %4722 = vmatpush1.bf16.msra.mxu0 0
    %4723 = vmatprep.subr.bf16.mxu0 0
    %4724 = vmatpush1.bf16.msra.mxu0 0
    %4725 = vmatprep.subr.bf16.mxu0 0
    %4726 = vmatpush1.bf16.msra.mxu0 0
    %4727 = vmatprep.subr.bf16.mxu0 0
    %4728 = vmatpush1.bf16.msra.mxu0 0
    %4729 = vmatprep.subr.bf16.mxu0 0
    %4730 = vmatpush1.bf16.msra.mxu0 0
    %4731 = vmatprep.subr.bf16.mxu0 0
    %4732 = vmatpush1.bf16.msra.mxu0 0
    %4733 = vmatprep.subr.bf16.mxu0 0
    %4734 = vmatpush1.bf16.msra.mxu0 0
    %4735 = vmatprep.subr.bf16.mxu0 0
    %4736 = vmatpush1.bf16.msra.mxu0 0
    %4737 = vmatprep.subr.bf16.mxu0 0
    %4738 = vmatpush1.bf16.msra.mxu0 0
    %4739 = vmatprep.subr.bf16.mxu0 0
    %4740 = vmatpush1.bf16.msra.mxu0 0
    %4741 = vmatprep.subr.bf16.mxu0 0
    %4742 = vmatpush1.bf16.msra.mxu0 0
    %4743 = vmatprep.subr.bf16.mxu0 0
    %4744 = vmatpush1.bf16.msra.mxu0 0
    %4745 = vmatprep.mubr.bf16.mxu0 0
    %4746 = vmatmul.mubr.bf16.gmra.mrb[0].mxu0 %v4678
    %v4747 = vpop.f32.mrb[0].mxu0
    %v4748 = vadd.f32 0.0, %v4747
    %v4749 = vpop.f32.mrb[0].mxu0
    %v4750 = vpop.f32.mrb[0].mxu0
    %v4751 = vadd.f32 0.0, %v4750
    %v4752 = vpop.f32.mrb[0].mxu0
    %4753 = vmatprep.mubr.bf16.mxu0 0
    %4754 = vmatmul.mubr.bf16.gmra.mrb[0].mxu0 %v4681
    %v4755 = vpop.f32.mrb[0].mxu0
    %v4756 = vadd.f32 0.0, %v4755
    %v4757 = vpop.f32.mrb[0].mxu0
    %v4758 = vpop.f32.mrb[0].mxu0
    %v4759 = vadd.f32 0.0, %v4758
    %v4760 = vpop.f32.mrb[0].mxu0
    %4761 = vmatprep.mubr.bf16.mxu0 0
    %4762 = vmatmul.mubr.bf16.gmra.mrb[0].mxu0 %v4684
    %v4763 = vpop.f32.mrb[0].mxu0
    %v4764 = vadd.f32 0.0, %v4763
    %v4765 = vpop.f32.mrb[0].mxu0
    %v4766 = vpop.f32.mrb[0].mxu0
    %v4767 = vadd.f32 0.0, %v4766
    %v4768 = vpop.f32.mrb[0].mxu0
    %4769 = vmatprep.mubr.bf16.mxu0 0
    %4770 = vmatmul.mubr.bf16.gmra.mrb[0].mxu0 %v4687
    %v4771 = vpop.f32.mrb[0].mxu0
    %v4772 = vadd.f32 0.0, %v4771
    %v4773 = vpop.f32.mrb[0].mxu0
    %v4774 = vpop.f32.mrb[0].mxu0
    %v4775 = vadd.f32 0.0, %v4774
    %v4776 = vpop.f32.mrb[0].mxu0
    %4777 = vmatprep.mubr.bf16.mxu0 0
    %4778 = vmatmul.mubr.bf16.gmra.mrb[0].mxu0 %v4690
    %v4779 = vpop.f32.mrb[0].mxu0
    %v4780 = vadd.f32 0.0, %v4779
    %v4781 = vpop.f32.mrb[0].mxu0
    %v4782 = vpop.f32.mrb[0].mxu0
    %v4783 = vadd.f32 0.0, %v4782
    %v4784 = vpop.f32.mrb[0].mxu0
    %4785 = vmatprep.mubr.bf16.mxu0 0
    %4786 = vmatmul.mubr.bf16.gmra.mrb[0].mxu0 %v4693
    %v4787 = vpop.f32.mrb[0].mxu0
    %v4788 = vadd.f32 0.0, %v4787
    %v4789 = vpop.f32.mrb[0].mxu0
    %v4790 = vpop.f32.mrb[0].mxu0
    %v4791 = vadd.f32 0.0, %v4790
    %v4792 = vpop.f32.mrb[0].mxu0
    %4793 = vmatprep.mubr.bf16.mxu0 0
    %4794 = vmatmul.mubr.bf16.gmra.mrb[0].mxu0 %v4696
    %v4795 = vpop.f32.mrb[0].mxu0
    %v4796 = vadd.f32 0.0, %v4795
    %v4797 = vpop.f32.mrb[0].mxu0
    %v4798 = vpop.f32.mrb[0].mxu0
    %v4799 = vadd.f32 0.0, %v4798
    %v4800 = vpop.f32.mrb[0].mxu0
    %4801 = vmatprep.mubr.bf16.mxu0 0
    %4802 = vmatmul.mubr.bf16.gmra.mrb[0].mxu0 %v4699
    %v4803 = vpop.f32.mrb[0].mxu0
    %v4804 = vadd.f32 0.0, %v4803
    %v4805 = vpop.f32.mrb[0].mxu0
    %v4806 = vpop.f32.mrb[0].mxu0
    %v4807 = vadd.f32 0.0, %v4806
    %v4808 = vpop.f32.mrb[0].mxu0
    %4809 = vmatprep.mubr.bf16.mxu0 0
    %4810 = vmatmul.mubr.bf16.gmra.mrb[0].mxu0 %v4702
    %v4811 = vpop.f32.mrb[0].mxu0
    %v4812 = vadd.f32 0.0, %v4811
    %v4813 = vpop.f32.mrb[0].mxu0
    %v4814 = vpop.f32.mrb[0].mxu0
    %v4815 = vadd.f32 0.0, %v4814
    %v4816 = vpop.f32.mrb[0].mxu0
    %4817 = vmatprep.mubr.bf16.mxu0 0
    %4818 = vmatmul.mubr.bf16.gmra.mrb[0].mxu0 %v4705
    %v4819 = vpop.f32.mrb[0].mxu0
    %v4820 = vadd.f32 0.0, %v4819
    %v4821 = vpop.f32.mrb[0].mxu0
    %v4822 = vpop.f32.mrb[0].mxu0
    %v4823 = vadd.f32 0.0, %v4822
    %v4824 = vpop.f32.mrb[0].mxu0
    %4825 = vmatprep.mubr.bf16.mxu0 0
    %4826 = vmatmul.mubr.bf16.gmra.mrb[0].mxu0 %v4708
    %v4827 = vpop.f32.mrb[0].mxu0
    %v4828 = vadd.f32 0.0, %v4827
    %v4829 = vpop.f32.mrb[0].mxu0
    %v4830 = vpop.f32.mrb[0].mxu0
    %v4831 = vadd.f32 0.0, %v4830
    %v4832 = vpop.f32.mrb[0].mxu0
    %4833 = vmatprep.mubr.bf16.mxu0 0
    %4834 = vmatmul.mubr.bf16.gmra.mrb[0].mxu0 %v4711
    %v4835 = vpop.f32.mrb[0].mxu0
    %v4836 = vadd.f32 0.0, %v4835
    %v4837 = vpop.f32.mrb[0].mxu0
    %v4838 = vpop.f32.mrb[0].mxu0
    %v4839 = vpop.f32.mrb[0].mxu0
    %4840 = vdwg.mxu0
    %v4841 = vadd.f32 %v4534, %v4748
    %v4842 = vadd.f32 %v4535, %v4751
    %v4843 = vadd.f32 %v4536, %v4756
    %v4844 = vadd.f32 %v4537, %v4759
    %v4845 = vadd.f32 %v4538, %v4764
    %v4846 = vadd.f32 %v4539, %v4767
    %v4847 = vadd.f32 %v4540, %v4772
    %v4848 = vadd.f32 %v4541, %v4775
    %v4849 = vadd.f32 %v4542, %v4780
    %v4850 = vadd.f32 %v4543, %v4783
    %v4851 = vadd.f32 %v4544, %v4788
    %v4852 = vadd.f32 %v4545, %v4791
    %v4853 = vadd.f32 %v4546, %v4796
    %v4854 = vadd.f32 %v4547, %v4799
    %v4855 = vadd.f32 %v4548, %v4804
    %v4856 = vadd.f32 %v4549, %v4807
    %v4857 = vadd.f32 %v4550, %v4812
    %v4858 = vadd.f32 %v4551, %v4815
    %v4859 = vadd.f32 %v4552, %v4820
    %v4860 = vadd.f32 %v4553, %v4823
    %v4861 = vadd.f32 %v4554, %v4828
    %v4862 = vadd.f32 %v4555, %v4831
    %v4863 = vadd.f32 %v4556, %v4836
    %v4864 = vld [vmem:[#allocation6 + $0x8] sm:$0xc]
    %v4865 = vld [vmem:[#allocation6 + $0xc] sm:$0xf]
    %v4866 = vld [vmem:[#allocation6 + $0x10] sm:$0xf]
    %v4867 = vld [vmem:[#allocation6 + $0x14] sm:$0xf]
    %v4868 = vld [vmem:[#allocation6 + $0x18] sm:$0xf]
    %v4869 = vld [vmem:[#allocation6 + $0x1c] sm:$0xf]
    %v4870 = vld [vmem:[#allocation6 + $0x20] sm:$0xf]
    %v4871 = vld [vmem:[#allocation6 + $0x24] sm:$0xf]
    %v4872 = vld [vmem:[#allocation6 + $0x28] sm:$0xf]
    %v4873 = vld [vmem:[#allocation6 + $0x2c] sm:$0xf]
    %v4874 = vld [vmem:[#allocation6 + $0x30] sm:$0xf]
    %v4875 = vld [vmem:[#allocation6 + $0x34] sm:$0xf]
    %v4876 = vld [vmem:[#allocation6 + $0x38] sm:$0xf]
    %v4877 = vld [vmem:[#allocation6 + $0x3c] sm:$0xf]
    %v4878 = vld [vmem:[#allocation6 + $0x40] sm:$0xf]
    %v4879 = vld [vmem:[#allocation6 + $0x44] sm:$0xf]
    %v4880 = vld [vmem:[#allocation6 + $0x48] sm:$0xf]
    %v4881 = vld [vmem:[#allocation6 + $0x4c] sm:$0xf]
    %v4882 = vld [vmem:[#allocation6 + $0x50] sm:$0xf]
    %v4883 = vld [vmem:[#allocation6 + $0x54] sm:$0xf]
    %v4884 = vld [vmem:[#allocation6 + $0x58] sm:$0xf]
    %v4885 = vld [vmem:[#allocation6 + $0x5c] sm:$0xf]
    %v4886 = vld [vmem:[#allocation6 + $0x60] sm:$0xf]
    %v4887 = vld [vmem:[#allocation6 + $0x64] sm:$0x1]
    %v4888 = vld [vmem:[%s3 + $0x70] sm:$0xf]
    %v4889 = vld [vmem:[%s3 + $0x74] sm:$0xf]
    %v4890 = vld [vmem:[%s3 + $0x78] sm:$0xf]
    %v4891 = vld [vmem:[%s3 + $0x7c] sm:$0xf]
    %v4916 = vunpack.c.l.b16 %v4864
    %v4917 = vunpack.c.l.b16 %v4865
    %v4918 = vunpack.c.l.b16 %v4866
    %v4919 = vunpack.c.l.b16 %v4867
    %v4920 = vunpack.c.l.b16 %v4868
    %v4921 = vunpack.c.l.b16 %v4869
    %v4922 = vunpack.c.l.b16 %v4870
    %v4923 = vunpack.c.l.b16 %v4871
    %v4924 = vunpack.c.l.b16 %v4872
    %v4925 = vunpack.c.l.b16 %v4873
    %v4926 = vunpack.c.l.b16 %v4874
    %v4927 = vunpack.c.l.b16 %v4875
    %v4928 = vunpack.c.l.b16 %v4876
    %v4929 = vunpack.c.l.b16 %v4877
    %v4930 = vunpack.c.l.b16 %v4878
    %v4931 = vunpack.c.l.b16 %v4879
    %v4932 = vunpack.c.l.b16 %v4880
    %v4933 = vunpack.c.l.b16 %v4881
    %v4934 = vunpack.c.l.b16 %v4882
    %v4935 = vunpack.c.l.b16 %v4883
    %v4936 = vunpack.c.l.b16 %v4884
    %v4937 = vunpack.c.l.b16 %v4885
    %v4938 = vunpack.c.l.b16 %v4886
    %v4939 = vunpack.c.l.b16 %v4887
    %v4940 = vpack.c.b16 %v4917, %v4916
    %v4941 = vpack.c.b16 %v4919, %v4918
    %v4942 = vpack.c.b16 %v4921, %v4920
    %v4943 = vpack.c.b16 %v4923, %v4922
    %v4944 = vpack.c.b16 %v4925, %v4924
    %v4945 = vpack.c.b16 %v4927, %v4926
    %v4946 = vpack.c.b16 %v4929, %v4928
    %v4947 = vpack.c.b16 %v4931, %v4930
    %v4948 = vpack.c.b16 %v4933, %v4932
    %v4949 = vpack.c.b16 %v4935, %v4934
    %v4950 = vpack.c.b16 %v4937, %v4936
    %v4951 = vpack.c.b16 %v4939, %v4938
    %vm4952 = vsmask.f32 5376
    %v4954 = vshrl.u32 %v4940, 16
    %v4956 = vrot.slane %v4954, 2
    %v4957 = vshll.u32 %v4940, 16
    %v4959 = vrot.slane %v4957, 3
    %v4960 = vor.u32 %v4956, %v4959
    %v4962 = vshrl.u32 %v4941, 16
    %v4964 = vrot.slane %v4962, 2
    %v4965 = vshll.u32 %v4941, 16
    %v4967 = vrot.slane %v4965, 3
    %v4968 = vor.u32 %v4964, %v4967
    %v4969 = vsel %vm4952, %v4960, %v4968
    %v4971 = vshrl.u32 %v4942, 16
    %v4973 = vrot.slane %v4971, 2
    %v4974 = vshll.u32 %v4942, 16
    %v4976 = vrot.slane %v4974, 3
    %v4977 = vor.u32 %v4973, %v4976
    %v4978 = vsel %vm4952, %v4968, %v4977
    %v4980 = vshrl.u32 %v4943, 16
    %v4982 = vrot.slane %v4980, 2
    %v4983 = vshll.u32 %v4943, 16
    %v4985 = vrot.slane %v4983, 3
    %v4986 = vor.u32 %v4982, %v4985
    %v4987 = vsel %vm4952, %v4977, %v4986
    %v4989 = vshrl.u32 %v4944, 16
    %v4991 = vrot.slane %v4989, 2
    %v4992 = vshll.u32 %v4944, 16
    %v4994 = vrot.slane %v4992, 3
    %v4995 = vor.u32 %v4991, %v4994
    %v4996 = vsel %vm4952, %v4986, %v4995
    %v4998 = vshrl.u32 %v4945, 16
    %v5000 = vrot.slane %v4998, 2
    %v5001 = vshll.u32 %v4945, 16
    %v5003 = vrot.slane %v5001, 3
    %v5004 = vor.u32 %v5000, %v5003
    %v5005 = vsel %vm4952, %v4995, %v5004
    %v5007 = vshrl.u32 %v4946, 16
    %v5009 = vrot.slane %v5007, 2
    %v5010 = vshll.u32 %v4946, 16
    %v5012 = vrot.slane %v5010, 3
    %v5013 = vor.u32 %v5009, %v5012
    %v5014 = vsel %vm4952, %v5004, %v5013
    %v5016 = vshrl.u32 %v4947, 16
    %v5018 = vrot.slane %v5016, 2
    %v5019 = vshll.u32 %v4947, 16
    %v5021 = vrot.slane %v5019, 3
    %v5022 = vor.u32 %v5018, %v5021
    %v5023 = vsel %vm4952, %v5013, %v5022
    %v5025 = vshrl.u32 %v4948, 16
    %v5027 = vrot.slane %v5025, 2
    %v5028 = vshll.u32 %v4948, 16
    %v5030 = vrot.slane %v5028, 3
    %v5031 = vor.u32 %v5027, %v5030
    %v5032 = vsel %vm4952, %v5022, %v5031
    %v5034 = vshrl.u32 %v4949, 16
    %v5036 = vrot.slane %v5034, 2
    %v5037 = vshll.u32 %v4949, 16
    %v5039 = vrot.slane %v5037, 3
    %v5040 = vor.u32 %v5036, %v5039
    %v5041 = vsel %vm4952, %v5031, %v5040
    %v5043 = vshrl.u32 %v4950, 16
    %v5045 = vrot.slane %v5043, 2
    %v5046 = vshll.u32 %v4950, 16
    %v5048 = vrot.slane %v5046, 3
    %v5049 = vor.u32 %v5045, %v5048
    %v5050 = vsel %vm4952, %v5040, %v5049
    %v5052 = vshrl.u32 %v4951, 16
    %v5054 = vrot.slane %v5052, 2
    %v5055 = vshll.u32 %v4951, 16
    %v5057 = vrot.slane %v5055, 3
    %v5058 = vor.u32 %v5054, %v5057
    %v5059 = vsel %vm4952, %v5049, %v5058
    %v5064 = vunpack.c.l.b16 %v4888
    %v5065 = vunpack.c.l.b16 %v4889
    %v5066 = vunpack.c.l.b16 %v4890
    %v5067 = vunpack.c.l.b16 %v4891
    %v5068 = vpack.c.b16 %v5065, %v5064
    %v5069 = vpack.c.b16 %v5067, %v5066
    %v5073 = vsel %vm1496, %v4969, 0
    %v5076 = vsel %vm1496, %v4978, 0
    %v5079 = vsel %vm1496, %v4987, 0
    %v5082 = vsel %vm1496, %v4996, 0
    %v5085 = vsel %vm1496, %v5005, 0
    %v5088 = vsel %vm1496, %v5014, 0
    %v5091 = vsel %vm1496, %v5023, 0
    %v5094 = vsel %vm1496, %v5032, 0
    %v5097 = vsel %vm1496, %v5041, 0
    %v5100 = vsel %vm1496, %v5050, 0
    %v5103 = vsel %vm1496, %v5059, 0
    %v5106 = vsel %vm1496, %v5058, 0
    %5108 = vmatprep.subr.bf16.mxu0 0
    %5109 = vmatpush1.bf16.msra.mxu0 %v5068
    %5110 = vmatprep.subr.bf16.mxu0 0
    %5111 = vmatpush1.bf16.msra.mxu0 %v5069
    %5112 = vmatprep.subr.bf16.mxu0 0
    %5113 = vmatpush1.bf16.msra.mxu0 0
    %5114 = vmatprep.subr.bf16.mxu0 0
    %5115 = vmatpush1.bf16.msra.mxu0 0
    %5116 = vmatprep.subr.bf16.mxu0 0
    %5117 = vmatpush1.bf16.msra.mxu0 0
    %5118 = vmatprep.subr.bf16.mxu0 0
    %5119 = vmatpush1.bf16.msra.mxu0 0
    %5120 = vmatprep.subr.bf16.mxu0 0
    %5121 = vmatpush1.bf16.msra.mxu0 0
    %5122 = vmatprep.subr.bf16.mxu0 0
    %5123 = vmatpush1.bf16.msra.mxu0 0
    %5124 = vmatprep.subr.bf16.mxu0 0
    %5125 = vmatpush1.bf16.msra.mxu0 0
    %5126 = vmatprep.subr.bf16.mxu0 0
    %5127 = vmatpush1.bf16.msra.mxu0 0
    %5128 = vmatprep.subr.bf16.mxu0 0
    %5129 = vmatpush1.bf16.msra.mxu0 0
    %5130 = vmatprep.subr.bf16.mxu0 0
    %5131 = vmatpush1.bf16.msra.mxu0 0
    %5132 = vmatprep.subr.bf16.mxu0 0
    %5133 = vmatpush1.bf16.msra.mxu0 0
    %5134 = vmatprep.subr.bf16.mxu0 0
    %5135 = vmatpush1.bf16.msra.mxu0 0
    %5136 = vmatprep.subr.bf16.mxu0 0
    %5137 = vmatpush1.bf16.msra.mxu0 0
    %5138 = vmatprep.subr.bf16.mxu0 0
    %5139 = vmatpush1.bf16.msra.mxu0 0
    %5140 = vmatprep.mubr.bf16.mxu0 0
    %5141 = vmatmul.mubr.bf16.gmra.mrb[0].mxu0 %v5073
    %v5142 = vpop.f32.mrb[0].mxu0
    %v5143 = vadd.f32 0.0, %v5142
    %v5144 = vpop.f32.mrb[0].mxu0
    %v5145 = vpop.f32.mrb[0].mxu0
    %v5146 = vadd.f32 0.0, %v5145
    %v5147 = vpop.f32.mrb[0].mxu0
    %5148 = vmatprep.mubr.bf16.mxu0 0
    %5149 = vmatmul.mubr.bf16.gmra.mrb[0].mxu0 %v5076
    %v5150 = vpop.f32.mrb[0].mxu0
    %v5151 = vadd.f32 0.0, %v5150
    %v5152 = vpop.f32.mrb[0].mxu0
    %v5153 = vpop.f32.mrb[0].mxu0
    %v5154 = vadd.f32 0.0, %v5153
    %v5155 = vpop.f32.mrb[0].mxu0
    %5156 = vmatprep.mubr.bf16.mxu0 0
    %5157 = vmatmul.mubr.bf16.gmra.mrb[0].mxu0 %v5079
    %v5158 = vpop.f32.mrb[0].mxu0
    %v5159 = vadd.f32 0.0, %v5158
    %v5160 = vpop.f32.mrb[0].mxu0
    %v5161 = vpop.f32.mrb[0].mxu0
    %v5162 = vadd.f32 0.0, %v5161
    %v5163 = vpop.f32.mrb[0].mxu0
    %5164 = vmatprep.mubr.bf16.mxu0 0
    %5165 = vmatmul.mubr.bf16.gmra.mrb[0].mxu0 %v5082
    %v5166 = vpop.f32.mrb[0].mxu0
    %v5167 = vadd.f32 0.0, %v5166
    %v5168 = vpop.f32.mrb[0].mxu0
    %v5169 = vpop.f32.mrb[0].mxu0
    %v5170 = vadd.f32 0.0, %v5169
    %v5171 = vpop.f32.mrb[0].mxu0
    %5172 = vmatprep.mubr.bf16.mxu0 0
    %5173 = vmatmul.mubr.bf16.gmra.mrb[0].mxu0 %v5085
    %v5174 = vpop.f32.mrb[0].mxu0
    %v5175 = vadd.f32 0.0, %v5174
    %v5176 = vpop.f32.mrb[0].mxu0
    %v5177 = vpop.f32.mrb[0].mxu0
    %v5178 = vadd.f32 0.0, %v5177
    %v5179 = vpop.f32.mrb[0].mxu0
    %5180 = vmatprep.mubr.bf16.mxu0 0
    %5181 = vmatmul.mubr.bf16.gmra.mrb[0].mxu0 %v5088
    %v5182 = vpop.f32.mrb[0].mxu0
    %v5183 = vadd.f32 0.0, %v5182
    %v5184 = vpop.f32.mrb[0].mxu0
    %v5185 = vpop.f32.mrb[0].mxu0
    %v5186 = vadd.f32 0.0, %v5185
    %v5187 = vpop.f32.mrb[0].mxu0
    %5188 = vmatprep.mubr.bf16.mxu0 0
    %5189 = vmatmul.mubr.bf16.gmra.mrb[0].mxu0 %v5091
    %v5190 = vpop.f32.mrb[0].mxu0
    %v5191 = vadd.f32 0.0, %v5190
    %v5192 = vpop.f32.mrb[0].mxu0
    %v5193 = vpop.f32.mrb[0].mxu0
    %v5194 = vadd.f32 0.0, %v5193
    %v5195 = vpop.f32.mrb[0].mxu0
    %5196 = vmatprep.mubr.bf16.mxu0 0
    %5197 = vmatmul.mubr.bf16.gmra.mrb[0].mxu0 %v5094
    %v5198 = vpop.f32.mrb[0].mxu0
    %v5199 = vadd.f32 0.0, %v5198
    %v5200 = vpop.f32.mrb[0].mxu0
    %v5201 = vpop.f32.mrb[0].mxu0
    %v5202 = vadd.f32 0.0, %v5201
    %v5203 = vpop.f32.mrb[0].mxu0
    %5204 = vmatprep.mubr.bf16.mxu0 0
    %5205 = vmatmul.mubr.bf16.gmra.mrb[0].mxu0 %v5097
    %v5206 = vpop.f32.mrb[0].mxu0
    %v5207 = vadd.f32 0.0, %v5206
    %v5208 = vpop.f32.mrb[0].mxu0
    %v5209 = vpop.f32.mrb[0].mxu0
    %v5210 = vadd.f32 0.0, %v5209
    %v5211 = vpop.f32.mrb[0].mxu0
    %5212 = vmatprep.mubr.bf16.mxu0 0
    %5213 = vmatmul.mubr.bf16.gmra.mrb[0].mxu0 %v5100
    %v5214 = vpop.f32.mrb[0].mxu0
    %v5215 = vadd.f32 0.0, %v5214
    %v5216 = vpop.f32.mrb[0].mxu0
    %v5217 = vpop.f32.mrb[0].mxu0
    %v5218 = vadd.f32 0.0, %v5217
    %v5219 = vpop.f32.mrb[0].mxu0
    %5220 = vmatprep.mubr.bf16.mxu0 0
    %5221 = vmatmul.mubr.bf16.gmra.mrb[0].mxu0 %v5103
    %v5222 = vpop.f32.mrb[0].mxu0
    %v5223 = vadd.f32 0.0, %v5222
    %v5224 = vpop.f32.mrb[0].mxu0
    %v5225 = vpop.f32.mrb[0].mxu0
    %v5226 = vadd.f32 0.0, %v5225
    %v5227 = vpop.f32.mrb[0].mxu0
    %5228 = vmatprep.mubr.bf16.mxu0 0
    %5229 = vmatmul.mubr.bf16.gmra.mrb[0].mxu0 %v5106
    %v5230 = vpop.f32.mrb[0].mxu0
    %v5231 = vadd.f32 0.0, %v5230
    %v5232 = vpop.f32.mrb[0].mxu0
    %v5233 = vpop.f32.mrb[0].mxu0
    %v5234 = vpop.f32.mrb[0].mxu0
    %5235 = vdwg.mxu0
    %v5236 = vadd.f32 %v4841, %v5143
    %v5237 = vadd.f32 %v4842, %v5146
    %v5238 = vadd.f32 %v4843, %v5151
    %v5239 = vadd.f32 %v4844, %v5154
    %v5240 = vadd.f32 %v4845, %v5159
    %v5241 = vadd.f32 %v4846, %v5162
    %v5242 = vadd.f32 %v4847, %v5167
    %v5243 = vadd.f32 %v4848, %v5170
    %v5244 = vadd.f32 %v4849, %v5175
    %v5245 = vadd.f32 %v4850, %v5178
    %v5246 = vadd.f32 %v4851, %v5183
    %v5247 = vadd.f32 %v4852, %v5186
    %v5248 = vadd.f32 %v4853, %v5191
    %v5249 = vadd.f32 %v4854, %v5194
    %v5250 = vadd.f32 %v4855, %v5199
    %v5251 = vadd.f32 %v4856, %v5202
    %v5252 = vadd.f32 %v4857, %v5207
    %v5253 = vadd.f32 %v4858, %v5210
    %v5254 = vadd.f32 %v4859, %v5215
    %v5255 = vadd.f32 %v4860, %v5218
    %v5256 = vadd.f32 %v4861, %v5223
    %v5257 = vadd.f32 %v4862, %v5226
    %v5258 = vadd.f32 %v4863, %v5231
    %v5259 = vld [vmem:[#allocation6 + $0x8] sm:$0x8]
    %v5260 = vld [vmem:[%s3 + $0x80] sm:$0xf]
    %v5261 = vld [vmem:[%s3 + $0x84] sm:$0xf]
    %v5262 = vld [vmem:[%s3 + $0x88] sm:$0xf]
    %v5263 = vld [vmem:[%s3 + $0x8c] sm:$0xf]
    %v5265 = vunpack.c.l.b16 %v5259
    %v5266 = vpack.c.b16 %v4917, %v5265
    %vm5267 = vcmask 1044480
    %v5268 = vrot.slane %v5266, 3
    %v5269 = vrot.slane %v4941, 3
    %v5270 = vsel %vm5267, %v5268, %v5269
    %v5271 = vrot.slane %v4942, 3
    %v5272 = vsel %vm5267, %v5269, %v5271
    %v5273 = vrot.slane %v4943, 3
    %v5274 = vsel %vm5267, %v5271, %v5273
    %v5275 = vrot.slane %v4944, 3
    %v5276 = vsel %vm5267, %v5273, %v5275
    %v5277 = vrot.slane %v4945, 3
    %v5278 = vsel %vm5267, %v5275, %v5277
    %v5279 = vrot.slane %v4946, 3
    %v5280 = vsel %vm5267, %v5277, %v5279
    %v5281 = vrot.slane %v4947, 3
    %v5282 = vsel %vm5267, %v5279, %v5281
    %v5283 = vrot.slane %v4948, 3
    %v5284 = vsel %vm5267, %v5281, %v5283
    %v5285 = vrot.slane %v4949, 3
    %v5286 = vsel %vm5267, %v5283, %v5285
    %v5287 = vrot.slane %v4950, 3
    %v5288 = vsel %vm5267, %v5285, %v5287
    %v5289 = vrot.slane %v4951, 3
    %v5290 = vsel %vm5267, %v5287, %v5289
    %v5295 = vunpack.c.l.b16 %v5260
    %v5296 = vunpack.c.l.b16 %v5261
    %v5297 = vunpack.c.l.b16 %v5262
    %v5298 = vunpack.c.l.b16 %v5263
    %v5299 = vpack.c.b16 %v5296, %v5295
    %v5300 = vpack.c.b16 %v5298, %v5297
    %v5304 = vsel %vm1496, %v5270, 0
    %v5307 = vsel %vm1496, %v5272, 0
    %v5310 = vsel %vm1496, %v5274, 0
    %v5313 = vsel %vm1496, %v5276, 0
    %v5316 = vsel %vm1496, %v5278, 0
    %v5319 = vsel %vm1496, %v5280, 0
    %v5322 = vsel %vm1496, %v5282, 0
    %v5325 = vsel %vm1496, %v5284, 0
    %v5328 = vsel %vm1496, %v5286, 0
    %v5331 = vsel %vm1496, %v5288, 0
    %v5334 = vsel %vm1496, %v5290, 0
    %v5337 = vsel %vm1496, %v5289, 0
    %5339 = vmatprep.subr.bf16.mxu0 0
    %5340 = vmatpush1.bf16.msra.mxu0 %v5299
    %5341 = vmatprep.subr.bf16.mxu0 0
    %5342 = vmatpush1.bf16.msra.mxu0 %v5300
    %5343 = vmatprep.subr.bf16.mxu0 0
    %5344 = vmatpush1.bf16.msra.mxu0 0
    %5345 = vmatprep.subr.bf16.mxu0 0
    %5346 = vmatpush1.bf16.msra.mxu0 0
    %5347 = vmatprep.subr.bf16.mxu0 0
    %5348 = vmatpush1.bf16.msra.mxu0 0
    %5349 = vmatprep.subr.bf16.mxu0 0
    %5350 = vmatpush1.bf16.msra.mxu0 0
    %5351 = vmatprep.subr.bf16.mxu0 0
    %5352 = vmatpush1.bf16.msra.mxu0 0
    %5353 = vmatprep.subr.bf16.mxu0 0
    %5354 = vmatpush1.bf16.msra.mxu0 0
    %5355 = vmatprep.subr.bf16.mxu0 0
    %5356 = vmatpush1.bf16.msra.mxu0 0
    %5357 = vmatprep.subr.bf16.mxu0 0
    %5358 = vmatpush1.bf16.msra.mxu0 0
    %5359 = vmatprep.subr.bf16.mxu0 0
    %5360 = vmatpush1.bf16.msra.mxu0 0
    %5361 = vmatprep.subr.bf16.mxu0 0
    %5362 = vmatpush1.bf16.msra.mxu0 0
    %5363 = vmatprep.subr.bf16.mxu0 0
    %5364 = vmatpush1.bf16.msra.mxu0 0
    %5365 = vmatprep.subr.bf16.mxu0 0
    %5366 = vmatpush1.bf16.msra.mxu0 0
    %5367 = vmatprep.subr.bf16.mxu0 0
    %5368 = vmatpush1.bf16.msra.mxu0 0
    %5369 = vmatprep.subr.bf16.mxu0 0
    %5370 = vmatpush1.bf16.msra.mxu0 0
    %5371 = vmatprep.mubr.bf16.mxu0 0
    %5372 = vmatmul.mubr.bf16.gmra.mrb[0].mxu0 %v5304
    %v5373 = vpop.f32.mrb[0].mxu0
    %v5374 = vadd.f32 0.0, %v5373
    %v5375 = vpop.f32.mrb[0].mxu0
    %v5376 = vpop.f32.mrb[0].mxu0
    %v5377 = vadd.f32 0.0, %v5376
    %v5378 = vpop.f32.mrb[0].mxu0
    %5379 = vmatprep.mubr.bf16.mxu0 0
    %5380 = vmatmul.mubr.bf16.gmra.mrb[0].mxu0 %v5307
    %v5381 = vpop.f32.mrb[0].mxu0
    %v5382 = vadd.f32 0.0, %v5381
    %v5383 = vpop.f32.mrb[0].mxu0
    %v5384 = vpop.f32.mrb[0].mxu0
    %v5385 = vadd.f32 0.0, %v5384
    %v5386 = vpop.f32.mrb[0].mxu0
    %5387 = vmatprep.mubr.bf16.mxu0 0
    %5388 = vmatmul.mubr.bf16.gmra.mrb[0].mxu0 %v5310
    %v5389 = vpop.f32.mrb[0].mxu0
    %v5390 = vadd.f32 0.0, %v5389
    %v5391 = vpop.f32.mrb[0].mxu0
    %v5392 = vpop.f32.mrb[0].mxu0
    %v5393 = vadd.f32 0.0, %v5392
    %v5394 = vpop.f32.mrb[0].mxu0
    %5395 = vmatprep.mubr.bf16.mxu0 0
    %5396 = vmatmul.mubr.bf16.gmra.mrb[0].mxu0 %v5313
    %v5397 = vpop.f32.mrb[0].mxu0
    %v5398 = vadd.f32 0.0, %v5397
    %v5399 = vpop.f32.mrb[0].mxu0
    %v5400 = vpop.f32.mrb[0].mxu0
    %v5401 = vadd.f32 0.0, %v5400
    %v5402 = vpop.f32.mrb[0].mxu0
    %5403 = vmatprep.mubr.bf16.mxu0 0
    %5404 = vmatmul.mubr.bf16.gmra.mrb[0].mxu0 %v5316
    %v5405 = vpop.f32.mrb[0].mxu0
    %v5406 = vadd.f32 0.0, %v5405
    %v5407 = vpop.f32.mrb[0].mxu0
    %v5408 = vpop.f32.mrb[0].mxu0
    %v5409 = vadd.f32 0.0, %v5408
    %v5410 = vpop.f32.mrb[0].mxu0
    %5411 = vmatprep.mubr.bf16.mxu0 0
    %5412 = vmatmul.mubr.bf16.gmra.mrb[0].mxu0 %v5319
    %v5413 = vpop.f32.mrb[0].mxu0
    %v5414 = vadd.f32 0.0, %v5413
    %v5415 = vpop.f32.mrb[0].mxu0
    %v5416 = vpop.f32.mrb[0].mxu0
    %v5417 = vadd.f32 0.0, %v5416
    %v5418 = vpop.f32.mrb[0].mxu0
    %5419 = vmatprep.mubr.bf16.mxu0 0
    %5420 = vmatmul.mubr.bf16.gmra.mrb[0].mxu0 %v5322
    %v5421 = vpop.f32.mrb[0].mxu0
    %v5422 = vadd.f32 0.0, %v5421
    %v5423 = vpop.f32.mrb[0].mxu0
    %v5424 = vpop.f32.mrb[0].mxu0
    %v5425 = vadd.f32 0.0, %v5424
    %v5426 = vpop.f32.mrb[0].mxu0
    %5427 = vmatprep.mubr.bf16.mxu0 0
    %5428 = vmatmul.mubr.bf16.gmra.mrb[0].mxu0 %v5325
    %v5429 = vpop.f32.mrb[0].mxu0
    %v5430 = vadd.f32 0.0, %v5429
    %v5431 = vpop.f32.mrb[0].mxu0
    %v5432 = vpop.f32.mrb[0].mxu0
    %v5433 = vadd.f32 0.0, %v5432
    %v5434 = vpop.f32.mrb[0].mxu0
    %5435 = vmatprep.mubr.bf16.mxu0 0
    %5436 = vmatmul.mubr.bf16.gmra.mrb[0].mxu0 %v5328
    %v5437 = vpop.f32.mrb[0].mxu0
    %v5438 = vadd.f32 0.0, %v5437
    %v5439 = vpop.f32.mrb[0].mxu0
    %v5440 = vpop.f32.mrb[0].mxu0
    %v5441 = vadd.f32 0.0, %v5440
    %v5442 = vpop.f32.mrb[0].mxu0
    %5443 = vmatprep.mubr.bf16.mxu0 0
    %5444 = vmatmul.mubr.bf16.gmra.mrb[0].mxu0 %v5331
    %v5445 = vpop.f32.mrb[0].mxu0
    %v5446 = vadd.f32 0.0, %v5445
    %v5447 = vpop.f32.mrb[0].mxu0
    %v5448 = vpop.f32.mrb[0].mxu0
    %v5449 = vadd.f32 0.0, %v5448
    %v5450 = vpop.f32.mrb[0].mxu0
    %5451 = vmatprep.mubr.bf16.mxu0 0
    %5452 = vmatmul.mubr.bf16.gmra.mrb[0].mxu0 %v5334
    %v5453 = vpop.f32.mrb[0].mxu0
    %v5454 = vadd.f32 0.0, %v5453
    %v5455 = vpop.f32.mrb[0].mxu0
    %v5456 = vpop.f32.mrb[0].mxu0
    %v5457 = vadd.f32 0.0, %v5456
    %v5458 = vpop.f32.mrb[0].mxu0
    %5459 = vmatprep.mubr.bf16.mxu0 0
    %5460 = vmatmul.mubr.bf16.gmra.mrb[0].mxu0 %v5337
    %v5461 = vpop.f32.mrb[0].mxu0
    %v5462 = vadd.f32 0.0, %v5461
    %v5463 = vpop.f32.mrb[0].mxu0
    %v5464 = vpop.f32.mrb[0].mxu0
    %v5465 = vpop.f32.mrb[0].mxu0
    %5466 = vdwg.mxu0
    %v5467 = vadd.f32 %v5236, %v5374
    %v5468 = vadd.f32 %v5237, %v5377
    %v5469 = vadd.f32 %v5238, %v5382
    %v5470 = vadd.f32 %v5239, %v5385
    %v5471 = vadd.f32 %v5240, %v5390
    %v5472 = vadd.f32 %v5241, %v5393
    %v5473 = vadd.f32 %v5242, %v5398
    %v5474 = vadd.f32 %v5243, %v5401
    %v5475 = vadd.f32 %v5244, %v5406
    %v5476 = vadd.f32 %v5245, %v5409
    %v5477 = vadd.f32 %v5246, %v5414
    %v5478 = vadd.f32 %v5247, %v5417
    %v5479 = vadd.f32 %v5248, %v5422
    %v5480 = vadd.f32 %v5249, %v5425
    %v5481 = vadd.f32 %v5250, %v5430
    %v5482 = vadd.f32 %v5251, %v5433
    %v5483 = vadd.f32 %v5252, %v5438
    %v5484 = vadd.f32 %v5253, %v5441
    %v5485 = vadd.f32 %v5254, %v5446
    %v5486 = vadd.f32 %v5255, %v5449
    %v5487 = vadd.f32 %v5256, %v5454
    %v5488 = vadd.f32 %v5257, %v5457
    %v5489 = vadd.f32 %v5258, %v5462
    %v5490 = vld [vmem:[%s4] sm:$0x1]
    %v5492 = vlaneseq
    %v5493 = vshrl.u32 %v5492, 7
    %v5494 = vsub.s32 0, %v5493
    %v5495 = vrot.slane %v5490, %v5494
    %v5497 = vadd.f32 %v5467, %v5495
    %v5498 = vadd.f32 %v5468, %v5495
    %v5499 = vadd.f32 %v5469, %v5495
    %v5500 = vadd.f32 %v5470, %v5495
    %v5501 = vadd.f32 %v5471, %v5495
    %v5502 = vadd.f32 %v5472, %v5495
    %v5503 = vadd.f32 %v5473, %v5495
    %v5504 = vadd.f32 %v5474, %v5495
    %v5505 = vadd.f32 %v5475, %v5495
    %v5506 = vadd.f32 %v5476, %v5495
    %v5507 = vadd.f32 %v5477, %v5495
    %v5508 = vadd.f32 %v5478, %v5495
    %v5509 = vadd.f32 %v5479, %v5495
    %v5510 = vadd.f32 %v5480, %v5495
    %v5511 = vadd.f32 %v5481, %v5495
    %v5512 = vadd.f32 %v5482, %v5495
    %v5513 = vadd.f32 %v5483, %v5495
    %v5514 = vadd.f32 %v5484, %v5495
    %v5515 = vadd.f32 %v5485, %v5495
    %v5516 = vadd.f32 %v5486, %v5495
    %v5517 = vadd.f32 %v5487, %v5495
    %v5518 = vadd.f32 %v5488, %v5495
    %v5519 = vadd.f32 %v5489, %v5495
    %v5520 = vmax.f32 %v5497, 0.0
    %v5521 = vmax.f32 %v5498, 0.0
    %v5522 = vmax.f32 %v5499, 0.0
    %v5523 = vmax.f32 %v5500, 0.0
    %v5524 = vmax.f32 %v5501, 0.0
    %v5525 = vmax.f32 %v5502, 0.0
    %v5526 = vmax.f32 %v5503, 0.0
    %v5527 = vmax.f32 %v5504, 0.0
    %v5528 = vmax.f32 %v5505, 0.0
    %v5529 = vmax.f32 %v5506, 0.0
    %v5530 = vmax.f32 %v5507, 0.0
    %v5531 = vmax.f32 %v5508, 0.0
    %v5532 = vmax.f32 %v5509, 0.0
    %v5533 = vmax.f32 %v5510, 0.0
    %v5534 = vmax.f32 %v5511, 0.0
    %v5535 = vmax.f32 %v5512, 0.0
    %v5536 = vmax.f32 %v5513, 0.0
    %v5537 = vmax.f32 %v5514, 0.0
    %v5538 = vmax.f32 %v5515, 0.0
    %v5539 = vmax.f32 %v5516, 0.0
    %v5540 = vmax.f32 %v5517, 0.0
    %v5541 = vmax.f32 %v5518, 0.0
    %v5542 = vmax.f32 %v5519, 0.0
    %vm5543 = vcmask 523264
    %5544 = vst.msk [vmem:[#allocation3] sm:$0xff] %vm5543, %v5520
    %5545 = vst.msk [vmem:[#allocation3 + $0x8] sm:$0xff] %vm5543, %v5521
    %5546 = vst.msk [vmem:[#allocation3 + $0x10] sm:$0xff] %vm5543, %v5522
    %5547 = vst.msk [vmem:[#allocation3 + $0x18] sm:$0xff] %vm5543, %v5523
    %5548 = vst.msk [vmem:[#allocation3 + $0x20] sm:$0xff] %vm5543, %v5524
    %5549 = vst.msk [vmem:[#allocation3 + $0x28] sm:$0xff] %vm5543, %v5525
    %5550 = vst.msk [vmem:[#allocation3 + $0x30] sm:$0xff] %vm5543, %v5526
    %5551 = vst.msk [vmem:[#allocation3 + $0x38] sm:$0xff] %vm5543, %v5527
    %5552 = vst.msk [vmem:[#allocation3 + $0x40] sm:$0xff] %vm5543, %v5528
    %5553 = vst.msk [vmem:[#allocation3 + $0x48] sm:$0xff] %vm5543, %v5529
    %5554 = vst.msk [vmem:[#allocation3 + $0x50] sm:$0xff] %vm5543, %v5530
    %5555 = vst.msk [vmem:[#allocation3 + $0x58] sm:$0xff] %vm5543, %v5531
    %5556 = vst.msk [vmem:[#allocation3 + $0x60] sm:$0xff] %vm5543, %v5532
    %5557 = vst.msk [vmem:[#allocation3 + $0x68] sm:$0xff] %vm5543, %v5533
    %5558 = vst.msk [vmem:[#allocation3 + $0x70] sm:$0xff] %vm5543, %v5534
    %5559 = vst.msk [vmem:[#allocation3 + $0x78] sm:$0xff] %vm5543, %v5535
    %5560 = vst.msk [vmem:[#allocation3 + $0x80] sm:$0xff] %vm5543, %v5536
    %5561 = vst.msk [vmem:[#allocation3 + $0x88] sm:$0xff] %vm5543, %v5537
    %5562 = vst.msk [vmem:[#allocation3 + $0x90] sm:$0xff] %vm5543, %v5538
    %5563 = vst.msk [vmem:[#allocation3 + $0x98] sm:$0xff] %vm5543, %v5539
    %5564 = vst.msk [vmem:[#allocation3 + $0xa0] sm:$0xff] %vm5543, %v5540
    %5565 = vst.msk [vmem:[#allocation3 + $0xa8] sm:$0xff] %vm5543, %v5541
    %5566 = vst.msk [vmem:[#allocation3 + $0xb0] sm:$0xf] %vm1268, %v5542
    %v5567 = vld [vmem:[#allocation3] sm:$0xff]
    %v5568 = vld [vmem:[#allocation3 + $0xa] sm:$0xff]
    %v5569 = vmax.f32 %v5567, %v5568
    %5570 = vst.msk [vmem:[#allocation3] sm:$0xff] %vm5543, %v5569
    %v5571 = vld [vmem:[#allocation3] ss:$2 sm:$0xf]
    %s5572 = scalar_lea.vmem [#allocation3], 1
    %v5573 = vld [vmem:[%s5572] ss:$2 sm:$0xf]
    %v5574 = vmax.f32 %v5571, %v5573
    %v5575 = vpack.c.bf16 %v5574, %v5574
    %v5577 = vunpack.c.l.b16 %v5575
    %v5578 = vpack.c.b16 %v5577, %v5577
    %v5580 = vshll.u32 %v5578, 16
    %v5582 = vrot.slane %v5580, 5
    %v5583 = vshrl.u32 %v5578, 16
    %v5585 = vrot.slane %v5583, 4
    %v5586 = vor.u32 %v5585, %v5582
    %v5587 = vrot.slane %v5586, 4
    %vm5590 = vcmask 519171
    %vm5591 = vmand %vm5590, %vm2489
    %v5592 = vld [vmem:[#allocation7] sm:$0x8]
    %v5593 = vsel %vm5591, %v5582, %v5592
    %5594 = vst [vmem:[#allocation7] sm:$0x8] %v5593
    %vm5595 = vcmask 517120
    %vm5596 = vmand %vm5595, %vm2415
    %v5597 = vld [vmem:[#allocation7 + $0x4] sm:$0x3]
    %v5598 = vsel %vm5596, %v5587, %v5597
    %5599 = vst [vmem:[#allocation7 + $0x4] sm:$0x3] %v5598
    %v5600 = vld [vmem:[#allocation3 + $0x14] sm:$0xff]
    %v5601 = vld [vmem:[#allocation3 + $0x1e] sm:$0xff]
    %v5602 = vmax.f32 %v5600, %v5601
    %5603 = vst.msk [vmem:[#allocation3 + $0x14] sm:$0xff] %vm5543, %v5602
    %s5604 = scalar_lea.vmem [#allocation3], 20
    %v5605 = vld [vmem:[%s5604] ss:$2 sm:$0xf]
    %s5606 = scalar_lea.vmem [#allocation3], 21
    %v5607 = vld [vmem:[%s5606] ss:$2 sm:$0xf]
    %v5608 = vmax.f32 %v5605, %v5607
    %v5609 = vpack.c.bf16 %v5608, %v5608
    %v5611 = vunpack.c.l.b16 %v5609
    %v5612 = vpack.c.b16 %v5611, %v5611
    %v5614 = vshrl.u32 %v5612, 16
    %v5616 = vrot.slane %v5614, 5
    %v5617 = vshll.u32 %v5612, 16
    %v5619 = vrot.slane %v5617, 6
    %v5620 = vor.u32 %v5616, %v5619
    %v5621 = vrot.slane %v5616, 4
    %vm5624 = vcmask 519170
    %vm5625 = vmand %vm5624, %vm2449
    %v5626 = vld [vmem:[#allocation7 + $0x4] sm:$0xc]
    %v5627 = vsel %vm5625, %v5620, %v5626
    %5628 = vst [vmem:[#allocation7 + $0x4] sm:$0xc] %v5627
    %vm5629 = vcmask 516096
    %vm5630 = vmand %vm5629, %vm2533
    %v5631 = vld [vmem:[#allocation7 + $0x8] sm:$0x1]
    %v5632 = vsel %vm5630, %v5621, %v5631
    %5633 = vst [vmem:[#allocation7 + $0x8] sm:$0x1] %v5632
    %v5634 = vld [vmem:[#allocation3 + $0x28] sm:$0xff]
    %v5635 = vld [vmem:[#allocation3 + $0x32] sm:$0xff]
    %v5636 = vmax.f32 %v5634, %v5635
    %5637 = vst.msk [vmem:[#allocation3 + $0x28] sm:$0xff] %vm5543, %v5636
    %s5638 = scalar_lea.vmem [#allocation3], 40
    %v5639 = vld [vmem:[%s5638] ss:$2 sm:$0xf]
    %s5640 = scalar_lea.vmem [#allocation3], 41
    %v5641 = vld [vmem:[%s5640] ss:$2 sm:$0xf]
    %v5642 = vmax.f32 %v5639, %v5641
    %v5643 = vpack.c.bf16 %v5642, %v5642
    %v5645 = vunpack.c.l.b16 %v5643
    %v5646 = vpack.c.b16 %v5645, %v5645
    %v5648 = vshrl.u32 %v5646, 16
    %v5650 = vrot.slane %v5648, 6
    %v5651 = vshll.u32 %v5646, 16
    %v5653 = vrot.slane %v5651, 7
    %v5654 = vor.u32 %v5650, %v5653
    %vm5656 = vcmask 519169
    %vm5657 = vsmask.f32 3334
    %vm5658 = vmand %vm5656, %vm5657
    %v5659 = vld [vmem:[#allocation7 + $0x8] sm:$0xe]
    %v5660 = vsel %vm5658, %v5654, %v5659
    %5661 = vst [vmem:[#allocation7 + $0x8] sm:$0xe] %v5660
    %v5662 = vld [vmem:[#allocation3 + $0x3c] sm:$0xff]
    %v5663 = vld [vmem:[#allocation3 + $0x46] sm:$0xff]
    %v5664 = vmax.f32 %v5662, %v5663
    %5665 = vst.msk [vmem:[#allocation3 + $0x3c] sm:$0xff] %vm5543, %v5664
    %s5666 = scalar_lea.vmem [#allocation3], 60
    %v5667 = vld [vmem:[%s5666] ss:$2 sm:$0xf]
    %s5668 = scalar_lea.vmem [#allocation3], 61
    %v5669 = vld [vmem:[%s5668] ss:$2 sm:$0xf]
    %v5670 = vmax.f32 %v5667, %v5669
    %v5671 = vpack.c.bf16 %v5670, %v5670
    %v5673 = vunpack.c.l.b16 %v5671
    %v5674 = vpack.c.b16 %v5673, %v5673
    %v5676 = vshrl.u32 %v5674, 16
    %v5678 = vrot.slane %v5676, 7
    %v5679 = vshll.u32 %v5674, 16
    %v5681 = vor.u32 %v5678, %v5679
    %vm5683 = vcmask 518144
    %vm5684 = vsmask.f32 2306
    %vm5685 = vmand %vm5683, %vm5684
    %v5686 = vld [vmem:[#allocation7 + $0xc] sm:$0x7]
    %v5687 = vsel %vm5685, %v5681, %v5686
    %5688 = vst [vmem:[#allocation7 + $0xc] sm:$0x7] %v5687
    %v5689 = vld [vmem:[#allocation3 + $0x64] sm:$0xff]
    %v5690 = vld [vmem:[#allocation3 + $0x6e] sm:$0xff]
    %v5691 = vmax.f32 %v5689, %v5690
    %5692 = vst.msk [vmem:[#allocation3 + $0x64] sm:$0xff] %vm5543, %v5691
    %s5693 = scalar_lea.vmem [#allocation3], 100
    %v5694 = vld [vmem:[%s5693] ss:$2 sm:$0xf]
    %s5695 = scalar_lea.vmem [#allocation3], 101
    %v5696 = vld [vmem:[%s5695] ss:$2 sm:$0xf]
    %v5697 = vmax.f32 %v5694, %v5696
    %v5698 = vpack.c.bf16 %v5697, %v5697
    %v5700 = vunpack.c.l.b16 %v5698
    %v5701 = vpack.c.b16 %v5700, %v5700
    %v5703 = vshrl.u32 %v5701, 16
    %v5705 = vrot.slane %v5703, 6
    %v5706 = vshll.u32 %v5701, 16
    %v5708 = vrot.slane %v5706, 7
    %v5709 = vor.u32 %v5705, %v5708
    %v5711 = vld [vmem:[#allocation7 + $0x14] sm:$0xe]
    %v5712 = vsel %vm5658, %v5709, %v5711
    %5713 = vst [vmem:[#allocation7 + $0x14] sm:$0xe] %v5712
    %v5714 = vld [vmem:[#allocation3 + $0x78] sm:$0xff]
    %v5715 = vld [vmem:[#allocation3 + $0x82] sm:$0xff]
    %v5716 = vmax.f32 %v5714, %v5715
    %5717 = vst.msk [vmem:[#allocation3 + $0x78] sm:$0xff] %vm5543, %v5716
    %s5718 = scalar_lea.vmem [#allocation3], 120
    %v5719 = vld [vmem:[%s5718] ss:$2 sm:$0xf]
    %s5720 = scalar_lea.vmem [#allocation3], 121
    %v5721 = vld [vmem:[%s5720] ss:$2 sm:$0xf]
    %v5722 = vmax.f32 %v5719, %v5721
    %v5723 = vpack.c.bf16 %v5722, %v5722
    %v5725 = vunpack.c.l.b16 %v5723
    %v5726 = vpack.c.b16 %v5725, %v5725
    %v5728 = vshrl.u32 %v5726, 16
    %v5730 = vrot.slane %v5728, 7
    %v5731 = vshll.u32 %v5726, 16
    %v5733 = vor.u32 %v5730, %v5731
    %v5735 = vld [vmem:[#allocation7 + $0x18] sm:$0x7]
    %v5736 = vsel %vm5685, %v5733, %v5735
    %5737 = vst [vmem:[#allocation7 + $0x18] sm:$0x7] %v5736
    %v5738 = vld [vmem:[#allocation3 + $0x8c] sm:$0xff]
    %v5739 = vld [vmem:[#allocation3 + $0x96] sm:$0xff]
    %v5740 = vmax.f32 %v5738, %v5739
    %5741 = vst.msk [vmem:[#allocation3 + $0x8c] sm:$0xff] %vm5543, %v5740
    %s5742 = scalar_lea.vmem [#allocation3], 140
    %v5743 = vld [vmem:[%s5742] ss:$2 sm:$0xf]
    %s5744 = scalar_lea.vmem [#allocation3], 141
    %v5745 = vld [vmem:[%s5744] ss:$2 sm:$0xf]
    %v5746 = vmax.f32 %v5743, %v5745
    %v5747 = vpack.c.bf16 %v5746, %v5746
    %v5749 = vunpack.c.l.b16 %v5747
    %v5750 = vpack.c.b16 %v5749, %v5749
    %v5752 = vshll.u32 %v5750, 16
    %v5754 = vrot.slane %v5752, 5
    %v5755 = vshrl.u32 %v5750, 16
    %v5757 = vrot.slane %v5755, 4
    %v5758 = vor.u32 %v5757, %v5754
    %v5759 = vrot.slane %v5758, 4
    %v5762 = vld [vmem:[#allocation7 + $0x18] sm:$0x8]
    %v5763 = vsel %vm5591, %v5754, %v5762
    %5764 = vst [vmem:[#allocation7 + $0x18] sm:$0x8] %v5763
    %v5765 = vld [vmem:[#allocation7 + $0x1c] sm:$0x3]
    %v5766 = vsel %vm5596, %v5759, %v5765
    %5767 = vst [vmem:[#allocation7 + $0x1c] sm:$0x3] %v5766
    %v5768 = vld [vmem:[#allocation3 + $0xa0] sm:$0xff]
    %v5769 = vld [vmem:[#allocation3 + $0xaa] sm:$0xff]
    %v5770 = vmax.f32 %v5768, %v5769
    %5771 = vst.msk [vmem:[#allocation3 + $0xa0] sm:$0xff] %vm5543, %v5770
    %s5772 = scalar_lea.vmem [#allocation3], 160
    %v5773 = vld [vmem:[%s5772] ss:$2 sm:$0xf]
    %s5774 = scalar_lea.vmem [#allocation3], 161
    %v5775 = vld [vmem:[%s5774] ss:$2 sm:$0xf]
    %v5776 = vmax.f32 %v5773, %v5775
    %v5777 = vpack.c.bf16 %v5776, %v5776
    %v5779 = vunpack.c.l.b16 %v5777
    %v5780 = vpack.c.b16 %v5779, %v5779
    %v5782 = vshrl.u32 %v5780, 16
    %v5784 = vrot.slane %v5782, 5
    %v5785 = vshll.u32 %v5780, 16
    %v5787 = vrot.slane %v5785, 6
    %v5788 = vor.u32 %v5784, %v5787
    %v5789 = vrot.slane %v5784, 4
    %v5792 = vld [vmem:[#allocation7 + $0x1c] sm:$0xc]
    %v5793 = vsel %vm5625, %v5788, %v5792
    %5794 = vst [vmem:[#allocation7 + $0x1c] sm:$0xc] %v5793
    %v5795 = vld [vmem:[#allocation7 + $0x20] sm:$0x1]
    %v5796 = vsel %vm5630, %v5789, %v5795
    %5797 = vst [vmem:[#allocation7 + $0x20] sm:$0x1] %v5796
    %v5798 = vld [vmem:[#allocation7] sm:$0xf]
    %v5799 = vld [vmem:[#allocation7 + $0x4] sm:$0xf]
    %v5800 = vld [vmem:[#allocation7 + $0x8] sm:$0xf]
    %v5801 = vld [vmem:[#allocation7 + $0xc] sm:$0xf]
    %v5802 = vld [vmem:[#allocation7 + $0x10] sm:$0xf]
    %v5803 = vld [vmem:[#allocation7 + $0x14] sm:$0xf]
    %v5804 = vld [vmem:[#allocation7 + $0x18] sm:$0xf]
    %v5805 = vld [vmem:[#allocation7 + $0x1c] sm:$0x3]
    %v5806 = vld [vmem:[%s5] sm:$0xf]
    %v5807 = vld [vmem:[%s5 + $0x4] sm:$0xf]
    %v5808 = vld [vmem:[%s5 + $0x8] sm:$0xf]
    %v5809 = vld [vmem:[%s5 + $0xc] sm:$0xf]
    %v5810 = vld [vmem:[%s5 + $0x10] sm:$0xf]
    %v5811 = vld [vmem:[%s5 + $0x14] sm:$0xf]
    %v5812 = vld [vmem:[%s5 + $0x18] sm:$0xf]
    %v5813 = vld [vmem:[%s5 + $0x1c] sm:$0xf]
    %v5814 = vld [vmem:[#allocation7 + $0x1c] sm:$0x7]
    %v5815 = vld [vmem:[%s5 + $0x20] sm:$0xf]
    %v5816 = vld [vmem:[%s5 + $0x24] sm:$0xf]
    %v5817 = vld [vmem:[%s5 + $0x28] sm:$0xf]
    %v5818 = vld [vmem:[%s5 + $0x2c] sm:$0xf]
    %v5819 = vld [vmem:[%s5 + $0x30] sm:$0xf]
    %v5820 = vld [vmem:[%s5 + $0x34] sm:$0xf]
    %v5821 = vld [vmem:[%s5 + $0x38] sm:$0xf]
    %v5822 = vld [vmem:[%s5 + $0x3c] sm:$0xf]
    %v5831 = vunpack.c.l.b16 %v5798
    %v5832 = vunpack.c.l.b16 %v5799
    %v5833 = vunpack.c.l.b16 %v5800
    %v5834 = vunpack.c.l.b16 %v5801
    %v5835 = vunpack.c.l.b16 %v5802
    %v5836 = vunpack.c.l.b16 %v5803
    %v5837 = vunpack.c.l.b16 %v5804
    %v5838 = vunpack.c.l.b16 %v5814
    %v5839 = vpack.c.b16 %v5832, %v5831
    %v5840 = vpack.c.b16 %v5834, %v5833
    %v5841 = vpack.c.b16 %v5836, %v5835
    %v5842 = vpack.c.b16 %v5838, %v5837
    %v5844 = vshrl.u32 %v5839, 16
    %v5846 = vshll.u32 %v5839, 16
    %v5848 = vrot.slane %v5846, 1
    %v5849 = vor.u32 %v5844, %v5848
    %v5851 = vshll.u32 %v5840, 16
    %v5853 = vrot.slane %v5851, 1
    %v5854 = vsel %vm3033, %v5849, %v5853
    %v5855 = vshrl.u32 %v5840, 16
    %v5857 = vor.u32 %v5855, %v5853
    %v5859 = vshll.u32 %v5841, 16
    %v5861 = vrot.slane %v5859, 1
    %v5862 = vsel %vm3033, %v5857, %v5861
    %v5863 = vshrl.u32 %v5841, 16
    %v5865 = vor.u32 %v5863, %v5861
    %v5867 = vshll.u32 %v5842, 16
    %v5869 = vrot.slane %v5867, 1
    %v5870 = vsel %vm3033, %v5865, %v5869
    %v5871 = vshrl.u32 %v5842, 16
    %v5873 = vor.u32 %v5871, %v5869
    %v5882 = vunpack.c.l.b16 %v5815
    %v5883 = vunpack.c.l.b16 %v5816
    %v5884 = vunpack.c.l.b16 %v5817
    %v5885 = vunpack.c.l.b16 %v5818
    %v5886 = vunpack.c.l.b16 %v5819
    %v5887 = vunpack.c.l.b16 %v5820
    %v5888 = vunpack.c.l.b16 %v5821
    %v5889 = vunpack.c.l.b16 %v5822
    %v5890 = vpack.c.b16 %v5883, %v5882
    %v5891 = vpack.c.b16 %v5885, %v5884
    %v5892 = vpack.c.b16 %v5887, %v5886
    %v5893 = vpack.c.b16 %v5889, %v5888
    %v5899 = vsel %vm5543, %v5854, 0
    %v5902 = vsel %vm5543, %v5862, 0
    %v5905 = vsel %vm5543, %v5870, 0
    %v5908 = vsel %vm5543, %v5873, 0
    %5910 = vmatprep.subr.bf16.mxu0 0
    %5911 = vmatpush1.bf16.msra.mxu0 %v5890
    %5912 = vmatprep.subr.bf16.mxu0 0
    %5913 = vmatpush1.bf16.msra.mxu0 %v5891
    %5914 = vmatprep.subr.bf16.mxu0 0
    %5915 = vmatpush1.bf16.msra.mxu0 %v5892
    %5916 = vmatprep.subr.bf16.mxu0 0
    %5917 = vmatpush1.bf16.msra.mxu0 %v5893
    %5918 = vmatprep.subr.bf16.mxu0 0
    %5919 = vmatpush1.bf16.msra.mxu0 0
    %5920 = vmatprep.subr.bf16.mxu0 0
    %5921 = vmatpush1.bf16.msra.mxu0 0
    %5922 = vmatprep.subr.bf16.mxu0 0
    %5923 = vmatpush1.bf16.msra.mxu0 0
    %5924 = vmatprep.subr.bf16.mxu0 0
    %5925 = vmatpush1.bf16.msra.mxu0 0
    %5926 = vmatprep.subr.bf16.mxu0 0
    %5927 = vmatpush1.bf16.msra.mxu0 0
    %5928 = vmatprep.subr.bf16.mxu0 0
    %5929 = vmatpush1.bf16.msra.mxu0 0
    %5930 = vmatprep.subr.bf16.mxu0 0
    %5931 = vmatpush1.bf16.msra.mxu0 0
    %5932 = vmatprep.subr.bf16.mxu0 0
    %5933 = vmatpush1.bf16.msra.mxu0 0
    %5934 = vmatprep.subr.bf16.mxu0 0
    %5935 = vmatpush1.bf16.msra.mxu0 0
    %5936 = vmatprep.subr.bf16.mxu0 0
    %5937 = vmatpush1.bf16.msra.mxu0 0
    %5938 = vmatprep.subr.bf16.mxu0 0
    %5939 = vmatpush1.bf16.msra.mxu0 0
    %5940 = vmatprep.subr.bf16.mxu0 0
    %5941 = vmatpush1.bf16.msra.mxu0 0
    %5942 = vmatprep.mubr.bf16.mxu0 0
    %5943 = vmatmul.mubr.bf16.gmra.mrb[0].mxu0 %v5899
    %v5944 = vpop.f32.mrb[0].mxu0
    %v5945 = vadd.f32 0.0, %v5944
    %v5946 = vpop.f32.mrb[0].mxu0
    %v5947 = vpop.f32.mrb[0].mxu0
    %v5948 = vadd.f32 0.0, %v5947
    %v5949 = vpop.f32.mrb[0].mxu0
    %5950 = vmatprep.mubr.bf16.mxu0 0
    %5951 = vmatmul.mubr.bf16.gmra.mrb[0].mxu0 %v5902
    %v5952 = vpop.f32.mrb[0].mxu0
    %v5953 = vadd.f32 0.0, %v5952
    %v5954 = vpop.f32.mrb[0].mxu0
    %v5955 = vpop.f32.mrb[0].mxu0
    %v5956 = vadd.f32 0.0, %v5955
    %v5957 = vpop.f32.mrb[0].mxu0
    %5958 = vmatprep.mubr.bf16.mxu0 0
    %5959 = vmatmul.mubr.bf16.gmra.mrb[0].mxu0 %v5905
    %v5960 = vpop.f32.mrb[0].mxu0
    %v5961 = vadd.f32 0.0, %v5960
    %v5962 = vpop.f32.mrb[0].mxu0
    %v5963 = vpop.f32.mrb[0].mxu0
    %v5964 = vadd.f32 0.0, %v5963
    %v5965 = vpop.f32.mrb[0].mxu0
    %5966 = vmatprep.mubr.bf16.mxu0 0
    %5967 = vmatmul.mubr.bf16.gmra.mrb[0].mxu0 %v5908
    %v5968 = vpop.f32.mrb[0].mxu0
    %v5969 = vadd.f32 0.0, %v5968
    %v5970 = vpop.f32.mrb[0].mxu0
    %v5971 = vpop.f32.mrb[0].mxu0
    %v5972 = vadd.f32 0.0, %v5971
    %v5973 = vpop.f32.mrb[0].mxu0
    %5974 = vdwg.mxu0
    %v5976 = vunpack.c.l.b16 %v5805
    %v5977 = vpack.c.b16 %v5976, %v5837
    %v5986 = vunpack.c.l.b16 %v5806
    %v5987 = vunpack.c.l.b16 %v5807
    %v5988 = vunpack.c.l.b16 %v5808
    %v5989 = vunpack.c.l.b16 %v5809
    %v5990 = vunpack.c.l.b16 %v5810
    %v5991 = vunpack.c.l.b16 %v5811
    %v5992 = vunpack.c.l.b16 %v5812
    %v5993 = vunpack.c.l.b16 %v5813
    %v5994 = vpack.c.b16 %v5987, %v5986
    %v5995 = vpack.c.b16 %v5989, %v5988
    %v5996 = vpack.c.b16 %v5991, %v5990
    %v5997 = vpack.c.b16 %v5993, %v5992
    %v6002 = vsel %vm5543, %v5839, 0
    %v6004 = vsel %vm5543, %v5840, 0
    %v6006 = vsel %vm5543, %v5841, 0
    %v6009 = vsel %vm5543, %v5977, 0
    %6011 = vmatprep.subr.bf16.mxu0 0
    %6012 = vmatpush1.bf16.msra.mxu0 %v5994
    %6013 = vmatprep.subr.bf16.mxu0 0
    %6014 = vmatpush1.bf16.msra.mxu0 %v5995
    %6015 = vmatprep.subr.bf16.mxu0 0
    %6016 = vmatpush1.bf16.msra.mxu0 %v5996
    %6017 = vmatprep.subr.bf16.mxu0 0
    %6018 = vmatpush1.bf16.msra.mxu0 %v5997
    %6019 = vmatprep.subr.bf16.mxu0 0
    %6020 = vmatpush1.bf16.msra.mxu0 0
    %6021 = vmatprep.subr.bf16.mxu0 0
    %6022 = vmatpush1.bf16.msra.mxu0 0
    %6023 = vmatprep.subr.bf16.mxu0 0
    %6024 = vmatpush1.bf16.msra.mxu0 0
    %6025 = vmatprep.subr.bf16.mxu0 0
    %6026 = vmatpush1.bf16.msra.mxu0 0
    %6027 = vmatprep.subr.bf16.mxu0 0
    %6028 = vmatpush1.bf16.msra.mxu0 0
    %6029 = vmatprep.subr.bf16.mxu0 0
    %6030 = vmatpush1.bf16.msra.mxu0 0
    %6031 = vmatprep.subr.bf16.mxu0 0
    %6032 = vmatpush1.bf16.msra.mxu0 0
    %6033 = vmatprep.subr.bf16.mxu0 0
    %6034 = vmatpush1.bf16.msra.mxu0 0
    %6035 = vmatprep.subr.bf16.mxu0 0
    %6036 = vmatpush1.bf16.msra.mxu0 0
    %6037 = vmatprep.subr.bf16.mxu0 0
    %6038 = vmatpush1.bf16.msra.mxu0 0
    %6039 = vmatprep.subr.bf16.mxu0 0
    %6040 = vmatpush1.bf16.msra.mxu0 0
    %6041 = vmatprep.subr.bf16.mxu0 0
    %6042 = vmatpush1.bf16.msra.mxu0 0
    %6043 = vmatprep.mubr.bf16.mxu0 0
    %6044 = vmatmul.mubr.bf16.gmra.mrb[0].mxu0 %v6002
    %v6045 = vpop.f32.mrb[0].mxu0
    %v6046 = vadd.f32 %v5945, %v6045
    %v6047 = vpop.f32.mrb[0].mxu0
    %v6048 = vpop.f32.mrb[0].mxu0
    %v6049 = vadd.f32 %v5948, %v6048
    %v6050 = vpop.f32.mrb[0].mxu0
    %6051 = vmatprep.mubr.bf16.mxu0 0
    %6052 = vmatmul.mubr.bf16.gmra.mrb[0].mxu0 %v6004
    %v6053 = vpop.f32.mrb[0].mxu0
    %v6054 = vadd.f32 %v5953, %v6053
    %v6055 = vpop.f32.mrb[0].mxu0
    %v6056 = vpop.f32.mrb[0].mxu0
    %v6057 = vadd.f32 %v5956, %v6056
    %v6058 = vpop.f32.mrb[0].mxu0
    %6059 = vmatprep.mubr.bf16.mxu0 0
    %6060 = vmatmul.mubr.bf16.gmra.mrb[0].mxu0 %v6006
    %v6061 = vpop.f32.mrb[0].mxu0
    %v6062 = vadd.f32 %v5961, %v6061
    %v6063 = vpop.f32.mrb[0].mxu0
    %v6064 = vpop.f32.mrb[0].mxu0
    %v6065 = vadd.f32 %v5964, %v6064
    %v6066 = vpop.f32.mrb[0].mxu0
    %6067 = vmatprep.mubr.bf16.mxu0 0
    %6068 = vmatmul.mubr.bf16.gmra.mrb[0].mxu0 %v6009
    %v6069 = vpop.f32.mrb[0].mxu0
    %v6070 = vadd.f32 %v5969, %v6069
    %v6071 = vpop.f32.mrb[0].mxu0
    %v6072 = vpop.f32.mrb[0].mxu0
    %v6073 = vadd.f32 %v5972, %v6072
    %v6074 = vpop.f32.mrb[0].mxu0
    %6075 = vdwg.mxu0
    %v6076 = vld [vmem:[#allocation7] sm:$0xe]
    %v6077 = vld [vmem:[%s5 + $0x40] sm:$0xf]
    %v6078 = vld [vmem:[%s5 + $0x44] sm:$0xf]
    %v6079 = vld [vmem:[%s5 + $0x48] sm:$0xf]
    %v6080 = vld [vmem:[%s5 + $0x4c] sm:$0xf]
    %v6081 = vld [vmem:[%s5 + $0x50] sm:$0xf]
    %v6082 = vld [vmem:[%s5 + $0x54] sm:$0xf]
    %v6083 = vld [vmem:[%s5 + $0x58] sm:$0xf]
    %v6084 = vld [vmem:[%s5 + $0x5c] sm:$0xf]
    %v6086 = vunpack.c.l.b16 %v6076
    %v6087 = vpack.c.b16 %v5832, %v6086
    %v6088 = vrot.slane %v6087, 1
    %v6089 = vrot.slane %v5840, 1
    %v6090 = vsel %vm3481, %v6088, %v6089
    %v6091 = vrot.slane %v5841, 1
    %v6092 = vsel %vm3481, %v6089, %v6091
    %v6093 = vrot.slane %v5842, 1
    %v6094 = vsel %vm3481, %v6091, %v6093
    %v6103 = vunpack.c.l.b16 %v6077
    %v6104 = vunpack.c.l.b16 %v6078
    %v6105 = vunpack.c.l.b16 %v6079
    %v6106 = vunpack.c.l.b16 %v6080
    %v6107 = vunpack.c.l.b16 %v6081
    %v6108 = vunpack.c.l.b16 %v6082
    %v6109 = vunpack.c.l.b16 %v6083
    %v6110 = vunpack.c.l.b16 %v6084
    %v6111 = vpack.c.b16 %v6104, %v6103
    %v6112 = vpack.c.b16 %v6106, %v6105
    %v6113 = vpack.c.b16 %v6108, %v6107
    %v6114 = vpack.c.b16 %v6110, %v6109
    %v6120 = vsel %vm5543, %v6090, 0
    %v6123 = vsel %vm5543, %v6092, 0
    %v6126 = vsel %vm5543, %v6094, 0
    %v6129 = vsel %vm5543, %v6093, 0
    %6131 = vmatprep.subr.bf16.mxu0 0
    %6132 = vmatpush1.bf16.msra.mxu0 %v6111
    %6133 = vmatprep.subr.bf16.mxu0 0
    %6134 = vmatpush1.bf16.msra.mxu0 %v6112
    %6135 = vmatprep.subr.bf16.mxu0 0
    %6136 = vmatpush1.bf16.msra.mxu0 %v6113
    %6137 = vmatprep.subr.bf16.mxu0 0
    %6138 = vmatpush1.bf16.msra.mxu0 %v6114
    %6139 = vmatprep.subr.bf16.mxu0 0
    %6140 = vmatpush1.bf16.msra.mxu0 0
    %6141 = vmatprep.subr.bf16.mxu0 0
    %6142 = vmatpush1.bf16.msra.mxu0 0
    %6143 = vmatprep.subr.bf16.mxu0 0
    %6144 = vmatpush1.bf16.msra.mxu0 0
    %6145 = vmatprep.subr.bf16.mxu0 0
    %6146 = vmatpush1.bf16.msra.mxu0 0
    %6147 = vmatprep.subr.bf16.mxu0 0
    %6148 = vmatpush1.bf16.msra.mxu0 0
    %6149 = vmatprep.subr.bf16.mxu0 0
    %6150 = vmatpush1.bf16.msra.mxu0 0
    %6151 = vmatprep.subr.bf16.mxu0 0
    %6152 = vmatpush1.bf16.msra.mxu0 0
    %6153 = vmatprep.subr.bf16.mxu0 0
    %6154 = vmatpush1.bf16.msra.mxu0 0
    %6155 = vmatprep.subr.bf16.mxu0 0
    %6156 = vmatpush1.bf16.msra.mxu0 0
    %6157 = vmatprep.subr.bf16.mxu0 0
    %6158 = vmatpush1.bf16.msra.mxu0 0
    %6159 = vmatprep.subr.bf16.mxu0 0
    %6160 = vmatpush1.bf16.msra.mxu0 0
    %6161 = vmatprep.subr.bf16.mxu0 0
    %6162 = vmatpush1.bf16.msra.mxu0 0
    %6163 = vmatprep.mubr.bf16.mxu0 0
    %6164 = vmatmul.mubr.bf16.gmra.mrb[0].mxu0 %v6120
    %v6165 = vpop.f32.mrb[0].mxu0
    %v6166 = vadd.f32 0.0, %v6165
    %v6167 = vpop.f32.mrb[0].mxu0
    %v6168 = vpop.f32.mrb[0].mxu0
    %v6169 = vadd.f32 0.0, %v6168
    %v6170 = vpop.f32.mrb[0].mxu0
    %6171 = vmatprep.mubr.bf16.mxu0 0
    %6172 = vmatmul.mubr.bf16.gmra.mrb[0].mxu0 %v6123
    %v6173 = vpop.f32.mrb[0].mxu0
    %v6174 = vadd.f32 0.0, %v6173
    %v6175 = vpop.f32.mrb[0].mxu0
    %v6176 = vpop.f32.mrb[0].mxu0
    %v6177 = vadd.f32 0.0, %v6176
    %v6178 = vpop.f32.mrb[0].mxu0
    %6179 = vmatprep.mubr.bf16.mxu0 0
    %6180 = vmatmul.mubr.bf16.gmra.mrb[0].mxu0 %v6126
    %v6181 = vpop.f32.mrb[0].mxu0
    %v6182 = vadd.f32 0.0, %v6181
    %v6183 = vpop.f32.mrb[0].mxu0
    %v6184 = vpop.f32.mrb[0].mxu0
    %v6185 = vadd.f32 0.0, %v6184
    %v6186 = vpop.f32.mrb[0].mxu0
    %6187 = vmatprep.mubr.bf16.mxu0 0
    %6188 = vmatmul.mubr.bf16.gmra.mrb[0].mxu0 %v6129
    %v6189 = vpop.f32.mrb[0].mxu0
    %v6190 = vadd.f32 0.0, %v6189
    %v6191 = vpop.f32.mrb[0].mxu0
    %v6192 = vpop.f32.mrb[0].mxu0
    %v6193 = vadd.f32 0.0, %v6192
    %v6194 = vpop.f32.mrb[0].mxu0
    %6195 = vdwg.mxu0
    %v6196 = vadd.f32 %v6046, %v6166
    %v6197 = vadd.f32 %v6049, %v6169
    %v6198 = vadd.f32 %v6054, %v6174
    %v6199 = vadd.f32 %v6057, %v6177
    %v6200 = vadd.f32 %v6062, %v6182
    %v6201 = vadd.f32 %v6065, %v6185
    %v6202 = vadd.f32 %v6070, %v6190
    %v6203 = vadd.f32 %v6073, %v6193
    %v6204 = vld [vmem:[#allocation7] sm:$0x8]
    %v6205 = vld [vmem:[#allocation7 + $0x4] sm:$0xf]
    %v6206 = vld [vmem:[#allocation7 + $0x8] sm:$0xf]
    %v6207 = vld [vmem:[#allocation7 + $0xc] sm:$0xf]
    %v6208 = vld [vmem:[#allocation7 + $0x10] sm:$0xf]
    %v6209 = vld [vmem:[#allocation7 + $0x14] sm:$0xf]
    %v6210 = vld [vmem:[#allocation7 + $0x18] sm:$0xf]
    %v6211 = vld [vmem:[#allocation7 + $0x1c] sm:$0xf]
    %v6212 = vld [vmem:[#allocation7 + $0x20] sm:$0x1]
    %v6213 = vld [vmem:[%s5 + $0x60] sm:$0xf]
    %v6214 = vld [vmem:[%s5 + $0x64] sm:$0xf]
    %v6215 = vld [vmem:[%s5 + $0x68] sm:$0xf]
    %v6216 = vld [vmem:[%s5 + $0x6c] sm:$0xf]
    %v6217 = vld [vmem:[%s5 + $0x70] sm:$0xf]
    %v6218 = vld [vmem:[%s5 + $0x74] sm:$0xf]
    %v6219 = vld [vmem:[%s5 + $0x78] sm:$0xf]
    %v6220 = vld [vmem:[%s5 + $0x7c] sm:$0xf]
    %v6230 = vunpack.c.l.b16 %v6204
    %v6231 = vunpack.c.l.b16 %v6205
    %v6232 = vunpack.c.l.b16 %v6206
    %v6233 = vunpack.c.l.b16 %v6207
    %v6234 = vunpack.c.l.b16 %v6208
    %v6235 = vunpack.c.l.b16 %v6209
    %v6236 = vunpack.c.l.b16 %v6210
    %v6237 = vunpack.c.l.b16 %v6211
    %v6238 = vunpack.c.l.b16 %v6212
    %v6239 = vpack.c.b16 %v6231, %v6230
    %v6240 = vpack.c.b16 %v6233, %v6232
    %v6241 = vpack.c.b16 %v6235, %v6234
    %v6242 = vpack.c.b16 %v6237, %v6236
    %v6243 = vpack.c.b16 %v6238, %v6238
    %v6244 = vrot.slane %v6239, 3
    %v6245 = vrot.slane %v6240, 3
    %v6246 = vsel %vm5267, %v6244, %v6245
    %v6247 = vrot.slane %v6241, 3
    %v6248 = vsel %vm5267, %v6245, %v6247
    %v6249 = vrot.slane %v6242, 3
    %v6250 = vsel %vm5267, %v6247, %v6249
    %v6251 = vrot.slane %v6243, 3
    %v6252 = vsel %vm5267, %v6249, %v6251
    %v6261 = vunpack.c.l.b16 %v6213
    %v6262 = vunpack.c.l.b16 %v6214
    %v6263 = vunpack.c.l.b16 %v6215
    %v6264 = vunpack.c.l.b16 %v6216
    %v6265 = vunpack.c.l.b16 %v6217
    %v6266 = vunpack.c.l.b16 %v6218
    %v6267 = vunpack.c.l.b16 %v6219
    %v6268 = vunpack.c.l.b16 %v6220
    %v6269 = vpack.c.b16 %v6262, %v6261
    %v6270 = vpack.c.b16 %v6264, %v6263
    %v6271 = vpack.c.b16 %v6266, %v6265
    %v6272 = vpack.c.b16 %v6268, %v6267
    %v6278 = vsel %vm5543, %v6246, 0
    %v6281 = vsel %vm5543, %v6248, 0
    %v6284 = vsel %vm5543, %v6250, 0
    %v6287 = vsel %vm5543, %v6252, 0
    %6289 = vmatprep.subr.bf16.mxu0 0
    %6290 = vmatpush1.bf16.msra.mxu0 %v6269
    %6291 = vmatprep.subr.bf16.mxu0 0
    %6292 = vmatpush1.bf16.msra.mxu0 %v6270
    %6293 = vmatprep.subr.bf16.mxu0 0
    %6294 = vmatpush1.bf16.msra.mxu0 %v6271
    %6295 = vmatprep.subr.bf16.mxu0 0
    %6296 = vmatpush1.bf16.msra.mxu0 %v6272
    %6297 = vmatprep.subr.bf16.mxu0 0
    %6298 = vmatpush1.bf16.msra.mxu0 0
    %6299 = vmatprep.subr.bf16.mxu0 0
    %6300 = vmatpush1.bf16.msra.mxu0 0
    %6301 = vmatprep.subr.bf16.mxu0 0
    %6302 = vmatpush1.bf16.msra.mxu0 0
    %6303 = vmatprep.subr.bf16.mxu0 0
    %6304 = vmatpush1.bf16.msra.mxu0 0
    %6305 = vmatprep.subr.bf16.mxu0 0
    %6306 = vmatpush1.bf16.msra.mxu0 0
    %6307 = vmatprep.subr.bf16.mxu0 0
    %6308 = vmatpush1.bf16.msra.mxu0 0
    %6309 = vmatprep.subr.bf16.mxu0 0
    %6310 = vmatpush1.bf16.msra.mxu0 0
    %6311 = vmatprep.subr.bf16.mxu0 0
    %6312 = vmatpush1.bf16.msra.mxu0 0
    %6313 = vmatprep.subr.bf16.mxu0 0
    %6314 = vmatpush1.bf16.msra.mxu0 0
    %6315 = vmatprep.subr.bf16.mxu0 0
    %6316 = vmatpush1.bf16.msra.mxu0 0
    %6317 = vmatprep.subr.bf16.mxu0 0
    %6318 = vmatpush1.bf16.msra.mxu0 0
    %6319 = vmatprep.subr.bf16.mxu0 0
    %6320 = vmatpush1.bf16.msra.mxu0 0
    %6321 = vmatprep.mubr.bf16.mxu0 0
    %6322 = vmatmul.mubr.bf16.gmra.mrb[0].mxu0 %v6278
    %v6323 = vpop.f32.mrb[0].mxu0
    %v6324 = vadd.f32 0.0, %v6323
    %v6325 = vpop.f32.mrb[0].mxu0
    %v6326 = vpop.f32.mrb[0].mxu0
    %v6327 = vadd.f32 0.0, %v6326
    %v6328 = vpop.f32.mrb[0].mxu0
    %6329 = vmatprep.mubr.bf16.mxu0 0
    %6330 = vmatmul.mubr.bf16.gmra.mrb[0].mxu0 %v6281
    %v6331 = vpop.f32.mrb[0].mxu0
    %v6332 = vadd.f32 0.0, %v6331
    %v6333 = vpop.f32.mrb[0].mxu0
    %v6334 = vpop.f32.mrb[0].mxu0
    %v6335 = vadd.f32 0.0, %v6334
    %v6336 = vpop.f32.mrb[0].mxu0
    %6337 = vmatprep.mubr.bf16.mxu0 0
    %6338 = vmatmul.mubr.bf16.gmra.mrb[0].mxu0 %v6284
    %v6339 = vpop.f32.mrb[0].mxu0
    %v6340 = vadd.f32 0.0, %v6339
    %v6341 = vpop.f32.mrb[0].mxu0
    %v6342 = vpop.f32.mrb[0].mxu0
    %v6343 = vadd.f32 0.0, %v6342
    %v6344 = vpop.f32.mrb[0].mxu0
    %6345 = vmatprep.mubr.bf16.mxu0 0
    %6346 = vmatmul.mubr.bf16.gmra.mrb[0].mxu0 %v6287
    %v6347 = vpop.f32.mrb[0].mxu0
    %v6348 = vadd.f32 0.0, %v6347
    %v6349 = vpop.f32.mrb[0].mxu0
    %v6350 = vpop.f32.mrb[0].mxu0
    %v6351 = vadd.f32 0.0, %v6350
    %v6352 = vpop.f32.mrb[0].mxu0
    %6353 = vdwg.mxu0
    %v6354 = vadd.f32 %v6196, %v6324
    %v6355 = vadd.f32 %v6197, %v6327
    %v6356 = vadd.f32 %v6198, %v6332
    %v6357 = vadd.f32 %v6199, %v6335
    %v6358 = vadd.f32 %v6200, %v6340
    %v6359 = vadd.f32 %v6201, %v6343
    %v6360 = vadd.f32 %v6202, %v6348
    %v6361 = vadd.f32 %v6203, %v6351
    %v6362 = vld [vmem:[#allocation7 + $0x20] sm:$0x3]
    %v6363 = vld [vmem:[%s5 + $0x80] sm:$0xf]
    %v6364 = vld [vmem:[%s5 + $0x84] sm:$0xf]
    %v6365 = vld [vmem:[%s5 + $0x88] sm:$0xf]
    %v6366 = vld [vmem:[%s5 + $0x8c] sm:$0xf]
    %v6367 = vld [vmem:[%s5 + $0x90] sm:$0xf]
    %v6368 = vld [vmem:[%s5 + $0x94] sm:$0xf]
    %v6369 = vld [vmem:[%s5 + $0x98] sm:$0xf]
    %v6370 = vld [vmem:[%s5 + $0x9c] sm:$0xf]
    %v6372 = vunpack.c.l.b16 %v6362
    %v6373 = vpack.c.b16 %v6372, %v6372
    %vm6374 = vsmask.f32 4352
    %v6376 = vshrl.u32 %v6239, 16
    %v6378 = vrot.slane %v6376, 3
    %v6379 = vshll.u32 %v6239, 16
    %v6381 = vrot.slane %v6379, 4
    %v6382 = vor.u32 %v6378, %v6381
    %v6384 = vshrl.u32 %v6240, 16
    %v6386 = vrot.slane %v6384, 3
    %v6387 = vshll.u32 %v6240, 16
    %v6389 = vrot.slane %v6387, 4
    %v6390 = vor.u32 %v6386, %v6389
    %v6391 = vsel %vm6374, %v6382, %v6390
    %v6393 = vshrl.u32 %v6241, 16
    %v6395 = vrot.slane %v6393, 3
    %v6396 = vshll.u32 %v6241, 16
    %v6398 = vrot.slane %v6396, 4
    %v6399 = vor.u32 %v6395, %v6398
    %v6400 = vsel %vm6374, %v6390, %v6399
    %v6402 = vshrl.u32 %v6242, 16
    %v6404 = vrot.slane %v6402, 3
    %v6405 = vshll.u32 %v6242, 16
    %v6407 = vrot.slane %v6405, 4
    %v6408 = vor.u32 %v6404, %v6407
    %v6409 = vsel %vm6374, %v6399, %v6408
    %v6411 = vshrl.u32 %v6373, 16
    %v6413 = vrot.slane %v6411, 3
    %v6414 = vshll.u32 %v6373, 16
    %v6416 = vrot.slane %v6414, 4
    %v6417 = vor.u32 %v6413, %v6416
    %v6418 = vsel %vm6374, %v6408, %v6417
    %v6427 = vunpack.c.l.b16 %v6363
    %v6428 = vunpack.c.l.b16 %v6364
    %v6429 = vunpack.c.l.b16 %v6365
    %v6430 = vunpack.c.l.b16 %v6366
    %v6431 = vunpack.c.l.b16 %v6367
    %v6432 = vunpack.c.l.b16 %v6368
    %v6433 = vunpack.c.l.b16 %v6369
    %v6434 = vunpack.c.l.b16 %v6370
    %v6435 = vpack.c.b16 %v6428, %v6427
    %v6436 = vpack.c.b16 %v6430, %v6429
    %v6437 = vpack.c.b16 %v6432, %v6431
    %v6438 = vpack.c.b16 %v6434, %v6433
    %v6444 = vsel %vm5543, %v6391, 0
    %v6447 = vsel %vm5543, %v6400, 0
    %v6450 = vsel %vm5543, %v6409, 0
    %v6453 = vsel %vm5543, %v6418, 0
    %6455 = vmatprep.subr.bf16.mxu0 0
    %6456 = vmatpush1.bf16.msra.mxu0 %v6435
    %6457 = vmatprep.subr.bf16.mxu0 0
    %6458 = vmatpush1.bf16.msra.mxu0 %v6436
    %6459 = vmatprep.subr.bf16.mxu0 0
    %6460 = vmatpush1.bf16.msra.mxu0 %v6437
    %6461 = vmatprep.subr.bf16.mxu0 0
    %6462 = vmatpush1.bf16.msra.mxu0 %v6438
    %6463 = vmatprep.subr.bf16.mxu0 0
    %6464 = vmatpush1.bf16.msra.mxu0 0
    %6465 = vmatprep.subr.bf16.mxu0 0
    %6466 = vmatpush1.bf16.msra.mxu0 0
    %6467 = vmatprep.subr.bf16.mxu0 0
    %6468 = vmatpush1.bf16.msra.mxu0 0
    %6469 = vmatprep.subr.bf16.mxu0 0
    %6470 = vmatpush1.bf16.msra.mxu0 0
    %6471 = vmatprep.subr.bf16.mxu0 0
    %6472 = vmatpush1.bf16.msra.mxu0 0
    %6473 = vmatprep.subr.bf16.mxu0 0
    %6474 = vmatpush1.bf16.msra.mxu0 0
    %6475 = vmatprep.subr.bf16.mxu0 0
    %6476 = vmatpush1.bf16.msra.mxu0 0
    %6477 = vmatprep.subr.bf16.mxu0 0
    %6478 = vmatpush1.bf16.msra.mxu0 0
    %6479 = vmatprep.subr.bf16.mxu0 0
    %6480 = vmatpush1.bf16.msra.mxu0 0
    %6481 = vmatprep.subr.bf16.mxu0 0
    %6482 = vmatpush1.bf16.msra.mxu0 0
    %6483 = vmatprep.subr.bf16.mxu0 0
    %6484 = vmatpush1.bf16.msra.mxu0 0
    %6485 = vmatprep.subr.bf16.mxu0 0
    %6486 = vmatpush1.bf16.msra.mxu0 0
    %6487 = vmatprep.mubr.bf16.mxu0 0
    %6488 = vmatmul.mubr.bf16.gmra.mrb[0].mxu0 %v6444
    %v6489 = vpop.f32.mrb[0].mxu0
    %v6490 = vadd.f32 0.0, %v6489
    %v6491 = vpop.f32.mrb[0].mxu0
    %v6492 = vpop.f32.mrb[0].mxu0
    %v6493 = vadd.f32 0.0, %v6492
    %v6494 = vpop.f32.mrb[0].mxu0
    %6495 = vmatprep.mubr.bf16.mxu0 0
    %6496 = vmatmul.mubr.bf16.gmra.mrb[0].mxu0 %v6447
    %v6497 = vpop.f32.mrb[0].mxu0
    %v6498 = vadd.f32 0.0, %v6497
    %v6499 = vpop.f32.mrb[0].mxu0
    %v6500 = vpop.f32.mrb[0].mxu0
    %v6501 = vadd.f32 0.0, %v6500
    %v6502 = vpop.f32.mrb[0].mxu0
    %6503 = vmatprep.mubr.bf16.mxu0 0
    %6504 = vmatmul.mubr.bf16.gmra.mrb[0].mxu0 %v6450
    %v6505 = vpop.f32.mrb[0].mxu0
    %v6506 = vadd.f32 0.0, %v6505
    %v6507 = vpop.f32.mrb[0].mxu0
    %v6508 = vpop.f32.mrb[0].mxu0
    %v6509 = vadd.f32 0.0, %v6508
    %v6510 = vpop.f32.mrb[0].mxu0
    %6511 = vmatprep.mubr.bf16.mxu0 0
    %6512 = vmatmul.mubr.bf16.gmra.mrb[0].mxu0 %v6453
    %v6513 = vpop.f32.mrb[0].mxu0
    %v6514 = vadd.f32 0.0, %v6513
    %v6515 = vpop.f32.mrb[0].mxu0
    %v6516 = vpop.f32.mrb[0].mxu0
    %v6517 = vadd.f32 0.0, %v6516
    %v6518 = vpop.f32.mrb[0].mxu0
    %6519 = vdwg.mxu0
    %v6520 = vadd.f32 %v6354, %v6490
    %v6521 = vadd.f32 %v6355, %v6493
    %v6522 = vadd.f32 %v6356, %v6498
    %v6523 = vadd.f32 %v6357, %v6501
    %v6524 = vadd.f32 %v6358, %v6506
    %v6525 = vadd.f32 %v6359, %v6509
    %v6526 = vadd.f32 %v6360, %v6514
    %v6527 = vadd.f32 %v6361, %v6517
    %v6528 = vld [vmem:[%s5 + $0xa0] sm:$0xf]
    %v6529 = vld [vmem:[%s5 + $0xa4] sm:$0xf]
    %v6530 = vld [vmem:[%s5 + $0xa8] sm:$0xf]
    %v6531 = vld [vmem:[%s5 + $0xac] sm:$0xf]
    %v6532 = vld [vmem:[%s5 + $0xb0] sm:$0xf]
    %v6533 = vld [vmem:[%s5 + $0xb4] sm:$0xf]
    %v6534 = vld [vmem:[%s5 + $0xb8] sm:$0xf]
    %v6535 = vld [vmem:[%s5 + $0xbc] sm:$0xf]
    %v6536 = vpack.c.b16 %v6232, %v6231
    %v6537 = vpack.c.b16 %v6234, %v6233
    %v6538 = vpack.c.b16 %v6236, %v6235
    %v6539 = vpack.c.b16 %v6372, %v6237
    %v6548 = vunpack.c.l.b16 %v6528
    %v6549 = vunpack.c.l.b16 %v6529
    %v6550 = vunpack.c.l.b16 %v6530
    %v6551 = vunpack.c.l.b16 %v6531
    %v6552 = vunpack.c.l.b16 %v6532
    %v6553 = vunpack.c.l.b16 %v6533
    %v6554 = vunpack.c.l.b16 %v6534
    %v6555 = vunpack.c.l.b16 %v6535
    %v6556 = vpack.c.b16 %v6549, %v6548
    %v6557 = vpack.c.b16 %v6551, %v6550
    %v6558 = vpack.c.b16 %v6553, %v6552
    %v6559 = vpack.c.b16 %v6555, %v6554
    %v6565 = vsel %vm5543, %v6536, 0
    %v6568 = vsel %vm5543, %v6537, 0
    %v6571 = vsel %vm5543, %v6538, 0
    %v6574 = vsel %vm5543, %v6539, 0
    %6576 = vmatprep.subr.bf16.mxu0 0
    %6577 = vmatpush1.bf16.msra.mxu0 %v6556
    %6578 = vmatprep.subr.bf16.mxu0 0
    %6579 = vmatpush1.bf16.msra.mxu0 %v6557
    %6580 = vmatprep.subr.bf16.mxu0 0
    %6581 = vmatpush1.bf16.msra.mxu0 %v6558
    %6582 = vmatprep.subr.bf16.mxu0 0
    %6583 = vmatpush1.bf16.msra.mxu0 %v6559
    %6584 = vmatprep.subr.bf16.mxu0 0
    %6585 = vmatpush1.bf16.msra.mxu0 0
    %6586 = vmatprep.subr.bf16.mxu0 0
    %6587 = vmatpush1.bf16.msra.mxu0 0
    %6588 = vmatprep.subr.bf16.mxu0 0
    %6589 = vmatpush1.bf16.msra.mxu0 0
    %6590 = vmatprep.subr.bf16.mxu0 0
    %6591 = vmatpush1.bf16.msra.mxu0 0
    %6592 = vmatprep.subr.bf16.mxu0 0
    %6593 = vmatpush1.bf16.msra.mxu0 0
    %6594 = vmatprep.subr.bf16.mxu0 0
    %6595 = vmatpush1.bf16.msra.mxu0 0
    %6596 = vmatprep.subr.bf16.mxu0 0
    %6597 = vmatpush1.bf16.msra.mxu0 0
    %6598 = vmatprep.subr.bf16.mxu0 0
    %6599 = vmatpush1.bf16.msra.mxu0 0
    %6600 = vmatprep.subr.bf16.mxu0 0
    %6601 = vmatpush1.bf16.msra.mxu0 0
    %6602 = vmatprep.subr.bf16.mxu0 0
    %6603 = vmatpush1.bf16.msra.mxu0 0
    %6604 = vmatprep.subr.bf16.mxu0 0
    %6605 = vmatpush1.bf16.msra.mxu0 0
    %6606 = vmatprep.subr.bf16.mxu0 0
    %6607 = vmatpush1.bf16.msra.mxu0 0
    %6608 = vmatprep.mubr.bf16.mxu0 0
    %6609 = vmatmul.mubr.bf16.gmra.mrb[0].mxu0 %v6565
    %v6610 = vpop.f32.mrb[0].mxu0
    %v6611 = vadd.f32 0.0, %v6610
    %v6612 = vpop.f32.mrb[0].mxu0
    %v6613 = vpop.f32.mrb[0].mxu0
    %v6614 = vadd.f32 0.0, %v6613
    %v6615 = vpop.f32.mrb[0].mxu0
    %6616 = vmatprep.mubr.bf16.mxu0 0
    %6617 = vmatmul.mubr.bf16.gmra.mrb[0].mxu0 %v6568
    %v6618 = vpop.f32.mrb[0].mxu0
    %v6619 = vadd.f32 0.0, %v6618
    %v6620 = vpop.f32.mrb[0].mxu0
    %v6621 = vpop.f32.mrb[0].mxu0
    %v6622 = vadd.f32 0.0, %v6621
    %v6623 = vpop.f32.mrb[0].mxu0
    %6624 = vmatprep.mubr.bf16.mxu0 0
    %6625 = vmatmul.mubr.bf16.gmra.mrb[0].mxu0 %v6571
    %v6626 = vpop.f32.mrb[0].mxu0
    %v6627 = vadd.f32 0.0, %v6626
    %v6628 = vpop.f32.mrb[0].mxu0
    %v6629 = vpop.f32.mrb[0].mxu0
    %v6630 = vadd.f32 0.0, %v6629
    %v6631 = vpop.f32.mrb[0].mxu0
    %6632 = vmatprep.mubr.bf16.mxu0 0
    %6633 = vmatmul.mubr.bf16.gmra.mrb[0].mxu0 %v6574
    %v6634 = vpop.f32.mrb[0].mxu0
    %v6635 = vadd.f32 0.0, %v6634
    %v6636 = vpop.f32.mrb[0].mxu0
    %v6637 = vpop.f32.mrb[0].mxu0
    %v6638 = vadd.f32 0.0, %v6637
    %v6639 = vpop.f32.mrb[0].mxu0
    %6640 = vdwg.mxu0
    %v6641 = vadd.f32 %v6520, %v6611
    %v6642 = vadd.f32 %v6521, %v6614
    %v6643 = vadd.f32 %v6522, %v6619
    %v6644 = vadd.f32 %v6523, %v6622
    %v6645 = vadd.f32 %v6524, %v6627
    %v6646 = vadd.f32 %v6525, %v6630
    %v6647 = vadd.f32 %v6526, %v6635
    %v6648 = vadd.f32 %v6527, %v6638
    %v6649 = vld [vmem:[#allocation7 + $0x4] sm:$0xc]
    %v6650 = vld [vmem:[#allocation7 + $0x20] sm:$0xf]
    %v6651 = vld [vmem:[%s5 + $0xc0] sm:$0xf]
    %v6652 = vld [vmem:[%s5 + $0xc4] sm:$0xf]
    %v6653 = vld [vmem:[%s5 + $0xc8] sm:$0xf]
    %v6654 = vld [vmem:[%s5 + $0xcc] sm:$0xf]
    %v6655 = vld [vmem:[%s5 + $0xd0] sm:$0xf]
    %v6656 = vld [vmem:[%s5 + $0xd4] sm:$0xf]
    %v6657 = vld [vmem:[%s5 + $0xd8] sm:$0xf]
    %v6658 = vld [vmem:[%s5 + $0xdc] sm:$0xf]
    %v6661 = vunpack.c.l.b16 %v6649
    %v6662 = vunpack.c.l.b16 %v6650
    %v6663 = vpack.c.b16 %v6232, %v6661
    %v6664 = vpack.c.b16 %v6662, %v6237
    %v6665 = vrot.slane %v6663, 2
    %v6666 = vrot.slane %v6537, 2
    %v6667 = vsel %vm4334, %v6665, %v6666
    %v6668 = vrot.slane %v6538, 2
    %v6669 = vsel %vm4334, %v6666, %v6668
    %v6670 = vrot.slane %v6664, 2
    %v6671 = vsel %vm4334, %v6668, %v6670
    %v6680 = vunpack.c.l.b16 %v6651
    %v6681 = vunpack.c.l.b16 %v6652
    %v6682 = vunpack.c.l.b16 %v6653
    %v6683 = vunpack.c.l.b16 %v6654
    %v6684 = vunpack.c.l.b16 %v6655
    %v6685 = vunpack.c.l.b16 %v6656
    %v6686 = vunpack.c.l.b16 %v6657
    %v6687 = vunpack.c.l.b16 %v6658
    %v6688 = vpack.c.b16 %v6681, %v6680
    %v6689 = vpack.c.b16 %v6683, %v6682
    %v6690 = vpack.c.b16 %v6685, %v6684
    %v6691 = vpack.c.b16 %v6687, %v6686
    %v6697 = vsel %vm5543, %v6667, 0
    %v6700 = vsel %vm5543, %v6669, 0
    %v6703 = vsel %vm5543, %v6671, 0
    %v6706 = vsel %vm5543, %v6670, 0
    %6708 = vmatprep.subr.bf16.mxu0 0
    %6709 = vmatpush1.bf16.msra.mxu0 %v6688
    %6710 = vmatprep.subr.bf16.mxu0 0
    %6711 = vmatpush1.bf16.msra.mxu0 %v6689
    %6712 = vmatprep.subr.bf16.mxu0 0
    %6713 = vmatpush1.bf16.msra.mxu0 %v6690
    %6714 = vmatprep.subr.bf16.mxu0 0
    %6715 = vmatpush1.bf16.msra.mxu0 %v6691
    %6716 = vmatprep.subr.bf16.mxu0 0
    %6717 = vmatpush1.bf16.msra.mxu0 0
    %6718 = vmatprep.subr.bf16.mxu0 0
    %6719 = vmatpush1.bf16.msra.mxu0 0
    %6720 = vmatprep.subr.bf16.mxu0 0
    %6721 = vmatpush1.bf16.msra.mxu0 0
    %6722 = vmatprep.subr.bf16.mxu0 0
    %6723 = vmatpush1.bf16.msra.mxu0 0
    %6724 = vmatprep.subr.bf16.mxu0 0
    %6725 = vmatpush1.bf16.msra.mxu0 0
    %6726 = vmatprep.subr.bf16.mxu0 0
    %6727 = vmatpush1.bf16.msra.mxu0 0
    %6728 = vmatprep.subr.bf16.mxu0 0
    %6729 = vmatpush1.bf16.msra.mxu0 0
    %6730 = vmatprep.subr.bf16.mxu0 0
    %6731 = vmatpush1.bf16.msra.mxu0 0
    %6732 = vmatprep.subr.bf16.mxu0 0
    %6733 = vmatpush1.bf16.msra.mxu0 0
    %6734 = vmatprep.subr.bf16.mxu0 0
    %6735 = vmatpush1.bf16.msra.mxu0 0
    %6736 = vmatprep.subr.bf16.mxu0 0
    %6737 = vmatpush1.bf16.msra.mxu0 0
    %6738 = vmatprep.subr.bf16.mxu0 0
    %6739 = vmatpush1.bf16.msra.mxu0 0
    %6740 = vmatprep.mubr.bf16.mxu0 0
    %6741 = vmatmul.mubr.bf16.gmra.mrb[0].mxu0 %v6697
    %v6742 = vpop.f32.mrb[0].mxu0
    %v6743 = vadd.f32 0.0, %v6742
    %v6744 = vpop.f32.mrb[0].mxu0
    %v6745 = vpop.f32.mrb[0].mxu0
    %v6746 = vadd.f32 0.0, %v6745
    %v6747 = vpop.f32.mrb[0].mxu0
    %6748 = vmatprep.mubr.bf16.mxu0 0
    %6749 = vmatmul.mubr.bf16.gmra.mrb[0].mxu0 %v6700
    %v6750 = vpop.f32.mrb[0].mxu0
    %v6751 = vadd.f32 0.0, %v6750
    %v6752 = vpop.f32.mrb[0].mxu0
    %v6753 = vpop.f32.mrb[0].mxu0
    %v6754 = vadd.f32 0.0, %v6753
    %v6755 = vpop.f32.mrb[0].mxu0
    %6756 = vmatprep.mubr.bf16.mxu0 0
    %6757 = vmatmul.mubr.bf16.gmra.mrb[0].mxu0 %v6703
    %v6758 = vpop.f32.mrb[0].mxu0
    %v6759 = vadd.f32 0.0, %v6758
    %v6760 = vpop.f32.mrb[0].mxu0
    %v6761 = vpop.f32.mrb[0].mxu0
    %v6762 = vadd.f32 0.0, %v6761
    %v6763 = vpop.f32.mrb[0].mxu0
    %6764 = vmatprep.mubr.bf16.mxu0 0
    %6765 = vmatmul.mubr.bf16.gmra.mrb[0].mxu0 %v6706
    %v6766 = vpop.f32.mrb[0].mxu0
    %v6767 = vadd.f32 0.0, %v6766
    %v6768 = vpop.f32.mrb[0].mxu0
    %v6769 = vpop.f32.mrb[0].mxu0
    %v6770 = vadd.f32 0.0, %v6769
    %v6771 = vpop.f32.mrb[0].mxu0
    %6772 = vdwg.mxu0
    %v6773 = vadd.f32 %v6641, %v6743
    %v6774 = vadd.f32 %v6642, %v6746
    %v6775 = vadd.f32 %v6643, %v6751
    %v6776 = vadd.f32 %v6644, %v6754
    %v6777 = vadd.f32 %v6645, %v6759
    %v6778 = vadd.f32 %v6646, %v6762
    %v6779 = vadd.f32 %v6647, %v6767
    %v6780 = vadd.f32 %v6648, %v6770
    %v6781 = vld [vmem:[#allocation7 + $0x4] sm:$0xc]
    %v6782 = vld [vmem:[#allocation7 + $0x8] sm:$0xf]
    %v6783 = vld [vmem:[#allocation7 + $0xc] sm:$0xf]
    %v6784 = vld [vmem:[#allocation7 + $0x10] sm:$0xf]
    %v6785 = vld [vmem:[#allocation7 + $0x14] sm:$0xf]
    %v6786 = vld [vmem:[#allocation7 + $0x18] sm:$0xf]
    %v6787 = vld [vmem:[#allocation7 + $0x1c] sm:$0xf]
    %v6788 = vld [vmem:[#allocation7 + $0x20] sm:$0xf]
    %v6789 = vld [vmem:[#allocation7 + $0x24] sm:$0x1]
    %v6790 = vld [vmem:[%s5 + $0xe0] sm:$0xf]
    %v6791 = vld [vmem:[%s5 + $0xe4] sm:$0xf]
    %v6792 = vld [vmem:[%s5 + $0xe8] sm:$0xf]
    %v6793 = vld [vmem:[%s5 + $0xec] sm:$0xf]
    %v6794 = vld [vmem:[%s5 + $0xf0] sm:$0xf]
    %v6795 = vld [vmem:[%s5 + $0xf4] sm:$0xf]
    %v6796 = vld [vmem:[%s5 + $0xf8] sm:$0xf]
    %v6797 = vld [vmem:[%s5 + $0xfc] sm:$0xf]
    %v6807 = vunpack.c.l.b16 %v6781
    %v6808 = vunpack.c.l.b16 %v6782
    %v6809 = vunpack.c.l.b16 %v6783
    %v6810 = vunpack.c.l.b16 %v6784
    %v6811 = vunpack.c.l.b16 %v6785
    %v6812 = vunpack.c.l.b16 %v6786
    %v6813 = vunpack.c.l.b16 %v6787
    %v6814 = vunpack.c.l.b16 %v6788
    %v6815 = vunpack.c.l.b16 %v6789
    %v6816 = vpack.c.b16 %v6808, %v6807
    %v6817 = vpack.c.b16 %v6810, %v6809
    %v6818 = vpack.c.b16 %v6812, %v6811
    %v6819 = vpack.c.b16 %v6814, %v6813
    %v6820 = vpack.c.b16 %v6815, %v6815
    %v6822 = vshrl.u32 %v6816, 16
    %v6824 = vrot.slane %v6822, 2
    %v6825 = vshll.u32 %v6816, 16
    %v6827 = vrot.slane %v6825, 3
    %v6828 = vor.u32 %v6824, %v6827
    %v6830 = vshrl.u32 %v6817, 16
    %v6832 = vrot.slane %v6830, 2
    %v6833 = vshll.u32 %v6817, 16
    %v6835 = vrot.slane %v6833, 3
    %v6836 = vor.u32 %v6832, %v6835
    %v6837 = vsel %vm4952, %v6828, %v6836
    %v6839 = vshrl.u32 %v6818, 16
    %v6841 = vrot.slane %v6839, 2
    %v6842 = vshll.u32 %v6818, 16
    %v6844 = vrot.slane %v6842, 3
    %v6845 = vor.u32 %v6841, %v6844
    %v6846 = vsel %vm4952, %v6836, %v6845
    %v6848 = vshrl.u32 %v6819, 16
    %v6850 = vrot.slane %v6848, 2
    %v6851 = vshll.u32 %v6819, 16
    %v6853 = vrot.slane %v6851, 3
    %v6854 = vor.u32 %v6850, %v6853
    %v6855 = vsel %vm4952, %v6845, %v6854
    %v6857 = vshll.u32 %v6820, 16
    %v6859 = vrot.slane %v6857, 3
    %v6860 = vsel %vm4952, %v6854, %v6859
    %v6869 = vunpack.c.l.b16 %v6790
    %v6870 = vunpack.c.l.b16 %v6791
    %v6871 = vunpack.c.l.b16 %v6792
    %v6872 = vunpack.c.l.b16 %v6793
    %v6873 = vunpack.c.l.b16 %v6794
    %v6874 = vunpack.c.l.b16 %v6795
    %v6875 = vunpack.c.l.b16 %v6796
    %v6876 = vunpack.c.l.b16 %v6797
    %v6877 = vpack.c.b16 %v6870, %v6869
    %v6878 = vpack.c.b16 %v6872, %v6871
    %v6879 = vpack.c.b16 %v6874, %v6873
    %v6880 = vpack.c.b16 %v6876, %v6875
    %v6886 = vsel %vm5543, %v6837, 0
    %v6889 = vsel %vm5543, %v6846, 0
    %v6892 = vsel %vm5543, %v6855, 0
    %v6895 = vsel %vm5543, %v6860, 0
    %6897 = vmatprep.subr.bf16.mxu0 0
    %6898 = vmatpush1.bf16.msra.mxu0 %v6877
    %6899 = vmatprep.subr.bf16.mxu0 0
    %6900 = vmatpush1.bf16.msra.mxu0 %v6878
    %6901 = vmatprep.subr.bf16.mxu0 0
    %6902 = vmatpush1.bf16.msra.mxu0 %v6879
    %6903 = vmatprep.subr.bf16.mxu0 0
    %6904 = vmatpush1.bf16.msra.mxu0 %v6880
    %6905 = vmatprep.subr.bf16.mxu0 0
    %6906 = vmatpush1.bf16.msra.mxu0 0
    %6907 = vmatprep.subr.bf16.mxu0 0
    %6908 = vmatpush1.bf16.msra.mxu0 0
    %6909 = vmatprep.subr.bf16.mxu0 0
    %6910 = vmatpush1.bf16.msra.mxu0 0
    %6911 = vmatprep.subr.bf16.mxu0 0
    %6912 = vmatpush1.bf16.msra.mxu0 0
    %6913 = vmatprep.subr.bf16.mxu0 0
    %6914 = vmatpush1.bf16.msra.mxu0 0
    %6915 = vmatprep.subr.bf16.mxu0 0
    %6916 = vmatpush1.bf16.msra.mxu0 0
    %6917 = vmatprep.subr.bf16.mxu0 0
    %6918 = vmatpush1.bf16.msra.mxu0 0
    %6919 = vmatprep.subr.bf16.mxu0 0
    %6920 = vmatpush1.bf16.msra.mxu0 0
    %6921 = vmatprep.subr.bf16.mxu0 0
    %6922 = vmatpush1.bf16.msra.mxu0 0
    %6923 = vmatprep.subr.bf16.mxu0 0
    %6924 = vmatpush1.bf16.msra.mxu0 0
    %6925 = vmatprep.subr.bf16.mxu0 0
    %6926 = vmatpush1.bf16.msra.mxu0 0
    %6927 = vmatprep.subr.bf16.mxu0 0
    %6928 = vmatpush1.bf16.msra.mxu0 0
    %6929 = vmatprep.mubr.bf16.mxu0 0
    %6930 = vmatmul.mubr.bf16.gmra.mrb[0].mxu0 %v6886
    %v6931 = vpop.f32.mrb[0].mxu0
    %v6932 = vadd.f32 0.0, %v6931
    %v6933 = vpop.f32.mrb[0].mxu0
    %v6934 = vpop.f32.mrb[0].mxu0
    %v6935 = vadd.f32 0.0, %v6934
    %v6936 = vpop.f32.mrb[0].mxu0
    %6937 = vmatprep.mubr.bf16.mxu0 0
    %6938 = vmatmul.mubr.bf16.gmra.mrb[0].mxu0 %v6889
    %v6939 = vpop.f32.mrb[0].mxu0
    %v6940 = vadd.f32 0.0, %v6939
    %v6941 = vpop.f32.mrb[0].mxu0
    %v6942 = vpop.f32.mrb[0].mxu0
    %v6943 = vadd.f32 0.0, %v6942
    %v6944 = vpop.f32.mrb[0].mxu0
    %6945 = vmatprep.mubr.bf16.mxu0 0
    %6946 = vmatmul.mubr.bf16.gmra.mrb[0].mxu0 %v6892
    %v6947 = vpop.f32.mrb[0].mxu0
    %v6948 = vadd.f32 0.0, %v6947
    %v6949 = vpop.f32.mrb[0].mxu0
    %v6950 = vpop.f32.mrb[0].mxu0
    %v6951 = vadd.f32 0.0, %v6950
    %v6952 = vpop.f32.mrb[0].mxu0
    %6953 = vmatprep.mubr.bf16.mxu0 0
    %6954 = vmatmul.mubr.bf16.gmra.mrb[0].mxu0 %v6895
    %v6955 = vpop.f32.mrb[0].mxu0
    %v6956 = vadd.f32 0.0, %v6955
    %v6957 = vpop.f32.mrb[0].mxu0
    %v6958 = vpop.f32.mrb[0].mxu0
    %v6959 = vadd.f32 0.0, %v6958
    %v6960 = vpop.f32.mrb[0].mxu0
    %6961 = vdwg.mxu0
    %v6962 = vadd.f32 %v6773, %v6932
    %v6963 = vadd.f32 %v6774, %v6935
    %v6964 = vadd.f32 %v6775, %v6940
    %v6965 = vadd.f32 %v6776, %v6943
    %v6966 = vadd.f32 %v6777, %v6948
    %v6967 = vadd.f32 %v6778, %v6951
    %v6968 = vadd.f32 %v6779, %v6956
    %v6969 = vadd.f32 %v6780, %v6959
    %v6970 = vld [vmem:[#allocation7 + $0x4] sm:$0x8]
    %v6971 = vld [vmem:[%s5 + $0x100] sm:$0xf]
    %v6972 = vld [vmem:[%s5 + $0x104] sm:$0xf]
    %v6973 = vld [vmem:[%s5 + $0x108] sm:$0xf]
    %v6974 = vld [vmem:[%s5 + $0x10c] sm:$0xf]
    %v6975 = vld [vmem:[%s5 + $0x110] sm:$0xf]
    %v6976 = vld [vmem:[%s5 + $0x114] sm:$0xf]
    %v6977 = vld [vmem:[%s5 + $0x118] sm:$0xf]
    %v6978 = vld [vmem:[%s5 + $0x11c] sm:$0xf]
    %v6980 = vunpack.c.l.b16 %v6970
    %v6981 = vpack.c.b16 %v6808, %v6980
    %v6982 = vrot.slane %v6981, 3
    %v6983 = vrot.slane %v6817, 3
    %v6984 = vsel %vm5267, %v6982, %v6983
    %v6985 = vrot.slane %v6818, 3
    %v6986 = vsel %vm5267, %v6983, %v6985
    %v6987 = vrot.slane %v6819, 3
    %v6988 = vsel %vm5267, %v6985, %v6987
    %v6989 = vrot.slane %v6820, 3
    %v6990 = vsel %vm5267, %v6987, %v6989
    %v6999 = vunpack.c.l.b16 %v6971
    %v7000 = vunpack.c.l.b16 %v6972
    %v7001 = vunpack.c.l.b16 %v6973
    %v7002 = vunpack.c.l.b16 %v6974
    %v7003 = vunpack.c.l.b16 %v6975
    %v7004 = vunpack.c.l.b16 %v6976
    %v7005 = vunpack.c.l.b16 %v6977
    %v7006 = vunpack.c.l.b16 %v6978
    %v7007 = vpack.c.b16 %v7000, %v6999
    %v7008 = vpack.c.b16 %v7002, %v7001
    %v7009 = vpack.c.b16 %v7004, %v7003
    %v7010 = vpack.c.b16 %v7006, %v7005
    %v7016 = vsel %vm5543, %v6984, 0
    %v7019 = vsel %vm5543, %v6986, 0
    %v7022 = vsel %vm5543, %v6988, 0
    %v7025 = vsel %vm5543, %v6990, 0
    %7027 = vmatprep.subr.bf16.mxu0 0
    %7028 = vmatpush1.bf16.msra.mxu0 %v7007
    %7029 = vmatprep.subr.bf16.mxu0 0
    %7030 = vmatpush1.bf16.msra.mxu0 %v7008
    %7031 = vmatprep.subr.bf16.mxu0 0
    %7032 = vmatpush1.bf16.msra.mxu0 %v7009
    %7033 = vmatprep.subr.bf16.mxu0 0
    %7034 = vmatpush1.bf16.msra.mxu0 %v7010
    %7035 = vmatprep.subr.bf16.mxu0 0
    %7036 = vmatpush1.bf16.msra.mxu0 0
    %7037 = vmatprep.subr.bf16.mxu0 0
    %7038 = vmatpush1.bf16.msra.mxu0 0
    %7039 = vmatprep.subr.bf16.mxu0 0
    %7040 = vmatpush1.bf16.msra.mxu0 0
    %7041 = vmatprep.subr.bf16.mxu0 0
    %7042 = vmatpush1.bf16.msra.mxu0 0
    %7043 = vmatprep.subr.bf16.mxu0 0
    %7044 = vmatpush1.bf16.msra.mxu0 0
    %7045 = vmatprep.subr.bf16.mxu0 0
    %7046 = vmatpush1.bf16.msra.mxu0 0
    %7047 = vmatprep.subr.bf16.mxu0 0
    %7048 = vmatpush1.bf16.msra.mxu0 0
    %7049 = vmatprep.subr.bf16.mxu0 0
    %7050 = vmatpush1.bf16.msra.mxu0 0
    %7051 = vmatprep.subr.bf16.mxu0 0
    %7052 = vmatpush1.bf16.msra.mxu0 0
    %7053 = vmatprep.subr.bf16.mxu0 0
    %7054 = vmatpush1.bf16.msra.mxu0 0
    %7055 = vmatprep.subr.bf16.mxu0 0
    %7056 = vmatpush1.bf16.msra.mxu0 0
    %7057 = vmatprep.subr.bf16.mxu0 0
    %7058 = vmatpush1.bf16.msra.mxu0 0
    %7059 = vmatprep.mubr.bf16.mxu0 0
    %7060 = vmatmul.mubr.bf16.gmra.mrb[0].mxu0 %v7016
    %v7061 = vpop.f32.mrb[0].mxu0
    %v7062 = vadd.f32 0.0, %v7061
    %v7063 = vpop.f32.mrb[0].mxu0
    %v7064 = vpop.f32.mrb[0].mxu0
    %v7065 = vadd.f32 0.0, %v7064
    %v7066 = vpop.f32.mrb[0].mxu0
    %7067 = vmatprep.mubr.bf16.mxu0 0
    %7068 = vmatmul.mubr.bf16.gmra.mrb[0].mxu0 %v7019
    %v7069 = vpop.f32.mrb[0].mxu0
    %v7070 = vadd.f32 0.0, %v7069
    %v7071 = vpop.f32.mrb[0].mxu0
    %v7072 = vpop.f32.mrb[0].mxu0
    %v7073 = vadd.f32 0.0, %v7072
    %v7074 = vpop.f32.mrb[0].mxu0
    %7075 = vmatprep.mubr.bf16.mxu0 0
    %7076 = vmatmul.mubr.bf16.gmra.mrb[0].mxu0 %v7022
    %v7077 = vpop.f32.mrb[0].mxu0
    %v7078 = vadd.f32 0.0, %v7077
    %v7079 = vpop.f32.mrb[0].mxu0
    %v7080 = vpop.f32.mrb[0].mxu0
    %v7081 = vadd.f32 0.0, %v7080
    %v7082 = vpop.f32.mrb[0].mxu0
    %7083 = vmatprep.mubr.bf16.mxu0 0
    %7084 = vmatmul.mubr.bf16.gmra.mrb[0].mxu0 %v7025
    %v7085 = vpop.f32.mrb[0].mxu0
    %v7086 = vadd.f32 0.0, %v7085
    %v7087 = vpop.f32.mrb[0].mxu0
    %v7088 = vpop.f32.mrb[0].mxu0
    %v7089 = vadd.f32 0.0, %v7088
    %v7090 = vpop.f32.mrb[0].mxu0
    %7091 = vdwg.mxu0
    %v7092 = vadd.f32 %v6962, %v7062
    %v7093 = vadd.f32 %v6963, %v7065
    %v7094 = vadd.f32 %v6964, %v7070
    %v7095 = vadd.f32 %v6965, %v7073
    %v7096 = vadd.f32 %v6966, %v7078
    %v7097 = vadd.f32 %v6967, %v7081
    %v7098 = vadd.f32 %v6968, %v7086
    %v7099 = vadd.f32 %v6969, %v7089
    %v7100 = vld [vmem:[%s6] sm:$0x1]
    %v7102 = vlaneseq
    %v7103 = vshrl.u32 %v7102, 7
    %v7104 = vsub.s32 0, %v7103
    %v7105 = vrot.slane %v7100, %v7104
    %v7107 = vadd.f32 %v7092, %v7105
    %v7108 = vadd.f32 %v7093, %v7105
    %v7109 = vadd.f32 %v7094, %v7105
    %v7110 = vadd.f32 %v7095, %v7105
    %v7111 = vadd.f32 %v7096, %v7105
    %v7112 = vadd.f32 %v7097, %v7105
    %v7113 = vadd.f32 %v7098, %v7105
    %v7114 = vadd.f32 %v7099, %v7105
    %v7115 = vmax.f32 %v7107, 0.0
    %v7116 = vmax.f32 %v7108, 0.0
    %v7117 = vmax.f32 %v7109, 0.0
    %v7118 = vmax.f32 %v7110, 0.0
    %v7119 = vmax.f32 %v7111, 0.0
    %v7120 = vmax.f32 %v7112, 0.0
    %v7121 = vmax.f32 %v7113, 0.0
    %v7122 = vmax.f32 %v7114, 0.0
    %7123 = vst [vmem:[#allocation4] sm:$0xff] %v7115
    %7124 = vst [vmem:[#allocation4 + $0x8] sm:$0xff] %v7116
    %7125 = vst [vmem:[#allocation4 + $0x10] sm:$0xff] %v7117
    %7126 = vst [vmem:[#allocation4 + $0x18] sm:$0xff] %v7118
    %7127 = vst [vmem:[#allocation4 + $0x20] sm:$0xff] %v7119
    %7128 = vst [vmem:[#allocation4 + $0x28] sm:$0xff] %v7120
    %7129 = vst [vmem:[#allocation4 + $0x30] sm:$0xff] %v7121
    %7130 = vst [vmem:[#allocation4 + $0x38] sm:$0xf] %v7122
    %v7131 = vld [vmem:[#allocation4] sm:$0xf]
    %v7132 = vld [vmem:[#allocation4 + $0x6] sm:$0xf]
    %v7133 = vmax.f32 %v7131, %v7132
    %7134 = vst [vmem:[#allocation4] sm:$0xf] %v7133
    %v7135 = vld [vmem:[#allocation4] ss:$2 sm:$0x3]
    %s7136 = scalar_lea.vmem [#allocation4], 1
    %v7137 = vld [vmem:[%s7136] ss:$2 sm:$0x3]
    %v7138 = vmax.f32 %v7135, %v7137
    %v7139 = vpack.c.bf16 %v7138, %v7138
    %v7141 = vunpack.c.l.b16 %v7139
    %v7142 = vpack.c.b16 %v7141, %v7141
    %v7144 = vshrl.u32 %v7142, 16
    %v7146 = vrot.slane %v7144, 5
    %v7147 = vshll.u32 %v7142, 16
    %v7149 = vrot.slane %v7147, 6
    %v7150 = vor.u32 %v7146, %v7149
    %vm7152 = vcmask 1043458
    %vm7153 = vsmask.f32 3338
    %vm7154 = vmand %vm7152, %vm7153
    %v7155 = vld [vmem:[#allocation8] sm:$0xc]
    %v7156 = vsel %vm7154, %v7150, %v7155
    %7157 = vst [vmem:[#allocation8] sm:$0xc] %v7156
    %v7158 = vld [vmem:[#allocation4 + $0xc] sm:$0xf]
    %v7159 = vld [vmem:[#allocation4 + $0x12] sm:$0xf]
    %v7160 = vmax.f32 %v7158, %v7159
    %7161 = vst [vmem:[#allocation4 + $0xc] sm:$0xf] %v7160
    %s7162 = scalar_lea.vmem [#allocation4], 12
    %v7163 = vld [vmem:[%s7162] ss:$2 sm:$0x3]
    %s7164 = scalar_lea.vmem [#allocation4], 13
    %v7165 = vld [vmem:[%s7164] ss:$2 sm:$0x3]
    %v7166 = vmax.f32 %v7163, %v7165
    %v7167 = vpack.c.bf16 %v7166, %v7166
    %v7169 = vunpack.c.l.b16 %v7167
    %v7170 = vpack.c.b16 %v7169, %v7169
    %v7172 = vshrl.u32 %v7170, 16
    %v7174 = vrot.slane %v7172, 7
    %v7175 = vshll.u32 %v7170, 16
    %v7177 = vor.u32 %v7174, %v7175
    %vm7179 = vcmask 1041408
    %vm7180 = vsmask.f32 1282
    %vm7181 = vmand %vm7179, %vm7180
    %v7182 = vld [vmem:[#allocation8 + $0x4] sm:$0x3]
    %v7183 = vsel %vm7181, %v7177, %v7182
    %7184 = vst [vmem:[#allocation8 + $0x4] sm:$0x3] %v7183
    %v7185 = vld [vmem:[#allocation4 + $0x24] sm:$0xf]
    %v7186 = vld [vmem:[#allocation4 + $0x2a] sm:$0xf]
    %v7187 = vmax.f32 %v7185, %v7186
    %7188 = vst [vmem:[#allocation4 + $0x24] sm:$0xf] %v7187
    %s7189 = scalar_lea.vmem [#allocation4], 36
    %v7190 = vld [vmem:[%s7189] ss:$2 sm:$0x3]
    %s7191 = scalar_lea.vmem [#allocation4], 37
    %v7192 = vld [vmem:[%s7191] ss:$2 sm:$0x3]
    %v7193 = vmax.f32 %v7190, %v7192
    %v7194 = vpack.c.bf16 %v7193, %v7193
    %v7196 = vunpack.c.l.b16 %v7194
    %v7197 = vpack.c.b16 %v7196, %v7196
    %v7199 = vshrl.u32 %v7197, 16
    %v7201 = vrot.slane %v7199, 5
    %v7202 = vshll.u32 %v7197, 16
    %v7204 = vrot.slane %v7202, 6
    %v7205 = vor.u32 %v7201, %v7204
    %v7207 = vld [vmem:[#allocation8 + $0x8] sm:$0xc]
    %v7208 = vsel %vm7154, %v7205, %v7207
    %7209 = vst [vmem:[#allocation8 + $0x8] sm:$0xc] %v7208
    %v7210 = vld [vmem:[#allocation4 + $0x30] sm:$0xf]
    %v7211 = vld [vmem:[#allocation4 + $0x36] sm:$0xf]
    %v7212 = vmax.f32 %v7210, %v7211
    %7213 = vst [vmem:[#allocation4 + $0x30] sm:$0xf] %v7212
    %s7214 = scalar_lea.vmem [#allocation4], 48
    %v7215 = vld [vmem:[%s7214] ss:$2 sm:$0x3]
    %s7216 = scalar_lea.vmem [#allocation4], 49
    %v7217 = vld [vmem:[%s7216] ss:$2 sm:$0x3]
    %v7218 = vmax.f32 %v7215, %v7217
    %v7219 = vpack.c.bf16 %v7218, %v7218
    %v7221 = vunpack.c.l.b16 %v7219
    %v7222 = vpack.c.b16 %v7221, %v7221
    %v7224 = vshrl.u32 %v7222, 16
    %v7226 = vrot.slane %v7224, 7
    %v7227 = vshll.u32 %v7222, 16
    %v7229 = vor.u32 %v7226, %v7227
    %v7231 = vld [vmem:[#allocation8 + $0xc] sm:$0x3]
    %v7232 = vsel %vm7181, %v7229, %v7231
    %7233 = vst [vmem:[#allocation8 + $0xc] sm:$0x3] %v7232
    %s7234 = smul.u32 4, 144
    %s7235 = smul.u32 %s7234, 2
    %s7236 = sshll.u32 %s7235, 4
    %7237 = dma.done [#allocation10], %s7236
    %v7238 = vld [vmem:[#allocation8] sm:$0xf]
    %v7239 = vld [vmem:[#allocation8 + $0x4] sm:$0xf]
    %v7240 = vld [vmem:[#allocation8 + $0x8] sm:$0xf]
    %v7241 = vld [vmem:[#allocation9] sm:$0xff]
    %v7242 = vld [vmem:[#allocation9 + $0x8] sm:$0xff]
    %v7243 = vld [vmem:[#allocation9 + $0x10] sm:$0xff]
    %v7244 = vld [vmem:[#allocation9 + $0x18] sm:$0xff]
    %v7245 = vld [vmem:[#allocation9 + $0x20] sm:$0xff]
    %v7246 = vld [vmem:[#allocation9 + $0x28] sm:$0xff]
    %v7247 = vld [vmem:[#allocation9 + $0x30] sm:$0xff]
    %v7248 = vld [vmem:[#allocation9 + $0x38] sm:$0xff]
    %v7249 = vld [vmem:[#allocation9 + $0x40] sm:$0xff]
    %v7250 = vld [vmem:[#allocation9 + $0x48] sm:$0xff]
    %v7251 = vld [vmem:[#allocation9 + $0x50] sm:$0xff]
    %v7252 = vld [vmem:[#allocation9 + $0x58] sm:$0xff]
    %v7253 = vld [vmem:[#allocation9 + $0x60] sm:$0xff]
    %v7254 = vld [vmem:[#allocation9 + $0x68] sm:$0xff]
    %v7255 = vld [vmem:[#allocation9 + $0x70] sm:$0xff]
    %v7256 = vld [vmem:[#allocation9 + $0x78] sm:$0xff]
    %v7257 = vld [vmem:[#allocation8 + $0xc] sm:$0x1]
    %v7258 = vld [vmem:[#allocation9 + $0x80] sm:$0xff]
    %v7259 = vld [vmem:[#allocation9 + $0x88] sm:$0xff]
    %v7260 = vld [vmem:[#allocation9 + $0x90] sm:$0xff]
    %v7261 = vld [vmem:[#allocation9 + $0x98] sm:$0xff]
    %v7262 = vld [vmem:[#allocation9 + $0xa0] sm:$0xff]
    %v7263 = vld [vmem:[#allocation9 + $0xa8] sm:$0xff]
    %v7264 = vld [vmem:[#allocation9 + $0xb0] sm:$0xff]
    %v7265 = vld [vmem:[#allocation9 + $0xb8] sm:$0xff]
    %v7266 = vld [vmem:[#allocation9 + $0xc0] sm:$0xff]
    %v7267 = vld [vmem:[#allocation9 + $0xc8] sm:$0xff]
    %v7268 = vld [vmem:[#allocation9 + $0xd0] sm:$0xff]
    %v7269 = vld [vmem:[#allocation9 + $0xd8] sm:$0xff]
    %v7270 = vld [vmem:[#allocation9 + $0xe0] sm:$0xff]
    %v7271 = vld [vmem:[#allocation9 + $0xe8] sm:$0xff]
    %v7272 = vld [vmem:[#allocation9 + $0xf0] sm:$0xff]
    %v7273 = vld [vmem:[#allocation9 + $0xf8] sm:$0xff]
    %v7278 = vunpack.c.l.b16 %v7238
    %v7279 = vunpack.c.l.b16 %v7239
    %v7280 = vunpack.c.l.b16 %v7240
    %v7281 = vunpack.c.l.b16 %v7257
    %v7282 = vpack.c.b16 %v7279, %v7278
    %v7283 = vpack.c.b16 %v7281, %v7280
    %v7285 = vshrl.u32 %v7282, 16
    %v7287 = vshll.u32 %v7282, 16
    %v7289 = vrot.slane %v7287, 1
    %v7290 = vor.u32 %v7285, %v7289
    %v7292 = vshll.u32 %v7283, 16
    %v7294 = vrot.slane %v7292, 1
    %v7295 = vsel %vm3033, %v7290, %v7294
    %v7296 = vshrl.u32 %v7283, 16
    %v7298 = vor.u32 %v7296, %v7294
    %7301 = vmatprep.subr.bf16.mxu0 %v7259
    %7302 = vmatpush1.bf16.msra.mxu0 %v7258
    %7303 = vmatprep.subr.bf16.mxu0 %v7261
    %7304 = vmatpush1.bf16.msra.mxu0 %v7260
    %7305 = vmatprep.subr.bf16.mxu0 %v7263
    %7306 = vmatpush1.bf16.msra.mxu0 %v7262
    %7307 = vmatprep.subr.bf16.mxu0 %v7265
    %7308 = vmatpush1.bf16.msra.mxu0 %v7264
    %7309 = vmatprep.subr.bf16.mxu0 %v7267
    %7310 = vmatpush1.bf16.msra.mxu0 %v7266
    %7311 = vmatprep.subr.bf16.mxu0 %v7269
    %7312 = vmatpush1.bf16.msra.mxu0 %v7268
    %7313 = vmatprep.subr.bf16.mxu0 %v7271
    %7314 = vmatpush1.bf16.msra.mxu0 %v7270
    %7315 = vmatprep.subr.bf16.mxu0 %v7273
    %7316 = vmatpush1.bf16.msra.mxu0 %v7272
    %7317 = vmatprep.subr.bf16.mxu0 0
    %7318 = vmatpush1.bf16.msra.mxu0 0
    %7319 = vmatprep.subr.bf16.mxu0 0
    %7320 = vmatpush1.bf16.msra.mxu0 0
    %7321 = vmatprep.subr.bf16.mxu0 0
    %7322 = vmatpush1.bf16.msra.mxu0 0
    %7323 = vmatprep.subr.bf16.mxu0 0
    %7324 = vmatpush1.bf16.msra.mxu0 0
    %7325 = vmatprep.subr.bf16.mxu0 0
    %7326 = vmatpush1.bf16.msra.mxu0 0
    %7327 = vmatprep.subr.bf16.mxu0 0
    %7328 = vmatpush1.bf16.msra.mxu0 0
    %7329 = vmatprep.subr.bf16.mxu0 0
    %7330 = vmatpush1.bf16.msra.mxu0 0
    %7331 = vmatprep.subr.bf16.mxu0 0
    %7332 = vmatpush1.bf16.msra.mxu0 0
    %7333 = vmatprep.mubr.bf16.mxu0 0
    %7334 = vmatmul.mubr.bf16.gmra.mrb[0].mxu0 %v7295
    %v7335 = vpop.f32.mrb[0].mxu0
    %v7336 = vadd.f32 0.0, %v7335
    %v7337 = vpop.f32.mrb[0].mxu0
    %v7338 = vadd.f32 0.0, %v7337
    %v7339 = vpop.f32.mrb[0].mxu0
    %v7340 = vadd.f32 0.0, %v7339
    %v7341 = vpop.f32.mrb[0].mxu0
    %v7342 = vadd.f32 0.0, %v7341
    %7343 = vmatprep.mubr.bf16.mxu0 0
    %7344 = vmatmul.mubr.bf16.gmra.mrb[0].mxu0 %v7298
    %v7345 = vpop.f32.mrb[0].mxu0
    %v7346 = vadd.f32 0.0, %v7345
    %v7347 = vpop.f32.mrb[0].mxu0
    %v7348 = vadd.f32 0.0, %v7347
    %v7349 = vpop.f32.mrb[0].mxu0
    %v7350 = vpop.f32.mrb[0].mxu0
    %7351 = vdwg.mxu0
    %v7352 = vpack.c.b16 %v7280, %v7280
    %7355 = vmatprep.subr.bf16.mxu0 %v7242
    %7356 = vmatpush1.bf16.msra.mxu0 %v7241
    %7357 = vmatprep.subr.bf16.mxu0 %v7244
    %7358 = vmatpush1.bf16.msra.mxu0 %v7243
    %7359 = vmatprep.subr.bf16.mxu0 %v7246
    %7360 = vmatpush1.bf16.msra.mxu0 %v7245
    %7361 = vmatprep.subr.bf16.mxu0 %v7248
    %7362 = vmatpush1.bf16.msra.mxu0 %v7247
    %7363 = vmatprep.subr.bf16.mxu0 %v7250
    %7364 = vmatpush1.bf16.msra.mxu0 %v7249
    %7365 = vmatprep.subr.bf16.mxu0 %v7252
    %7366 = vmatpush1.bf16.msra.mxu0 %v7251
    %7367 = vmatprep.subr.bf16.mxu0 %v7254
    %7368 = vmatpush1.bf16.msra.mxu0 %v7253
    %7369 = vmatprep.subr.bf16.mxu0 %v7256
    %7370 = vmatpush1.bf16.msra.mxu0 %v7255
    %7371 = vmatprep.subr.bf16.mxu0 0
    %7372 = vmatpush1.bf16.msra.mxu0 0
    %7373 = vmatprep.subr.bf16.mxu0 0
    %7374 = vmatpush1.bf16.msra.mxu0 0
    %7375 = vmatprep.subr.bf16.mxu0 0
    %7376 = vmatpush1.bf16.msra.mxu0 0
    %7377 = vmatprep.subr.bf16.mxu0 0
    %7378 = vmatpush1.bf16.msra.mxu0 0
    %7379 = vmatprep.subr.bf16.mxu0 0
    %7380 = vmatpush1.bf16.msra.mxu0 0
    %7381 = vmatprep.subr.bf16.mxu0 0
    %7382 = vmatpush1.bf16.msra.mxu0 0
    %7383 = vmatprep.subr.bf16.mxu0 0
    %7384 = vmatpush1.bf16.msra.mxu0 0
    %7385 = vmatprep.subr.bf16.mxu0 0
    %7386 = vmatpush1.bf16.msra.mxu0 0
    %7387 = vmatprep.mubr.bf16.mxu0 0
    %7388 = vmatmul.mubr.bf16.gmra.mrb[0].mxu0 %v7282
    %v7389 = vpop.f32.mrb[0].mxu0
    %v7390 = vadd.f32 %v7336, %v7389
    %v7391 = vpop.f32.mrb[0].mxu0
    %v7392 = vadd.f32 %v7338, %v7391
    %v7393 = vpop.f32.mrb[0].mxu0
    %v7394 = vadd.f32 %v7340, %v7393
    %v7395 = vpop.f32.mrb[0].mxu0
    %v7396 = vadd.f32 %v7342, %v7395
    %7397 = vmatprep.mubr.bf16.mxu0 0
    %7398 = vmatmul.mubr.bf16.gmra.mrb[0].mxu0 %v7352
    %v7399 = vpop.f32.mrb[0].mxu0
    %v7400 = vadd.f32 %v7346, %v7399
    %v7401 = vpop.f32.mrb[0].mxu0
    %v7402 = vadd.f32 %v7348, %v7401
    %v7403 = vpop.f32.mrb[0].mxu0
    %v7404 = vpop.f32.mrb[0].mxu0
    %7405 = vdwg.mxu0
    %v7406 = vld [vmem:[#allocation8] sm:$0xe]
    %v7407 = vld [vmem:[#allocation9 + $0x100] sm:$0xff]
    %v7408 = vld [vmem:[#allocation9 + $0x108] sm:$0xff]
    %v7409 = vld [vmem:[#allocation9 + $0x110] sm:$0xff]
    %v7410 = vld [vmem:[#allocation9 + $0x118] sm:$0xff]
    %v7411 = vld [vmem:[#allocation9 + $0x120] sm:$0xff]
    %v7412 = vld [vmem:[#allocation9 + $0x128] sm:$0xff]
    %v7413 = vld [vmem:[#allocation9 + $0x130] sm:$0xff]
    %v7414 = vld [vmem:[#allocation9 + $0x138] sm:$0xff]
    %v7415 = vld [vmem:[#allocation9 + $0x140] sm:$0xff]
    %v7416 = vld [vmem:[#allocation9 + $0x148] sm:$0xff]
    %v7417 = vld [vmem:[#allocation9 + $0x150] sm:$0xff]
    %v7418 = vld [vmem:[#allocation9 + $0x158] sm:$0xff]
    %v7419 = vld [vmem:[#allocation9 + $0x160] sm:$0xff]
    %v7420 = vld [vmem:[#allocation9 + $0x168] sm:$0xff]
    %v7421 = vld [vmem:[#allocation9 + $0x170] sm:$0xff]
    %v7422 = vld [vmem:[#allocation9 + $0x178] sm:$0xff]
    %v7424 = vunpack.c.l.b16 %v7406
    %v7425 = vpack.c.b16 %v7279, %v7424
    %v7426 = vrot.slane %v7425, 1
    %v7427 = vrot.slane %v7283, 1
    %v7428 = vsel %vm3481, %v7426, %v7427
    %7431 = vmatprep.subr.bf16.mxu0 %v7408
    %7432 = vmatpush1.bf16.msra.mxu0 %v7407
    %7433 = vmatprep.subr.bf16.mxu0 %v7410
    %7434 = vmatpush1.bf16.msra.mxu0 %v7409
    %7435 = vmatprep.subr.bf16.mxu0 %v7412
    %7436 = vmatpush1.bf16.msra.mxu0 %v7411
    %7437 = vmatprep.subr.bf16.mxu0 %v7414
    %7438 = vmatpush1.bf16.msra.mxu0 %v7413
    %7439 = vmatprep.subr.bf16.mxu0 %v7416
    %7440 = vmatpush1.bf16.msra.mxu0 %v7415
    %7441 = vmatprep.subr.bf16.mxu0 %v7418
    %7442 = vmatpush1.bf16.msra.mxu0 %v7417
    %7443 = vmatprep.subr.bf16.mxu0 %v7420
    %7444 = vmatpush1.bf16.msra.mxu0 %v7419
    %7445 = vmatprep.subr.bf16.mxu0 %v7422
    %7446 = vmatpush1.bf16.msra.mxu0 %v7421
    %7447 = vmatprep.subr.bf16.mxu0 0
    %7448 = vmatpush1.bf16.msra.mxu0 0
    %7449 = vmatprep.subr.bf16.mxu0 0
    %7450 = vmatpush1.bf16.msra.mxu0 0
    %7451 = vmatprep.subr.bf16.mxu0 0
    %7452 = vmatpush1.bf16.msra.mxu0 0
    %7453 = vmatprep.subr.bf16.mxu0 0
    %7454 = vmatpush1.bf16.msra.mxu0 0
    %7455 = vmatprep.subr.bf16.mxu0 0
    %7456 = vmatpush1.bf16.msra.mxu0 0
    %7457 = vmatprep.subr.bf16.mxu0 0
    %7458 = vmatpush1.bf16.msra.mxu0 0
    %7459 = vmatprep.subr.bf16.mxu0 0
    %7460 = vmatpush1.bf16.msra.mxu0 0
    %7461 = vmatprep.subr.bf16.mxu0 0
    %7462 = vmatpush1.bf16.msra.mxu0 0
    %7463 = vmatprep.mubr.bf16.mxu0 0
    %7464 = vmatmul.mubr.bf16.gmra.mrb[0].mxu0 %v7428
    %v7465 = vpop.f32.mrb[0].mxu0
    %v7466 = vadd.f32 0.0, %v7465
    %v7467 = vpop.f32.mrb[0].mxu0
    %v7468 = vadd.f32 0.0, %v7467
    %v7469 = vpop.f32.mrb[0].mxu0
    %v7470 = vadd.f32 0.0, %v7469
    %v7471 = vpop.f32.mrb[0].mxu0
    %v7472 = vadd.f32 0.0, %v7471
    %7473 = vmatprep.mubr.bf16.mxu0 0
    %7474 = vmatmul.mubr.bf16.gmra.mrb[0].mxu0 %v7427
    %v7475 = vpop.f32.mrb[0].mxu0
    %v7476 = vadd.f32 0.0, %v7475
    %v7477 = vpop.f32.mrb[0].mxu0
    %v7478 = vadd.f32 0.0, %v7477
    %v7479 = vpop.f32.mrb[0].mxu0
    %v7480 = vpop.f32.mrb[0].mxu0
    %7481 = vdwg.mxu0
    %v7482 = vadd.f32 %v7390, %v7466
    %v7483 = vadd.f32 %v7392, %v7468
    %v7484 = vadd.f32 %v7394, %v7470
    %v7485 = vadd.f32 %v7396, %v7472
    %v7486 = vadd.f32 %v7400, %v7476
    %v7487 = vadd.f32 %v7402, %v7478
    %v7488 = vld [vmem:[#allocation8] sm:$0xc]
    %v7489 = vld [vmem:[#allocation8 + $0xc] sm:$0x3]
    %v7490 = vld [vmem:[#allocation9 + $0x180] sm:$0xff]
    %v7491 = vld [vmem:[#allocation9 + $0x188] sm:$0xff]
    %v7492 = vld [vmem:[#allocation9 + $0x190] sm:$0xff]
    %v7493 = vld [vmem:[#allocation9 + $0x198] sm:$0xff]
    %v7494 = vld [vmem:[#allocation9 + $0x1a0] sm:$0xff]
    %v7495 = vld [vmem:[#allocation9 + $0x1a8] sm:$0xff]
    %v7496 = vld [vmem:[#allocation9 + $0x1b0] sm:$0xff]
    %v7497 = vld [vmem:[#allocation9 + $0x1b8] sm:$0xff]
    %v7498 = vld [vmem:[#allocation9 + $0x1c0] sm:$0xff]
    %v7499 = vld [vmem:[#allocation9 + $0x1c8] sm:$0xff]
    %v7500 = vld [vmem:[#allocation9 + $0x1d0] sm:$0xff]
    %v7501 = vld [vmem:[#allocation9 + $0x1d8] sm:$0xff]
    %v7502 = vld [vmem:[#allocation9 + $0x1e0] sm:$0xff]
    %v7503 = vld [vmem:[#allocation9 + $0x1e8] sm:$0xff]
    %v7504 = vld [vmem:[#allocation9 + $0x1f0] sm:$0xff]
    %v7505 = vld [vmem:[#allocation9 + $0x1f8] sm:$0xff]
    %v7508 = vunpack.c.l.b16 %v7488
    %v7509 = vunpack.c.l.b16 %v7489
    %v7510 = vpack.c.b16 %v7279, %v7508
    %v7511 = vpack.c.b16 %v7509, %v7280
    %v7512 = vrot.slane %v7510, 2
    %v7513 = vrot.slane %v7511, 2
    %v7514 = vsel %vm4334, %v7512, %v7513
    %7517 = vmatprep.subr.bf16.mxu0 %v7491
    %7518 = vmatpush1.bf16.msra.mxu0 %v7490
    %7519 = vmatprep.subr.bf16.mxu0 %v7493
    %7520 = vmatpush1.bf16.msra.mxu0 %v7492
    %7521 = vmatprep.subr.bf16.mxu0 %v7495
    %7522 = vmatpush1.bf16.msra.mxu0 %v7494
    %7523 = vmatprep.subr.bf16.mxu0 %v7497
    %7524 = vmatpush1.bf16.msra.mxu0 %v7496
    %7525 = vmatprep.subr.bf16.mxu0 %v7499
    %7526 = vmatpush1.bf16.msra.mxu0 %v7498
    %7527 = vmatprep.subr.bf16.mxu0 %v7501
    %7528 = vmatpush1.bf16.msra.mxu0 %v7500
    %7529 = vmatprep.subr.bf16.mxu0 %v7503
    %7530 = vmatpush1.bf16.msra.mxu0 %v7502
    %7531 = vmatprep.subr.bf16.mxu0 %v7505
    %7532 = vmatpush1.bf16.msra.mxu0 %v7504
    %7533 = vmatprep.subr.bf16.mxu0 0
    %7534 = vmatpush1.bf16.msra.mxu0 0
    %7535 = vmatprep.subr.bf16.mxu0 0
    %7536 = vmatpush1.bf16.msra.mxu0 0
    %7537 = vmatprep.subr.bf16.mxu0 0
    %7538 = vmatpush1.bf16.msra.mxu0 0
    %7539 = vmatprep.subr.bf16.mxu0 0
    %7540 = vmatpush1.bf16.msra.mxu0 0
    %7541 = vmatprep.subr.bf16.mxu0 0
    %7542 = vmatpush1.bf16.msra.mxu0 0
    %7543 = vmatprep.subr.bf16.mxu0 0
    %7544 = vmatpush1.bf16.msra.mxu0 0
    %7545 = vmatprep.subr.bf16.mxu0 0
    %7546 = vmatpush1.bf16.msra.mxu0 0
    %7547 = vmatprep.subr.bf16.mxu0 0
    %7548 = vmatpush1.bf16.msra.mxu0 0
    %7549 = vmatprep.mubr.bf16.mxu0 0
    %7550 = vmatmul.mubr.bf16.gmra.mrb[0].mxu0 %v7514
    %v7551 = vpop.f32.mrb[0].mxu0
    %v7552 = vadd.f32 0.0, %v7551
    %v7553 = vpop.f32.mrb[0].mxu0
    %v7554 = vadd.f32 0.0, %v7553
    %v7555 = vpop.f32.mrb[0].mxu0
    %v7556 = vadd.f32 0.0, %v7555
    %v7557 = vpop.f32.mrb[0].mxu0
    %v7558 = vadd.f32 0.0, %v7557
    %7559 = vmatprep.mubr.bf16.mxu0 0
    %7560 = vmatmul.mubr.bf16.gmra.mrb[0].mxu0 %v7513
    %v7561 = vpop.f32.mrb[0].mxu0
    %v7562 = vadd.f32 0.0, %v7561
    %v7563 = vpop.f32.mrb[0].mxu0
    %v7564 = vadd.f32 0.0, %v7563
    %v7565 = vpop.f32.mrb[0].mxu0
    %v7566 = vpop.f32.mrb[0].mxu0
    %7567 = vdwg.mxu0
    %v7568 = vadd.f32 %v7482, %v7552
    %v7569 = vadd.f32 %v7483, %v7554
    %v7570 = vadd.f32 %v7484, %v7556
    %v7571 = vadd.f32 %v7485, %v7558
    %v7572 = vadd.f32 %v7486, %v7562
    %v7573 = vadd.f32 %v7487, %v7564
    %v7574 = vld [vmem:[#allocation8 + $0xc] sm:$0x7]
    %v7575 = vld [vmem:[#allocation9 + $0x200] sm:$0xff]
    %v7576 = vld [vmem:[#allocation9 + $0x208] sm:$0xff]
    %v7577 = vld [vmem:[#allocation9 + $0x210] sm:$0xff]
    %v7578 = vld [vmem:[#allocation9 + $0x218] sm:$0xff]
    %v7579 = vld [vmem:[#allocation9 + $0x220] sm:$0xff]
    %v7580 = vld [vmem:[#allocation9 + $0x228] sm:$0xff]
    %v7581 = vld [vmem:[#allocation9 + $0x230] sm:$0xff]
    %v7582 = vld [vmem:[#allocation9 + $0x238] sm:$0xff]
    %v7583 = vld [vmem:[#allocation9 + $0x240] sm:$0xff]
    %v7584 = vld [vmem:[#allocation9 + $0x248] sm:$0xff]
    %v7585 = vld [vmem:[#allocation9 + $0x250] sm:$0xff]
    %v7586 = vld [vmem:[#allocation9 + $0x258] sm:$0xff]
    %v7587 = vld [vmem:[#allocation9 + $0x260] sm:$0xff]
    %v7588 = vld [vmem:[#allocation9 + $0x268] sm:$0xff]
    %v7589 = vld [vmem:[#allocation9 + $0x270] sm:$0xff]
    %v7590 = vld [vmem:[#allocation9 + $0x278] sm:$0xff]
    %v7592 = vunpack.c.l.b16 %v7574
    %v7593 = vpack.c.b16 %v7592, %v7280
    %v7595 = vshrl.u32 %v7510, 16
    %v7597 = vrot.slane %v7595, 2
    %v7598 = vshll.u32 %v7510, 16
    %v7600 = vrot.slane %v7598, 3
    %v7601 = vor.u32 %v7597, %v7600
    %v7603 = vshrl.u32 %v7593, 16
    %v7605 = vrot.slane %v7603, 2
    %v7606 = vshll.u32 %v7593, 16
    %v7608 = vrot.slane %v7606, 3
    %v7609 = vor.u32 %v7605, %v7608
    %v7610 = vsel %vm4952, %v7601, %v7609
    %7613 = vmatprep.subr.bf16.mxu0 %v7576
    %7614 = vmatpush1.bf16.msra.mxu0 %v7575
    %7615 = vmatprep.subr.bf16.mxu0 %v7578
    %7616 = vmatpush1.bf16.msra.mxu0 %v7577
    %7617 = vmatprep.subr.bf16.mxu0 %v7580
    %7618 = vmatpush1.bf16.msra.mxu0 %v7579
    %7619 = vmatprep.subr.bf16.mxu0 %v7582
    %7620 = vmatpush1.bf16.msra.mxu0 %v7581
    %7621 = vmatprep.subr.bf16.mxu0 %v7584
    %7622 = vmatpush1.bf16.msra.mxu0 %v7583
    %7623 = vmatprep.subr.bf16.mxu0 %v7586
    %7624 = vmatpush1.bf16.msra.mxu0 %v7585
    %7625 = vmatprep.subr.bf16.mxu0 %v7588
    %7626 = vmatpush1.bf16.msra.mxu0 %v7587
    %7627 = vmatprep.subr.bf16.mxu0 %v7590
    %7628 = vmatpush1.bf16.msra.mxu0 %v7589
    %7629 = vmatprep.subr.bf16.mxu0 0
    %7630 = vmatpush1.bf16.msra.mxu0 0
    %7631 = vmatprep.subr.bf16.mxu0 0
    %7632 = vmatpush1.bf16.msra.mxu0 0
    %7633 = vmatprep.subr.bf16.mxu0 0
    %7634 = vmatpush1.bf16.msra.mxu0 0
    %7635 = vmatprep.subr.bf16.mxu0 0
    %7636 = vmatpush1.bf16.msra.mxu0 0
    %7637 = vmatprep.subr.bf16.mxu0 0
    %7638 = vmatpush1.bf16.msra.mxu0 0
    %7639 = vmatprep.subr.bf16.mxu0 0
    %7640 = vmatpush1.bf16.msra.mxu0 0
    %7641 = vmatprep.subr.bf16.mxu0 0
    %7642 = vmatpush1.bf16.msra.mxu0 0
    %7643 = vmatprep.subr.bf16.mxu0 0
    %7644 = vmatpush1.bf16.msra.mxu0 0
    %7645 = vmatprep.mubr.bf16.mxu0 0
    %7646 = vmatmul.mubr.bf16.gmra.mrb[0].mxu0 %v7610
    %v7647 = vpop.f32.mrb[0].mxu0
    %v7648 = vadd.f32 0.0, %v7647
    %v7649 = vpop.f32.mrb[0].mxu0
    %v7650 = vadd.f32 0.0, %v7649
    %v7651 = vpop.f32.mrb[0].mxu0
    %v7652 = vadd.f32 0.0, %v7651
    %v7653 = vpop.f32.mrb[0].mxu0
    %v7654 = vadd.f32 0.0, %v7653
    %7655 = vmatprep.mubr.bf16.mxu0 0
    %7656 = vmatmul.mubr.bf16.gmra.mrb[0].mxu0 %v7609
    %v7657 = vpop.f32.mrb[0].mxu0
    %v7658 = vadd.f32 0.0, %v7657
    %v7659 = vpop.f32.mrb[0].mxu0
    %v7660 = vadd.f32 0.0, %v7659
    %v7661 = vpop.f32.mrb[0].mxu0
    %v7662 = vpop.f32.mrb[0].mxu0
    %7663 = vdwg.mxu0
    %v7664 = vadd.f32 %v7568, %v7648
    %v7665 = vadd.f32 %v7569, %v7650
    %v7666 = vadd.f32 %v7570, %v7652
    %v7667 = vadd.f32 %v7571, %v7654
    %v7668 = vadd.f32 %v7572, %v7658
    %v7669 = vadd.f32 %v7573, %v7660
    %v7670 = vld [vmem:[#allocation8] sm:$0x8]
    %v7671 = vld [vmem:[#allocation9 + $0x280] sm:$0xff]
    %v7672 = vld [vmem:[#allocation9 + $0x288] sm:$0xff]
    %v7673 = vld [vmem:[#allocation9 + $0x290] sm:$0xff]
    %v7674 = vld [vmem:[#allocation9 + $0x298] sm:$0xff]
    %v7675 = vld [vmem:[#allocation9 + $0x2a0] sm:$0xff]
    %v7676 = vld [vmem:[#allocation9 + $0x2a8] sm:$0xff]
    %v7677 = vld [vmem:[#allocation9 + $0x2b0] sm:$0xff]
    %v7678 = vld [vmem:[#allocation9 + $0x2b8] sm:$0xff]
    %v7679 = vld [vmem:[#allocation9 + $0x2c0] sm:$0xff]
    %v7680 = vld [vmem:[#allocation9 + $0x2c8] sm:$0xff]
    %v7681 = vld [vmem:[#allocation9 + $0x2d0] sm:$0xff]
    %v7682 = vld [vmem:[#allocation9 + $0x2d8] sm:$0xff]
    %v7683 = vld [vmem:[#allocation9 + $0x2e0] sm:$0xff]
    %v7684 = vld [vmem:[#allocation9 + $0x2e8] sm:$0xff]
    %v7685 = vld [vmem:[#allocation9 + $0x2f0] sm:$0xff]
    %v7686 = vld [vmem:[#allocation9 + $0x2f8] sm:$0xff]
    %v7688 = vunpack.c.l.b16 %v7670
    %v7689 = vpack.c.b16 %v7279, %v7688
    %v7690 = vrot.slane %v7689, 3
    %v7691 = vrot.slane %v7593, 3
    %v7692 = vsel %vm5267, %v7690, %v7691
    %7695 = vmatprep.subr.bf16.mxu0 %v7672
    %7696 = vmatpush1.bf16.msra.mxu0 %v7671
    %7697 = vmatprep.subr.bf16.mxu0 %v7674
    %7698 = vmatpush1.bf16.msra.mxu0 %v7673
    %7699 = vmatprep.subr.bf16.mxu0 %v7676
    %7700 = vmatpush1.bf16.msra.mxu0 %v7675
    %7701 = vmatprep.subr.bf16.mxu0 %v7678
    %7702 = vmatpush1.bf16.msra.mxu0 %v7677
    %7703 = vmatprep.subr.bf16.mxu0 %v7680
    %7704 = vmatpush1.bf16.msra.mxu0 %v7679
    %7705 = vmatprep.subr.bf16.mxu0 %v7682
    %7706 = vmatpush1.bf16.msra.mxu0 %v7681
    %7707 = vmatprep.subr.bf16.mxu0 %v7684
    %7708 = vmatpush1.bf16.msra.mxu0 %v7683
    %7709 = vmatprep.subr.bf16.mxu0 %v7686
    %7710 = vmatpush1.bf16.msra.mxu0 %v7685
    %7711 = vmatprep.subr.bf16.mxu0 0
    %7712 = vmatpush1.bf16.msra.mxu0 0
    %7713 = vmatprep.subr.bf16.mxu0 0
    %7714 = vmatpush1.bf16.msra.mxu0 0
    %7715 = vmatprep.subr.bf16.mxu0 0
    %7716 = vmatpush1.bf16.msra.mxu0 0
    %7717 = vmatprep.subr.bf16.mxu0 0
    %7718 = vmatpush1.bf16.msra.mxu0 0
    %7719 = vmatprep.subr.bf16.mxu0 0
    %7720 = vmatpush1.bf16.msra.mxu0 0
    %7721 = vmatprep.subr.bf16.mxu0 0
    %7722 = vmatpush1.bf16.msra.mxu0 0
    %7723 = vmatprep.subr.bf16.mxu0 0
    %7724 = vmatpush1.bf16.msra.mxu0 0
    %7725 = vmatprep.subr.bf16.mxu0 0
    %7726 = vmatpush1.bf16.msra.mxu0 0
    %7727 = vmatprep.mubr.bf16.mxu0 0
    %7728 = vmatmul.mubr.bf16.gmra.mrb[0].mxu0 %v7692
    %v7729 = vpop.f32.mrb[0].mxu0
    %v7730 = vadd.f32 0.0, %v7729
    %v7731 = vpop.f32.mrb[0].mxu0
    %v7732 = vadd.f32 0.0, %v7731
    %v7733 = vpop.f32.mrb[0].mxu0
    %v7734 = vadd.f32 0.0, %v7733
    %v7735 = vpop.f32.mrb[0].mxu0
    %v7736 = vadd.f32 0.0, %v7735
    %7737 = vmatprep.mubr.bf16.mxu0 0
    %7738 = vmatmul.mubr.bf16.gmra.mrb[0].mxu0 %v7691
    %v7739 = vpop.f32.mrb[0].mxu0
    %v7740 = vadd.f32 0.0, %v7739
    %v7741 = vpop.f32.mrb[0].mxu0
    %v7742 = vadd.f32 0.0, %v7741
    %v7743 = vpop.f32.mrb[0].mxu0
    %v7744 = vpop.f32.mrb[0].mxu0
    %7745 = vdwg.mxu0
    %v7746 = vadd.f32 %v7664, %v7730
    %v7747 = vadd.f32 %v7665, %v7732
    %v7748 = vadd.f32 %v7666, %v7734
    %v7749 = vadd.f32 %v7667, %v7736
    %v7750 = vadd.f32 %v7668, %v7740
    %v7751 = vadd.f32 %v7669, %v7742
    %v7752 = vld [vmem:[#allocation8 + $0xc] sm:$0xf]
    %v7753 = vld [vmem:[#allocation9 + $0x300] sm:$0xff]
    %v7754 = vld [vmem:[#allocation9 + $0x308] sm:$0xff]
    %v7755 = vld [vmem:[#allocation9 + $0x310] sm:$0xff]
    %v7756 = vld [vmem:[#allocation9 + $0x318] sm:$0xff]
    %v7757 = vld [vmem:[#allocation9 + $0x320] sm:$0xff]
    %v7758 = vld [vmem:[#allocation9 + $0x328] sm:$0xff]
    %v7759 = vld [vmem:[#allocation9 + $0x330] sm:$0xff]
    %v7760 = vld [vmem:[#allocation9 + $0x338] sm:$0xff]
    %v7761 = vld [vmem:[#allocation9 + $0x340] sm:$0xff]
    %v7762 = vld [vmem:[#allocation9 + $0x348] sm:$0xff]
    %v7763 = vld [vmem:[#allocation9 + $0x350] sm:$0xff]
    %v7764 = vld [vmem:[#allocation9 + $0x358] sm:$0xff]
    %v7765 = vld [vmem:[#allocation9 + $0x360] sm:$0xff]
    %v7766 = vld [vmem:[#allocation9 + $0x368] sm:$0xff]
    %v7767 = vld [vmem:[#allocation9 + $0x370] sm:$0xff]
    %v7768 = vld [vmem:[#allocation9 + $0x378] sm:$0xff]
    %v7770 = vunpack.c.l.b16 %v7752
    %v7771 = vpack.c.b16 %v7280, %v7279
    %v7772 = vpack.c.b16 %v7770, %v7770
    %7775 = vmatprep.subr.bf16.mxu0 %v7754
    %7776 = vmatpush1.bf16.msra.mxu0 %v7753
    %7777 = vmatprep.subr.bf16.mxu0 %v7756
    %7778 = vmatpush1.bf16.msra.mxu0 %v7755
    %7779 = vmatprep.subr.bf16.mxu0 %v7758
    %7780 = vmatpush1.bf16.msra.mxu0 %v7757
    %7781 = vmatprep.subr.bf16.mxu0 %v7760
    %7782 = vmatpush1.bf16.msra.mxu0 %v7759
    %7783 = vmatprep.subr.bf16.mxu0 %v7762
    %7784 = vmatpush1.bf16.msra.mxu0 %v7761
    %7785 = vmatprep.subr.bf16.mxu0 %v7764
    %7786 = vmatpush1.bf16.msra.mxu0 %v7763
    %7787 = vmatprep.subr.bf16.mxu0 %v7766
    %7788 = vmatpush1.bf16.msra.mxu0 %v7765
    %7789 = vmatprep.subr.bf16.mxu0 %v7768
    %7790 = vmatpush1.bf16.msra.mxu0 %v7767
    %7791 = vmatprep.subr.bf16.mxu0 0
    %7792 = vmatpush1.bf16.msra.mxu0 0
    %7793 = vmatprep.subr.bf16.mxu0 0
    %7794 = vmatpush1.bf16.msra.mxu0 0
    %7795 = vmatprep.subr.bf16.mxu0 0
    %7796 = vmatpush1.bf16.msra.mxu0 0
    %7797 = vmatprep.subr.bf16.mxu0 0
    %7798 = vmatpush1.bf16.msra.mxu0 0
    %7799 = vmatprep.subr.bf16.mxu0 0
    %7800 = vmatpush1.bf16.msra.mxu0 0
    %7801 = vmatprep.subr.bf16.mxu0 0
    %7802 = vmatpush1.bf16.msra.mxu0 0
    %7803 = vmatprep.subr.bf16.mxu0 0
    %7804 = vmatpush1.bf16.msra.mxu0 0
    %7805 = vmatprep.subr.bf16.mxu0 0
    %7806 = vmatpush1.bf16.msra.mxu0 0
    %7807 = vmatprep.mubr.bf16.mxu0 0
    %7808 = vmatmul.mubr.bf16.gmra.mrb[0].mxu0 %v7771
    %v7809 = vpop.f32.mrb[0].mxu0
    %v7810 = vadd.f32 0.0, %v7809
    %v7811 = vpop.f32.mrb[0].mxu0
    %v7812 = vadd.f32 0.0, %v7811
    %v7813 = vpop.f32.mrb[0].mxu0
    %v7814 = vadd.f32 0.0, %v7813
    %v7815 = vpop.f32.mrb[0].mxu0
    %v7816 = vadd.f32 0.0, %v7815
    %7817 = vmatprep.mubr.bf16.mxu0 0
    %7818 = vmatmul.mubr.bf16.gmra.mrb[0].mxu0 %v7772
    %v7819 = vpop.f32.mrb[0].mxu0
    %v7820 = vadd.f32 0.0, %v7819
    %v7821 = vpop.f32.mrb[0].mxu0
    %v7822 = vadd.f32 0.0, %v7821
    %v7823 = vpop.f32.mrb[0].mxu0
    %v7824 = vpop.f32.mrb[0].mxu0
    %7825 = vdwg.mxu0
    %v7826 = vadd.f32 %v7746, %v7810
    %v7827 = vadd.f32 %v7747, %v7812
    %v7828 = vadd.f32 %v7748, %v7814
    %v7829 = vadd.f32 %v7749, %v7816
    %v7830 = vadd.f32 %v7750, %v7820
    %v7831 = vadd.f32 %v7751, %v7822
    %v7832 = vld [vmem:[#allocation8 + $0x4] sm:$0xf]
    %v7833 = vld [vmem:[#allocation8 + $0x8] sm:$0xf]
    %v7834 = vld [vmem:[#allocation8 + $0xc] sm:$0xf]
    %v7835 = vld [vmem:[#allocation8 + $0x10] sm:$0x1]
    %v7836 = vld [vmem:[#allocation9 + $0x380] sm:$0xff]
    %v7837 = vld [vmem:[#allocation9 + $0x388] sm:$0xff]
    %v7838 = vld [vmem:[#allocation9 + $0x390] sm:$0xff]
    %v7839 = vld [vmem:[#allocation9 + $0x398] sm:$0xff]
    %v7840 = vld [vmem:[#allocation9 + $0x3a0] sm:$0xff]
    %v7841 = vld [vmem:[#allocation9 + $0x3a8] sm:$0xff]
    %v7842 = vld [vmem:[#allocation9 + $0x3b0] sm:$0xff]
    %v7843 = vld [vmem:[#allocation9 + $0x3b8] sm:$0xff]
    %v7844 = vld [vmem:[#allocation9 + $0x3c0] sm:$0xff]
    %v7845 = vld [vmem:[#allocation9 + $0x3c8] sm:$0xff]
    %v7846 = vld [vmem:[#allocation9 + $0x3d0] sm:$0xff]
    %v7847 = vld [vmem:[#allocation9 + $0x3d8] sm:$0xff]
    %v7848 = vld [vmem:[#allocation9 + $0x3e0] sm:$0xff]
    %v7849 = vld [vmem:[#allocation9 + $0x3e8] sm:$0xff]
    %v7850 = vld [vmem:[#allocation9 + $0x3f0] sm:$0xff]
    %v7851 = vld [vmem:[#allocation9 + $0x3f8] sm:$0xff]
    %v7856 = vunpack.c.l.b16 %v7832
    %v7857 = vunpack.c.l.b16 %v7833
    %v7858 = vunpack.c.l.b16 %v7834
    %v7859 = vunpack.c.l.b16 %v7835
    %v7860 = vpack.c.b16 %v7857, %v7856
    %v7861 = vpack.c.b16 %v7859, %v7858
    %v7863 = vshrl.u32 %v7860, 16
    %v7865 = vshll.u32 %v7860, 16
    %v7867 = vrot.slane %v7865, 1
    %v7868 = vor.u32 %v7863, %v7867
    %v7870 = vshll.u32 %v7861, 16
    %v7872 = vrot.slane %v7870, 1
    %v7873 = vsel %vm3033, %v7868, %v7872
    %v7874 = vshrl.u32 %v7861, 16
    %v7876 = vor.u32 %v7874, %v7872
    %7879 = vmatprep.subr.bf16.mxu0 %v7837
    %7880 = vmatpush1.bf16.msra.mxu0 %v7836
    %7881 = vmatprep.subr.bf16.mxu0 %v7839
    %7882 = vmatpush1.bf16.msra.mxu0 %v7838
    %7883 = vmatprep.subr.bf16.mxu0 %v7841
    %7884 = vmatpush1.bf16.msra.mxu0 %v7840
    %7885 = vmatprep.subr.bf16.mxu0 %v7843
    %7886 = vmatpush1.bf16.msra.mxu0 %v7842
    %7887 = vmatprep.subr.bf16.mxu0 %v7845
    %7888 = vmatpush1.bf16.msra.mxu0 %v7844
    %7889 = vmatprep.subr.bf16.mxu0 %v7847
    %7890 = vmatpush1.bf16.msra.mxu0 %v7846
    %7891 = vmatprep.subr.bf16.mxu0 %v7849
    %7892 = vmatpush1.bf16.msra.mxu0 %v7848
    %7893 = vmatprep.subr.bf16.mxu0 %v7851
    %7894 = vmatpush1.bf16.msra.mxu0 %v7850
    %7895 = vmatprep.subr.bf16.mxu0 0
    %7896 = vmatpush1.bf16.msra.mxu0 0
    %7897 = vmatprep.subr.bf16.mxu0 0
    %7898 = vmatpush1.bf16.msra.mxu0 0
    %7899 = vmatprep.subr.bf16.mxu0 0
    %7900 = vmatpush1.bf16.msra.mxu0 0
    %7901 = vmatprep.subr.bf16.mxu0 0
    %7902 = vmatpush1.bf16.msra.mxu0 0
    %7903 = vmatprep.subr.bf16.mxu0 0
    %7904 = vmatpush1.bf16.msra.mxu0 0
    %7905 = vmatprep.subr.bf16.mxu0 0
    %7906 = vmatpush1.bf16.msra.mxu0 0
    %7907 = vmatprep.subr.bf16.mxu0 0
    %7908 = vmatpush1.bf16.msra.mxu0 0
    %7909 = vmatprep.subr.bf16.mxu0 0
    %7910 = vmatpush1.bf16.msra.mxu0 0
    %7911 = vmatprep.mubr.bf16.mxu0 0
    %7912 = vmatmul.mubr.bf16.gmra.mrb[0].mxu0 %v7873
    %v7913 = vpop.f32.mrb[0].mxu0
    %v7914 = vadd.f32 0.0, %v7913
    %v7915 = vpop.f32.mrb[0].mxu0
    %v7916 = vadd.f32 0.0, %v7915
    %v7917 = vpop.f32.mrb[0].mxu0
    %v7918 = vadd.f32 0.0, %v7917
    %v7919 = vpop.f32.mrb[0].mxu0
    %v7920 = vadd.f32 0.0, %v7919
    %7921 = vmatprep.mubr.bf16.mxu0 0
    %7922 = vmatmul.mubr.bf16.gmra.mrb[0].mxu0 %v7876
    %v7923 = vpop.f32.mrb[0].mxu0
    %v7924 = vadd.f32 0.0, %v7923
    %v7925 = vpop.f32.mrb[0].mxu0
    %v7926 = vadd.f32 0.0, %v7925
    %v7927 = vpop.f32.mrb[0].mxu0
    %v7928 = vpop.f32.mrb[0].mxu0
    %7929 = vdwg.mxu0
    %v7930 = vadd.f32 %v7826, %v7914
    %v7931 = vadd.f32 %v7827, %v7916
    %v7932 = vadd.f32 %v7828, %v7918
    %v7933 = vadd.f32 %v7829, %v7920
    %v7934 = vadd.f32 %v7830, %v7924
    %v7935 = vadd.f32 %v7831, %v7926
    %v7936 = vld [vmem:[#allocation8 + $0x4] sm:$0xe]
    %v7937 = vld [vmem:[#allocation9 + $0x400] sm:$0xff]
    %v7938 = vld [vmem:[#allocation9 + $0x408] sm:$0xff]
    %v7939 = vld [vmem:[#allocation9 + $0x410] sm:$0xff]
    %v7940 = vld [vmem:[#allocation9 + $0x418] sm:$0xff]
    %v7941 = vld [vmem:[#allocation9 + $0x420] sm:$0xff]
    %v7942 = vld [vmem:[#allocation9 + $0x428] sm:$0xff]
    %v7943 = vld [vmem:[#allocation9 + $0x430] sm:$0xff]
    %v7944 = vld [vmem:[#allocation9 + $0x438] sm:$0xff]
    %v7945 = vld [vmem:[#allocation9 + $0x440] sm:$0xff]
    %v7946 = vld [vmem:[#allocation9 + $0x448] sm:$0xff]
    %v7947 = vld [vmem:[#allocation9 + $0x450] sm:$0xff]
    %v7948 = vld [vmem:[#allocation9 + $0x458] sm:$0xff]
    %v7949 = vld [vmem:[#allocation9 + $0x460] sm:$0xff]
    %v7950 = vld [vmem:[#allocation9 + $0x468] sm:$0xff]
    %v7951 = vld [vmem:[#allocation9 + $0x470] sm:$0xff]
    %v7952 = vld [vmem:[#allocation9 + $0x478] sm:$0xff]
    %v7954 = vunpack.c.l.b16 %v7936
    %v7955 = vpack.c.b16 %v7857, %v7954
    %v7956 = vrot.slane %v7955, 1
    %v7957 = vrot.slane %v7861, 1
    %v7958 = vsel %vm3481, %v7956, %v7957
    %7961 = vmatprep.subr.bf16.mxu0 %v7938
    %7962 = vmatpush1.bf16.msra.mxu0 %v7937
    %7963 = vmatprep.subr.bf16.mxu0 %v7940
    %7964 = vmatpush1.bf16.msra.mxu0 %v7939
    %7965 = vmatprep.subr.bf16.mxu0 %v7942
    %7966 = vmatpush1.bf16.msra.mxu0 %v7941
    %7967 = vmatprep.subr.bf16.mxu0 %v7944
    %7968 = vmatpush1.bf16.msra.mxu0 %v7943
    %7969 = vmatprep.subr.bf16.mxu0 %v7946
    %7970 = vmatpush1.bf16.msra.mxu0 %v7945
    %7971 = vmatprep.subr.bf16.mxu0 %v7948
    %7972 = vmatpush1.bf16.msra.mxu0 %v7947
    %7973 = vmatprep.subr.bf16.mxu0 %v7950
    %7974 = vmatpush1.bf16.msra.mxu0 %v7949
    %7975 = vmatprep.subr.bf16.mxu0 %v7952
    %7976 = vmatpush1.bf16.msra.mxu0 %v7951
    %7977 = vmatprep.subr.bf16.mxu0 0
    %7978 = vmatpush1.bf16.msra.mxu0 0
    %7979 = vmatprep.subr.bf16.mxu0 0
    %7980 = vmatpush1.bf16.msra.mxu0 0
    %7981 = vmatprep.subr.bf16.mxu0 0
    %7982 = vmatpush1.bf16.msra.mxu0 0
    %7983 = vmatprep.subr.bf16.mxu0 0
    %7984 = vmatpush1.bf16.msra.mxu0 0
    %7985 = vmatprep.subr.bf16.mxu0 0
    %7986 = vmatpush1.bf16.msra.mxu0 0
    %7987 = vmatprep.subr.bf16.mxu0 0
    %7988 = vmatpush1.bf16.msra.mxu0 0
    %7989 = vmatprep.subr.bf16.mxu0 0
    %7990 = vmatpush1.bf16.msra.mxu0 0
    %7991 = vmatprep.subr.bf16.mxu0 0
    %7992 = vmatpush1.bf16.msra.mxu0 0
    %7993 = vmatprep.mubr.bf16.mxu0 0
    %7994 = vmatmul.mubr.bf16.gmra.mrb[0].mxu0 %v7958
    %v7995 = vpop.f32.mrb[0].mxu0
    %v7996 = vadd.f32 0.0, %v7995
    %v7997 = vpop.f32.mrb[0].mxu0
    %v7998 = vadd.f32 0.0, %v7997
    %v7999 = vpop.f32.mrb[0].mxu0
    %v8000 = vadd.f32 0.0, %v7999
    %v8001 = vpop.f32.mrb[0].mxu0
    %v8002 = vadd.f32 0.0, %v8001
    %8003 = vmatprep.mubr.bf16.mxu0 0
    %8004 = vmatmul.mubr.bf16.gmra.mrb[0].mxu0 %v7957
    %v8005 = vpop.f32.mrb[0].mxu0
    %v8006 = vadd.f32 0.0, %v8005
    %v8007 = vpop.f32.mrb[0].mxu0
    %v8008 = vadd.f32 0.0, %v8007
    %v8009 = vpop.f32.mrb[0].mxu0
    %v8010 = vpop.f32.mrb[0].mxu0
    %8011 = vdwg.mxu0
    %v8012 = vadd.f32 %v7930, %v7996
    %v8013 = vadd.f32 %v7931, %v7998
    %v8014 = vadd.f32 %v7932, %v8000
    %v8015 = vadd.f32 %v7933, %v8002
    %v8016 = vadd.f32 %v7934, %v8006
    %v8017 = vadd.f32 %v7935, %v8008
    %v8018 = vld [vmem:[%s8] sm:$0x3]
    %v8020 = vlaneseq
    %v8021 = vshrl.u32 %v8020, 7
    %v8022 = vsub.s32 0, %v8021
    %v8023 = vrot.slane %v8018, %v8022
    %v8024 = vlaneseq
    %v8025 = vshrl.u32 %v8024, 7
    %v8026 = vsub.s32 1, %v8025
    %v8027 = vrot.slane %v8018, %v8026
    %v8030 = vadd.f32 %v8012, %v8023
    %v8031 = vadd.f32 %v8013, %v8027
    %v8032 = vadd.f32 %v8014, %v8023
    %v8033 = vadd.f32 %v8015, %v8027
    %v8034 = vadd.f32 %v8016, %v8023
    %v8035 = vadd.f32 %v8017, %v8027
    %v8036 = vmax.f32 %v8030, 0.0
    %v8037 = vmax.f32 %v8031, 0.0
    %v8038 = vmax.f32 %v8032, 0.0
    %v8039 = vmax.f32 %v8033, 0.0
    %v8040 = vmax.f32 %v8034, 0.0
    %v8041 = vmax.f32 %v8035, 0.0
    %8042 = vst [vmem:[#allocation5] sm:$0xff] %v8036
    %8043 = vst [vmem:[#allocation5 + $0x8] sm:$0xff] %v8037
    %8044 = vst [vmem:[#allocation5 + $0x10] sm:$0xff] %v8038
    %8045 = vst [vmem:[#allocation5 + $0x18] sm:$0xff] %v8039
    %8046 = vst [vmem:[#allocation5 + $0x20] sm:$0xff] %v8040
    %8047 = vst [vmem:[#allocation5 + $0x28] sm:$0xff] %v8041
    %v8048 = vld [vmem:[#allocation5] ss:$8 sm:$0x3]
    %s8049 = scalar_lea.vmem [#allocation5], 1
    %v8050 = vld [vmem:[%s8049] ss:$8 sm:$0x3]
    %v8051 = vmax.f32 %v8048, %v8050
    %s8052 = scalar_lea.vmem [#allocation5], 4
    %v8053 = vld [vmem:[%s8052] ss:$8 sm:$0x3]
    %s8054 = scalar_lea.vmem [#allocation5], 5
    %v8055 = vld [vmem:[%s8054] ss:$8 sm:$0x3]
    %v8056 = vmax.f32 %v8053, %v8055
    %v8057 = vmax.f32 %v8051, %v8056
    %s8058 = scalar_lea.vmem [#allocation5], 32
    %v8059 = vld [vmem:[%s8058] ss:$8 sm:$0x3]
    %s8060 = scalar_lea.vmem [#allocation5], 33
    %v8061 = vld [vmem:[%s8060] ss:$8 sm:$0x3]
    %v8062 = vmax.f32 %v8059, %v8061
    %s8063 = scalar_lea.vmem [#allocation5], 36
    %v8064 = vld [vmem:[%s8063] ss:$8 sm:$0x3]
    %s8065 = scalar_lea.vmem [#allocation5], 37
    %v8066 = vld [vmem:[%s8065] ss:$8 sm:$0x3]
    %v8067 = vmax.f32 %v8064, %v8066
    %v8068 = vmax.f32 %v8062, %v8067
    %v8070 = vlaneseq
    %v8071 = vshrl.u32 %v8070, 7
    %v8072 = vsub.s32 0, %v8071
    %v8073 = vrot.slane %v8057, %v8072
    %v8074 = vlaneseq
    %v8075 = vshrl.u32 %v8074, 7
    %v8076 = vsub.s32 1, %v8075
    %v8077 = vrot.slane %v8057, %v8076
    %v8081 = vlaneseq
    %v8082 = vshrl.u32 %v8081, 7
    %v8083 = vsub.s32 0, %v8082
    %v8084 = vrot.slane %v8068, %v8083
    %v8085 = vlaneseq
    %v8086 = vshrl.u32 %v8085, 7
    %v8087 = vsub.s32 1, %v8086
    %v8088 = vrot.slane %v8068, %v8087
    %vm8091 = vcmask 1040384
    %v8092 = vsel %vm8091, %v8073, %v8084
    %v8093 = vsel %vm8091, %v8077, %v8088
    %v8094 = vpack.c.bf16 %v8092, %v8092
    %v8095 = vpack.c.bf16 %v8093, %v8093
    %v8096 = vld [vmem:[%s9] sm:$0xf]
    %v8097 = vld [vmem:[%s9 + $0x4] sm:$0xf]
    %v8098 = vld [vmem:[%s9 + $0x8] sm:$0xf]
    %v8099 = vld [vmem:[%s9 + $0xc] sm:$0xf]
    %v8100 = vld [vmem:[%s9 + $0x10] sm:$0xf]
    %v8101 = vld [vmem:[%s9 + $0x14] sm:$0xf]
    %v8102 = vld [vmem:[%s9 + $0x18] sm:$0xf]
    %v8103 = vld [vmem:[%s9 + $0x1c] sm:$0xf]
    %v8104 = vld [vmem:[%s9 + $0x20] sm:$0xf]
    %v8105 = vld [vmem:[%s9 + $0x24] sm:$0xf]
    %v8106 = vld [vmem:[%s9 + $0x28] sm:$0xf]
    %v8107 = vld [vmem:[%s9 + $0x2c] sm:$0xf]
    %v8108 = vld [vmem:[%s9 + $0x30] sm:$0xf]
    %v8109 = vld [vmem:[%s9 + $0x34] sm:$0xf]
    %v8110 = vld [vmem:[%s9 + $0x38] sm:$0xf]
    %v8111 = vld [vmem:[%s9 + $0x3c] sm:$0xf]
    %v8112 = vld [vmem:[%s9 + $0x40] sm:$0xf]
    %v8113 = vld [vmem:[%s9 + $0x44] sm:$0xf]
    %v8114 = vld [vmem:[%s9 + $0x48] sm:$0xf]
    %v8115 = vld [vmem:[%s9 + $0x4c] sm:$0xf]
    %v8116 = vld [vmem:[%s9 + $0x50] sm:$0xf]
    %v8117 = vld [vmem:[%s9 + $0x54] sm:$0xf]
    %v8118 = vld [vmem:[%s9 + $0x58] sm:$0xf]
    %v8119 = vld [vmem:[%s9 + $0x5c] sm:$0xf]
    %v8120 = vld [vmem:[%s9 + $0x60] sm:$0xf]
    %v8121 = vld [vmem:[%s9 + $0x64] sm:$0xf]
    %v8122 = vld [vmem:[%s9 + $0x68] sm:$0xf]
    %v8123 = vld [vmem:[%s9 + $0x6c] sm:$0xf]
    %v8124 = vld [vmem:[%s9 + $0x70] sm:$0xf]
    %v8125 = vld [vmem:[%s9 + $0x74] sm:$0xf]
    %v8126 = vld [vmem:[%s9 + $0x78] sm:$0xf]
    %v8127 = vld [vmem:[%s9 + $0x7c] sm:$0xf]
    %v8128 = vld [vmem:[%s10] sm:$0x1]
    %v8130 = vlaneseq
    %v8131 = vshrl.u32 %v8130, 7
    %v8132 = vsub.s32 0, %v8131
    %v8133 = vrot.slane %v8128, %v8132
    %v8167 = vunpack.c.l.b16 %v8096
    %v8168 = vunpack.c.l.b16 %v8097
    %v8169 = vunpack.c.l.b16 %v8098
    %v8170 = vunpack.c.l.b16 %v8099
    %v8171 = vunpack.c.l.b16 %v8100
    %v8172 = vunpack.c.l.b16 %v8101
    %v8173 = vunpack.c.l.b16 %v8102
    %v8174 = vunpack.c.l.b16 %v8103
    %v8175 = vunpack.c.l.b16 %v8104
    %v8176 = vunpack.c.l.b16 %v8105
    %v8177 = vunpack.c.l.b16 %v8106
    %v8178 = vunpack.c.l.b16 %v8107
    %v8179 = vunpack.c.l.b16 %v8108
    %v8180 = vunpack.c.l.b16 %v8109
    %v8181 = vunpack.c.l.b16 %v8110
    %v8182 = vunpack.c.l.b16 %v8111
    %v8183 = vunpack.c.l.b16 %v8112
    %v8184 = vunpack.c.l.b16 %v8113
    %v8185 = vunpack.c.l.b16 %v8114
    %v8186 = vunpack.c.l.b16 %v8115
    %v8187 = vunpack.c.l.b16 %v8116
    %v8188 = vunpack.c.l.b16 %v8117
    %v8189 = vunpack.c.l.b16 %v8118
    %v8190 = vunpack.c.l.b16 %v8119
    %v8191 = vunpack.c.l.b16 %v8120
    %v8192 = vunpack.c.l.b16 %v8121
    %v8193 = vunpack.c.l.b16 %v8122
    %v8194 = vunpack.c.l.b16 %v8123
    %v8195 = vunpack.c.l.b16 %v8124
    %v8196 = vunpack.c.l.b16 %v8125
    %v8197 = vunpack.c.l.b16 %v8126
    %v8198 = vunpack.c.l.b16 %v8127
    %v8199 = vpack.c.b16 %v8168, %v8167
    %v8200 = vpack.c.b16 %v8170, %v8169
    %v8201 = vpack.c.b16 %v8172, %v8171
    %v8202 = vpack.c.b16 %v8174, %v8173
    %v8203 = vpack.c.b16 %v8176, %v8175
    %v8204 = vpack.c.b16 %v8178, %v8177
    %v8205 = vpack.c.b16 %v8180, %v8179
    %v8206 = vpack.c.b16 %v8182, %v8181
    %v8207 = vpack.c.b16 %v8184, %v8183
    %v8208 = vpack.c.b16 %v8186, %v8185
    %v8209 = vpack.c.b16 %v8188, %v8187
    %v8210 = vpack.c.b16 %v8190, %v8189
    %v8211 = vpack.c.b16 %v8192, %v8191
    %v8212 = vpack.c.b16 %v8194, %v8193
    %v8213 = vpack.c.b16 %v8196, %v8195
    %v8214 = vpack.c.b16 %v8198, %v8197
    %8231 = vmatprep.subr.bf16.mxu0 0
    %8232 = vmatpush1.bf16.msra.mxu0 %v8199
    %8233 = vmatprep.subr.bf16.mxu0 0
    %8234 = vmatpush1.bf16.msra.mxu0 %v8200
    %8235 = vmatprep.subr.bf16.mxu0 0
    %8236 = vmatpush1.bf16.msra.mxu0 %v8201
    %8237 = vmatprep.subr.bf16.mxu0 0
    %8238 = vmatpush1.bf16.msra.mxu0 %v8202
    %8239 = vmatprep.subr.bf16.mxu0 0
    %8240 = vmatpush1.bf16.msra.mxu0 %v8203
    %8241 = vmatprep.subr.bf16.mxu0 0
    %8242 = vmatpush1.bf16.msra.mxu0 %v8204
    %8243 = vmatprep.subr.bf16.mxu0 0
    %8244 = vmatpush1.bf16.msra.mxu0 %v8205
    %8245 = vmatprep.subr.bf16.mxu0 0
    %8246 = vmatpush1.bf16.msra.mxu0 %v8206
    %8247 = vmatprep.subr.bf16.mxu0 0
    %8248 = vmatpush1.bf16.msra.mxu0 %v8207
    %8249 = vmatprep.subr.bf16.mxu0 0
    %8250 = vmatpush1.bf16.msra.mxu0 %v8208
    %8251 = vmatprep.subr.bf16.mxu0 0
    %8252 = vmatpush1.bf16.msra.mxu0 %v8209
    %8253 = vmatprep.subr.bf16.mxu0 0
    %8254 = vmatpush1.bf16.msra.mxu0 %v8210
    %8255 = vmatprep.subr.bf16.mxu0 0
    %8256 = vmatpush1.bf16.msra.mxu0 %v8211
    %8257 = vmatprep.subr.bf16.mxu0 0
    %8258 = vmatpush1.bf16.msra.mxu0 %v8212
    %8259 = vmatprep.subr.bf16.mxu0 0
    %8260 = vmatpush1.bf16.msra.mxu0 %v8213
    %8261 = vmatprep.subr.bf16.mxu0 0
    %8262 = vmatpush1.bf16.msra.mxu0 %v8214
    %8263 = vmatprep.mubr.bf16.mxu0 %v8095
    %8264 = vmatmul.mubr.bf16.gmra.mrb[0].mxu0 %v8094
    %v8265 = vpop.f32.mrb[0].mxu0
    %v8266 = vadd.f32 %v8133, %v8265
    %v8267 = vpop.f32.mrb[0].mxu0
    %v8268 = vpop.f32.mrb[0].mxu0
    %v8269 = vpop.f32.mrb[0].mxu0
    %8270 = vdwg.mxu0
    %vm8271 = vcmask 74752
    %v8272 = vsel %vm8271, %v8266, -inf
    %8273 = vmax.xlane.f32.xlu0 %v8272
    %v8274 = vpop.xlane.xlu0 %8273
    %v8275 = vsub.f32 %v8266, %v8274
    %v8276 = vmul.f32 %v8275, 1.442695
    %v8277 = vpow.pop %v8276
    %v8278 = vsel %vm8271, %v8277, 0.0
    %8279 = vadd.xlane.f32.xlu0 %v8278
    %v8280 = vpop.xlane.xlu0 %8279
    %v8281 = vlog2.pop %v8280
    %v8282 = vmul.f32 %v8281, 0.6931472
    %v8283 = vsub.f32 %v8275, %v8282
    %8284 = vst.msk [vmem:[#allocation11] sm:$0x3] %vm8271, %v8283
    // Predicated region
    $region79: #{neural_net_forward.1} parent=1 // pred_check
      _
    $region80: #{neural_net_forward.1} parent=1 // pred_check_branch
      %8286 = sbr.rel (0) target = $region82
    $region81: #{neural_net_forward.1} parent=1 // pred_region
      %s8288 = ssub.s32 32, 32
      %8289 = vsyncadd [#allocation12], %s8288
      %s8291 = sshll.u32 [#allocation11], 4
      %s8292 = int_to_ptr.vmem [resolvable:$true] %s8291
      %8294 = dma.vmem_to_hbm [thread:$0]  %s8292, 32, %s11, [#allocation12]
    $region82: #{neural_net_forward.1} parent=1 // pred_fallthru
      _
    // Predicated region
    $region83: #{neural_net_forward.1} parent=1 // pred_check
      _
    $region84: #{neural_net_forward.1} parent=1 // pred_check_branch
      %8296 = sbr.rel (0) target = $region86
    $region85: #{neural_net_forward.1} parent=1 // pred_region
      %8297 = dma.done [#allocation12], 32
    $region86: #{neural_net_forward.1} parent=1 // pred_fallthru
      _
    %8298 = vsyncpa [#allocation12], 1
  %8299 = vsyncmov [#allocation10]
  %s8300 = vpop.sfrf %8299
  %p8301 = scmp.eq.s32.totalorder %s8300, 0
  %p8302 = pneg %p8301
  %8304 = shalt.err (%p8302)

</llo_original>
